<compile_context>
chip_gen: v7x
topology: tpu7x:2x2x1
jax: 0.10.0
libtpu: 0.0.40
codegen_flags: <defaults>
</compile_context>

<pallas_src>
import jax
import jax.numpy as jnp
from jax import lax
from jax.experimental import pallas as pl
from jax.experimental.pallas import tpu as pltpu

ENCODING_SIZE = 50
ENCODING_PAD = 128           # lane-dense output slab
HIDDEN_SIZE = 100            # logical H (PyTorch)
HIDDEN_PAD = 128             # lane-aligned H used inside the kernel
NUM_CORRECTNESS_STATES = 3
CHUNK_T = 16                 # timesteps per grid step (fully unrolled inside)
MAX_TILE_B = 256             # default batch tile (parallel grid axis)
BATCH_ALIGN = 16             # sublane alignment that is safe for bf16 blocks


def _round_up(x, m):
    return ((x + m - 1) // m) * m


def _pad_gates_last(w, h, hp):
    """Re-lay the last dim [3*h] as three hp-aligned slabs [3*hp] (zero pad)."""
    lead = w.shape[:-1]
    w3 = w.reshape(lead + (3, h))
    pads = [(0, 0)] * (len(lead) + 1) + [(0, hp - h)]
    return jnp.pad(w3, pads).reshape(lead + (3 * hp,))


def _gru_encoder_kernel(len_ref, x_ref, wih_ref, whh_ref, bhn_ref,
                        wc_ref, bc_ref, out_ref, h_scr):
    """Grid = (batch_tile [parallel], time_chunk [arbitrary]).

    len_ref : (TILE_B, 1)  int32 sequence lengths
    x_ref   : (CHUNK_T, TILE_B, Rp)   sparse input block (one-hots|time|1)
    wih_ref : (Rp, 3*Hp)   input projection (bias + b_hr/b_hz folded in row R)
    whh_ref : (Hp, 3*Hp)   recurrent weights (gate slabs r|z|n, 128-aligned)
    bhn_ref : (1, Hp)      hidden bias of the n gate only
    wc_ref  : (Hp, ENCODING_PAD), bc_ref: (1, ENCODING_PAD)  Tanh->Linear head
    out_ref : (TILE_B, ENCODING_PAD)  written on the last time chunk
    h_scr   : (TILE_B, Hp) f32 resident hidden state
    """
    c = pl.program_id(1)
    chunk_t = x_ref.shape[0]
    tile_b, hp = h_scr.shape

    @pl.when(c == 0)
    def _():
        h_scr[...] = jnp.zeros_like(h_scr)

    wih = wih_ref[...]                 # [Rp, 3Hp]   (bf16 or f32)
    whh = whh_ref[...]                 # [Hp, 3Hp]
    bhn = bhn_ref[...]                 # [1, Hp] f32
    mm_dtype = whh.dtype
    # Hoisted once per chunk (JAX does not CSE broadcast_in_dim).
    lens_b = jnp.broadcast_to(len_ref[...], (tile_b, hp))   # [TILE_B, Hp] int32
    t0 = c * chunk_t

    h = h_scr[...]                     # f32, stays live in vregs across chunk
    # Fully unrolled: static indices, LLO overlaps the gi matmul / EUP / VPU
    # work of adjacent steps with the serial gh recurrence.
    for i in range(chunk_t):
        x_i = x_ref[i]                 # [TILE_B, Rp]
        gi = jnp.dot(x_i, wih, preferred_element_type=jnp.float32)
        gh = jnp.dot(h.astype(mm_dtype), whh,
                     preferred_element_type=jnp.float32)

        # 128-aligned gate slabs -> whole-vreg slices.
        r = jax.nn.sigmoid(gi[:, 0:hp] + gh[:, 0:hp])
        z = jax.nn.sigmoid(gi[:, hp:2 * hp] + gh[:, hp:2 * hp])
        n = jnp.tanh(gi[:, 2 * hp:3 * hp] + r * (gh[:, 2 * hp:3 * hp] + bhn))
        h_new = (1.0 - z) * n + z * h

        # validity mask: one int32 compare + one select on the critical path
        h = jnp.where((t0 + i) < lens_b, h_new, h)

    h_scr[...] = h

    @pl.when(c == pl.num_programs(1) - 1)
    def _():
        enc = jnp.tanh(h_scr[...])
        out_ref[...] = (jnp.dot(enc, wc_ref[...],
                                preferred_element_type=jnp.float32)
                        + bc_ref[...]).astype(out_ref.dtype)


def ckt_encoder_forward(batch, params, num_event_types, use_correctness=True,
                        chunk_t=CHUNK_T, tile_b=MAX_TILE_B,
                        mxu_dtype=jnp.bfloat16):
    """Inference forward of CKTEncoder (train_mode=False). Returns [B, 50]."""
    event_types = batch["event_types"]        # int32 [B, T]
    time_deltas = batch["time_deltas"]        # f32   [B, T]
    lengths = batch["sequence_lengths"]       # int32 [B]
    B, T = event_types.shape

    H, Hp = HIDDEN_SIZE, HIDDEN_PAD
    ENC, ENCP = ENCODING_SIZE, ENCODING_PAD
    E = num_event_types
    C = NUM_CORRECTNESS_STATES if use_correctness else 0
    R = E + C + 1                             # event | correctness | time
    Rp = _round_up(R + 1, 8)                  # +1 constant-bias column

    # ---- weights: transpose, 128-aligned gate slabs, fold biases ----
    wih_p = _pad_gates_last(params["w_ih"].T.astype(jnp.float32), H, Hp)  # [R,3Hp]
    bih_p = _pad_gates_last(params["b_ih"].astype(jnp.float32), H, Hp)    # [3Hp]
    bhh_p = _pad_gates_last(params["b_hh"].astype(jnp.float32), H, Hp)    # [3Hp]
    # gi bias column = b_ih (all slabs) + b_hr / b_hz (r,z slabs only)
    gi_bias = bih_p + jnp.concatenate(
        [bhh_p[:2 * Hp], jnp.zeros((Hp,), jnp.float32)])
    wih_full = jnp.zeros((Rp, 3 * Hp), jnp.float32)
    wih_full = wih_full.at[:R].set(wih_p).at[R].set(gi_bias)              # [Rp,3Hp]

    whh_p = jnp.pad(_pad_gates_last(params["w_hh"].T.astype(jnp.float32), H, Hp),
                    ((0, Hp - H), (0, 0)))                                # [Hp,3Hp]
    bhn = jnp.pad(params["b_hh"][2 * H:3 * H].astype(jnp.float32),
                  (0, Hp - H))[None, :]                                   # [1,Hp]
    wc_p = jnp.pad(params["w_c"].T.astype(jnp.float32),
                   ((0, Hp - H), (0, ENCP - ENC)))                        # [Hp,128]
    bc_p = jnp.pad(params["b_c"].astype(jnp.float32),
                   (0, ENCP - ENC))[None, :]                              # [1,128]

    # ---- T-major sparse input stream (Rp lanes per (t,b) instead of 384) ----
    x = jax.nn.one_hot(event_types.T, Rp, dtype=jnp.float32)              # [T,B,Rp]
    if use_correctness:
        x = x + jax.nn.one_hot(batch["correctness"].T + E, Rp, dtype=jnp.float32)
    x = x.at[:, :, E + C].set(time_deltas.T.astype(jnp.float32))
    x = x.at[:, :, R].set(1.0)                # constant-1 bias column

    # ---- pad B (batch tiles, sublane/bf16 aligned) and T (chunk multiple) ----
    TILE_B = _round_up(min(tile_b, _round_up(B, BATCH_ALIGN)), BATCH_ALIGN)
    Bp = _round_up(B, TILE_B)
    Tp = _round_up(max(T, 1), chunk_t)
    x = jnp.pad(x, ((0, Tp - T), (0, Bp - B), (0, 0))).astype(mxu_dtype)
    lens = jnp.pad(lengths.astype(jnp.int32), (0, Bp - B))[:, None]       # [Bp,1]

    n_btiles = Bp // TILE_B
    n_chunks = Tp // chunk_t
    G = 3 * Hp

    out = pl.pallas_call(
        _gru_encoder_kernel,
        out_shape=jax.ShapeDtypeStruct((Bp, ENCP), jnp.float32),
        grid_spec=pltpu.PrefetchScalarGridSpec(
            num_scalar_prefetch=0,
            grid=(n_btiles, n_chunks),
            in_specs=[
                pl.BlockSpec((TILE_B, 1), lambda b, c: (b, 0)),            # lens
                pl.BlockSpec((chunk_t, TILE_B, Rp), lambda b, c: (c, b, 0)),  # X
                pl.BlockSpec((Rp, G), lambda b, c: (0, 0)),                # wih
                pl.BlockSpec((Hp, G), lambda b, c: (0, 0)),                # whh
                pl.BlockSpec((1, Hp), lambda b, c: (0, 0)),                # bhn
                pl.BlockSpec((Hp, ENCP), lambda b, c: (0, 0)),             # wc
                pl.BlockSpec((1, ENCP), lambda b, c: (0, 0)),              # bc
            ],
            out_specs=pl.BlockSpec((TILE_B, ENCP), lambda b, c: (b, 0)),
            scratch_shapes=[pltpu.VMEM((TILE_B, Hp), jnp.float32)],
        ),
        compiler_params=pltpu.CompilerParams(
            dimension_semantics=("parallel", "arbitrary")),
    )(lens, x, wih_full.astype(mxu_dtype), whh_p.astype(mxu_dtype),
      bhn, wc_p, bc_p)
    return out[:B, :ENC]


# ------------------- pure-JAX reference (for validation) -------------------
def ckt_encoder_reference(batch, params, num_event_types, use_correctness=True):
    event_types = batch["event_types"]
    time_deltas = batch["time_deltas"]
    lengths = batch["sequence_lengths"]
    B, T = event_types.shape

    ev = jax.nn.one_hot(event_types, num_event_types, dtype=jnp.float32)
    pieces = [ev]
    if use_correctness:
        pieces.append(jax.nn.one_hot(batch["correctness"],
                                     NUM_CORRECTNESS_STATES, dtype=jnp.float32))
    pieces.append(time_deltas[..., None])
    rnn_input = jnp.concatenate(pieces, axis=2)                # [B,T,R]
    x_tbr = jnp.transpose(rnn_input, (1, 0, 2))                # [T,B,R]
    mask = (jnp.arange(T)[:, None] < lengths[None, :]).astype(jnp.float32)

    wih, whh = params["w_ih"].T, params["w_hh"].T
    bih, bhh = params["b_ih"], params["b_hh"]
    H = HIDDEN_SIZE

    def step(h, inp):
        x, m = inp
        gi = x @ wih + bih
        gh = h @ whh + bhh
        r = jax.nn.sigmoid(gi[:, 0:H] + gh[:, 0:H])
        z = jax.nn.sigmoid(gi[:, H:2 * H] + gh[:, H:2 * H])
        n = jnp.tanh(gi[:, 2 * H:] + r * gh[:, 2 * H:])
        h_new = (1.0 - z) * n + z * h
        h = m[:, None] * h_new + (1.0 - m[:, None]) * h
        return h, None

    h0 = jnp.zeros((B, H), jnp.float32)
    h_final, _ = lax.scan(step, h0, (x_tbr, mask))
    enc = jnp.tanh(h_final) @ params["w_c"].T + params["b_c"]
    return enc


def init_params(key, num_event_types, use_correctness=True):
    R = num_event_types + 1 + (NUM_CORRECTNESS_STATES if use_correctness else 0)
    H = HIDDEN_SIZE
    ks = jax.random.split(key, 6)
    s = 1.0 / jnp.sqrt(H)
    return {
        "w_ih": jax.random.uniform(ks[0], (3 * H, R), jnp.float32, -s, s),
        "w_hh": jax.random.uniform(ks[1], (3 * H, H), jnp.float32, -s, s),
        "b_ih": jax.random.uniform(ks[2], (3 * H,), jnp.float32, -s, s),
        "b_hh": jax.random.uniform(ks[3], (3 * H,), jnp.float32, -s, s),
        "w_c": jax.random.uniform(ks[4], (ENCODING_SIZE, H), jnp.float32, -s, s),
        "b_c": jax.random.uniform(ks[5], (ENCODING_SIZE,), jnp.float32, -s, s),
    }


if __name__ == "__main__":
    key = jax.random.PRNGKey(0)
    B, T = 24, 20                      # -> 2 batch tiles x 2 time chunks
    NUM_EVENT_TYPES = 10
    USE_CORRECTNESS = True

    k1, k2, k3, k4, kp = jax.random.split(key, 5)
    batch = {
        "event_types": jax.random.randint(k1, (B, T), 0, NUM_EVENT_TYPES, jnp.int32),
        "correctness": jax.random.randint(k2, (B, T), 0, NUM_CORRECTNESS_STATES, jnp.int32),
        "time_deltas": jax.random.uniform(k3, (B, T), jnp.float32),
        "sequence_lengths": jax.random.randint(k4, (B,), 1, T + 1, jnp.int32),
    }
    params = init_params(kp, NUM_EVENT_TYPES, USE_CORRECTNESS)

    ref = jax.block_until_ready(
        ckt_encoder_reference(batch, params, NUM_EVENT_TYPES, USE_CORRECTNESS))

    # Exact-arithmetic path (f32 MXU operands): tight tolerance vs f32 reference.
    out_f32 = jax.block_until_ready(
        ckt_encoder_forward(batch, params, NUM_EVENT_TYPES, USE_CORRECTNESS,
                            chunk_t=CHUNK_T, tile_b=16, mxu_dtype=jnp.float32))
    assert out_f32.shape == (B, ENCODING_SIZE)
    assert jnp.allclose(out_f32, ref, atol=1e-3, rtol=1e-3), "f32 path mismatch"

    # Default fast path (bf16 MXU operands, f32 accumulate/carry/gates): the
    # recurrent bf16 rounding drifts over T steps, so a looser tolerance.
    out = jax.block_until_ready(
        ckt_encoder_forward(batch, params, NUM_EVENT_TYPES, USE_CORRECTNESS,
                            chunk_t=CHUNK_T, tile_b=16))
    assert out.shape == (B, ENCODING_SIZE)
    assert jnp.allclose(out, ref, atol=3e-2, rtol=3e-2), "bf16 path mismatch"

    print("KERNEL_OK")
</pallas_src>

<mosaic_0001>
module attributes {stable_mosaic.version = 11 : i64} {
  func.func @_gru_encoder_kernel(%arg0: i32, %arg1: i32, %arg2: memref<16x1xi32, #tpu.memory_space<vmem>>, %arg3: memref<16x16x16xf32, #tpu.memory_space<vmem>>, %arg4: memref<16x384xf32, #tpu.memory_space<vmem>>, %arg5: memref<128x384xf32, #tpu.memory_space<vmem>>, %arg6: memref<1x128xf32, #tpu.memory_space<vmem>>, %arg7: memref<128x128xf32, #tpu.memory_space<vmem>>, %arg8: memref<1x128xf32, #tpu.memory_space<vmem>>, %arg9: memref<16x128xf32, #tpu.memory_space<vmem>>, %arg10: memref<16x128xf32, #tpu.memory_space<vmem>>) attributes {dimension_semantics = [#tpu.dimension_semantics<parallel>, #tpu.dimension_semantics<arbitrary>], iteration_bounds = array<i64: 2, 2>, scalar_prefetch = 0 : i64, scratch_operands = 1 : i64, tpu.core_type = #tpu.core_type<tc>, window_params = [{transform_indices = @transform_0, window_bounds = array<i64: 16, 1>}, {transform_indices = @transform_1, window_bounds = array<i64: 16, 16, 16>}, {pipeline_mode = #tpu.pipeline_mode<synchronous>, transform_indices = @transform_2, window_bounds = array<i64: 16, 384>}, {pipeline_mode = #tpu.pipeline_mode<synchronous>, transform_indices = @transform_3, window_bounds = array<i64: 128, 384>}, {pipeline_mode = #tpu.pipeline_mode<synchronous>, transform_indices = @transform_4, window_bounds = array<i64: 1, 128>}, {pipeline_mode = #tpu.pipeline_mode<synchronous>, transform_indices = @transform_5, window_bounds = array<i64: 128, 128>}, {pipeline_mode = #tpu.pipeline_mode<synchronous>, transform_indices = @transform_6, window_bounds = array<i64: 1, 128>}, {transform_indices = @transform_7, window_bounds = array<i64: 16, 128>}]} {
    %c0_i32 = arith.constant 0 : i32
    %0 = arith.cmpi eq, %arg1, %c0_i32 : i32
    %1 = arith.extui %0 : i1 to i32
    %c0_i32_0 = arith.constant 0 : i32
    %2 = arith.cmpi ne, %1, %c0_i32_0 : i32
    scf.if %2 {
      %cst_127 = arith.constant 0.000000e+00 : f32
      %591 = vector.broadcast %cst_127 : f32 to vector<16x128xf32>
      %c0_128 = arith.constant 0 : index
      %c0_129 = arith.constant 0 : index
      %592 = vector.load %arg10[%c0_128, %c0_129] : memref<16x128xf32, #tpu.memory_space<vmem>>, vector<16x128xf32>
      tpu.vector_store %arg10[%c0_128, %c0_129], %591 {strides = array<i32>} : memref<16x128xf32, #tpu.memory_space<vmem>>, vector<16x128xf32>,
    } else {
    }
    %c0 = arith.constant 0 : index
    %c0_1 = arith.constant 0 : index
    %3 = vector.load %arg4[%c0, %c0_1] : memref<16x384xf32, #tpu.memory_space<vmem>>, vector<16x384xf32>
    %c0_2 = arith.constant 0 : index
    %c0_3 = arith.constant 0 : index
    %4 = vector.load %arg5[%c0_2, %c0_3] : memref<128x384xf32, #tpu.memory_space<vmem>>, vector<128x384xf32>
    %c0_4 = arith.constant 0 : index
    %c0_5 = arith.constant 0 : index
    %5 = vector.load %arg6[%c0_4, %c0_5] : memref<1x128xf32, #tpu.memory_space<vmem>>, vector<1x128xf32>
    %c0_6 = arith.constant 0 : index
    %c0_7 = arith.constant 0 : index
    %6 = vector.load %arg2[%c0_6, %c0_7] : memref<16x1xi32, #tpu.memory_space<vmem>>, vector<16x1xi32>
    %7 = vector.shape_cast %6 : vector<16x1xi32> to vector<16x1xi32>
    %8 = vector.broadcast %7 : vector<16x1xi32> to vector<16x128xi32>
    %c16_i32 = arith.constant 16 : i32
    %9 = arith.muli %arg1, %c16_i32 : i32
    %c0_8 = arith.constant 0 : index
    %c0_9 = arith.constant 0 : index
    %10 = vector.load %arg10[%c0_8, %c0_9] : memref<16x128xf32, #tpu.memory_space<vmem>>, vector<16x128xf32>
    %c0_10 = arith.constant 0 : index
    %c0_11 = arith.constant 0 : index
    %c0_12 = arith.constant 0 : index
    %11 = vector.load %arg3[%c0_10, %c0_11, %c0_12] : memref<16x16x16xf32, #tpu.memory_space<vmem>>, vector<1x16x16xf32>
    %12 = vector.shape_cast %11 : vector<1x16x16xf32> to vector<16x16xf32>
    %cst = arith.constant dense<0.000000e+00> : vector<16x384xf32>
    %13 = tpu.matmul %12, %3, %cst {dimension_numbers = #tpu.dot_dimension_numbers<[1], [0], [0], [1], [0, 0, 1, 1], [], []>} : vector<16x16xf32>, vector<16x384xf32>, vector<16x384xf32> -> vector<16x384xf32>
    %cst_13 = arith.constant dense<0.000000e+00> : vector<16x384xf32>
    %14 = tpu.matmul %10, %4, %cst_13 {dimension_numbers = #tpu.dot_dimension_numbers<[1], [0], [0], [1], [0, 0, 1, 1], [], []>} : vector<16x128xf32>, vector<128x384xf32>, vector<16x384xf32> -> vector<16x384xf32>
    %15 = vector.extract_strided_slice %13 {offsets = [0, 0], sizes = [16, 128], strides = [1, 1]} : vector<16x384xf32> to vector<16x128xf32>
    %16 = vector.extract_strided_slice %14 {offsets = [0, 0], sizes = [16, 128], strides = [1, 1]} : vector<16x384xf32> to vector<16x128xf32>
    %17 = arith.addf %15, %16 : vector<16x128xf32>
    %18 = arith.negf %17 : vector<16x128xf32>
    %19 = math.exp %18 : vector<16x128xf32>
    %cst_14 = arith.constant 1.000000e+00 : f32
    %20 = vector.broadcast %cst_14 : f32 to vector<16x128xf32>
    %21 = arith.addf %20, %19 : vector<16x128xf32>
    %22 = arith.divf %20, %21 : vector<16x128xf32>
    %23 = vector.extract_strided_slice %13 {offsets = [0, 128], sizes = [16, 128], strides = [1, 1]} : vector<16x384xf32> to vector<16x128xf32>
    %24 = vector.extract_strided_slice %14 {offsets = [0, 128], sizes = [16, 128], strides = [1, 1]} : vector<16x384xf32> to vector<16x128xf32>
    %25 = arith.addf %23, %24 : vector<16x128xf32>
    %26 = arith.negf %25 : vector<16x128xf32>
    %27 = math.exp %26 : vector<16x128xf32>
    %cst_15 = arith.constant 1.000000e+00 : f32
    %28 = vector.broadcast %cst_15 : f32 to vector<16x128xf32>
    %29 = arith.addf %28, %27 : vector<16x128xf32>
    %30 = arith.divf %28, %29 : vector<16x128xf32>
    %31 = vector.extract_strided_slice %13 {offsets = [0, 256], sizes = [16, 128], strides = [1, 1]} : vector<16x384xf32> to vector<16x128xf32>
    %32 = vector.extract_strided_slice %14 {offsets = [0, 256], sizes = [16, 128], strides = [1, 1]} : vector<16x384xf32> to vector<16x128xf32>
    %33 = vector.broadcast %5 : vector<1x128xf32> to vector<16x128xf32>
    %34 = arith.addf %32, %33 : vector<16x128xf32>
    %35 = arith.mulf %22, %34 : vector<16x128xf32>
    %36 = arith.addf %31, %35 : vector<16x128xf32>
    %37 = math.tanh %36 : vector<16x128xf32>
    %cst_16 = arith.constant 1.000000e+00 : f32
    %38 = vector.broadcast %cst_16 : f32 to vector<16x128xf32>
    %39 = arith.subf %38, %30 : vector<16x128xf32>
    %40 = arith.mulf %39, %37 : vector<16x128xf32>
    %41 = arith.mulf %30, %10 : vector<16x128xf32>
    %42 = arith.addf %40, %41 : vector<16x128xf32>
    %c0_i32_17 = arith.constant 0 : i32
    %43 = arith.addi %9, %c0_i32_17 : i32
    %44 = vector.broadcast %43 : i32 to vector<16x128xi32>
    %45 = arith.cmpi slt, %44, %8 : vector<16x128xi32>
    %46 = arith.select %45, %42, %10 : vector<16x128xi1>, vector<16x128xf32>
    %c1 = arith.constant 1 : index
    %c0_18 = arith.constant 0 : index
    %c0_19 = arith.constant 0 : index
    %47 = vector.load %arg3[%c1, %c0_18, %c0_19] : memref<16x16x16xf32, #tpu.memory_space<vmem>>, vector<1x16x16xf32>
    %48 = vector.shape_cast %47 : vector<1x16x16xf32> to vector<16x16xf32>
    %cst_20 = arith.constant dense<0.000000e+00> : vector<16x384xf32>
    %49 = tpu.matmul %48, %3, %cst_20 {dimension_numbers = #tpu.dot_dimension_numbers<[1], [0], [0], [1], [0, 0, 1, 1], [], []>} : vector<16x16xf32>, vector<16x384xf32>, vector<16x384xf32> -> vector<16x384xf32>
    %cst_21 = arith.constant dense<0.000000e+00> : vector<16x384xf32>
    %50 = tpu.matmul %46, %4, %cst_21 {dimension_numbers = #tpu.dot_dimension_numbers<[1], [0], [0], [1], [0, 0, 1, 1], [], []>} : vector<16x128xf32>, vector<128x384xf32>, vector<16x384xf32> -> vector<16x384xf32>
    %51 = vector.extract_strided_slice %49 {offsets = [0, 0], sizes = [16, 128], strides = [1, 1]} : vector<16x384xf32> to vector<16x128xf32>
    %52 = vector.extract_strided_slice %50 {offsets = [0, 0], sizes = [16, 128], strides = [1, 1]} : vector<16x384xf32> to vector<16x128xf32>
    %53 = arith.addf %51, %52 : vector<16x128xf32>
    %54 = arith.negf %53 : vector<16x128xf32>
    %55 = math.exp %54 : vector<16x128xf32>
    %cst_22 = arith.constant 1.000000e+00 : f32
    %56 = vector.broadcast %cst_22 : f32 to vector<16x128xf32>
    %57 = arith.addf %56, %55 : vector<16x128xf32>
    %58 = arith.divf %56, %57 : vector<16x128xf32>
    %59 = vector.extract_strided_slice %49 {offsets = [0, 128], sizes = [16, 128], strides = [1, 1]} : vector<16x384xf32> to vector<16x128xf32>
    %60 = vector.extract_strided_slice %50 {offsets = [0, 128], sizes = [16, 128], strides = [1, 1]} : vector<16x384xf32> to vector<16x128xf32>
    %61 = arith.addf %59, %60 : vector<16x128xf32>
    %62 = arith.negf %61 : vector<16x128xf32>
    %63 = math.exp %62 : vector<16x128xf32>
    %cst_23 = arith.constant 1.000000e+00 : f32
    %64 = vector.broadcast %cst_23 : f32 to vector<16x128xf32>
    %65 = arith.addf %64, %63 : vector<16x128xf32>
    %66 = arith.divf %64, %65 : vector<16x128xf32>
    %67 = vector.extract_strided_slice %49 {offsets = [0, 256], sizes = [16, 128], strides = [1, 1]} : vector<16x384xf32> to vector<16x128xf32>
    %68 = vector.extract_strided_slice %50 {offsets = [0, 256], sizes = [16, 128], strides = [1, 1]} : vector<16x384xf32> to vector<16x128xf32>
    %69 = vector.broadcast %5 : vector<1x128xf32> to vector<16x128xf32>
    %70 = arith.addf %68, %69 : vector<16x128xf32>
    %71 = arith.mulf %58, %70 : vector<16x128xf32>
    %72 = arith.addf %67, %71 : vector<16x128xf32>
    %73 = math.tanh %72 : vector<16x128xf32>
    %cst_24 = arith.constant 1.000000e+00 : f32
    %74 = vector.broadcast %cst_24 : f32 to vector<16x128xf32>
    %75 = arith.subf %74, %66 : vector<16x128xf32>
    %76 = arith.mulf %75, %73 : vector<16x128xf32>
    %77 = arith.mulf %66, %46 : vector<16x128xf32>
    %78 = arith.addf %76, %77 : vector<16x128xf32>
    %c1_i32 = arith.constant 1 : i32
    %79 = arith.addi %9, %c1_i32 : i32
    %80 = vector.broadcast %79 : i32 to vector<16x128xi32>
    %81 = arith.cmpi slt, %80, %8 : vector<16x128xi32>
    %82 = arith.select %81, %78, %46 : vector<16x128xi1>, vector<16x128xf32>
    %c2 = arith.constant 2 : index
    %c0_25 = arith.constant 0 : index
    %c0_26 = arith.constant 0 : index
    %83 = vector.load %arg3[%c2, %c0_25, %c0_26] : memref<16x16x16xf32, #tpu.memory_space<vmem>>, vector<1x16x16xf32>
    %84 = vector.shape_cast %83 : vector<1x16x16xf32> to vector<16x16xf32>
    %cst_27 = arith.constant dense<0.000000e+00> : vector<16x384xf32>
    %85 = tpu.matmul %84, %3, %cst_27 {dimension_numbers = #tpu.dot_dimension_numbers<[1], [0], [0], [1], [0, 0, 1, 1], [], []>} : vector<16x16xf32>, vector<16x384xf32>, vector<16x384xf32> -> vector<16x384xf32>
    %cst_28 = arith.constant dense<0.000000e+00> : vector<16x384xf32>
    %86 = tpu.matmul %82, %4, %cst_28 {dimension_numbers = #tpu.dot_dimension_numbers<[1], [0], [0], [1], [0, 0, 1, 1], [], []>} : vector<16x128xf32>, vector<128x384xf32>, vector<16x384xf32> -> vector<16x384xf32>
    %87 = vector.extract_strided_slice %85 {offsets = [0, 0], sizes = [16, 128], strides = [1, 1]} : vector<16x384xf32> to vector<16x128xf32>
    %88 = vector.extract_strided_slice %86 {offsets = [0, 0], sizes = [16, 128], strides = [1, 1]} : vector<16x384xf32> to vector<16x128xf32>
    %89 = arith.addf %87, %88 : vector<16x128xf32>
    %90 = arith.negf %89 : vector<16x128xf32>
    %91 = math.exp %90 : vector<16x128xf32>
    %cst_29 = arith.constant 1.000000e+00 : f32
    %92 = vector.broadcast %cst_29 : f32 to vector<16x128xf32>
    %93 = arith.addf %92, %91 : vector<16x128xf32>
    %94 = arith.divf %92, %93 : vector<16x128xf32>
    %95 = vector.extract_strided_slice %85 {offsets = [0, 128], sizes = [16, 128], strides = [1, 1]} : vector<16x384xf32> to vector<16x128xf32>
    %96 = vector.extract_strided_slice %86 {offsets = [0, 128], sizes = [16, 128], strides = [1, 1]} : vector<16x384xf32> to vector<16x128xf32>
    %97 = arith.addf %95, %96 : vector<16x128xf32>
    %98 = arith.negf %97 : vector<16x128xf32>
    %99 = math.exp %98 : vector<16x128xf32>
    %cst_30 = arith.constant 1.000000e+00 : f32
    %100 = vector.broadcast %cst_30 : f32 to vector<16x128xf32>
    %101 = arith.addf %100, %99 : vector<16x128xf32>
    %102 = arith.divf %100, %101 : vector<16x128xf32>
    %103 = vector.extract_strided_slice %85 {offsets = [0, 256], sizes = [16, 128], strides = [1, 1]} : vector<16x384xf32> to vector<16x128xf32>
    %104 = vector.extract_strided_slice %86 {offsets = [0, 256], sizes = [16, 128], strides = [1, 1]} : vector<16x384xf32> to vector<16x128xf32>
    %105 = vector.broadcast %5 : vector<1x128xf32> to vector<16x128xf32>
    %106 = arith.addf %104, %105 : vector<16x128xf32>
    %107 = arith.mulf %94, %106 : vector<16x128xf32>
    %108 = arith.addf %103, %107 : vector<16x128xf32>
    %109 = math.tanh %108 : vector<16x128xf32>
    %cst_31 = arith.constant 1.000000e+00 : f32
    %110 = vector.broadcast %cst_31 : f32 to vector<16x128xf32>
    %111 = arith.subf %110, %102 : vector<16x128xf32>
    %112 = arith.mulf %111, %109 : vector<16x128xf32>
    %113 = arith.mulf %102, %82 : vector<16x128xf32>
    %114 = arith.addf %112, %113 : vector<16x128xf32>
    %c2_i32 = arith.constant 2 : i32
    %115 = arith.addi %9, %c2_i32 : i32
    %116 = vector.broadcast %115 : i32 to vector<16x128xi32>
    %117 = arith.cmpi slt, %116, %8 : vector<16x128xi32>
    %118 = arith.select %117, %114, %82 : vector<16x128xi1>, vector<16x128xf32>
    %c3 = arith.constant 3 : index
    %c0_32 = arith.constant 0 : index
    %c0_33 = arith.constant 0 : index
    %119 = vector.load %arg3[%c3, %c0_32, %c0_33] : memref<16x16x16xf32, #tpu.memory_space<vmem>>, vector<1x16x16xf32>
    %120 = vector.shape_cast %119 : vector<1x16x16xf32> to vector<16x16xf32>
    %cst_34 = arith.constant dense<0.000000e+00> : vector<16x384xf32>
    %121 = tpu.matmul %120, %3, %cst_34 {dimension_numbers = #tpu.dot_dimension_numbers<[1], [0], [0], [1], [0, 0, 1, 1], [], []>} : vector<16x16xf32>, vector<16x384xf32>, vector<16x384xf32> -> vector<16x384xf32>
    %cst_35 = arith.constant dense<0.000000e+00> : vector<16x384xf32>
    %122 = tpu.matmul %118, %4, %cst_35 {dimension_numbers = #tpu.dot_dimension_numbers<[1], [0], [0], [1], [0, 0, 1, 1], [], []>} : vector<16x128xf32>, vector<128x384xf32>, vector<16x384xf32> -> vector<16x384xf32>
    %123 = vector.extract_strided_slice %121 {offsets = [0, 0], sizes = [16, 128], strides = [1, 1]} : vector<16x384xf32> to vector<16x128xf32>
    %124 = vector.extract_strided_slice %122 {offsets = [0, 0], sizes = [16, 128], strides = [1, 1]} : vector<16x384xf32> to vector<16x128xf32>
    %125 = arith.addf %123, %124 : vector<16x128xf32>
    %126 = arith.negf %125 : vector<16x128xf32>
    %127 = math.exp %126 : vector<16x128xf32>
    %cst_36 = arith.constant 1.000000e+00 : f32
    %128 = vector.broadcast %cst_36 : f32 to vector<16x128xf32>
    %129 = arith.addf %128, %127 : vector<16x128xf32>
    %130 = arith.divf %128, %129 : vector<16x128xf32>
    %131 = vector.extract_strided_slice %121 {offsets = [0, 128], sizes = [16, 128], strides = [1, 1]} : vector<16x384xf32> to vector<16x128xf32>
    %132 = vector.extract_strided_slice %122 {offsets = [0, 128], sizes = [16, 128], strides = [1, 1]} : vector<16x384xf32> to vector<16x128xf32>
    %133 = arith.addf %131, %132 : vector<16x128xf32>
    %134 = arith.negf %133 : vector<16x128xf32>
    %135 = math.exp %134 : vector<16x128xf32>
    %cst_37 = arith.constant 1.000000e+00 : f32
    %136 = vector.broadcast %cst_37 : f32 to vector<16x128xf32>
    %137 = arith.addf %136, %135 : vector<16x128xf32>
    %138 = arith.divf %136, %137 : vector<16x128xf32>
    %139 = vector.extract_strided_slice %121 {offsets = [0, 256], sizes = [16, 128], strides = [1, 1]} : vector<16x384xf32> to vector<16x128xf32>
    %140 = vector.extract_strided_slice %122 {offsets = [0, 256], sizes = [16, 128], strides = [1, 1]} : vector<16x384xf32> to vector<16x128xf32>
    %141 = vector.broadcast %5 : vector<1x128xf32> to vector<16x128xf32>
    %142 = arith.addf %140, %141 : vector<16x128xf32>
    %143 = arith.mulf %130, %142 : vector<16x128xf32>
    %144 = arith.addf %139, %143 : vector<16x128xf32>
    %145 = math.tanh %144 : vector<16x128xf32>
    %cst_38 = arith.constant 1.000000e+00 : f32
    %146 = vector.broadcast %cst_38 : f32 to vector<16x128xf32>
    %147 = arith.subf %146, %138 : vector<16x128xf32>
    %148 = arith.mulf %147, %145 : vector<16x128xf32>
    %149 = arith.mulf %138, %118 : vector<16x128xf32>
    %150 = arith.addf %148, %149 : vector<16x128xf32>
    %c3_i32 = arith.constant 3 : i32
    %151 = arith.addi %9, %c3_i32 : i32
    %152 = vector.broadcast %151 : i32 to vector<16x128xi32>
    %153 = arith.cmpi slt, %152, %8 : vector<16x128xi32>
    %154 = arith.select %153, %150, %118 : vector<16x128xi1>, vector<16x128xf32>
    %c4 = arith.constant 4 : index
    %c0_39 = arith.constant 0 : index
    %c0_40 = arith.constant 0 : index
    %155 = vector.load %arg3[%c4, %c0_39, %c0_40] : memref<16x16x16xf32, #tpu.memory_space<vmem>>, vector<1x16x16xf32>
    %156 = vector.shape_cast %155 : vector<1x16x16xf32> to vector<16x16xf32>
    %cst_41 = arith.constant dense<0.000000e+00> : vector<16x384xf32>
    %157 = tpu.matmul %156, %3, %cst_41 {dimension_numbers = #tpu.dot_dimension_numbers<[1], [0], [0], [1], [0, 0, 1, 1], [], []>} : vector<16x16xf32>, vector<16x384xf32>, vector<16x384xf32> -> vector<16x384xf32>
    %cst_42 = arith.constant dense<0.000000e+00> : vector<16x384xf32>
    %158 = tpu.matmul %154, %4, %cst_42 {dimension_numbers = #tpu.dot_dimension_numbers<[1], [0], [0], [1], [0, 0, 1, 1], [], []>} : vector<16x128xf32>, vector<128x384xf32>, vector<16x384xf32> -> vector<16x384xf32>
    %159 = vector.extract_strided_slice %157 {offsets = [0, 0], sizes = [16, 128], strides = [1, 1]} : vector<16x384xf32> to vector<16x128xf32>
    %160 = vector.extract_strided_slice %158 {offsets = [0, 0], sizes = [16, 128], strides = [1, 1]} : vector<16x384xf32> to vector<16x128xf32>
    %161 = arith.addf %159, %160 : vector<16x128xf32>
    %162 = arith.negf %161 : vector<16x128xf32>
    %163 = math.exp %162 : vector<16x128xf32>
    %cst_43 = arith.constant 1.000000e+00 : f32
    %164 = vector.broadcast %cst_43 : f32 to vector<16x128xf32>
    %165 = arith.addf %164, %163 : vector<16x128xf32>
    %166 = arith.divf %164, %165 : vector<16x128xf32>
    %167 = vector.extract_strided_slice %157 {offsets = [0, 128], sizes = [16, 128], strides = [1, 1]} : vector<16x384xf32> to vector<16x128xf32>
    %168 = vector.extract_strided_slice %158 {offsets = [0, 128], sizes = [16, 128], strides = [1, 1]} : vector<16x384xf32> to vector<16x128xf32>
    %169 = arith.addf %167, %168 : vector<16x128xf32>
    %170 = arith.negf %169 : vector<16x128xf32>
    %171 = math.exp %170 : vector<16x128xf32>
    %cst_44 = arith.constant 1.000000e+00 : f32
    %172 = vector.broadcast %cst_44 : f32 to vector<16x128xf32>
    %173 = arith.addf %172, %171 : vector<16x128xf32>
    %174 = arith.divf %172, %173 : vector<16x128xf32>
    %175 = vector.extract_strided_slice %157 {offsets = [0, 256], sizes = [16, 128], strides = [1, 1]} : vector<16x384xf32> to vector<16x128xf32>
    %176 = vector.extract_strided_slice %158 {offsets = [0, 256], sizes = [16, 128], strides = [1, 1]} : vector<16x384xf32> to vector<16x128xf32>
    %177 = vector.broadcast %5 : vector<1x128xf32> to vector<16x128xf32>
    %178 = arith.addf %176, %177 : vector<16x128xf32>
    %179 = arith.mulf %166, %178 : vector<16x128xf32>
    %180 = arith.addf %175, %179 : vector<16x128xf32>
    %181 = math.tanh %180 : vector<16x128xf32>
    %cst_45 = arith.constant 1.000000e+00 : f32
    %182 = vector.broadcast %cst_45 : f32 to vector<16x128xf32>
    %183 = arith.subf %182, %174 : vector<16x128xf32>
    %184 = arith.mulf %183, %181 : vector<16x128xf32>
    %185 = arith.mulf %174, %154 : vector<16x128xf32>
    %186 = arith.addf %184, %185 : vector<16x128xf32>
    %c4_i32 = arith.constant 4 : i32
    %187 = arith.addi %9, %c4_i32 : i32
    %188 = vector.broadcast %187 : i32 to vector<16x128xi32>
    %189 = arith.cmpi slt, %188, %8 : vector<16x128xi32>
    %190 = arith.select %189, %186, %154 : vector<16x128xi1>, vector<16x128xf32>
    %c5 = arith.constant 5 : index
    %c0_46 = arith.constant 0 : index
    %c0_47 = arith.constant 0 : index
    %191 = vector.load %arg3[%c5, %c0_46, %c0_47] : memref<16x16x16xf32, #tpu.memory_space<vmem>>, vector<1x16x16xf32>
    %192 = vector.shape_cast %191 : vector<1x16x16xf32> to vector<16x16xf32>
    %cst_48 = arith.constant dense<0.000000e+00> : vector<16x384xf32>
    %193 = tpu.matmul %192, %3, %cst_48 {dimension_numbers = #tpu.dot_dimension_numbers<[1], [0], [0], [1], [0, 0, 1, 1], [], []>} : vector<16x16xf32>, vector<16x384xf32>, vector<16x384xf32> -> vector<16x384xf32>
    %cst_49 = arith.constant dense<0.000000e+00> : vector<16x384xf32>
    %194 = tpu.matmul %190, %4, %cst_49 {dimension_numbers = #tpu.dot_dimension_numbers<[1], [0], [0], [1], [0, 0, 1, 1], [], []>} : vector<16x128xf32>, vector<128x384xf32>, vector<16x384xf32> -> vector<16x384xf32>
    %195 = vector.extract_strided_slice %193 {offsets = [0, 0], sizes = [16, 128], strides = [1, 1]} : vector<16x384xf32> to vector<16x128xf32>
    %196 = vector.extract_strided_slice %194 {offsets = [0, 0], sizes = [16, 128], strides = [1, 1]} : vector<16x384xf32> to vector<16x128xf32>
    %197 = arith.addf %195, %196 : vector<16x128xf32>
    %198 = arith.negf %197 : vector<16x128xf32>
    %199 = math.exp %198 : vector<16x128xf32>
    %cst_50 = arith.constant 1.000000e+00 : f32
    %200 = vector.broadcast %cst_50 : f32 to vector<16x128xf32>
    %201 = arith.addf %200, %199 : vector<16x128xf32>
    %202 = arith.divf %200, %201 : vector<16x128xf32>
    %203 = vector.extract_strided_slice %193 {offsets = [0, 128], sizes = [16, 128], strides = [1, 1]} : vector<16x384xf32> to vector<16x128xf32>
    %204 = vector.extract_strided_slice %194 {offsets = [0, 128], sizes = [16, 128], strides = [1, 1]} : vector<16x384xf32> to vector<16x128xf32>
    %205 = arith.addf %203, %204 : vector<16x128xf32>
    %206 = arith.negf %205 : vector<16x128xf32>
    %207 = math.exp %206 : vector<16x128xf32>
    %cst_51 = arith.constant 1.000000e+00 : f32
    %208 = vector.broadcast %cst_51 : f32 to vector<16x128xf32>
    %209 = arith.addf %208, %207 : vector<16x128xf32>
    %210 = arith.divf %208, %209 : vector<16x128xf32>
    %211 = vector.extract_strided_slice %193 {offsets = [0, 256], sizes = [16, 128], strides = [1, 1]} : vector<16x384xf32> to vector<16x128xf32>
    %212 = vector.extract_strided_slice %194 {offsets = [0, 256], sizes = [16, 128], strides = [1, 1]} : vector<16x384xf32> to vector<16x128xf32>
    %213 = vector.broadcast %5 : vector<1x128xf32> to vector<16x128xf32>
    %214 = arith.addf %212, %213 : vector<16x128xf32>
    %215 = arith.mulf %202, %214 : vector<16x128xf32>
    %216 = arith.addf %211, %215 : vector<16x128xf32>
    %217 = math.tanh %216 : vector<16x128xf32>
    %cst_52 = arith.constant 1.000000e+00 : f32
    %218 = vector.broadcast %cst_52 : f32 to vector<16x128xf32>
    %219 = arith.subf %218, %210 : vector<16x128xf32>
    %220 = arith.mulf %219, %217 : vector<16x128xf32>
    %221 = arith.mulf %210, %190 : vector<16x128xf32>
    %222 = arith.addf %220, %221 : vector<16x128xf32>
    %c5_i32 = arith.constant 5 : i32
    %223 = arith.addi %9, %c5_i32 : i32
    %224 = vector.broadcast %223 : i32 to vector<16x128xi32>
    %225 = arith.cmpi slt, %224, %8 : vector<16x128xi32>
    %226 = arith.select %225, %222, %190 : vector<16x128xi1>, vector<16x128xf32>
    %c6 = arith.constant 6 : index
    %c0_53 = arith.constant 0 : index
    %c0_54 = arith.constant 0 : index
    %227 = vector.load %arg3[%c6, %c0_53, %c0_54] : memref<16x16x16xf32, #tpu.memory_space<vmem>>, vector<1x16x16xf32>
    %228 = vector.shape_cast %227 : vector<1x16x16xf32> to vector<16x16xf32>
    %cst_55 = arith.constant dense<0.000000e+00> : vector<16x384xf32>
    %229 = tpu.matmul %228, %3, %cst_55 {dimension_numbers = #tpu.dot_dimension_numbers<[1], [0], [0], [1], [0, 0, 1, 1], [], []>} : vector<16x16xf32>, vector<16x384xf32>, vector<16x384xf32> -> vector<16x384xf32>
    %cst_56 = arith.constant dense<0.000000e+00> : vector<16x384xf32>
    %230 = tpu.matmul %226, %4, %cst_56 {dimension_numbers = #tpu.dot_dimension_numbers<[1], [0], [0], [1], [0, 0, 1, 1], [], []>} : vector<16x128xf32>, vector<128x384xf32>, vector<16x384xf32> -> vector<16x384xf32>
    %231 = vector.extract_strided_slice %229 {offsets = [0, 0], sizes = [16, 128], strides = [1, 1]} : vector<16x384xf32> to vector<16x128xf32>
    %232 = vector.extract_strided_slice %230 {offsets = [0, 0], sizes = [16, 128], strides = [1, 1]} : vector<16x384xf32> to vector<16x128xf32>
    %233 = arith.addf %231, %232 : vector<16x128xf32>
    %234 = arith.negf %233 : vector<16x128xf32>
    %235 = math.exp %234 : vector<16x128xf32>
    %cst_57 = arith.constant 1.000000e+00 : f32
    %236 = vector.broadcast %cst_57 : f32 to vector<16x128xf32>
    %237 = arith.addf %236, %235 : vector<16x128xf32>
    %238 = arith.divf %236, %237 : vector<16x128xf32>
    %239 = vector.extract_strided_slice %229 {offsets = [0, 128], sizes = [16, 128], strides = [1, 1]} : vector<16x384xf32> to vector<16x128xf32>
    %240 = vector.extract_strided_slice %230 {offsets = [0, 128], sizes = [16, 128], strides = [1, 1]} : vector<16x384xf32> to vector<16x128xf32>
    %241 = arith.addf %239, %240 : vector<16x128xf32>
    %242 = arith.negf %241 : vector<16x128xf32>
    %243 = math.exp %242 : vector<16x128xf32>
    %cst_58 = arith.constant 1.000000e+00 : f32
    %244 = vector.broadcast %cst_58 : f32 to vector<16x128xf32>
    %245 = arith.addf %244, %243 : vector<16x128xf32>
    %246 = arith.divf %244, %245 : vector<16x128xf32>
    %247 = vector.extract_strided_slice %229 {offsets = [0, 256], sizes = [16, 128], strides = [1, 1]} : vector<16x384xf32> to vector<16x128xf32>
    %248 = vector.extract_strided_slice %230 {offsets = [0, 256], sizes = [16, 128], strides = [1, 1]} : vector<16x384xf32> to vector<16x128xf32>
    %249 = vector.broadcast %5 : vector<1x128xf32> to vector<16x128xf32>
    %250 = arith.addf %248, %249 : vector<16x128xf32>
    %251 = arith.mulf %238, %250 : vector<16x128xf32>
    %252 = arith.addf %247, %251 : vector<16x128xf32>
    %253 = math.tanh %252 : vector<16x128xf32>
    %cst_59 = arith.constant 1.000000e+00 : f32
    %254 = vector.broadcast %cst_59 : f32 to vector<16x128xf32>
    %255 = arith.subf %254, %246 : vector<16x128xf32>
    %256 = arith.mulf %255, %253 : vector<16x128xf32>
    %257 = arith.mulf %246, %226 : vector<16x128xf32>
    %258 = arith.addf %256, %257 : vector<16x128xf32>
    %c6_i32 = arith.constant 6 : i32
    %259 = arith.addi %9, %c6_i32 : i32
    %260 = vector.broadcast %259 : i32 to vector<16x128xi32>
    %261 = arith.cmpi slt, %260, %8 : vector<16x128xi32>
    %262 = arith.select %261, %258, %226 : vector<16x128xi1>, vector<16x128xf32>
    %c7 = arith.constant 7 : index
    %c0_60 = arith.constant 0 : index
    %c0_61 = arith.constant 0 : index
    %263 = vector.load %arg3[%c7, %c0_60, %c0_61] : memref<16x16x16xf32, #tpu.memory_space<vmem>>, vector<1x16x16xf32>
    %264 = vector.shape_cast %263 : vector<1x16x16xf32> to vector<16x16xf32>
    %cst_62 = arith.constant dense<0.000000e+00> : vector<16x384xf32>
    %265 = tpu.matmul %264, %3, %cst_62 {dimension_numbers = #tpu.dot_dimension_numbers<[1], [0], [0], [1], [0, 0, 1, 1], [], []>} : vector<16x16xf32>, vector<16x384xf32>, vector<16x384xf32> -> vector<16x384xf32>
    %cst_63 = arith.constant dense<0.000000e+00> : vector<16x384xf32>
    %266 = tpu.matmul %262, %4, %cst_63 {dimension_numbers = #tpu.dot_dimension_numbers<[1], [0], [0], [1], [0, 0, 1, 1], [], []>} : vector<16x128xf32>, vector<128x384xf32>, vector<16x384xf32> -> vector<16x384xf32>
    %267 = vector.extract_strided_slice %265 {offsets = [0, 0], sizes = [16, 128], strides = [1, 1]} : vector<16x384xf32> to vector<16x128xf32>
    %268 = vector.extract_strided_slice %266 {offsets = [0, 0], sizes = [16, 128], strides = [1, 1]} : vector<16x384xf32> to vector<16x128xf32>
    %269 = arith.addf %267, %268 : vector<16x128xf32>
    %270 = arith.negf %269 : vector<16x128xf32>
    %271 = math.exp %270 : vector<16x128xf32>
    %cst_64 = arith.constant 1.000000e+00 : f32
    %272 = vector.broadcast %cst_64 : f32 to vector<16x128xf32>
    %273 = arith.addf %272, %271 : vector<16x128xf32>
    %274 = arith.divf %272, %273 : vector<16x128xf32>
    %275 = vector.extract_strided_slice %265 {offsets = [0, 128], sizes = [16, 128], strides = [1, 1]} : vector<16x384xf32> to vector<16x128xf32>
    %276 = vector.extract_strided_slice %266 {offsets = [0, 128], sizes = [16, 128], strides = [1, 1]} : vector<16x384xf32> to vector<16x128xf32>
    %277 = arith.addf %275, %276 : vector<16x128xf32>
    %278 = arith.negf %277 : vector<16x128xf32>
    %279 = math.exp %278 : vector<16x128xf32>
    %cst_65 = arith.constant 1.000000e+00 : f32
    %280 = vector.broadcast %cst_65 : f32 to vector<16x128xf32>
    %281 = arith.addf %280, %279 : vector<16x128xf32>
    %282 = arith.divf %280, %281 : vector<16x128xf32>
    %283 = vector.extract_strided_slice %265 {offsets = [0, 256], sizes = [16, 128], strides = [1, 1]} : vector<16x384xf32> to vector<16x128xf32>
    %284 = vector.extract_strided_slice %266 {offsets = [0, 256], sizes = [16, 128], strides = [1, 1]} : vector<16x384xf32> to vector<16x128xf32>
    %285 = vector.broadcast %5 : vector<1x128xf32> to vector<16x128xf32>
    %286 = arith.addf %284, %285 : vector<16x128xf32>
    %287 = arith.mulf %274, %286 : vector<16x128xf32>
    %288 = arith.addf %283, %287 : vector<16x128xf32>
    %289 = math.tanh %288 : vector<16x128xf32>
    %cst_66 = arith.constant 1.000000e+00 : f32
    %290 = vector.broadcast %cst_66 : f32 to vector<16x128xf32>
    %291 = arith.subf %290, %282 : vector<16x128xf32>
    %292 = arith.mulf %291, %289 : vector<16x128xf32>
    %293 = arith.mulf %282, %262 : vector<16x128xf32>
    %294 = arith.addf %292, %293 : vector<16x128xf32>
    %c7_i32 = arith.constant 7 : i32
    %295 = arith.addi %9, %c7_i32 : i32
    %296 = vector.broadcast %295 : i32 to vector<16x128xi32>
    %297 = arith.cmpi slt, %296, %8 : vector<16x128xi32>
    %298 = arith.select %297, %294, %262 : vector<16x128xi1>, vector<16x128xf32>
    %c8 = arith.constant 8 : index
    %c0_67 = arith.constant 0 : index
    %c0_68 = arith.constant 0 : index
    %299 = vector.load %arg3[%c8, %c0_67, %c0_68] : memref<16x16x16xf32, #tpu.memory_space<vmem>>, vector<1x16x16xf32>
    %300 = vector.shape_cast %299 : vector<1x16x16xf32> to vector<16x16xf32>
    %cst_69 = arith.constant dense<0.000000e+00> : vector<16x384xf32>
    %301 = tpu.matmul %300, %3, %cst_69 {dimension_numbers = #tpu.dot_dimension_numbers<[1], [0], [0], [1], [0, 0, 1, 1], [], []>} : vector<16x16xf32>, vector<16x384xf32>, vector<16x384xf32> -> vector<16x384xf32>
    %cst_70 = arith.constant dense<0.000000e+00> : vector<16x384xf32>
    %302 = tpu.matmul %298, %4, %cst_70 {dimension_numbers = #tpu.dot_dimension_numbers<[1], [0], [0], [1], [0, 0, 1, 1], [], []>} : vector<16x128xf32>, vector<128x384xf32>, vector<16x384xf32> -> vector<16x384xf32>
    %303 = vector.extract_strided_slice %301 {offsets = [0, 0], sizes = [16, 128], strides = [1, 1]} : vector<16x384xf32> to vector<16x128xf32>
    %304 = vector.extract_strided_slice %302 {offsets = [0, 0], sizes = [16, 128], strides = [1, 1]} : vector<16x384xf32> to vector<16x128xf32>
    %305 = arith.addf %303, %304 : vector<16x128xf32>
    %306 = arith.negf %305 : vector<16x128xf32>
    %307 = math.exp %306 : vector<16x128xf32>
    %cst_71 = arith.constant 1.000000e+00 : f32
    %308 = vector.broadcast %cst_71 : f32 to vector<16x128xf32>
    %309 = arith.addf %308, %307 : vector<16x128xf32>
    %310 = arith.divf %308, %309 : vector<16x128xf32>
    %311 = vector.extract_strided_slice %301 {offsets = [0, 128], sizes = [16, 128], strides = [1, 1]} : vector<16x384xf32> to vector<16x128xf32>
    %312 = vector.extract_strided_slice %302 {offsets = [0, 128], sizes = [16, 128], strides = [1, 1]} : vector<16x384xf32> to vector<16x128xf32>
    %313 = arith.addf %311, %312 : vector<16x128xf32>
    %314 = arith.negf %313 : vector<16x128xf32>
    %315 = math.exp %314 : vector<16x128xf32>
    %cst_72 = arith.constant 1.000000e+00 : f32
    %316 = vector.broadcast %cst_72 : f32 to vector<16x128xf32>
    %317 = arith.addf %316, %315 : vector<16x128xf32>
    %318 = arith.divf %316, %317 : vector<16x128xf32>
    %319 = vector.extract_strided_slice %301 {offsets = [0, 256], sizes = [16, 128], strides = [1, 1]} : vector<16x384xf32> to vector<16x128xf32>
    %320 = vector.extract_strided_slice %302 {offsets = [0, 256], sizes = [16, 128], strides = [1, 1]} : vector<16x384xf32> to vector<16x128xf32>
    %321 = vector.broadcast %5 : vector<1x128xf32> to vector<16x128xf32>
    %322 = arith.addf %320, %321 : vector<16x128xf32>
    %323 = arith.mulf %310, %322 : vector<16x128xf32>
    %324 = arith.addf %319, %323 : vector<16x128xf32>
    %325 = math.tanh %324 : vector<16x128xf32>
    %cst_73 = arith.constant 1.000000e+00 : f32
    %326 = vector.broadcast %cst_73 : f32 to vector<16x128xf32>
    %327 = arith.subf %326, %318 : vector<16x128xf32>
    %328 = arith.mulf %327, %325 : vector<16x128xf32>
    %329 = arith.mulf %318, %298 : vector<16x128xf32>
    %330 = arith.addf %328, %329 : vector<16x128xf32>
    %c8_i32 = arith.constant 8 : i32
    %331 = arith.addi %9, %c8_i32 : i32
    %332 = vector.broadcast %331 : i32 to vector<16x128xi32>
    %333 = arith.cmpi slt, %332, %8 : vector<16x128xi32>
    %334 = arith.select %333, %330, %298 : vector<16x128xi1>, vector<16x128xf32>
    %c9 = arith.constant 9 : index
    %c0_74 = arith.constant 0 : index
    %c0_75 = arith.constant 0 : index
    %335 = vector.load %arg3[%c9, %c0_74, %c0_75] : memref<16x16x16xf32, #tpu.memory_space<vmem>>, vector<1x16x16xf32>
    %336 = vector.shape_cast %335 : vector<1x16x16xf32> to vector<16x16xf32>
    %cst_76 = arith.constant dense<0.000000e+00> : vector<16x384xf32>
    %337 = tpu.matmul %336, %3, %cst_76 {dimension_numbers = #tpu.dot_dimension_numbers<[1], [0], [0], [1], [0, 0, 1, 1], [], []>} : vector<16x16xf32>, vector<16x384xf32>, vector<16x384xf32> -> vector<16x384xf32>
    %cst_77 = arith.constant dense<0.000000e+00> : vector<16x384xf32>
    %338 = tpu.matmul %334, %4, %cst_77 {dimension_numbers = #tpu.dot_dimension_numbers<[1], [0], [0], [1], [0, 0, 1, 1], [], []>} : vector<16x128xf32>, vector<128x384xf32>, vector<16x384xf32> -> vector<16x384xf32>
    %339 = vector.extract_strided_slice %337 {offsets = [0, 0], sizes = [16, 128], strides = [1, 1]} : vector<16x384xf32> to vector<16x128xf32>
    %340 = vector.extract_strided_slice %338 {offsets = [0, 0], sizes = [16, 128], strides = [1, 1]} : vector<16x384xf32> to vector<16x128xf32>
    %341 = arith.addf %339, %340 : vector<16x128xf32>
    %342 = arith.negf %341 : vector<16x128xf32>
    %343 = math.exp %342 : vector<16x128xf32>
    %cst_78 = arith.constant 1.000000e+00 : f32
    %344 = vector.broadcast %cst_78 : f32 to vector<16x128xf32>
    %345 = arith.addf %344, %343 : vector<16x128xf32>
    %346 = arith.divf %344, %345 : vector<16x128xf32>
    %347 = vector.extract_strided_slice %337 {offsets = [0, 128], sizes = [16, 128], strides = [1, 1]} : vector<16x384xf32> to vector<16x128xf32>
    %348 = vector.extract_strided_slice %338 {offsets = [0, 128], sizes = [16, 128], strides = [1, 1]} : vector<16x384xf32> to vector<16x128xf32>
    %349 = arith.addf %347, %348 : vector<16x128xf32>
    %350 = arith.negf %349 : vector<16x128xf32>
    %351 = math.exp %350 : vector<16x128xf32>
    %cst_79 = arith.constant 1.000000e+00 : f32
    %352 = vector.broadcast %cst_79 : f32 to vector<16x128xf32>
    %353 = arith.addf %352, %351 : vector<16x128xf32>
    %354 = arith.divf %352, %353 : vector<16x128xf32>
    %355 = vector.extract_strided_slice %337 {offsets = [0, 256], sizes = [16, 128], strides = [1, 1]} : vector<16x384xf32> to vector<16x128xf32>
    %356 = vector.extract_strided_slice %338 {offsets = [0, 256], sizes = [16, 128], strides = [1, 1]} : vector<16x384xf32> to vector<16x128xf32>
    %357 = vector.broadcast %5 : vector<1x128xf32> to vector<16x128xf32>
    %358 = arith.addf %356, %357 : vector<16x128xf32>
    %359 = arith.mulf %346, %358 : vector<16x128xf32>
    %360 = arith.addf %355, %359 : vector<16x128xf32>
    %361 = math.tanh %360 : vector<16x128xf32>
    %cst_80 = arith.constant 1.000000e+00 : f32
    %362 = vector.broadcast %cst_80 : f32 to vector<16x128xf32>
    %363 = arith.subf %362, %354 : vector<16x128xf32>
    %364 = arith.mulf %363, %361 : vector<16x128xf32>
    %365 = arith.mulf %354, %334 : vector<16x128xf32>
    %366 = arith.addf %364, %365 : vector<16x128xf32>
    %c9_i32 = arith.constant 9 : i32
    %367 = arith.addi %9, %c9_i32 : i32
    %368 = vector.broadcast %367 : i32 to vector<16x128xi32>
    %369 = arith.cmpi slt, %368, %8 : vector<16x128xi32>
    %370 = arith.select %369, %366, %334 : vector<16x128xi1>, vector<16x128xf32>
    %c10 = arith.constant 10 : index
    %c0_81 = arith.constant 0 : index
    %c0_82 = arith.constant 0 : index
    %371 = vector.load %arg3[%c10, %c0_81, %c0_82] : memref<16x16x16xf32, #tpu.memory_space<vmem>>, vector<1x16x16xf32>
    %372 = vector.shape_cast %371 : vector<1x16x16xf32> to vector<16x16xf32>
    %cst_83 = arith.constant dense<0.000000e+00> : vector<16x384xf32>
    %373 = tpu.matmul %372, %3, %cst_83 {dimension_numbers = #tpu.dot_dimension_numbers<[1], [0], [0], [1], [0, 0, 1, 1], [], []>} : vector<16x16xf32>, vector<16x384xf32>, vector<16x384xf32> -> vector<16x384xf32>
    %cst_84 = arith.constant dense<0.000000e+00> : vector<16x384xf32>
    %374 = tpu.matmul %370, %4, %cst_84 {dimension_numbers = #tpu.dot_dimension_numbers<[1], [0], [0], [1], [0, 0, 1, 1], [], []>} : vector<16x128xf32>, vector<128x384xf32>, vector<16x384xf32> -> vector<16x384xf32>
    %375 = vector.extract_strided_slice %373 {offsets = [0, 0], sizes = [16, 128], strides = [1, 1]} : vector<16x384xf32> to vector<16x128xf32>
    %376 = vector.extract_strided_slice %374 {offsets = [0, 0], sizes = [16, 128], strides = [1, 1]} : vector<16x384xf32> to vector<16x128xf32>
    %377 = arith.addf %375, %376 : vector<16x128xf32>
    %378 = arith.negf %377 : vector<16x128xf32>
    %379 = math.exp %378 : vector<16x128xf32>
    %cst_85 = arith.constant 1.000000e+00 : f32
    %380 = vector.broadcast %cst_85 : f32 to vector<16x128xf32>
    %381 = arith.addf %380, %379 : vector<16x128xf32>
    %382 = arith.divf %380, %381 : vector<16x128xf32>
    %383 = vector.extract_strided_slice %373 {offsets = [0, 128], sizes = [16, 128], strides = [1, 1]} : vector<16x384xf32> to vector<16x128xf32>
    %384 = vector.extract_strided_slice %374 {offsets = [0, 128], sizes = [16, 128], strides = [1, 1]} : vector<16x384xf32> to vector<16x128xf32>
    %385 = arith.addf %383, %384 : vector<16x128xf32>
    %386 = arith.negf %385 : vector<16x128xf32>
    %387 = math.exp %386 : vector<16x128xf32>
    %cst_86 = arith.constant 1.000000e+00 : f32
    %388 = vector.broadcast %cst_86 : f32 to vector<16x128xf32>
    %389 = arith.addf %388, %387 : vector<16x128xf32>
    %390 = arith.divf %388, %389 : vector<16x128xf32>
    %391 = vector.extract_strided_slice %373 {offsets = [0, 256], sizes = [16, 128], strides = [1, 1]} : vector<16x384xf32> to vector<16x128xf32>
    %392 = vector.extract_strided_slice %374 {offsets = [0, 256], sizes = [16, 128], strides = [1, 1]} : vector<16x384xf32> to vector<16x128xf32>
    %393 = vector.broadcast %5 : vector<1x128xf32> to vector<16x128xf32>
    %394 = arith.addf %392, %393 : vector<16x128xf32>
    %395 = arith.mulf %382, %394 : vector<16x128xf32>
    %396 = arith.addf %391, %395 : vector<16x128xf32>
    %397 = math.tanh %396 : vector<16x128xf32>
    %cst_87 = arith.constant 1.000000e+00 : f32
    %398 = vector.broadcast %cst_87 : f32 to vector<16x128xf32>
    %399 = arith.subf %398, %390 : vector<16x128xf32>
    %400 = arith.mulf %399, %397 : vector<16x128xf32>
    %401 = arith.mulf %390, %370 : vector<16x128xf32>
    %402 = arith.addf %400, %401 : vector<16x128xf32>
    %c10_i32 = arith.constant 10 : i32
    %403 = arith.addi %9, %c10_i32 : i32
    %404 = vector.broadcast %403 : i32 to vector<16x128xi32>
    %405 = arith.cmpi slt, %404, %8 : vector<16x128xi32>
    %406 = arith.select %405, %402, %370 : vector<16x128xi1>, vector<16x128xf32>
    %c11 = arith.constant 11 : index
    %c0_88 = arith.constant 0 : index
    %c0_89 = arith.constant 0 : index
    %407 = vector.load %arg3[%c11, %c0_88, %c0_89] : memref<16x16x16xf32, #tpu.memory_space<vmem>>, vector<1x16x16xf32>
    %408 = vector.shape_cast %407 : vector<1x16x16xf32> to vector<16x16xf32>
    %cst_90 = arith.constant dense<0.000000e+00> : vector<16x384xf32>
    %409 = tpu.matmul %408, %3, %cst_90 {dimension_numbers = #tpu.dot_dimension_numbers<[1], [0], [0], [1], [0, 0, 1, 1], [], []>} : vector<16x16xf32>, vector<16x384xf32>, vector<16x384xf32> -> vector<16x384xf32>
    %cst_91 = arith.constant dense<0.000000e+00> : vector<16x384xf32>
    %410 = tpu.matmul %406, %4, %cst_91 {dimension_numbers = #tpu.dot_dimension_numbers<[1], [0], [0], [1], [0, 0, 1, 1], [], []>} : vector<16x128xf32>, vector<128x384xf32>, vector<16x384xf32> -> vector<16x384xf32>
    %411 = vector.extract_strided_slice %409 {offsets = [0, 0], sizes = [16, 128], strides = [1, 1]} : vector<16x384xf32> to vector<16x128xf32>
    %412 = vector.extract_strided_slice %410 {offsets = [0, 0], sizes = [16, 128], strides = [1, 1]} : vector<16x384xf32> to vector<16x128xf32>
    %413 = arith.addf %411, %412 : vector<16x128xf32>
    %414 = arith.negf %413 : vector<16x128xf32>
    %415 = math.exp %414 : vector<16x128xf32>
    %cst_92 = arith.constant 1.000000e+00 : f32
    %416 = vector.broadcast %cst_92 : f32 to vector<16x128xf32>
    %417 = arith.addf %416, %415 : vector<16x128xf32>
    %418 = arith.divf %416, %417 : vector<16x128xf32>
    %419 = vector.extract_strided_slice %409 {offsets = [0, 128], sizes = [16, 128], strides = [1, 1]} : vector<16x384xf32> to vector<16x128xf32>
    %420 = vector.extract_strided_slice %410 {offsets = [0, 128], sizes = [16, 128], strides = [1, 1]} : vector<16x384xf32> to vector<16x128xf32>
    %421 = arith.addf %419, %420 : vector<16x128xf32>
    %422 = arith.negf %421 : vector<16x128xf32>
    %423 = math.exp %422 : vector<16x128xf32>
    %cst_93 = arith.constant 1.000000e+00 : f32
    %424 = vector.broadcast %cst_93 : f32 to vector<16x128xf32>
    %425 = arith.addf %424, %423 : vector<16x128xf32>
    %426 = arith.divf %424, %425 : vector<16x128xf32>
    %427 = vector.extract_strided_slice %409 {offsets = [0, 256], sizes = [16, 128], strides = [1, 1]} : vector<16x384xf32> to vector<16x128xf32>
    %428 = vector.extract_strided_slice %410 {offsets = [0, 256], sizes = [16, 128], strides = [1, 1]} : vector<16x384xf32> to vector<16x128xf32>
    %429 = vector.broadcast %5 : vector<1x128xf32> to vector<16x128xf32>
    %430 = arith.addf %428, %429 : vector<16x128xf32>
    %431 = arith.mulf %418, %430 : vector<16x128xf32>
    %432 = arith.addf %427, %431 : vector<16x128xf32>
    %433 = math.tanh %432 : vector<16x128xf32>
    %cst_94 = arith.constant 1.000000e+00 : f32
    %434 = vector.broadcast %cst_94 : f32 to vector<16x128xf32>
    %435 = arith.subf %434, %426 : vector<16x128xf32>
    %436 = arith.mulf %435, %433 : vector<16x128xf32>
    %437 = arith.mulf %426, %406 : vector<16x128xf32>
    %438 = arith.addf %436, %437 : vector<16x128xf32>
    %c11_i32 = arith.constant 11 : i32
    %439 = arith.addi %9, %c11_i32 : i32
    %440 = vector.broadcast %439 : i32 to vector<16x128xi32>
    %441 = arith.cmpi slt, %440, %8 : vector<16x128xi32>
    %442 = arith.select %441, %438, %406 : vector<16x128xi1>, vector<16x128xf32>
    %c12 = arith.constant 12 : index
    %c0_95 = arith.constant 0 : index
    %c0_96 = arith.constant 0 : index
    %443 = vector.load %arg3[%c12, %c0_95, %c0_96] : memref<16x16x16xf32, #tpu.memory_space<vmem>>, vector<1x16x16xf32>
    %444 = vector.shape_cast %443 : vector<1x16x16xf32> to vector<16x16xf32>
    %cst_97 = arith.constant dense<0.000000e+00> : vector<16x384xf32>
    %445 = tpu.matmul %444, %3, %cst_97 {dimension_numbers = #tpu.dot_dimension_numbers<[1], [0], [0], [1], [0, 0, 1, 1], [], []>} : vector<16x16xf32>, vector<16x384xf32>, vector<16x384xf32> -> vector<16x384xf32>
    %cst_98 = arith.constant dense<0.000000e+00> : vector<16x384xf32>
    %446 = tpu.matmul %442, %4, %cst_98 {dimension_numbers = #tpu.dot_dimension_numbers<[1], [0], [0], [1], [0, 0, 1, 1], [], []>} : vector<16x128xf32>, vector<128x384xf32>, vector<16x384xf32> -> vector<16x384xf32>
    %447 = vector.extract_strided_slice %445 {offsets = [0, 0], sizes = [16, 128], strides = [1, 1]} : vector<16x384xf32> to vector<16x128xf32>
    %448 = vector.extract_strided_slice %446 {offsets = [0, 0], sizes = [16, 128], strides = [1, 1]} : vector<16x384xf32> to vector<16x128xf32>
    %449 = arith.addf %447, %448 : vector<16x128xf32>
    %450 = arith.negf %449 : vector<16x128xf32>
    %451 = math.exp %450 : vector<16x128xf32>
    %cst_99 = arith.constant 1.000000e+00 : f32
    %452 = vector.broadcast %cst_99 : f32 to vector<16x128xf32>
    %453 = arith.addf %452, %451 : vector<16x128xf32>
    %454 = arith.divf %452, %453 : vector<16x128xf32>
    %455 = vector.extract_strided_slice %445 {offsets = [0, 128], sizes = [16, 128], strides = [1, 1]} : vector<16x384xf32> to vector<16x128xf32>
    %456 = vector.extract_strided_slice %446 {offsets = [0, 128], sizes = [16, 128], strides = [1, 1]} : vector<16x384xf32> to vector<16x128xf32>
    %457 = arith.addf %455, %456 : vector<16x128xf32>
    %458 = arith.negf %457 : vector<16x128xf32>
    %459 = math.exp %458 : vector<16x128xf32>
    %cst_100 = arith.constant 1.000000e+00 : f32
    %460 = vector.broadcast %cst_100 : f32 to vector<16x128xf32>
    %461 = arith.addf %460, %459 : vector<16x128xf32>
    %462 = arith.divf %460, %461 : vector<16x128xf32>
    %463 = vector.extract_strided_slice %445 {offsets = [0, 256], sizes = [16, 128], strides = [1, 1]} : vector<16x384xf32> to vector<16x128xf32>
    %464 = vector.extract_strided_slice %446 {offsets = [0, 256], sizes = [16, 128], strides = [1, 1]} : vector<16x384xf32> to vector<16x128xf32>
    %465 = vector.broadcast %5 : vector<1x128xf32> to vector<16x128xf32>
    %466 = arith.addf %464, %465 : vector<16x128xf32>
    %467 = arith.mulf %454, %466 : vector<16x128xf32>
    %468 = arith.addf %463, %467 : vector<16x128xf32>
    %469 = math.tanh %468 : vector<16x128xf32>
    %cst_101 = arith.constant 1.000000e+00 : f32
    %470 = vector.broadcast %cst_101 : f32 to vector<16x128xf32>
    %471 = arith.subf %470, %462 : vector<16x128xf32>
    %472 = arith.mulf %471, %469 : vector<16x128xf32>
    %473 = arith.mulf %462, %442 : vector<16x128xf32>
    %474 = arith.addf %472, %473 : vector<16x128xf32>
    %c12_i32 = arith.constant 12 : i32
    %475 = arith.addi %9, %c12_i32 : i32
    %476 = vector.broadcast %475 : i32 to vector<16x128xi32>
    %477 = arith.cmpi slt, %476, %8 : vector<16x128xi32>
    %478 = arith.select %477, %474, %442 : vector<16x128xi1>, vector<16x128xf32>
    %c13 = arith.constant 13 : index
    %c0_102 = arith.constant 0 : index
    %c0_103 = arith.constant 0 : index
    %479 = vector.load %arg3[%c13, %c0_102, %c0_103] : memref<16x16x16xf32, #tpu.memory_space<vmem>>, vector<1x16x16xf32>
    %480 = vector.shape_cast %479 : vector<1x16x16xf32> to vector<16x16xf32>
    %cst_104 = arith.constant dense<0.000000e+00> : vector<16x384xf32>
    %481 = tpu.matmul %480, %3, %cst_104 {dimension_numbers = #tpu.dot_dimension_numbers<[1], [0], [0], [1], [0, 0, 1, 1], [], []>} : vector<16x16xf32>, vector<16x384xf32>, vector<16x384xf32> -> vector<16x384xf32>
    %cst_105 = arith.constant dense<0.000000e+00> : vector<16x384xf32>
    %482 = tpu.matmul %478, %4, %cst_105 {dimension_numbers = #tpu.dot_dimension_numbers<[1], [0], [0], [1], [0, 0, 1, 1], [], []>} : vector<16x128xf32>, vector<128x384xf32>, vector<16x384xf32> -> vector<16x384xf32>
    %483 = vector.extract_strided_slice %481 {offsets = [0, 0], sizes = [16, 128], strides = [1, 1]} : vector<16x384xf32> to vector<16x128xf32>
    %484 = vector.extract_strided_slice %482 {offsets = [0, 0], sizes = [16, 128], strides = [1, 1]} : vector<16x384xf32> to vector<16x128xf32>
    %485 = arith.addf %483, %484 : vector<16x128xf32>
    %486 = arith.negf %485 : vector<16x128xf32>
    %487 = math.exp %486 : vector<16x128xf32>
    %cst_106 = arith.constant 1.000000e+00 : f32
    %488 = vector.broadcast %cst_106 : f32 to vector<16x128xf32>
    %489 = arith.addf %488, %487 : vector<16x128xf32>
    %490 = arith.divf %488, %489 : vector<16x128xf32>
    %491 = vector.extract_strided_slice %481 {offsets = [0, 128], sizes = [16, 128], strides = [1, 1]} : vector<16x384xf32> to vector<16x128xf32>
    %492 = vector.extract_strided_slice %482 {offsets = [0, 128], sizes = [16, 128], strides = [1, 1]} : vector<16x384xf32> to vector<16x128xf32>
    %493 = arith.addf %491, %492 : vector<16x128xf32>
    %494 = arith.negf %493 : vector<16x128xf32>
    %495 = math.exp %494 : vector<16x128xf32>
    %cst_107 = arith.constant 1.000000e+00 : f32
    %496 = vector.broadcast %cst_107 : f32 to vector<16x128xf32>
    %497 = arith.addf %496, %495 : vector<16x128xf32>
    %498 = arith.divf %496, %497 : vector<16x128xf32>
    %499 = vector.extract_strided_slice %481 {offsets = [0, 256], sizes = [16, 128], strides = [1, 1]} : vector<16x384xf32> to vector<16x128xf32>
    %500 = vector.extract_strided_slice %482 {offsets = [0, 256], sizes = [16, 128], strides = [1, 1]} : vector<16x384xf32> to vector<16x128xf32>
    %501 = vector.broadcast %5 : vector<1x128xf32> to vector<16x128xf32>
    %502 = arith.addf %500, %501 : vector<16x128xf32>
    %503 = arith.mulf %490, %502 : vector<16x128xf32>
    %504 = arith.addf %499, %503 : vector<16x128xf32>
    %505 = math.tanh %504 : vector<16x128xf32>
    %cst_108 = arith.constant 1.000000e+00 : f32
    %506 = vector.broadcast %cst_108 : f32 to vector<16x128xf32>
    %507 = arith.subf %506, %498 : vector<16x128xf32>
    %508 = arith.mulf %507, %505 : vector<16x128xf32>
    %509 = arith.mulf %498, %478 : vector<16x128xf32>
    %510 = arith.addf %508, %509 : vector<16x128xf32>
    %c13_i32 = arith.constant 13 : i32
    %511 = arith.addi %9, %c13_i32 : i32
    %512 = vector.broadcast %511 : i32 to vector<16x128xi32>
    %513 = arith.cmpi slt, %512, %8 : vector<16x128xi32>
    %514 = arith.select %513, %510, %478 : vector<16x128xi1>, vector<16x128xf32>
    %c14 = arith.constant 14 : index
    %c0_109 = arith.constant 0 : index
    %c0_110 = arith.constant 0 : index
    %515 = vector.load %arg3[%c14, %c0_109, %c0_110] : memref<16x16x16xf32, #tpu.memory_space<vmem>>, vector<1x16x16xf32>
    %516 = vector.shape_cast %515 : vector<1x16x16xf32> to vector<16x16xf32>
    %cst_111 = arith.constant dense<0.000000e+00> : vector<16x384xf32>
    %517 = tpu.matmul %516, %3, %cst_111 {dimension_numbers = #tpu.dot_dimension_numbers<[1], [0], [0], [1], [0, 0, 1, 1], [], []>} : vector<16x16xf32>, vector<16x384xf32>, vector<16x384xf32> -> vector<16x384xf32>
    %cst_112 = arith.constant dense<0.000000e+00> : vector<16x384xf32>
    %518 = tpu.matmul %514, %4, %cst_112 {dimension_numbers = #tpu.dot_dimension_numbers<[1], [0], [0], [1], [0, 0, 1, 1], [], []>} : vector<16x128xf32>, vector<128x384xf32>, vector<16x384xf32> -> vector<16x384xf32>
    %519 = vector.extract_strided_slice %517 {offsets = [0, 0], sizes = [16, 128], strides = [1, 1]} : vector<16x384xf32> to vector<16x128xf32>
    %520 = vector.extract_strided_slice %518 {offsets = [0, 0], sizes = [16, 128], strides = [1, 1]} : vector<16x384xf32> to vector<16x128xf32>
    %521 = arith.addf %519, %520 : vector<16x128xf32>
    %522 = arith.negf %521 : vector<16x128xf32>
    %523 = math.exp %522 : vector<16x128xf32>
    %cst_113 = arith.constant 1.000000e+00 : f32
    %524 = vector.broadcast %cst_113 : f32 to vector<16x128xf32>
    %525 = arith.addf %524, %523 : vector<16x128xf32>
    %526 = arith.divf %524, %525 : vector<16x128xf32>
    %527 = vector.extract_strided_slice %517 {offsets = [0, 128], sizes = [16, 128], strides = [1, 1]} : vector<16x384xf32> to vector<16x128xf32>
    %528 = vector.extract_strided_slice %518 {offsets = [0, 128], sizes = [16, 128], strides = [1, 1]} : vector<16x384xf32> to vector<16x128xf32>
    %529 = arith.addf %527, %528 : vector<16x128xf32>
    %530 = arith.negf %529 : vector<16x128xf32>
    %531 = math.exp %530 : vector<16x128xf32>
    %cst_114 = arith.constant 1.000000e+00 : f32
    %532 = vector.broadcast %cst_114 : f32 to vector<16x128xf32>
    %533 = arith.addf %532, %531 : vector<16x128xf32>
    %534 = arith.divf %532, %533 : vector<16x128xf32>
    %535 = vector.extract_strided_slice %517 {offsets = [0, 256], sizes = [16, 128], strides = [1, 1]} : vector<16x384xf32> to vector<16x128xf32>
    %536 = vector.extract_strided_slice %518 {offsets = [0, 256], sizes = [16, 128], strides = [1, 1]} : vector<16x384xf32> to vector<16x128xf32>
    %537 = vector.broadcast %5 : vector<1x128xf32> to vector<16x128xf32>
    %538 = arith.addf %536, %537 : vector<16x128xf32>
    %539 = arith.mulf %526, %538 : vector<16x128xf32>
    %540 = arith.addf %535, %539 : vector<16x128xf32>
    %541 = math.tanh %540 : vector<16x128xf32>
    %cst_115 = arith.constant 1.000000e+00 : f32
    %542 = vector.broadcast %cst_115 : f32 to vector<16x128xf32>
    %543 = arith.subf %542, %534 : vector<16x128xf32>
    %544 = arith.mulf %543, %541 : vector<16x128xf32>
    %545 = arith.mulf %534, %514 : vector<16x128xf32>
    %546 = arith.addf %544, %545 : vector<16x128xf32>
    %c14_i32 = arith.constant 14 : i32
    %547 = arith.addi %9, %c14_i32 : i32
    %548 = vector.broadcast %547 : i32 to vector<16x128xi32>
    %549 = arith.cmpi slt, %548, %8 : vector<16x128xi32>
    %550 = arith.select %549, %546, %514 : vector<16x128xi1>, vector<16x128xf32>
    %c15 = arith.constant 15 : index
    %c0_116 = arith.constant 0 : index
    %c0_117 = arith.constant 0 : index
    %551 = vector.load %arg3[%c15, %c0_116, %c0_117] : memref<16x16x16xf32, #tpu.memory_space<vmem>>, vector<1x16x16xf32>
    %552 = vector.shape_cast %551 : vector<1x16x16xf32> to vector<16x16xf32>
    %cst_118 = arith.constant dense<0.000000e+00> : vector<16x384xf32>
    %553 = tpu.matmul %552, %3, %cst_118 {dimension_numbers = #tpu.dot_dimension_numbers<[1], [0], [0], [1], [0, 0, 1, 1], [], []>} : vector<16x16xf32>, vector<16x384xf32>, vector<16x384xf32> -> vector<16x384xf32>
    %cst_119 = arith.constant dense<0.000000e+00> : vector<16x384xf32>
    %554 = tpu.matmul %550, %4, %cst_119 {dimension_numbers = #tpu.dot_dimension_numbers<[1], [0], [0], [1], [0, 0, 1, 1], [], []>} : vector<16x128xf32>, vector<128x384xf32>, vector<16x384xf32> -> vector<16x384xf32>
    %555 = vector.extract_strided_slice %553 {offsets = [0, 0], sizes = [16, 128], strides = [1, 1]} : vector<16x384xf32> to vector<16x128xf32>
    %556 = vector.extract_strided_slice %554 {offsets = [0, 0], sizes = [16, 128], strides = [1, 1]} : vector<16x384xf32> to vector<16x128xf32>
    %557 = arith.addf %555, %556 : vector<16x128xf32>
    %558 = arith.negf %557 : vector<16x128xf32>
    %559 = math.exp %558 : vector<16x128xf32>
    %cst_120 = arith.constant 1.000000e+00 : f32
    %560 = vector.broadcast %cst_120 : f32 to vector<16x128xf32>
    %561 = arith.addf %560, %559 : vector<16x128xf32>
    %562 = arith.divf %560, %561 : vector<16x128xf32>
    %563 = vector.extract_strided_slice %553 {offsets = [0, 128], sizes = [16, 128], strides = [1, 1]} : vector<16x384xf32> to vector<16x128xf32>
    %564 = vector.extract_strided_slice %554 {offsets = [0, 128], sizes = [16, 128], strides = [1, 1]} : vector<16x384xf32> to vector<16x128xf32>
    %565 = arith.addf %563, %564 : vector<16x128xf32>
    %566 = arith.negf %565 : vector<16x128xf32>
    %567 = math.exp %566 : vector<16x128xf32>
    %cst_121 = arith.constant 1.000000e+00 : f32
    %568 = vector.broadcast %cst_121 : f32 to vector<16x128xf32>
    %569 = arith.addf %568, %567 : vector<16x128xf32>
    %570 = arith.divf %568, %569 : vector<16x128xf32>
    %571 = vector.extract_strided_slice %553 {offsets = [0, 256], sizes = [16, 128], strides = [1, 1]} : vector<16x384xf32> to vector<16x128xf32>
    %572 = vector.extract_strided_slice %554 {offsets = [0, 256], sizes = [16, 128], strides = [1, 1]} : vector<16x384xf32> to vector<16x128xf32>
    %573 = vector.broadcast %5 : vector<1x128xf32> to vector<16x128xf32>
    %574 = arith.addf %572, %573 : vector<16x128xf32>
    %575 = arith.mulf %562, %574 : vector<16x128xf32>
    %576 = arith.addf %571, %575 : vector<16x128xf32>
    %577 = math.tanh %576 : vector<16x128xf32>
    %cst_122 = arith.constant 1.000000e+00 : f32
    %578 = vector.broadcast %cst_122 : f32 to vector<16x128xf32>
    %579 = arith.subf %578, %570 : vector<16x128xf32>
    %580 = arith.mulf %579, %577 : vector<16x128xf32>
    %581 = arith.mulf %570, %550 : vector<16x128xf32>
    %582 = arith.addf %580, %581 : vector<16x128xf32>
    %c15_i32 = arith.constant 15 : i32
    %583 = arith.addi %9, %c15_i32 : i32
    %584 = vector.broadcast %583 : i32 to vector<16x128xi32>
    %585 = arith.cmpi slt, %584, %8 : vector<16x128xi32>
    %586 = arith.select %585, %582, %550 : vector<16x128xi1>, vector<16x128xf32>
    %c0_123 = arith.constant 0 : index
    %c0_124 = arith.constant 0 : index
    %587 = vector.load %arg10[%c0_123, %c0_124] : memref<16x128xf32, #tpu.memory_space<vmem>>, vector<16x128xf32>
    tpu.vector_store %arg10[%c0_123, %c0_124], %586 {strides = array<i32>} : memref<16x128xf32, #tpu.memory_space<vmem>>, vector<16x128xf32>,
    %c1_i32_125 = arith.constant 1 : i32
    %588 = arith.cmpi eq, %arg1, %c1_i32_125 : i32
    %589 = arith.extui %588 : i1 to i32
    %c0_i32_126 = arith.constant 0 : i32
    %590 = arith.cmpi ne, %589, %c0_i32_126 : i32
    scf.if %590 {
      %c0_127 = arith.constant 0 : index
      %c0_128 = arith.constant 0 : index
      %591 = vector.load %arg10[%c0_127, %c0_128] : memref<16x128xf32, #tpu.memory_space<vmem>>, vector<16x128xf32>
      %592 = math.tanh %591 : vector<16x128xf32>
      %c0_129 = arith.constant 0 : index
      %c0_130 = arith.constant 0 : index
      %593 = vector.load %arg7[%c0_129, %c0_130] : memref<128x128xf32, #tpu.memory_space<vmem>>, vector<128x128xf32>
      %cst_131 = arith.constant dense<0.000000e+00> : vector<16x128xf32>
      %594 = tpu.matmul %592, %593, %cst_131 {dimension_numbers = #tpu.dot_dimension_numbers<[1], [0], [0], [1], [0, 0, 1, 1], [], []>} : vector<16x128xf32>, vector<128x128xf32>, vector<16x128xf32> -> vector<16x128xf32>
      %c0_132 = arith.constant 0 : index
      %c0_133 = arith.constant 0 : index
      %595 = vector.load %arg8[%c0_132, %c0_133] : memref<1x128xf32, #tpu.memory_space<vmem>>, vector<1x128xf32>
      %596 = vector.broadcast %595 : vector<1x128xf32> to vector<16x128xf32>
      %597 = arith.addf %594, %596 : vector<16x128xf32>
      %c0_134 = arith.constant 0 : index
      %c0_135 = arith.constant 0 : index
      %598 = vector.load %arg9[%c0_134, %c0_135] : memref<16x128xf32, #tpu.memory_space<vmem>>, vector<16x128xf32>
      tpu.vector_store %arg9[%c0_134, %c0_135], %597 {strides = array<i32>} : memref<16x128xf32, #tpu.memory_space<vmem>>, vector<16x128xf32>,
    } else {
    }
    return
  }
  func.func @transform_0(%arg0: i32, %arg1: i32) -> (i32, i32) {
    %c0_i32 = arith.constant 0 : i32
    %c0_i32_0 = arith.constant 0 : i32
    return %arg0, %c0_i32 : i32, i32
  }
  func.func @transform_1(%arg0: i32, %arg1: i32) -> (i32, i32, i32) {
    %c0_i32 = arith.constant 0 : i32
    %c0_i32_0 = arith.constant 0 : i32
    return %arg1, %arg0, %c0_i32 : i32, i32, i32
  }
  func.func @transform_2(%arg0: i32, %arg1: i32) -> (i32, i32) {
    %c0_i32 = arith.constant 0 : i32
    %c0_i32_0 = arith.constant 0 : i32
    %c0_i32_1 = arith.constant 0 : i32
    return %c0_i32, %c0_i32_0 : i32, i32
  }
  func.func @transform_3(%arg0: i32, %arg1: i32) -> (i32, i32) {
    %c0_i32 = arith.constant 0 : i32
    %c0_i32_0 = arith.constant 0 : i32
    %c0_i32_1 = arith.constant 0 : i32
    return %c0_i32, %c0_i32_0 : i32, i32
  }
  func.func @transform_4(%arg0: i32, %arg1: i32) -> (i32, i32) {
    %c0_i32 = arith.constant 0 : i32
    %c0_i32_0 = arith.constant 0 : i32
    %c0_i32_1 = arith.constant 0 : i32
    return %c0_i32, %c0_i32_0 : i32, i32
  }
  func.func @transform_5(%arg0: i32, %arg1: i32) -> (i32, i32) {
    %c0_i32 = arith.constant 0 : i32
    %c0_i32_0 = arith.constant 0 : i32
    %c0_i32_1 = arith.constant 0 : i32
    return %c0_i32, %c0_i32_0 : i32, i32
  }
  func.func @transform_6(%arg0: i32, %arg1: i32) -> (i32, i32) {
    %c0_i32 = arith.constant 0 : i32
    %c0_i32_0 = arith.constant 0 : i32
    %c0_i32_1 = arith.constant 0 : i32
    return %c0_i32, %c0_i32_0 : i32, i32
  }
  func.func @transform_7(%arg0: i32, %arg1: i32) -> (i32, i32) {
    %c0_i32 = arith.constant 0 : i32
    %c0_i32_0 = arith.constant 0 : i32
    return %arg0, %c0_i32 : i32, i32
  }
}

</mosaic_0001>

<llo_original>
// kernel: tpu_custom_call.1
$region0: #{tpu_custom_call.1}
  #allocation0 [shape = 'u32[]', space=smem, size = 0x4, offset = 0x4, fixed_abs, tag = 'smem constant byte address 0x4 - core index']
  #allocation1 [shape = 'u32[144,128]{1,0:T(1,128)}', space=vmem, size = 0x12000, scoped, tag = 'internal scratch']
  #allocation2 [shape = 'f32[16,128]{1,0:T(8,128)}', space=vmem, size = 0x2000, scoped, tag = 'scratch operand']
  %s0 = inlined_call_operand.vmem [shape: s32[32,1], index: 0, kind: input, shape index: {}]
  %s1 = inlined_call_operand.vmem [shape: f32[32,32,16], index: 1, kind: input, shape index: {}]
  %s2 = inlined_call_operand.vmem [shape: f32[16,384], index: 2, kind: input, shape index: {}]
  %s3 = inlined_call_operand.vmem [shape: f32[128,384], index: 3, kind: input, shape index: {}]
  %s4 = inlined_call_operand.vmem [shape: f32[1,128], index: 4, kind: input, shape index: {}]
  %s5 = inlined_call_operand.vmem [shape: f32[128,128], index: 5, kind: input, shape index: {}]
  %s6 = inlined_call_operand.vmem [shape: f32[1,128], index: 6, kind: input, shape index: {}]
  %s7 = inlined_call_operand.hbm [shape: f32[32,128], index: 7, kind: output, shape index: {}]
  %s8 = sld [smem:[#allocation0]]
  $region107: #{tpu_custom_call.1} parent=0
    _
  %s10 = ssub.s32 1, %s8
  %s11 = scalar_select 0, %s10, %s8
  $region1: #{tpu_custom_call.1} parent=0
    #allocation3 [shape = 'u8[262144]{0}', space=vmem, size = 0x40000, scoped, tag = 'input window, operand 1']
    #allocation4 [shape = 'u8[16384]{0}', space=vmem, size = 0x4000, scoped, tag = 'output window, operand 0']
    #allocation5 [shape = 's32[2]{0}', space=sflag, size = 0x8, scoped, tag = 'scoped memory for tpu_custom_call.1']
    %12 = vsyncpa [#allocation5], 0
    %s13 = scalar_lea.sflag [#allocation5], 1
    %14 = vsyncpa %s13, 0
    loop: start=0, step=1, limit=6
    $region2: #{tpu_custom_call.1} parent=1 // loop_pre_header
      _
    $region3: #{tpu_custom_call.1} parent=1 // loop_header
      %s16 = sphi 0, %s20
      %p17 = scmp.ge.s32.totalorder %s16, 6
      %s23 = sphi 0, %s35
      %s24 = sphi 0, %s31
      %s25 = sphi 0, %s23
      %s26 = sphi 0, %s24
      %s27 = sphi 0, %s25
      %s28 = sphi 0, %s26
      %s38 = sphi 0, %s40
      %s41 = sphi 0, %s38
      %s42 = sphi 0, %s41
      %s58 = sphi 0, %s42
      %s66 = sphi 0, %s68
      %s69 = sphi 0, %s66
      %s70 = sphi 0, %s69
      %s86 = sphi 0, %s70
      %s90 = sphi 0, %s90
      %s92 = sphi 0, %s90
      %s93 = sphi 0, %s92
      %s107 = sphi 0, %s93
      %s111 = sphi 0, %s111
      %s113 = sphi 0, %s111
      %s114 = sphi 0, %s113
      %s128 = sphi 0, %s114
      %s132 = sphi 0, %s132
      %s134 = sphi 0, %s132
      %s135 = sphi 0, %s134
      %s149 = sphi 0, %s135
      %s153 = sphi 0, %s153
      %s155 = sphi 0, %s153
      %s156 = sphi 0, %s155
      %s170 = sphi 0, %s156
      %s174 = sphi 0, %s174
      %s176 = sphi 0, %s174
      %s177 = sphi 0, %s176
      %s191 = sphi 0, %s177
      %s197 = sphi 0, %s199
      %s200 = sphi 0, %s197
      %s201 = sphi 0, %s200
      %s217 = sphi 0, %s201
    $region4: #{tpu_custom_call.1} parent=1 // loop_header_branch
      %19 = sbr.rel (%p17) target = $region8
    $region5: #{tpu_custom_call.1} parent=1 // loop_body
      %s21 = ssub.s32 %s16, 1
      %s22 = ssub.s32 %s16, 2
      %s29 = sadd.s32 1, %s24
      %p30 = scmp.ge.s32.totalorder %s29, 2
      %s31 = scalar_select %p30, 0, %s29
      %s32 = sadd.s32 1, %s23
      %s33 = scalar_select %p30, %s32, %s23
      %p34 = scmp.ge.s32.totalorder %s33, 2
      %s35 = scalar_select %p34, 0, %s33
      %s36 = ssub.s32 %s23, %s35
      %p37 = scmp.eq.s32.totalorder %s36, 0
      %s39 = sadd.s32 %s38, 1
      %s40 = scalar_select %p37, %s38, %s39
      %p43 = pneg %p37
      %p44 = scmp.eq.s32.totalorder %s16, 3
      %p45 = por %p43, %p44
      %p46 = scmp.ne.s32.totalorder %s38, %s41
      %p47 = scmp.eq.s32.totalorder %s16, 0
      %p48 = por %p46, %p47
      %p49 = scmp.ne.s32.totalorder %s38, %s41
      %p50 = scmp.eq.s32.totalorder %s21, 3
      %p51 = por %p49, %p50
      %p52 = scmp.ne.s32.totalorder %s41, %s42
      %p53 = scmp.eq.s32.totalorder %s21, 0
      %p54 = por %p52, %p53
      %p55 = scmp.ne.s32.totalorder %s41, %s42
      %p56 = scmp.eq.s32.totalorder %s22, 3
      %p57 = por %p55, %p56
      %p59 = scmp.ne.s32.totalorder %s42, %s58
      %p60 = scmp.eq.s32.totalorder %s22, 0
      %p61 = por %p59, %p60
      %s62 = ssub.s32 %s24, %s31
      %s63 = ssub.s32 %s23, %s35
      %s64 = sor.u32 %s62, %s63
      %p65 = scmp.eq.s32.totalorder %s64, 0
      %s67 = sadd.s32 %s66, 1
      %s68 = scalar_select %p65, %s66, %s67
      %p71 = pneg %p65
      %p72 = scmp.eq.s32.totalorder %s16, 3
      %p73 = por %p71, %p72
      %p74 = scmp.ne.s32.totalorder %s66, %s69
      %p75 = scmp.eq.s32.totalorder %s16, 0
      %p76 = por %p74, %p75
      %p77 = scmp.ne.s32.totalorder %s66, %s69
      %p78 = scmp.eq.s32.totalorder %s21, 3
      %p79 = por %p77, %p78
      %p80 = scmp.ne.s32.totalorder %s69, %s70
      %p81 = scmp.eq.s32.totalorder %s21, 0
      %p82 = por %p80, %p81
      %p83 = scmp.ne.s32.totalorder %s69, %s70
      %p84 = scmp.eq.s32.totalorder %s22, 3
      %p85 = por %p83, %p84
      %p87 = scmp.ne.s32.totalorder %s70, %s86
      %p88 = scmp.eq.s32.totalorder %s22, 0
      %p89 = por %p87, %p88
      %s91 = sadd.s32 %s90, 1
      %p94 = scmp.eq.s32.totalorder %s16, 3
      %p95 = scmp.ne.s32.totalorder %s90, %s92
      %p96 = scmp.eq.s32.totalorder %s16, 0
      %p97 = por %p95, %p96
      %p98 = scmp.ne.s32.totalorder %s90, %s92
      %p99 = scmp.eq.s32.totalorder %s21, 3
      %p100 = por %p98, %p99
      %p101 = scmp.ne.s32.totalorder %s92, %s93
      %p102 = scmp.eq.s32.totalorder %s21, 0
      %p103 = por %p101, %p102
      %p104 = scmp.ne.s32.totalorder %s92, %s93
      %p105 = scmp.eq.s32.totalorder %s22, 3
      %p106 = por %p104, %p105
      %p108 = scmp.ne.s32.totalorder %s93, %s107
      %p109 = scmp.eq.s32.totalorder %s22, 0
      %p110 = por %p108, %p109
      %s112 = sadd.s32 %s111, 1
      %p115 = scmp.eq.s32.totalorder %s16, 3
      %p116 = scmp.ne.s32.totalorder %s111, %s113
      %p117 = scmp.eq.s32.totalorder %s16, 0
      %p118 = por %p116, %p117
      %p119 = scmp.ne.s32.totalorder %s111, %s113
      %p120 = scmp.eq.s32.totalorder %s21, 3
      %p121 = por %p119, %p120
      %p122 = scmp.ne.s32.totalorder %s113, %s114
      %p123 = scmp.eq.s32.totalorder %s21, 0
      %p124 = por %p122, %p123
      %p125 = scmp.ne.s32.totalorder %s113, %s114
      %p126 = scmp.eq.s32.totalorder %s22, 3
      %p127 = por %p125, %p126
      %p129 = scmp.ne.s32.totalorder %s114, %s128
      %p130 = scmp.eq.s32.totalorder %s22, 0
      %p131 = por %p129, %p130
      %s133 = sadd.s32 %s132, 1
      %p136 = scmp.eq.s32.totalorder %s16, 3
      %p137 = scmp.ne.s32.totalorder %s132, %s134
      %p138 = scmp.eq.s32.totalorder %s16, 0
      %p139 = por %p137, %p138
      %p140 = scmp.ne.s32.totalorder %s132, %s134
      %p141 = scmp.eq.s32.totalorder %s21, 3
      %p142 = por %p140, %p141
      %p143 = scmp.ne.s32.totalorder %s134, %s135
      %p144 = scmp.eq.s32.totalorder %s21, 0
      %p145 = por %p143, %p144
      %p146 = scmp.ne.s32.totalorder %s134, %s135
      %p147 = scmp.eq.s32.totalorder %s22, 3
      %p148 = por %p146, %p147
      %p150 = scmp.ne.s32.totalorder %s135, %s149
      %p151 = scmp.eq.s32.totalorder %s22, 0
      %p152 = por %p150, %p151
      %s154 = sadd.s32 %s153, 1
      %p157 = scmp.eq.s32.totalorder %s16, 3
      %p158 = scmp.ne.s32.totalorder %s153, %s155
      %p159 = scmp.eq.s32.totalorder %s16, 0
      %p160 = por %p158, %p159
      %p161 = scmp.ne.s32.totalorder %s153, %s155
      %p162 = scmp.eq.s32.totalorder %s21, 3
      %p163 = por %p161, %p162
      %p164 = scmp.ne.s32.totalorder %s155, %s156
      %p165 = scmp.eq.s32.totalorder %s21, 0
      %p166 = por %p164, %p165
      %p167 = scmp.ne.s32.totalorder %s155, %s156
      %p168 = scmp.eq.s32.totalorder %s22, 3
      %p169 = por %p167, %p168
      %p171 = scmp.ne.s32.totalorder %s156, %s170
      %p172 = scmp.eq.s32.totalorder %s22, 0
      %p173 = por %p171, %p172
      %s175 = sadd.s32 %s174, 1
      %p178 = scmp.eq.s32.totalorder %s16, 3
      %p179 = scmp.ne.s32.totalorder %s174, %s176
      %p180 = scmp.eq.s32.totalorder %s16, 0
      %p181 = por %p179, %p180
      %p182 = scmp.ne.s32.totalorder %s174, %s176
      %p183 = scmp.eq.s32.totalorder %s21, 3
      %p184 = por %p182, %p183
      %p185 = scmp.ne.s32.totalorder %s176, %s177
      %p186 = scmp.eq.s32.totalorder %s21, 0
      %p187 = por %p185, %p186
      %p188 = scmp.ne.s32.totalorder %s176, %s177
      %p189 = scmp.eq.s32.totalorder %s22, 3
      %p190 = por %p188, %p189
      %p192 = scmp.ne.s32.totalorder %s177, %s191
      %p193 = scmp.eq.s32.totalorder %s22, 0
      %p194 = por %p192, %p193
      %s195 = ssub.s32 %s23, %s35
      %p196 = scmp.eq.s32.totalorder %s195, 0
      %s198 = sadd.s32 %s197, 1
      %s199 = scalar_select %p196, %s197, %s198
      %p202 = pneg %p196
      %p203 = scmp.eq.s32.totalorder %s16, 3
      %p204 = por %p202, %p203
      %p205 = scmp.ne.s32.totalorder %s197, %s200
      %p206 = scmp.eq.s32.totalorder %s16, 0
      %p207 = por %p205, %p206
      %p208 = scmp.ne.s32.totalorder %s197, %s200
      %p209 = scmp.eq.s32.totalorder %s21, 3
      %p210 = por %p208, %p209
      %p211 = scmp.ne.s32.totalorder %s200, %s201
      %p212 = scmp.eq.s32.totalorder %s21, 0
      %p213 = por %p211, %p212
      %p214 = scmp.ne.s32.totalorder %s200, %s201
      %p215 = scmp.eq.s32.totalorder %s22, 3
      %p216 = por %p214, %p215
      %p218 = scmp.ne.s32.totalorder %s201, %s217
      %p219 = scmp.eq.s32.totalorder %s22, 0
      %p220 = por %p218, %p219
      %p221 = scmp.le.s32.totalorder 1, %s16
      %p222 = scmp.lt.s32.totalorder %s16, 5
      %p223 = pnand %p221, %p222
      %p224 = pneg %p223
      // Predicated region
      $region9: #{tpu_custom_call.1} parent=5 // pred_check
        _
      $region10: #{tpu_custom_call.1} parent=5 // pred_check_branch
        %226 = sbr.rel (%p223) target = $region12
      $region11: #{tpu_custom_call.1} parent=5 // pred_region
        %s227 = ssub.s32 %s16, 1
        // Predicated region
        $region13: #{tpu_custom_call.1} parent=11 // pred_check
          %p228 = pneg %p103
        $region14: #{tpu_custom_call.1} parent=11 // pred_check_branch
          %230 = sbr.rel (%p228) target = $region16
        $region15: #{tpu_custom_call.1} parent=11 // pred_region
          _
        $region16: #{tpu_custom_call.1} parent=11 // pred_fallthru
          _
        // Predicated region
        $region17: #{tpu_custom_call.1} parent=11 // pred_check
          %p231 = pneg %p124
        $region18: #{tpu_custom_call.1} parent=11 // pred_check_branch
          %233 = sbr.rel (%p231) target = $region20
        $region19: #{tpu_custom_call.1} parent=11 // pred_region
          _
        $region20: #{tpu_custom_call.1} parent=11 // pred_fallthru
          _
        // Predicated region
        $region21: #{tpu_custom_call.1} parent=11 // pred_check
          %p234 = pneg %p145
        $region22: #{tpu_custom_call.1} parent=11 // pred_check_branch
          %236 = sbr.rel (%p234) target = $region24
        $region23: #{tpu_custom_call.1} parent=11 // pred_region
          _
        $region24: #{tpu_custom_call.1} parent=11 // pred_fallthru
          _
        // Predicated region
        $region25: #{tpu_custom_call.1} parent=11 // pred_check
          %p237 = pneg %p166
        $region26: #{tpu_custom_call.1} parent=11 // pred_check_branch
          %239 = sbr.rel (%p237) target = $region28
        $region27: #{tpu_custom_call.1} parent=11 // pred_region
          _
        $region28: #{tpu_custom_call.1} parent=11 // pred_fallthru
          _
        // Predicated region
        $region29: #{tpu_custom_call.1} parent=11 // pred_check
          %p240 = pneg %p187
        $region30: #{tpu_custom_call.1} parent=11 // pred_check_branch
          %242 = sbr.rel (%p240) target = $region32
        $region31: #{tpu_custom_call.1} parent=11 // pred_region
          _
        $region32: #{tpu_custom_call.1} parent=11 // pred_fallthru
          _
      $region12: #{tpu_custom_call.1} parent=5 // pred_fallthru
        _
      %p243 = scmp.lt.s32.totalorder %s16, 4
      // Predicated region
      $region33: #{tpu_custom_call.1} parent=5 // pred_check
        %p244 = pneg %p243
      $region34: #{tpu_custom_call.1} parent=5 // pred_check_branch
        %246 = sbr.rel (%p244) target = $region36
      $region35: #{tpu_custom_call.1} parent=5 // pred_region
        // Predicated region
        $region37: #{tpu_custom_call.1} parent=35 // pred_check
          %p247 = pneg %p48
        $region38: #{tpu_custom_call.1} parent=35 // pred_check_branch
          %249 = sbr.rel (%p247) target = $region40
        $region39: #{tpu_custom_call.1} parent=35 // pred_region
          %s250 = smul.u32 2, %s23
          %p251 = scmp.lt.s32.totalorder %s250, 3
          %s252 = scalar_select %p251, %s250, 3
          %s253 = smul.addr %s252, 8
          %s254 = scalar_lea.vmem %s0, %s253
          %s255 = smul.u32 2, %s23
        $region40: #{tpu_custom_call.1} parent=35 // pred_fallthru
          _
        // Predicated region
        $region41: #{tpu_custom_call.1} parent=35 // pred_check
          %p256 = pneg %p76
        $region42: #{tpu_custom_call.1} parent=35 // pred_check_branch
          %258 = sbr.rel (%p256) target = $region44
        $region43: #{tpu_custom_call.1} parent=35 // pred_region
          %s259 = sand.u32 %s66, 1
          %s260 = sand.u32 %s66, 1
          %s261 = smul.addr %s260, 256
          %s262 = scalar_lea.vmem [#allocation3], %s261
          %s263 = smul.u32 16, %s24
          %s264 = smul.u32 2, %s23
          %s265 = smul.addr %s263, 4
          %s266 = sadd.s32 %s264, %s265
          %s267 = smul.addr %s266, 8
          %s268 = scalar_lea.vmem %s1, %s267
          // Predicated region
          $region45: #{tpu_custom_call.1} parent=43 // pred_check
            _
          $region46: #{tpu_custom_call.1} parent=43 // pred_check_branch
            %270 = sbr.rel (0) target = $region48
          $region47: #{tpu_custom_call.1} parent=43 // pred_region
            // Predicated region
            $region49: #{tpu_custom_call.1} parent=47 // pred_check
              _
            $region50: #{tpu_custom_call.1} parent=47 // pred_check_branch
              %272 = sbr.rel (0) target = $region52
            $region51: #{tpu_custom_call.1} parent=47 // pred_region
              // Predicated region
              $region64: #{tpu_custom_call.1} parent=51 // pred_check
                _
              $region65: #{tpu_custom_call.1} parent=51 // pred_check_branch
                %349 = sbr.rel (0) target = $region67
              $region66: #{tpu_custom_call.1} parent=51 // pred_region
                loop: start=0, step=1, limit=1
                $region68: #{tpu_custom_call.1} parent=66 // loop_pre_header
                  _
                $region69: #{tpu_custom_call.1} parent=66 // loop_header
                  %s351 = sphi 0, %s355
                  %p352 = scmp.ge.s32.totalorder %s351, 1
                  %s356 = sphi %s268, %s268
                  %s357 = sphi %s262, %s262
                $region70: #{tpu_custom_call.1} parent=66 // loop_header_branch
                  %354 = sbr.rel (%p352) target = $region74
                $region71: #{tpu_custom_call.1} parent=66 // loop_body
                  %v358 = vld [vmem:[%s356] sm:$0xff]
                  %359 = vst [vmem:[%s357] sm:$0xff] %v358
                  %v360 = vld [vmem:[%s356 + $0x8] sm:$0xff]
                  %361 = vst [vmem:[%s357 + $0x8] sm:$0xff] %v360
                  %v362 = vld [vmem:[%s356 + $0x20] sm:$0xff]
                  %363 = vst [vmem:[%s357 + $0x10] sm:$0xff] %v362
                  %v364 = vld [vmem:[%s356 + $0x28] sm:$0xff]
                  %365 = vst [vmem:[%s357 + $0x18] sm:$0xff] %v364
                  %v366 = vld [vmem:[%s356 + $0x40] sm:$0xff]
                  %367 = vst [vmem:[%s357 + $0x20] sm:$0xff] %v366
                  %v368 = vld [vmem:[%s356 + $0x48] sm:$0xff]
                  %369 = vst [vmem:[%s357 + $0x28] sm:$0xff] %v368
                  %v370 = vld [vmem:[%s356 + $0x60] sm:$0xff]
                  %371 = vst [vmem:[%s357 + $0x30] sm:$0xff] %v370
                  %v372 = vld [vmem:[%s356 + $0x68] sm:$0xff]
                  %373 = vst [vmem:[%s357 + $0x38] sm:$0xff] %v372
                  %v374 = vld [vmem:[%s356 + $0x80] sm:$0xff]
                  %375 = vst [vmem:[%s357 + $0x40] sm:$0xff] %v374
                  %v376 = vld [vmem:[%s356 + $0x88] sm:$0xff]
                  %377 = vst [vmem:[%s357 + $0x48] sm:$0xff] %v376
                  %v378 = vld [vmem:[%s356 + $0xa0] sm:$0xff]
                  %379 = vst [vmem:[%s357 + $0x50] sm:$0xff] %v378
                  %v380 = vld [vmem:[%s356 + $0xa8] sm:$0xff]
                  %381 = vst [vmem:[%s357 + $0x58] sm:$0xff] %v380
                  %v382 = vld [vmem:[%s356 + $0xc0] sm:$0xff]
                  %383 = vst [vmem:[%s357 + $0x60] sm:$0xff] %v382
                  %v384 = vld [vmem:[%s356 + $0xc8] sm:$0xff]
                  %385 = vst [vmem:[%s357 + $0x68] sm:$0xff] %v384
                  %v386 = vld [vmem:[%s356 + $0xe0] sm:$0xff]
                  %387 = vst [vmem:[%s357 + $0x70] sm:$0xff] %v386
                  %v388 = vld [vmem:[%s356 + $0xe8] sm:$0xff]
                  %389 = vst [vmem:[%s357 + $0x78] sm:$0xff] %v388
                  %v390 = vld [vmem:[%s356 + $0x100] sm:$0xff]
                  %391 = vst [vmem:[%s357 + $0x80] sm:$0xff] %v390
                  %v392 = vld [vmem:[%s356 + $0x108] sm:$0xff]
                  %393 = vst [vmem:[%s357 + $0x88] sm:$0xff] %v392
                  %v394 = vld [vmem:[%s356 + $0x120] sm:$0xff]
                  %395 = vst [vmem:[%s357 + $0x90] sm:$0xff] %v394
                  %v396 = vld [vmem:[%s356 + $0x128] sm:$0xff]
                  %397 = vst [vmem:[%s357 + $0x98] sm:$0xff] %v396
                  %v398 = vld [vmem:[%s356 + $0x140] sm:$0xff]
                  %399 = vst [vmem:[%s357 + $0xa0] sm:$0xff] %v398
                  %v400 = vld [vmem:[%s356 + $0x148] sm:$0xff]
                  %401 = vst [vmem:[%s357 + $0xa8] sm:$0xff] %v400
                  %v402 = vld [vmem:[%s356 + $0x160] sm:$0xff]
                  %403 = vst [vmem:[%s357 + $0xb0] sm:$0xff] %v402
                  %v404 = vld [vmem:[%s356 + $0x168] sm:$0xff]
                  %405 = vst [vmem:[%s357 + $0xb8] sm:$0xff] %v404
                  %v406 = vld [vmem:[%s356 + $0x180] sm:$0xff]
                  %407 = vst [vmem:[%s357 + $0xc0] sm:$0xff] %v406
                  %v408 = vld [vmem:[%s356 + $0x188] sm:$0xff]
                  %409 = vst [vmem:[%s357 + $0xc8] sm:$0xff] %v408
                  %v410 = vld [vmem:[%s356 + $0x1a0] sm:$0xff]
                  %411 = vst [vmem:[%s357 + $0xd0] sm:$0xff] %v410
                  %v412 = vld [vmem:[%s356 + $0x1a8] sm:$0xff]
                  %413 = vst [vmem:[%s357 + $0xd8] sm:$0xff] %v412
                  %v414 = vld [vmem:[%s356 + $0x1c0] sm:$0xff]
                  %415 = vst [vmem:[%s357 + $0xe0] sm:$0xff] %v414
                  %v416 = vld [vmem:[%s356 + $0x1c8] sm:$0xff]
                  %417 = vst [vmem:[%s357 + $0xe8] sm:$0xff] %v416
                  %v418 = vld [vmem:[%s356 + $0x1e0] sm:$0xff]
                  %419 = vst [vmem:[%s357 + $0xf0] sm:$0xff] %v418
                  %v420 = vld [vmem:[%s356 + $0x1e8] sm:$0xff]
                  %421 = vst [vmem:[%s357 + $0xf8] sm:$0xff] %v420
                $region72: #{tpu_custom_call.1} parent=66 // loop_footer
                  %s355 = sadd.s32 1, %s351
                $region73: #{tpu_custom_call.1} parent=66 // loop_footer_branch
                  %350 = sbr.rel target = $region69
                $region74: #{tpu_custom_call.1} parent=66 // loop_exit
                  _
              $region67: #{tpu_custom_call.1} parent=51 // pred_fallthru
                _
              // Predicated region
              $region75: #{tpu_custom_call.1} parent=51 // pred_check
                _
              $region76: #{tpu_custom_call.1} parent=51 // pred_check_branch
                %423 = sbr.rel target = $region78
              $region77: #{tpu_custom_call.1} parent=51 // pred_region
                _
              $region78: #{tpu_custom_call.1} parent=51 // pred_fallthru
                _
            $region52: #{tpu_custom_call.1} parent=47 // pred_fallthru
              _
            // Predicated region
            $region53: #{tpu_custom_call.1} parent=47 // pred_check
              _
            $region54: #{tpu_custom_call.1} parent=47 // pred_check_branch
              %274 = sbr.rel target = $region56
            $region55: #{tpu_custom_call.1} parent=47 // pred_region
              loop: start=0, step=1, limit=1
              $region57: #{tpu_custom_call.1} parent=55 // loop_pre_header
                _
              $region58: #{tpu_custom_call.1} parent=55 // loop_header
                %s277 = sphi 0, %s281
                %p278 = scmp.ge.s32.totalorder %s277, 1
                %s282 = sphi %s268, %s268
                %s283 = sphi %s262, %s262
              $region59: #{tpu_custom_call.1} parent=55 // loop_header_branch
                %280 = sbr.rel (%p278) target = $region63
              $region60: #{tpu_custom_call.1} parent=55 // loop_body
                %v284 = vld [vmem:[%s282] sm:$0xff]
                %285 = vst [vmem:[%s283] sm:$0xff] %v284
                %v286 = vld [vmem:[%s282 + $0x8] sm:$0xff]
                %287 = vst [vmem:[%s283 + $0x8] sm:$0xff] %v286
                %v288 = vld [vmem:[%s282 + $0x20] sm:$0xff]
                %289 = vst [vmem:[%s283 + $0x10] sm:$0xff] %v288
                %v290 = vld [vmem:[%s282 + $0x28] sm:$0xff]
                %291 = vst [vmem:[%s283 + $0x18] sm:$0xff] %v290
                %v292 = vld [vmem:[%s282 + $0x40] sm:$0xff]
                %293 = vst [vmem:[%s283 + $0x20] sm:$0xff] %v292
                %v294 = vld [vmem:[%s282 + $0x48] sm:$0xff]
                %295 = vst [vmem:[%s283 + $0x28] sm:$0xff] %v294
                %v296 = vld [vmem:[%s282 + $0x60] sm:$0xff]
                %297 = vst [vmem:[%s283 + $0x30] sm:$0xff] %v296
                %v298 = vld [vmem:[%s282 + $0x68] sm:$0xff]
                %299 = vst [vmem:[%s283 + $0x38] sm:$0xff] %v298
                %v300 = vld [vmem:[%s282 + $0x80] sm:$0xff]
                %301 = vst [vmem:[%s283 + $0x40] sm:$0xff] %v300
                %v302 = vld [vmem:[%s282 + $0x88] sm:$0xff]
                %303 = vst [vmem:[%s283 + $0x48] sm:$0xff] %v302
                %v304 = vld [vmem:[%s282 + $0xa0] sm:$0xff]
                %305 = vst [vmem:[%s283 + $0x50] sm:$0xff] %v304
                %v306 = vld [vmem:[%s282 + $0xa8] sm:$0xff]
                %307 = vst [vmem:[%s283 + $0x58] sm:$0xff] %v306
                %v308 = vld [vmem:[%s282 + $0xc0] sm:$0xff]
                %309 = vst [vmem:[%s283 + $0x60] sm:$0xff] %v308
                %v310 = vld [vmem:[%s282 + $0xc8] sm:$0xff]
                %311 = vst [vmem:[%s283 + $0x68] sm:$0xff] %v310
                %v312 = vld [vmem:[%s282 + $0xe0] sm:$0xff]
                %313 = vst [vmem:[%s283 + $0x70] sm:$0xff] %v312
                %v314 = vld [vmem:[%s282 + $0xe8] sm:$0xff]
                %315 = vst [vmem:[%s283 + $0x78] sm:$0xff] %v314
                %v316 = vld [vmem:[%s282 + $0x100] sm:$0xff]
                %317 = vst [vmem:[%s283 + $0x80] sm:$0xff] %v316
                %v318 = vld [vmem:[%s282 + $0x108] sm:$0xff]
                %319 = vst [vmem:[%s283 + $0x88] sm:$0xff] %v318
                %v320 = vld [vmem:[%s282 + $0x120] sm:$0xff]
                %321 = vst [vmem:[%s283 + $0x90] sm:$0xff] %v320
                %v322 = vld [vmem:[%s282 + $0x128] sm:$0xff]
                %323 = vst [vmem:[%s283 + $0x98] sm:$0xff] %v322
                %v324 = vld [vmem:[%s282 + $0x140] sm:$0xff]
                %325 = vst [vmem:[%s283 + $0xa0] sm:$0xff] %v324
                %v326 = vld [vmem:[%s282 + $0x148] sm:$0xff]
                %327 = vst [vmem:[%s283 + $0xa8] sm:$0xff] %v326
                %v328 = vld [vmem:[%s282 + $0x160] sm:$0xff]
                %329 = vst [vmem:[%s283 + $0xb0] sm:$0xff] %v328
                %v330 = vld [vmem:[%s282 + $0x168] sm:$0xff]
                %331 = vst [vmem:[%s283 + $0xb8] sm:$0xff] %v330
                %v332 = vld [vmem:[%s282 + $0x180] sm:$0xff]
                %333 = vst [vmem:[%s283 + $0xc0] sm:$0xff] %v332
                %v334 = vld [vmem:[%s282 + $0x188] sm:$0xff]
                %335 = vst [vmem:[%s283 + $0xc8] sm:$0xff] %v334
                %v336 = vld [vmem:[%s282 + $0x1a0] sm:$0xff]
                %337 = vst [vmem:[%s283 + $0xd0] sm:$0xff] %v336
                %v338 = vld [vmem:[%s282 + $0x1a8] sm:$0xff]
                %339 = vst [vmem:[%s283 + $0xd8] sm:$0xff] %v338
                %v340 = vld [vmem:[%s282 + $0x1c0] sm:$0xff]
                %341 = vst [vmem:[%s283 + $0xe0] sm:$0xff] %v340
                %v342 = vld [vmem:[%s282 + $0x1c8] sm:$0xff]
                %343 = vst [vmem:[%s283 + $0xe8] sm:$0xff] %v342
                %v344 = vld [vmem:[%s282 + $0x1e0] sm:$0xff]
                %345 = vst [vmem:[%s283 + $0xf0] sm:$0xff] %v344
                %v346 = vld [vmem:[%s282 + $0x1e8] sm:$0xff]
                %347 = vst [vmem:[%s283 + $0xf8] sm:$0xff] %v346
              $region61: #{tpu_custom_call.1} parent=55 // loop_footer
                %s281 = sadd.s32 1, %s277
              $region62: #{tpu_custom_call.1} parent=55 // loop_footer_branch
                %276 = sbr.rel target = $region58
              $region63: #{tpu_custom_call.1} parent=55 // loop_exit
                _
            $region56: #{tpu_custom_call.1} parent=47 // pred_fallthru
              _
          $region48: #{tpu_custom_call.1} parent=43 // pred_fallthru
            _
          %424 = vnop
        $region44: #{tpu_custom_call.1} parent=35 // pred_fallthru
          _
      $region36: #{tpu_custom_call.1} parent=5 // pred_fallthru
        _
      %p425 = scmp.le.s32.totalorder 1, %s16
      %p426 = scmp.lt.s32.totalorder %s16, 5
      %p427 = pnand %p425, %p426
      %p428 = pneg %p427
      // Predicated region
      $region79: #{tpu_custom_call.1} parent=5 // pred_check
        _
      $region80: #{tpu_custom_call.1} parent=5 // pred_check_branch
        %430 = sbr.rel (%p427) target = $region82
      $region81: #{tpu_custom_call.1} parent=5 // pred_region
        %s431 = ssub.s32 %s16, 1
        %s432 = sand.u32 %s69, 1
        %s433 = sand.u32 %s69, 1
        %s434 = smul.addr %s433, 256
        %s435 = scalar_lea.vmem [#allocation3], %s434
        // Predicated region
        $region83: #{tpu_custom_call.1} parent=81 // pred_check
          %p436 = pneg %p82
        $region84: #{tpu_custom_call.1} parent=81 // pred_check_branch
          %438 = sbr.rel (%p436) target = $region86
        $region85: #{tpu_custom_call.1} parent=81 // pred_region
          _
        $region86: #{tpu_custom_call.1} parent=81 // pred_fallthru
          _
        %s439 = smul.u32 2, %s25
        %p440 = scmp.lt.s32.totalorder %s439, 3
        %s441 = scalar_select %p440, %s439, 3
        %s442 = smul.addr %s441, 8
        %s443 = scalar_lea.vmem %s0, %s442
        %p444 = pneg %p54
        %p445 = pneg %p51
        %s446 = sand.u32 %s69, 1
        %s447 = sand.u32 %s69, 1
        %s448 = smul.addr %s447, 256
        %s449 = scalar_lea.vmem [#allocation3], %s448
        %p450 = pneg %p82
        %p451 = pneg %p79
        %p452 = pneg %p103
        %p453 = pneg %p100
        %p454 = pneg %p124
        %p455 = pneg %p121
        %p456 = pneg %p145
        %p457 = pneg %p142
        %p458 = pneg %p166
        %p459 = pneg %p163
        %p460 = pneg %p187
        %p461 = pneg %p184
        %p462 = pneg %p213
        %p463 = pneg %p210
        %s464 = sand.u32 %s200, 1
        %s465 = scalar_lea.sflag [#allocation5], %s464
        %s466 = sand.u32 %s200, 1
        %s467 = smul.addr %s466, 16
        %s468 = scalar_lea.vmem [#allocation4], %s467
        %s469 = smul.u32 2, %s25
        %p470 = scmp.lt.s32.totalorder %s469, 3
        %s471 = scalar_select %p470, %s469, 3
        %s472 = smul.addr %s471, 8
        %s473 = scalar_lea.vmem %s0, %s472
        %s474 = smul.u32 2, %s25
        %s475 = smul.u32 16, %s26
        %s476 = smul.u32 2, %s25
        %s477 = smul.u32 2, %s25
        %p478 = scmp.eq.s32.totalorder %s26, 0
        // Predicated region
        $region87: #{tpu_custom_call.1} parent=81 // pred_check
          %p479 = pneg %p478
        $region88: #{tpu_custom_call.1} parent=81 // pred_check_branch
          %481 = sbr.rel (%p479) target = $region90
        $region89: #{tpu_custom_call.1} parent=81 // pred_region
          %482 = vst [vmem:[#allocation2] sm:$0xff] 0.0
          %483 = vst [vmem:[#allocation2 + $0x8] sm:$0xff] 0.0
        $region90: #{tpu_custom_call.1} parent=81 // pred_fallthru
          _
        %v484 = vld [vmem:[%s2] sm:$0xff]
        %v485 = vld [vmem:[%s2 + $0x8] sm:$0xff]
        %v486 = vld [vmem:[%s2 + $0x10] sm:$0xff]
        %v487 = vld [vmem:[%s2 + $0x18] sm:$0xff]
        %v488 = vld [vmem:[%s2 + $0x20] sm:$0xff]
        %v489 = vld [vmem:[%s2 + $0x28] sm:$0xff]
        %v490 = vld [vmem:[%s3] sm:$0xff]
        %v491 = vld [vmem:[%s3 + $0x8] sm:$0xff]
        %v492 = vld [vmem:[%s3 + $0x10] sm:$0xff]
        %v493 = vld [vmem:[%s3 + $0x18] sm:$0xff]
        %v494 = vld [vmem:[%s3 + $0x20] sm:$0xff]
        %v495 = vld [vmem:[%s3 + $0x28] sm:$0xff]
        %v496 = vld [vmem:[%s3 + $0x30] sm:$0xff]
        %v497 = vld [vmem:[%s3 + $0x38] sm:$0xff]
        %v498 = vld [vmem:[%s3 + $0x40] sm:$0xff]
        %v499 = vld [vmem:[%s3 + $0x48] sm:$0xff]
        %v500 = vld [vmem:[%s3 + $0x50] sm:$0xff]
        %v501 = vld [vmem:[%s3 + $0x58] sm:$0xff]
        %v502 = vld [vmem:[%s3 + $0x60] sm:$0xff]
        %v503 = vld [vmem:[%s3 + $0x68] sm:$0xff]
        %v504 = vld [vmem:[%s3 + $0x70] sm:$0xff]
        %v505 = vld [vmem:[%s3 + $0x78] sm:$0xff]
        %v506 = vld [vmem:[%s3 + $0x80] sm:$0xff]
        %v507 = vld [vmem:[%s3 + $0x88] sm:$0xff]
        %v508 = vld [vmem:[%s3 + $0x90] sm:$0xff]
        %v509 = vld [vmem:[%s3 + $0x98] sm:$0xff]
        %v510 = vld [vmem:[%s3 + $0xa0] sm:$0xff]
        %v511 = vld [vmem:[%s3 + $0xa8] sm:$0xff]
        %v512 = vld [vmem:[%s3 + $0xb0] sm:$0xff]
        %v513 = vld [vmem:[%s3 + $0xb8] sm:$0xff]
        %v514 = vld [vmem:[%s3 + $0xc0] sm:$0xff]
        %v515 = vld [vmem:[%s3 + $0xc8] sm:$0xff]
        %v516 = vld [vmem:[%s3 + $0xd0] sm:$0xff]
        %v517 = vld [vmem:[%s3 + $0xd8] sm:$0xff]
        %v518 = vld [vmem:[%s3 + $0xe0] sm:$0xff]
        %v519 = vld [vmem:[%s3 + $0xe8] sm:$0xff]
        %v520 = vld [vmem:[%s3 + $0xf0] sm:$0xff]
        %v521 = vld [vmem:[%s3 + $0xf8] sm:$0xff]
        %v522 = vld [vmem:[%s3 + $0x100] sm:$0xff]
        %v523 = vld [vmem:[%s3 + $0x108] sm:$0xff]
        %v524 = vld [vmem:[%s3 + $0x110] sm:$0xff]
        %v525 = vld [vmem:[%s3 + $0x118] sm:$0xff]
        %v526 = vld [vmem:[%s3 + $0x120] sm:$0xff]
        %v527 = vld [vmem:[%s3 + $0x128] sm:$0xff]
        %v528 = vld [vmem:[%s3 + $0x130] sm:$0xff]
        %v529 = vld [vmem:[%s3 + $0x138] sm:$0xff]
        %v530 = vld [vmem:[%s3 + $0x140] sm:$0xff]
        %v531 = vld [vmem:[%s3 + $0x148] sm:$0xff]
        %v532 = vld [vmem:[%s3 + $0x150] sm:$0xff]
        %v533 = vld [vmem:[%s3 + $0x158] sm:$0xff]
        %v534 = vld [vmem:[%s3 + $0x160] sm:$0xff]
        %v535 = vld [vmem:[%s3 + $0x168] sm:$0xff]
        %v536 = vld [vmem:[%s3 + $0x170] sm:$0xff]
        %v537 = vld [vmem:[%s3 + $0x178] sm:$0xff]
        %v538 = vld [vmem:[%s4] sm:$0x1]
        %v539 = vld [vmem:[%s473] sm:$0xff]
        %v540 = vld [vmem:[%s473 + $0x8] sm:$0xff]
        %541 = vset.pattern.permute.xlu0 0
        %542 = vperm.xlu0 %541, %v539
        %v543 = vpop.permute.xlu0 %542
        %544 = vset.pattern.permute.xlu0 0
        %545 = vperm.xlu0 %544, %v540
        %v546 = vpop.permute.xlu0 %545
        %s547 = smul.u32 %s26, 16
        %v548 = vld [vmem:[#allocation2] sm:$0xff]
        %v549 = vld [vmem:[#allocation2 + $0x8] sm:$0xff]
        %v550 = vld [vmem:[%s435] sm:$0xff]
        %v551 = vld [vmem:[%s435 + $0x8] sm:$0xff]
        %vm552 = vcmask 130048
        %v554 = vsel %vm552, %v550, 0
        %v557 = vsel %vm552, %v551, 0
        %559 = vmatprep.subr.mxu0 %v485
        %560 = vmatpush1.msra.mxu0 %v484
        %561 = vmatprep.subr.mxu0 %v488
        %562 = vmatpush1.msra.mxu0 %v487
        %563 = vmatprep.subr.mxu0 0.0
        %564 = vmatpush1.msra.mxu0 0.0
        %565 = vmatprep.subr.mxu0 0.0
        %566 = vmatpush1.msra.mxu0 0.0
        %567 = vmatprep.subr.mxu0 0.0
        %568 = vmatpush1.msra.mxu0 0.0
        %569 = vmatprep.subr.mxu0 0.0
        %570 = vmatpush1.msra.mxu0 0.0
        %571 = vmatprep.subr.mxu0 0.0
        %572 = vmatpush1.msra.mxu0 0.0
        %573 = vmatprep.subr.mxu0 0.0
        %574 = vmatpush1.msra.mxu0 0.0
        %575 = vmatprep.subr.mxu0 0.0
        %576 = vmatpush1.msra.mxu0 0.0
        %577 = vmatprep.subr.mxu0 0.0
        %578 = vmatpush1.msra.mxu0 0.0
        %579 = vmatprep.subr.mxu0 0.0
        %580 = vmatpush1.msra.mxu0 0.0
        %581 = vmatprep.subr.mxu0 0.0
        %582 = vmatpush1.msra.mxu0 0.0
        %583 = vmatprep.subr.mxu0 0.0
        %584 = vmatpush1.msra.mxu0 0.0
        %585 = vmatprep.subr.mxu0 0.0
        %586 = vmatpush1.msra.mxu0 0.0
        %587 = vmatprep.subr.mxu0 0.0
        %588 = vmatpush1.msra.mxu0 0.0
        %589 = vmatprep.subr.mxu0 0.0
        %590 = vmatpush1.msra.mxu0 0.0
        %591 = vmatprep.subr.mxu0 0.0
        %592 = vmatpush1.msra.mxu0 0.0
        %593 = vmatprep.subr.mxu0 0.0
        %594 = vmatpush1.msra.mxu0 0.0
        %595 = vmatprep.subr.mxu0 0.0
        %596 = vmatpush1.msra.mxu0 0.0
        %597 = vmatprep.subr.mxu0 0.0
        %598 = vmatpush1.msra.mxu0 0.0
        %599 = vmatprep.subr.mxu0 0.0
        %600 = vmatpush1.msra.mxu0 0.0
        %601 = vmatprep.subr.mxu0 0.0
        %602 = vmatpush1.msra.mxu0 0.0
        %603 = vmatprep.subr.mxu0 0.0
        %604 = vmatpush1.msra.mxu0 0.0
        %605 = vmatprep.subr.mxu0 0.0
        %606 = vmatpush1.msra.mxu0 0.0
        %607 = vmatprep.subr.mxu0 0.0
        %608 = vmatpush1.msra.mxu0 0.0
        %609 = vmatprep.subr.mxu0 0.0
        %610 = vmatpush1.msra.mxu0 0.0
        %611 = vmatprep.subr.mxu0 0.0
        %612 = vmatpush1.msra.mxu0 0.0
        %613 = vmatprep.subr.mxu0 0.0
        %614 = vmatpush1.msra.mxu0 0.0
        %615 = vmatprep.subr.mxu0 0.0
        %616 = vmatpush1.msra.mxu0 0.0
        %617 = vmatprep.subr.mxu0 0.0
        %618 = vmatpush1.msra.mxu0 0.0
        %619 = vmatprep.subr.mxu0 0.0
        %620 = vmatpush1.msra.mxu0 0.0
        %621 = vmatprep.subr.mxu0 0.0
        %622 = vmatpush1.msra.mxu0 0.0
        %623 = vmatprep.mubr.f32.mxu0 0.0
        %624 = vmatmul.mubr.f32.gmra.mrb[0].mxu0 %v554
        %v625 = vpop.f32.mrb[0].mxu0
        %v626 = vadd.f32 0.0, %v625
        %v627 = vpop.f32.mrb[0].mxu0
        %v628 = vadd.f32 0.0, %v627
        %629 = vmatprep.mubr.f32.mxu0 0.0
        %630 = vmatmul.mubr.f32.gmra.mrb[0].mxu0 %v557
        %v631 = vpop.f32.mrb[0].mxu0
        %v632 = vadd.f32 0.0, %v631
        %v633 = vpop.f32.mrb[0].mxu0
        %v634 = vadd.f32 0.0, %v633
        %635 = vdwg.mxu0
        %636 = vmatprep.subr.mxu0 0.0
        %637 = vmatpush1.msra.mxu0 %v486
        %638 = vmatprep.subr.mxu0 0.0
        %639 = vmatpush1.msra.mxu0 %v489
        %640 = vmatprep.subr.mxu0 0.0
        %641 = vmatpush1.msra.mxu0 0.0
        %642 = vmatprep.subr.mxu0 0.0
        %643 = vmatpush1.msra.mxu0 0.0
        %644 = vmatprep.subr.mxu0 0.0
        %645 = vmatpush1.msra.mxu0 0.0
        %646 = vmatprep.subr.mxu0 0.0
        %647 = vmatpush1.msra.mxu0 0.0
        %648 = vmatprep.subr.mxu0 0.0
        %649 = vmatpush1.msra.mxu0 0.0
        %650 = vmatprep.subr.mxu0 0.0
        %651 = vmatpush1.msra.mxu0 0.0
        %652 = vmatprep.subr.mxu0 0.0
        %653 = vmatpush1.msra.mxu0 0.0
        %654 = vmatprep.subr.mxu0 0.0
        %655 = vmatpush1.msra.mxu0 0.0
        %656 = vmatprep.subr.mxu0 0.0
        %657 = vmatpush1.msra.mxu0 0.0
        %658 = vmatprep.subr.mxu0 0.0
        %659 = vmatpush1.msra.mxu0 0.0
        %660 = vmatprep.subr.mxu0 0.0
        %661 = vmatpush1.msra.mxu0 0.0
        %662 = vmatprep.subr.mxu0 0.0
        %663 = vmatpush1.msra.mxu0 0.0
        %664 = vmatprep.subr.mxu0 0.0
        %665 = vmatpush1.msra.mxu0 0.0
        %666 = vmatprep.subr.mxu0 0.0
        %667 = vmatpush1.msra.mxu0 0.0
        %668 = vmatprep.subr.mxu0 0.0
        %669 = vmatpush1.msra.mxu0 0.0
        %670 = vmatprep.subr.mxu0 0.0
        %671 = vmatpush1.msra.mxu0 0.0
        %672 = vmatprep.subr.mxu0 0.0
        %673 = vmatpush1.msra.mxu0 0.0
        %674 = vmatprep.subr.mxu0 0.0
        %675 = vmatpush1.msra.mxu0 0.0
        %676 = vmatprep.subr.mxu0 0.0
        %677 = vmatpush1.msra.mxu0 0.0
        %678 = vmatprep.subr.mxu0 0.0
        %679 = vmatpush1.msra.mxu0 0.0
        %680 = vmatprep.subr.mxu0 0.0
        %681 = vmatpush1.msra.mxu0 0.0
        %682 = vmatprep.subr.mxu0 0.0
        %683 = vmatpush1.msra.mxu0 0.0
        %684 = vmatprep.subr.mxu0 0.0
        %685 = vmatpush1.msra.mxu0 0.0
        %686 = vmatprep.subr.mxu0 0.0
        %687 = vmatpush1.msra.mxu0 0.0
        %688 = vmatprep.subr.mxu0 0.0
        %689 = vmatpush1.msra.mxu0 0.0
        %690 = vmatprep.subr.mxu0 0.0
        %691 = vmatpush1.msra.mxu0 0.0
        %692 = vmatprep.subr.mxu0 0.0
        %693 = vmatpush1.msra.mxu0 0.0
        %694 = vmatprep.subr.mxu0 0.0
        %695 = vmatpush1.msra.mxu0 0.0
        %696 = vmatprep.subr.mxu0 0.0
        %697 = vmatpush1.msra.mxu0 0.0
        %698 = vmatprep.subr.mxu0 0.0
        %699 = vmatpush1.msra.mxu0 0.0
        %700 = vmatprep.mubr.f32.mxu0 0.0
        %701 = vmatmul.mubr.f32.gmra.mrb[0].mxu0 %v554
        %v702 = vpop.f32.mrb[0].mxu0
        %v703 = vadd.f32 0.0, %v702
        %v704 = vpop.f32.mrb[0].mxu0
        %705 = vmatprep.mubr.f32.mxu0 0.0
        %706 = vmatmul.mubr.f32.gmra.mrb[0].mxu0 %v557
        %v707 = vpop.f32.mrb[0].mxu0
        %v708 = vadd.f32 0.0, %v707
        %v709 = vpop.f32.mrb[0].mxu0
        %710 = vdwg.mxu0
        %711 = vmatprep.subr.mxu0 %v491
        %712 = vmatpush1.msra.mxu0 %v490
        %713 = vmatprep.subr.mxu0 %v494
        %714 = vmatpush1.msra.mxu0 %v493
        %715 = vmatprep.subr.mxu0 %v497
        %716 = vmatpush1.msra.mxu0 %v496
        %717 = vmatprep.subr.mxu0 %v500
        %718 = vmatpush1.msra.mxu0 %v499
        %719 = vmatprep.subr.mxu0 %v503
        %720 = vmatpush1.msra.mxu0 %v502
        %721 = vmatprep.subr.mxu0 %v506
        %722 = vmatpush1.msra.mxu0 %v505
        %723 = vmatprep.subr.mxu0 %v509
        %724 = vmatpush1.msra.mxu0 %v508
        %725 = vmatprep.subr.mxu0 %v512
        %726 = vmatpush1.msra.mxu0 %v511
        %727 = vmatprep.subr.mxu0 %v515
        %728 = vmatpush1.msra.mxu0 %v514
        %729 = vmatprep.subr.mxu0 %v518
        %730 = vmatpush1.msra.mxu0 %v517
        %731 = vmatprep.subr.mxu0 %v521
        %732 = vmatpush1.msra.mxu0 %v520
        %733 = vmatprep.subr.mxu0 %v524
        %734 = vmatpush1.msra.mxu0 %v523
        %735 = vmatprep.subr.mxu0 %v527
        %736 = vmatpush1.msra.mxu0 %v526
        %737 = vmatprep.subr.mxu0 %v530
        %738 = vmatpush1.msra.mxu0 %v529
        %739 = vmatprep.subr.mxu0 %v533
        %740 = vmatpush1.msra.mxu0 %v532
        %741 = vmatprep.subr.mxu0 %v536
        %742 = vmatpush1.msra.mxu0 %v535
        %743 = vmatprep.subr.mxu0 0.0
        %744 = vmatpush1.msra.mxu0 0.0
        %745 = vmatprep.subr.mxu0 0.0
        %746 = vmatpush1.msra.mxu0 0.0
        %747 = vmatprep.subr.mxu0 0.0
        %748 = vmatpush1.msra.mxu0 0.0
        %749 = vmatprep.subr.mxu0 0.0
        %750 = vmatpush1.msra.mxu0 0.0
        %751 = vmatprep.subr.mxu0 0.0
        %752 = vmatpush1.msra.mxu0 0.0
        %753 = vmatprep.subr.mxu0 0.0
        %754 = vmatpush1.msra.mxu0 0.0
        %755 = vmatprep.subr.mxu0 0.0
        %756 = vmatpush1.msra.mxu0 0.0
        %757 = vmatprep.subr.mxu0 0.0
        %758 = vmatpush1.msra.mxu0 0.0
        %759 = vmatprep.subr.mxu0 0.0
        %760 = vmatpush1.msra.mxu0 0.0
        %761 = vmatprep.subr.mxu0 0.0
        %762 = vmatpush1.msra.mxu0 0.0
        %763 = vmatprep.subr.mxu0 0.0
        %764 = vmatpush1.msra.mxu0 0.0
        %765 = vmatprep.subr.mxu0 0.0
        %766 = vmatpush1.msra.mxu0 0.0
        %767 = vmatprep.subr.mxu0 0.0
        %768 = vmatpush1.msra.mxu0 0.0
        %769 = vmatprep.subr.mxu0 0.0
        %770 = vmatpush1.msra.mxu0 0.0
        %771 = vmatprep.subr.mxu0 0.0
        %772 = vmatpush1.msra.mxu0 0.0
        %773 = vmatprep.subr.mxu0 0.0
        %774 = vmatpush1.msra.mxu0 0.0
        %775 = vmatprep.mubr.f32.mxu0 0.0
        %776 = vmatmul.mubr.f32.gmra.mrb[0].mxu0 %v548
        %v777 = vpop.f32.mrb[0].mxu0
        %v778 = vadd.f32 0.0, %v777
        %v779 = vpop.f32.mrb[0].mxu0
        %v780 = vadd.f32 0.0, %v779
        %781 = vmatprep.mubr.f32.mxu0 0.0
        %782 = vmatmul.mubr.f32.gmra.mrb[0].mxu0 %v549
        %v783 = vpop.f32.mrb[0].mxu0
        %v784 = vadd.f32 0.0, %v783
        %v785 = vpop.f32.mrb[0].mxu0
        %v786 = vadd.f32 0.0, %v785
        %787 = vdwg.mxu0
        %788 = vmatprep.subr.mxu0 0.0
        %789 = vmatpush1.msra.mxu0 %v492
        %790 = vmatprep.subr.mxu0 0.0
        %791 = vmatpush1.msra.mxu0 %v495
        %792 = vmatprep.subr.mxu0 0.0
        %793 = vmatpush1.msra.mxu0 %v498
        %794 = vmatprep.subr.mxu0 0.0
        %795 = vmatpush1.msra.mxu0 %v501
        %796 = vmatprep.subr.mxu0 0.0
        %797 = vmatpush1.msra.mxu0 %v504
        %798 = vmatprep.subr.mxu0 0.0
        %799 = vmatpush1.msra.mxu0 %v507
        %800 = vmatprep.subr.mxu0 0.0
        %801 = vmatpush1.msra.mxu0 %v510
        %802 = vmatprep.subr.mxu0 0.0
        %803 = vmatpush1.msra.mxu0 %v513
        %804 = vmatprep.subr.mxu0 0.0
        %805 = vmatpush1.msra.mxu0 %v516
        %806 = vmatprep.subr.mxu0 0.0
        %807 = vmatpush1.msra.mxu0 %v519
        %808 = vmatprep.subr.mxu0 0.0
        %809 = vmatpush1.msra.mxu0 %v522
        %810 = vmatprep.subr.mxu0 0.0
        %811 = vmatpush1.msra.mxu0 %v525
        %812 = vmatprep.subr.mxu0 0.0
        %813 = vmatpush1.msra.mxu0 %v528
        %814 = vmatprep.subr.mxu0 0.0
        %815 = vmatpush1.msra.mxu0 %v531
        %816 = vmatprep.subr.mxu0 0.0
        %817 = vmatpush1.msra.mxu0 %v534
        %818 = vmatprep.subr.mxu0 0.0
        %819 = vmatpush1.msra.mxu0 %v537
        %820 = vmatprep.subr.mxu0 0.0
        %821 = vmatpush1.msra.mxu0 0.0
        %822 = vmatprep.subr.mxu0 0.0
        %823 = vmatpush1.msra.mxu0 0.0
        %824 = vmatprep.subr.mxu0 0.0
        %825 = vmatpush1.msra.mxu0 0.0
        %826 = vmatprep.subr.mxu0 0.0
        %827 = vmatpush1.msra.mxu0 0.0
        %828 = vmatprep.subr.mxu0 0.0
        %829 = vmatpush1.msra.mxu0 0.0
        %830 = vmatprep.subr.mxu0 0.0
        %831 = vmatpush1.msra.mxu0 0.0
        %832 = vmatprep.subr.mxu0 0.0
        %833 = vmatpush1.msra.mxu0 0.0
        %834 = vmatprep.subr.mxu0 0.0
        %835 = vmatpush1.msra.mxu0 0.0
        %836 = vmatprep.subr.mxu0 0.0
        %837 = vmatpush1.msra.mxu0 0.0
        %838 = vmatprep.subr.mxu0 0.0
        %839 = vmatpush1.msra.mxu0 0.0
        %840 = vmatprep.subr.mxu0 0.0
        %841 = vmatpush1.msra.mxu0 0.0
        %842 = vmatprep.subr.mxu0 0.0
        %843 = vmatpush1.msra.mxu0 0.0
        %844 = vmatprep.subr.mxu0 0.0
        %845 = vmatpush1.msra.mxu0 0.0
        %846 = vmatprep.subr.mxu0 0.0
        %847 = vmatpush1.msra.mxu0 0.0
        %848 = vmatprep.subr.mxu0 0.0
        %849 = vmatpush1.msra.mxu0 0.0
        %850 = vmatprep.subr.mxu0 0.0
        %851 = vmatpush1.msra.mxu0 0.0
        %852 = vmatprep.mubr.f32.mxu0 0.0
        %853 = vmatmul.mubr.f32.gmra.mrb[0].mxu0 %v548
        %v854 = vpop.f32.mrb[0].mxu0
        %v855 = vadd.f32 0.0, %v854
        %v856 = vpop.f32.mrb[0].mxu0
        %857 = vmatprep.mubr.f32.mxu0 0.0
        %858 = vmatmul.mubr.f32.gmra.mrb[0].mxu0 %v549
        %v859 = vpop.f32.mrb[0].mxu0
        %v860 = vadd.f32 0.0, %v859
        %v861 = vpop.f32.mrb[0].mxu0
        %862 = vdwg.mxu0
        %v863 = vadd.f32 %v626, %v778
        %v864 = vadd.f32 %v632, %v784
        %v865 = vxor.u32 %v863, 2147483648
        %v866 = vxor.u32 %v864, 2147483648
        %v867 = vmul.f32 %v865, 1.442695
        %v868 = vpow.pop %v867
        %v869 = vmul.f32 %v866, 1.442695
        %v870 = vpow.pop %v869
        %v871 = vadd.f32 %v868, 1.0
        %v872 = vadd.f32 %v870, 1.0
        %v873 = vrcp.pop %v871
        %v874 = vmul.f32 1.0, %v873
        %v875 = vrcp.pop %v872
        %v876 = vmul.f32 1.0, %v875
        %v877 = vadd.f32 %v628, %v780
        %v878 = vadd.f32 %v634, %v786
        %v879 = vxor.u32 %v877, 2147483648
        %v880 = vxor.u32 %v878, 2147483648
        %v881 = vmul.f32 %v879, 1.442695
        %v882 = vpow.pop %v881
        %v883 = vmul.f32 %v880, 1.442695
        %v884 = vpow.pop %v883
        %v885 = vadd.f32 %v882, 1.0
        %v886 = vadd.f32 %v884, 1.0
        %v887 = vrcp.pop %v885
        %v888 = vmul.f32 1.0, %v887
        %v889 = vrcp.pop %v886
        %v890 = vmul.f32 1.0, %v889
        %v892 = vlaneseq
        %v893 = vshrl.u32 %v892, 7
        %v894 = vsub.s32 0, %v893
        %v895 = vrot.slane %v538, %v894
        %v897 = vadd.f32 %v855, %v895
        %v898 = vadd.f32 %v860, %v895
        %v899 = vmul.f32 %v874, %v897
        %v900 = vmul.f32 %v876, %v898
        %v901 = vadd.f32 %v703, %v899
        %v902 = vadd.f32 %v708, %v900
        %v903 = vtanh.pop %v901
        %v904 = vtanh.pop %v902
        %v905 = vsub.f32 1.0, %v888
        %v906 = vsub.f32 1.0, %v890
        %v907 = vmul.f32 %v905, %v903
        %v908 = vmul.f32 %v906, %v904
        %v909 = vmul.f32 %v888, %v548
        %v910 = vmul.f32 %v890, %v549
        %v911 = vadd.f32 %v907, %v909
        %v912 = vadd.f32 %v908, %v910
        %v913 = vstv %s547
        %vm914 = vcmp.lt.s32.totalorder %v913, %v543
        %vm915 = vcmp.lt.s32.totalorder %v913, %v546
        %v916 = vsel %vm914, %v911, %v548
        %v917 = vsel %vm915, %v912, %v549
        %s918 = scalar_lea.vmem %s435, 16 [#allocation3]
        %v919 = vld [vmem:[%s918] sm:$0xff]
        %v920 = vld [vmem:[%s918 + $0x8] sm:$0xff]
        %v922 = vsel %vm552, %v919, 0
        %v925 = vsel %vm552, %v920, 0
        %927 = vmatprep.subr.mxu0 %v485
        %928 = vmatpush1.msra.mxu0 %v484
        %929 = vmatprep.subr.mxu0 %v488
        %930 = vmatpush1.msra.mxu0 %v487
        %931 = vmatprep.subr.mxu0 0.0
        %932 = vmatpush1.msra.mxu0 0.0
        %933 = vmatprep.subr.mxu0 0.0
        %934 = vmatpush1.msra.mxu0 0.0
        %935 = vmatprep.subr.mxu0 0.0
        %936 = vmatpush1.msra.mxu0 0.0
        %937 = vmatprep.subr.mxu0 0.0
        %938 = vmatpush1.msra.mxu0 0.0
        %939 = vmatprep.subr.mxu0 0.0
        %940 = vmatpush1.msra.mxu0 0.0
        %941 = vmatprep.subr.mxu0 0.0
        %942 = vmatpush1.msra.mxu0 0.0
        %943 = vmatprep.subr.mxu0 0.0
        %944 = vmatpush1.msra.mxu0 0.0
        %945 = vmatprep.subr.mxu0 0.0
        %946 = vmatpush1.msra.mxu0 0.0
        %947 = vmatprep.subr.mxu0 0.0
        %948 = vmatpush1.msra.mxu0 0.0
        %949 = vmatprep.subr.mxu0 0.0
        %950 = vmatpush1.msra.mxu0 0.0
        %951 = vmatprep.subr.mxu0 0.0
        %952 = vmatpush1.msra.mxu0 0.0
        %953 = vmatprep.subr.mxu0 0.0
        %954 = vmatpush1.msra.mxu0 0.0
        %955 = vmatprep.subr.mxu0 0.0
        %956 = vmatpush1.msra.mxu0 0.0
        %957 = vmatprep.subr.mxu0 0.0
        %958 = vmatpush1.msra.mxu0 0.0
        %959 = vmatprep.subr.mxu0 0.0
        %960 = vmatpush1.msra.mxu0 0.0
        %961 = vmatprep.subr.mxu0 0.0
        %962 = vmatpush1.msra.mxu0 0.0
        %963 = vmatprep.subr.mxu0 0.0
        %964 = vmatpush1.msra.mxu0 0.0
        %965 = vmatprep.subr.mxu0 0.0
        %966 = vmatpush1.msra.mxu0 0.0
        %967 = vmatprep.subr.mxu0 0.0
        %968 = vmatpush1.msra.mxu0 0.0
        %969 = vmatprep.subr.mxu0 0.0
        %970 = vmatpush1.msra.mxu0 0.0
        %971 = vmatprep.subr.mxu0 0.0
        %972 = vmatpush1.msra.mxu0 0.0
        %973 = vmatprep.subr.mxu0 0.0
        %974 = vmatpush1.msra.mxu0 0.0
        %975 = vmatprep.subr.mxu0 0.0
        %976 = vmatpush1.msra.mxu0 0.0
        %977 = vmatprep.subr.mxu0 0.0
        %978 = vmatpush1.msra.mxu0 0.0
        %979 = vmatprep.subr.mxu0 0.0
        %980 = vmatpush1.msra.mxu0 0.0
        %981 = vmatprep.subr.mxu0 0.0
        %982 = vmatpush1.msra.mxu0 0.0
        %983 = vmatprep.subr.mxu0 0.0
        %984 = vmatpush1.msra.mxu0 0.0
        %985 = vmatprep.subr.mxu0 0.0
        %986 = vmatpush1.msra.mxu0 0.0
        %987 = vmatprep.subr.mxu0 0.0
        %988 = vmatpush1.msra.mxu0 0.0
        %989 = vmatprep.subr.mxu0 0.0
        %990 = vmatpush1.msra.mxu0 0.0
        %991 = vmatprep.mubr.f32.mxu0 0.0
        %992 = vmatmul.mubr.f32.gmra.mrb[0].mxu0 %v922
        %v993 = vpop.f32.mrb[0].mxu0
        %v994 = vadd.f32 0.0, %v993
        %v995 = vpop.f32.mrb[0].mxu0
        %v996 = vadd.f32 0.0, %v995
        %997 = vmatprep.mubr.f32.mxu0 0.0
        %998 = vmatmul.mubr.f32.gmra.mrb[0].mxu0 %v925
        %v999 = vpop.f32.mrb[0].mxu0
        %v1000 = vadd.f32 0.0, %v999
        %v1001 = vpop.f32.mrb[0].mxu0
        %v1002 = vadd.f32 0.0, %v1001
        %1003 = vdwg.mxu0
        %1004 = vmatprep.subr.mxu0 0.0
        %1005 = vmatpush1.msra.mxu0 %v486
        %1006 = vmatprep.subr.mxu0 0.0
        %1007 = vmatpush1.msra.mxu0 %v489
        %1008 = vmatprep.subr.mxu0 0.0
        %1009 = vmatpush1.msra.mxu0 0.0
        %1010 = vmatprep.subr.mxu0 0.0
        %1011 = vmatpush1.msra.mxu0 0.0
        %1012 = vmatprep.subr.mxu0 0.0
        %1013 = vmatpush1.msra.mxu0 0.0
        %1014 = vmatprep.subr.mxu0 0.0
        %1015 = vmatpush1.msra.mxu0 0.0
        %1016 = vmatprep.subr.mxu0 0.0
        %1017 = vmatpush1.msra.mxu0 0.0
        %1018 = vmatprep.subr.mxu0 0.0
        %1019 = vmatpush1.msra.mxu0 0.0
        %1020 = vmatprep.subr.mxu0 0.0
        %1021 = vmatpush1.msra.mxu0 0.0
        %1022 = vmatprep.subr.mxu0 0.0
        %1023 = vmatpush1.msra.mxu0 0.0
        %1024 = vmatprep.subr.mxu0 0.0
        %1025 = vmatpush1.msra.mxu0 0.0
        %1026 = vmatprep.subr.mxu0 0.0
        %1027 = vmatpush1.msra.mxu0 0.0
        %1028 = vmatprep.subr.mxu0 0.0
        %1029 = vmatpush1.msra.mxu0 0.0
        %1030 = vmatprep.subr.mxu0 0.0
        %1031 = vmatpush1.msra.mxu0 0.0
        %1032 = vmatprep.subr.mxu0 0.0
        %1033 = vmatpush1.msra.mxu0 0.0
        %1034 = vmatprep.subr.mxu0 0.0
        %1035 = vmatpush1.msra.mxu0 0.0
        %1036 = vmatprep.subr.mxu0 0.0
        %1037 = vmatpush1.msra.mxu0 0.0
        %1038 = vmatprep.subr.mxu0 0.0
        %1039 = vmatpush1.msra.mxu0 0.0
        %1040 = vmatprep.subr.mxu0 0.0
        %1041 = vmatpush1.msra.mxu0 0.0
        %1042 = vmatprep.subr.mxu0 0.0
        %1043 = vmatpush1.msra.mxu0 0.0
        %1044 = vmatprep.subr.mxu0 0.0
        %1045 = vmatpush1.msra.mxu0 0.0
        %1046 = vmatprep.subr.mxu0 0.0
        %1047 = vmatpush1.msra.mxu0 0.0
        %1048 = vmatprep.subr.mxu0 0.0
        %1049 = vmatpush1.msra.mxu0 0.0
        %1050 = vmatprep.subr.mxu0 0.0
        %1051 = vmatpush1.msra.mxu0 0.0
        %1052 = vmatprep.subr.mxu0 0.0
        %1053 = vmatpush1.msra.mxu0 0.0
        %1054 = vmatprep.subr.mxu0 0.0
        %1055 = vmatpush1.msra.mxu0 0.0
        %1056 = vmatprep.subr.mxu0 0.0
        %1057 = vmatpush1.msra.mxu0 0.0
        %1058 = vmatprep.subr.mxu0 0.0
        %1059 = vmatpush1.msra.mxu0 0.0
        %1060 = vmatprep.subr.mxu0 0.0
        %1061 = vmatpush1.msra.mxu0 0.0
        %1062 = vmatprep.subr.mxu0 0.0
        %1063 = vmatpush1.msra.mxu0 0.0
        %1064 = vmatprep.subr.mxu0 0.0
        %1065 = vmatpush1.msra.mxu0 0.0
        %1066 = vmatprep.subr.mxu0 0.0
        %1067 = vmatpush1.msra.mxu0 0.0
        %1068 = vmatprep.mubr.f32.mxu0 0.0
        %1069 = vmatmul.mubr.f32.gmra.mrb[0].mxu0 %v922
        %v1070 = vpop.f32.mrb[0].mxu0
        %v1071 = vadd.f32 0.0, %v1070
        %v1072 = vpop.f32.mrb[0].mxu0
        %1073 = vmatprep.mubr.f32.mxu0 0.0
        %1074 = vmatmul.mubr.f32.gmra.mrb[0].mxu0 %v925
        %v1075 = vpop.f32.mrb[0].mxu0
        %v1076 = vadd.f32 0.0, %v1075
        %v1077 = vpop.f32.mrb[0].mxu0
        %1078 = vdwg.mxu0
        %1079 = vmatprep.subr.mxu0 %v491
        %1080 = vmatpush1.msra.mxu0 %v490
        %1081 = vmatprep.subr.mxu0 %v494
        %1082 = vmatpush1.msra.mxu0 %v493
        %1083 = vmatprep.subr.mxu0 %v497
        %1084 = vmatpush1.msra.mxu0 %v496
        %1085 = vmatprep.subr.mxu0 %v500
        %1086 = vmatpush1.msra.mxu0 %v499
        %1087 = vmatprep.subr.mxu0 %v503
        %1088 = vmatpush1.msra.mxu0 %v502
        %1089 = vmatprep.subr.mxu0 %v506
        %1090 = vmatpush1.msra.mxu0 %v505
        %1091 = vmatprep.subr.mxu0 %v509
        %1092 = vmatpush1.msra.mxu0 %v508
        %1093 = vmatprep.subr.mxu0 %v512
        %1094 = vmatpush1.msra.mxu0 %v511
        %1095 = vmatprep.subr.mxu0 %v515
        %1096 = vmatpush1.msra.mxu0 %v514
        %1097 = vmatprep.subr.mxu0 %v518
        %1098 = vmatpush1.msra.mxu0 %v517
        %1099 = vmatprep.subr.mxu0 %v521
        %1100 = vmatpush1.msra.mxu0 %v520
        %1101 = vmatprep.subr.mxu0 %v524
        %1102 = vmatpush1.msra.mxu0 %v523
        %1103 = vmatprep.subr.mxu0 %v527
        %1104 = vmatpush1.msra.mxu0 %v526
        %1105 = vmatprep.subr.mxu0 %v530
        %1106 = vmatpush1.msra.mxu0 %v529
        %1107 = vmatprep.subr.mxu0 %v533
        %1108 = vmatpush1.msra.mxu0 %v532
        %1109 = vmatprep.subr.mxu0 %v536
        %1110 = vmatpush1.msra.mxu0 %v535
        %1111 = vmatprep.subr.mxu0 0.0
        %1112 = vmatpush1.msra.mxu0 0.0
        %1113 = vmatprep.subr.mxu0 0.0
        %1114 = vmatpush1.msra.mxu0 0.0
        %1115 = vmatprep.subr.mxu0 0.0
        %1116 = vmatpush1.msra.mxu0 0.0
        %1117 = vmatprep.subr.mxu0 0.0
        %1118 = vmatpush1.msra.mxu0 0.0
        %1119 = vmatprep.subr.mxu0 0.0
        %1120 = vmatpush1.msra.mxu0 0.0
        %1121 = vmatprep.subr.mxu0 0.0
        %1122 = vmatpush1.msra.mxu0 0.0
        %1123 = vmatprep.subr.mxu0 0.0
        %1124 = vmatpush1.msra.mxu0 0.0
        %1125 = vmatprep.subr.mxu0 0.0
        %1126 = vmatpush1.msra.mxu0 0.0
        %1127 = vmatprep.subr.mxu0 0.0
        %1128 = vmatpush1.msra.mxu0 0.0
        %1129 = vmatprep.subr.mxu0 0.0
        %1130 = vmatpush1.msra.mxu0 0.0
        %1131 = vmatprep.subr.mxu0 0.0
        %1132 = vmatpush1.msra.mxu0 0.0
        %1133 = vmatprep.subr.mxu0 0.0
        %1134 = vmatpush1.msra.mxu0 0.0
        %1135 = vmatprep.subr.mxu0 0.0
        %1136 = vmatpush1.msra.mxu0 0.0
        %1137 = vmatprep.subr.mxu0 0.0
        %1138 = vmatpush1.msra.mxu0 0.0
        %1139 = vmatprep.subr.mxu0 0.0
        %1140 = vmatpush1.msra.mxu0 0.0
        %1141 = vmatprep.subr.mxu0 0.0
        %1142 = vmatpush1.msra.mxu0 0.0
        %1143 = vmatprep.mubr.f32.mxu0 0.0
        %1144 = vmatmul.mubr.f32.gmra.mrb[0].mxu0 %v916
        %v1145 = vpop.f32.mrb[0].mxu0
        %v1146 = vadd.f32 0.0, %v1145
        %v1147 = vpop.f32.mrb[0].mxu0
        %v1148 = vadd.f32 0.0, %v1147
        %1149 = vmatprep.mubr.f32.mxu0 0.0
        %1150 = vmatmul.mubr.f32.gmra.mrb[0].mxu0 %v917
        %v1151 = vpop.f32.mrb[0].mxu0
        %v1152 = vadd.f32 0.0, %v1151
        %v1153 = vpop.f32.mrb[0].mxu0
        %v1154 = vadd.f32 0.0, %v1153
        %1155 = vdwg.mxu0
        %1156 = vmatprep.subr.mxu0 0.0
        %1157 = vmatpush1.msra.mxu0 %v492
        %1158 = vmatprep.subr.mxu0 0.0
        %1159 = vmatpush1.msra.mxu0 %v495
        %1160 = vmatprep.subr.mxu0 0.0
        %1161 = vmatpush1.msra.mxu0 %v498
        %1162 = vmatprep.subr.mxu0 0.0
        %1163 = vmatpush1.msra.mxu0 %v501
        %1164 = vmatprep.subr.mxu0 0.0
        %1165 = vmatpush1.msra.mxu0 %v504
        %1166 = vmatprep.subr.mxu0 0.0
        %1167 = vmatpush1.msra.mxu0 %v507
        %1168 = vmatprep.subr.mxu0 0.0
        %1169 = vmatpush1.msra.mxu0 %v510
        %1170 = vmatprep.subr.mxu0 0.0
        %1171 = vmatpush1.msra.mxu0 %v513
        %1172 = vmatprep.subr.mxu0 0.0
        %1173 = vmatpush1.msra.mxu0 %v516
        %1174 = vmatprep.subr.mxu0 0.0
        %1175 = vmatpush1.msra.mxu0 %v519
        %1176 = vmatprep.subr.mxu0 0.0
        %1177 = vmatpush1.msra.mxu0 %v522
        %1178 = vmatprep.subr.mxu0 0.0
        %1179 = vmatpush1.msra.mxu0 %v525
        %1180 = vmatprep.subr.mxu0 0.0
        %1181 = vmatpush1.msra.mxu0 %v528
        %1182 = vmatprep.subr.mxu0 0.0
        %1183 = vmatpush1.msra.mxu0 %v531
        %1184 = vmatprep.subr.mxu0 0.0
        %1185 = vmatpush1.msra.mxu0 %v534
        %1186 = vmatprep.subr.mxu0 0.0
        %1187 = vmatpush1.msra.mxu0 %v537
        %1188 = vmatprep.subr.mxu0 0.0
        %1189 = vmatpush1.msra.mxu0 0.0
        %1190 = vmatprep.subr.mxu0 0.0
        %1191 = vmatpush1.msra.mxu0 0.0
        %1192 = vmatprep.subr.mxu0 0.0
        %1193 = vmatpush1.msra.mxu0 0.0
        %1194 = vmatprep.subr.mxu0 0.0
        %1195 = vmatpush1.msra.mxu0 0.0
        %1196 = vmatprep.subr.mxu0 0.0
        %1197 = vmatpush1.msra.mxu0 0.0
        %1198 = vmatprep.subr.mxu0 0.0
        %1199 = vmatpush1.msra.mxu0 0.0
        %1200 = vmatprep.subr.mxu0 0.0
        %1201 = vmatpush1.msra.mxu0 0.0
        %1202 = vmatprep.subr.mxu0 0.0
        %1203 = vmatpush1.msra.mxu0 0.0
        %1204 = vmatprep.subr.mxu0 0.0
        %1205 = vmatpush1.msra.mxu0 0.0
        %1206 = vmatprep.subr.mxu0 0.0
        %1207 = vmatpush1.msra.mxu0 0.0
        %1208 = vmatprep.subr.mxu0 0.0
        %1209 = vmatpush1.msra.mxu0 0.0
        %1210 = vmatprep.subr.mxu0 0.0
        %1211 = vmatpush1.msra.mxu0 0.0
        %1212 = vmatprep.subr.mxu0 0.0
        %1213 = vmatpush1.msra.mxu0 0.0
        %1214 = vmatprep.subr.mxu0 0.0
        %1215 = vmatpush1.msra.mxu0 0.0
        %1216 = vmatprep.subr.mxu0 0.0
        %1217 = vmatpush1.msra.mxu0 0.0
        %1218 = vmatprep.subr.mxu0 0.0
        %1219 = vmatpush1.msra.mxu0 0.0
        %1220 = vmatprep.mubr.f32.mxu0 0.0
        %1221 = vmatmul.mubr.f32.gmra.mrb[0].mxu0 %v916
        %v1222 = vpop.f32.mrb[0].mxu0
        %v1223 = vadd.f32 0.0, %v1222
        %v1224 = vpop.f32.mrb[0].mxu0
        %1225 = vmatprep.mubr.f32.mxu0 0.0
        %1226 = vmatmul.mubr.f32.gmra.mrb[0].mxu0 %v917
        %v1227 = vpop.f32.mrb[0].mxu0
        %v1228 = vadd.f32 0.0, %v1227
        %v1229 = vpop.f32.mrb[0].mxu0
        %1230 = vdwg.mxu0
        %v1231 = vadd.f32 %v994, %v1146
        %v1232 = vadd.f32 %v1000, %v1152
        %v1233 = vxor.u32 %v1231, 2147483648
        %v1234 = vxor.u32 %v1232, 2147483648
        %v1235 = vmul.f32 %v1233, 1.442695
        %v1236 = vpow.pop %v1235
        %v1237 = vmul.f32 %v1234, 1.442695
        %v1238 = vpow.pop %v1237
        %v1239 = vadd.f32 %v1236, 1.0
        %v1240 = vadd.f32 %v1238, 1.0
        %v1241 = vrcp.pop %v1239
        %v1242 = vmul.f32 1.0, %v1241
        %v1243 = vrcp.pop %v1240
        %v1244 = vmul.f32 1.0, %v1243
        %v1245 = vadd.f32 %v996, %v1148
        %v1246 = vadd.f32 %v1002, %v1154
        %v1247 = vxor.u32 %v1245, 2147483648
        %v1248 = vxor.u32 %v1246, 2147483648
        %v1249 = vmul.f32 %v1247, 1.442695
        %v1250 = vpow.pop %v1249
        %v1251 = vmul.f32 %v1248, 1.442695
        %v1252 = vpow.pop %v1251
        %v1253 = vadd.f32 %v1250, 1.0
        %v1254 = vadd.f32 %v1252, 1.0
        %v1255 = vrcp.pop %v1253
        %v1256 = vmul.f32 1.0, %v1255
        %v1257 = vrcp.pop %v1254
        %v1258 = vmul.f32 1.0, %v1257
        %v1259 = vadd.f32 %v1223, %v895
        %v1260 = vadd.f32 %v1228, %v895
        %v1261 = vmul.f32 %v1242, %v1259
        %v1262 = vmul.f32 %v1244, %v1260
        %v1263 = vadd.f32 %v1071, %v1261
        %v1264 = vadd.f32 %v1076, %v1262
        %v1265 = vtanh.pop %v1263
        %v1266 = vtanh.pop %v1264
        %v1267 = vsub.f32 1.0, %v1256
        %v1268 = vsub.f32 1.0, %v1258
        %v1269 = vmul.f32 %v1267, %v1265
        %v1270 = vmul.f32 %v1268, %v1266
        %v1271 = vmul.f32 %v1256, %v916
        %v1272 = vmul.f32 %v1258, %v917
        %v1273 = vadd.f32 %v1269, %v1271
        %v1274 = vadd.f32 %v1270, %v1272
        %s1275 = sadd.s32 %s547, 1
        %v1276 = vstv %s1275
        %vm1277 = vcmp.lt.s32.totalorder %v1276, %v543
        %vm1278 = vcmp.lt.s32.totalorder %v1276, %v546
        %v1279 = vsel %vm1277, %v1273, %v916
        %v1280 = vsel %vm1278, %v1274, %v917
        %s1281 = scalar_lea.vmem %s435, 32 [#allocation3]
        %v1282 = vld [vmem:[%s1281] sm:$0xff]
        %v1283 = vld [vmem:[%s1281 + $0x8] sm:$0xff]
        %v1285 = vsel %vm552, %v1282, 0
        %v1288 = vsel %vm552, %v1283, 0
        %1290 = vmatprep.subr.mxu0 %v485
        %1291 = vmatpush1.msra.mxu0 %v484
        %1292 = vmatprep.subr.mxu0 %v488
        %1293 = vmatpush1.msra.mxu0 %v487
        %1294 = vmatprep.subr.mxu0 0.0
        %1295 = vmatpush1.msra.mxu0 0.0
        %1296 = vmatprep.subr.mxu0 0.0
        %1297 = vmatpush1.msra.mxu0 0.0
        %1298 = vmatprep.subr.mxu0 0.0
        %1299 = vmatpush1.msra.mxu0 0.0
        %1300 = vmatprep.subr.mxu0 0.0
        %1301 = vmatpush1.msra.mxu0 0.0
        %1302 = vmatprep.subr.mxu0 0.0
        %1303 = vmatpush1.msra.mxu0 0.0
        %1304 = vmatprep.subr.mxu0 0.0
        %1305 = vmatpush1.msra.mxu0 0.0
        %1306 = vmatprep.subr.mxu0 0.0
        %1307 = vmatpush1.msra.mxu0 0.0
        %1308 = vmatprep.subr.mxu0 0.0
        %1309 = vmatpush1.msra.mxu0 0.0
        %1310 = vmatprep.subr.mxu0 0.0
        %1311 = vmatpush1.msra.mxu0 0.0
        %1312 = vmatprep.subr.mxu0 0.0
        %1313 = vmatpush1.msra.mxu0 0.0
        %1314 = vmatprep.subr.mxu0 0.0
        %1315 = vmatpush1.msra.mxu0 0.0
        %1316 = vmatprep.subr.mxu0 0.0
        %1317 = vmatpush1.msra.mxu0 0.0
        %1318 = vmatprep.subr.mxu0 0.0
        %1319 = vmatpush1.msra.mxu0 0.0
        %1320 = vmatprep.subr.mxu0 0.0
        %1321 = vmatpush1.msra.mxu0 0.0
        %1322 = vmatprep.subr.mxu0 0.0
        %1323 = vmatpush1.msra.mxu0 0.0
        %1324 = vmatprep.subr.mxu0 0.0
        %1325 = vmatpush1.msra.mxu0 0.0
        %1326 = vmatprep.subr.mxu0 0.0
        %1327 = vmatpush1.msra.mxu0 0.0
        %1328 = vmatprep.subr.mxu0 0.0
        %1329 = vmatpush1.msra.mxu0 0.0
        %1330 = vmatprep.subr.mxu0 0.0
        %1331 = vmatpush1.msra.mxu0 0.0
        %1332 = vmatprep.subr.mxu0 0.0
        %1333 = vmatpush1.msra.mxu0 0.0
        %1334 = vmatprep.subr.mxu0 0.0
        %1335 = vmatpush1.msra.mxu0 0.0
        %1336 = vmatprep.subr.mxu0 0.0
        %1337 = vmatpush1.msra.mxu0 0.0
        %1338 = vmatprep.subr.mxu0 0.0
        %1339 = vmatpush1.msra.mxu0 0.0
        %1340 = vmatprep.subr.mxu0 0.0
        %1341 = vmatpush1.msra.mxu0 0.0
        %1342 = vmatprep.subr.mxu0 0.0
        %1343 = vmatpush1.msra.mxu0 0.0
        %1344 = vmatprep.subr.mxu0 0.0
        %1345 = vmatpush1.msra.mxu0 0.0
        %1346 = vmatprep.subr.mxu0 0.0
        %1347 = vmatpush1.msra.mxu0 0.0
        %1348 = vmatprep.subr.mxu0 0.0
        %1349 = vmatpush1.msra.mxu0 0.0
        %1350 = vmatprep.subr.mxu0 0.0
        %1351 = vmatpush1.msra.mxu0 0.0
        %1352 = vmatprep.subr.mxu0 0.0
        %1353 = vmatpush1.msra.mxu0 0.0
        %1354 = vmatprep.mubr.f32.mxu0 0.0
        %1355 = vmatmul.mubr.f32.gmra.mrb[0].mxu0 %v1285
        %v1356 = vpop.f32.mrb[0].mxu0
        %v1357 = vadd.f32 0.0, %v1356
        %v1358 = vpop.f32.mrb[0].mxu0
        %v1359 = vadd.f32 0.0, %v1358
        %1360 = vmatprep.mubr.f32.mxu0 0.0
        %1361 = vmatmul.mubr.f32.gmra.mrb[0].mxu0 %v1288
        %v1362 = vpop.f32.mrb[0].mxu0
        %v1363 = vadd.f32 0.0, %v1362
        %v1364 = vpop.f32.mrb[0].mxu0
        %v1365 = vadd.f32 0.0, %v1364
        %1366 = vdwg.mxu0
        %1367 = vmatprep.subr.mxu0 0.0
        %1368 = vmatpush1.msra.mxu0 %v486
        %1369 = vmatprep.subr.mxu0 0.0
        %1370 = vmatpush1.msra.mxu0 %v489
        %1371 = vmatprep.subr.mxu0 0.0
        %1372 = vmatpush1.msra.mxu0 0.0
        %1373 = vmatprep.subr.mxu0 0.0
        %1374 = vmatpush1.msra.mxu0 0.0
        %1375 = vmatprep.subr.mxu0 0.0
        %1376 = vmatpush1.msra.mxu0 0.0
        %1377 = vmatprep.subr.mxu0 0.0
        %1378 = vmatpush1.msra.mxu0 0.0
        %1379 = vmatprep.subr.mxu0 0.0
        %1380 = vmatpush1.msra.mxu0 0.0
        %1381 = vmatprep.subr.mxu0 0.0
        %1382 = vmatpush1.msra.mxu0 0.0
        %1383 = vmatprep.subr.mxu0 0.0
        %1384 = vmatpush1.msra.mxu0 0.0
        %1385 = vmatprep.subr.mxu0 0.0
        %1386 = vmatpush1.msra.mxu0 0.0
        %1387 = vmatprep.subr.mxu0 0.0
        %1388 = vmatpush1.msra.mxu0 0.0
        %1389 = vmatprep.subr.mxu0 0.0
        %1390 = vmatpush1.msra.mxu0 0.0
        %1391 = vmatprep.subr.mxu0 0.0
        %1392 = vmatpush1.msra.mxu0 0.0
        %1393 = vmatprep.subr.mxu0 0.0
        %1394 = vmatpush1.msra.mxu0 0.0
        %1395 = vmatprep.subr.mxu0 0.0
        %1396 = vmatpush1.msra.mxu0 0.0
        %1397 = vmatprep.subr.mxu0 0.0
        %1398 = vmatpush1.msra.mxu0 0.0
        %1399 = vmatprep.subr.mxu0 0.0
        %1400 = vmatpush1.msra.mxu0 0.0
        %1401 = vmatprep.subr.mxu0 0.0
        %1402 = vmatpush1.msra.mxu0 0.0
        %1403 = vmatprep.subr.mxu0 0.0
        %1404 = vmatpush1.msra.mxu0 0.0
        %1405 = vmatprep.subr.mxu0 0.0
        %1406 = vmatpush1.msra.mxu0 0.0
        %1407 = vmatprep.subr.mxu0 0.0
        %1408 = vmatpush1.msra.mxu0 0.0
        %1409 = vmatprep.subr.mxu0 0.0
        %1410 = vmatpush1.msra.mxu0 0.0
        %1411 = vmatprep.subr.mxu0 0.0
        %1412 = vmatpush1.msra.mxu0 0.0
        %1413 = vmatprep.subr.mxu0 0.0
        %1414 = vmatpush1.msra.mxu0 0.0
        %1415 = vmatprep.subr.mxu0 0.0
        %1416 = vmatpush1.msra.mxu0 0.0
        %1417 = vmatprep.subr.mxu0 0.0
        %1418 = vmatpush1.msra.mxu0 0.0
        %1419 = vmatprep.subr.mxu0 0.0
        %1420 = vmatpush1.msra.mxu0 0.0
        %1421 = vmatprep.subr.mxu0 0.0
        %1422 = vmatpush1.msra.mxu0 0.0
        %1423 = vmatprep.subr.mxu0 0.0
        %1424 = vmatpush1.msra.mxu0 0.0
        %1425 = vmatprep.subr.mxu0 0.0
        %1426 = vmatpush1.msra.mxu0 0.0
        %1427 = vmatprep.subr.mxu0 0.0
        %1428 = vmatpush1.msra.mxu0 0.0
        %1429 = vmatprep.subr.mxu0 0.0
        %1430 = vmatpush1.msra.mxu0 0.0
        %1431 = vmatprep.mubr.f32.mxu0 0.0
        %1432 = vmatmul.mubr.f32.gmra.mrb[0].mxu0 %v1285
        %v1433 = vpop.f32.mrb[0].mxu0
        %v1434 = vadd.f32 0.0, %v1433
        %v1435 = vpop.f32.mrb[0].mxu0
        %1436 = vmatprep.mubr.f32.mxu0 0.0
        %1437 = vmatmul.mubr.f32.gmra.mrb[0].mxu0 %v1288
        %v1438 = vpop.f32.mrb[0].mxu0
        %v1439 = vadd.f32 0.0, %v1438
        %v1440 = vpop.f32.mrb[0].mxu0
        %1441 = vdwg.mxu0
        %1442 = vmatprep.subr.mxu0 %v491
        %1443 = vmatpush1.msra.mxu0 %v490
        %1444 = vmatprep.subr.mxu0 %v494
        %1445 = vmatpush1.msra.mxu0 %v493
        %1446 = vmatprep.subr.mxu0 %v497
        %1447 = vmatpush1.msra.mxu0 %v496
        %1448 = vmatprep.subr.mxu0 %v500
        %1449 = vmatpush1.msra.mxu0 %v499
        %1450 = vmatprep.subr.mxu0 %v503
        %1451 = vmatpush1.msra.mxu0 %v502
        %1452 = vmatprep.subr.mxu0 %v506
        %1453 = vmatpush1.msra.mxu0 %v505
        %1454 = vmatprep.subr.mxu0 %v509
        %1455 = vmatpush1.msra.mxu0 %v508
        %1456 = vmatprep.subr.mxu0 %v512
        %1457 = vmatpush1.msra.mxu0 %v511
        %1458 = vmatprep.subr.mxu0 %v515
        %1459 = vmatpush1.msra.mxu0 %v514
        %1460 = vmatprep.subr.mxu0 %v518
        %1461 = vmatpush1.msra.mxu0 %v517
        %1462 = vmatprep.subr.mxu0 %v521
        %1463 = vmatpush1.msra.mxu0 %v520
        %1464 = vmatprep.subr.mxu0 %v524
        %1465 = vmatpush1.msra.mxu0 %v523
        %1466 = vmatprep.subr.mxu0 %v527
        %1467 = vmatpush1.msra.mxu0 %v526
        %1468 = vmatprep.subr.mxu0 %v530
        %1469 = vmatpush1.msra.mxu0 %v529
        %1470 = vmatprep.subr.mxu0 %v533
        %1471 = vmatpush1.msra.mxu0 %v532
        %1472 = vmatprep.subr.mxu0 %v536
        %1473 = vmatpush1.msra.mxu0 %v535
        %1474 = vmatprep.subr.mxu0 0.0
        %1475 = vmatpush1.msra.mxu0 0.0
        %1476 = vmatprep.subr.mxu0 0.0
        %1477 = vmatpush1.msra.mxu0 0.0
        %1478 = vmatprep.subr.mxu0 0.0
        %1479 = vmatpush1.msra.mxu0 0.0
        %1480 = vmatprep.subr.mxu0 0.0
        %1481 = vmatpush1.msra.mxu0 0.0
        %1482 = vmatprep.subr.mxu0 0.0
        %1483 = vmatpush1.msra.mxu0 0.0
        %1484 = vmatprep.subr.mxu0 0.0
        %1485 = vmatpush1.msra.mxu0 0.0
        %1486 = vmatprep.subr.mxu0 0.0
        %1487 = vmatpush1.msra.mxu0 0.0
        %1488 = vmatprep.subr.mxu0 0.0
        %1489 = vmatpush1.msra.mxu0 0.0
        %1490 = vmatprep.subr.mxu0 0.0
        %1491 = vmatpush1.msra.mxu0 0.0
        %1492 = vmatprep.subr.mxu0 0.0
        %1493 = vmatpush1.msra.mxu0 0.0
        %1494 = vmatprep.subr.mxu0 0.0
        %1495 = vmatpush1.msra.mxu0 0.0
        %1496 = vmatprep.subr.mxu0 0.0
        %1497 = vmatpush1.msra.mxu0 0.0
        %1498 = vmatprep.subr.mxu0 0.0
        %1499 = vmatpush1.msra.mxu0 0.0
        %1500 = vmatprep.subr.mxu0 0.0
        %1501 = vmatpush1.msra.mxu0 0.0
        %1502 = vmatprep.subr.mxu0 0.0
        %1503 = vmatpush1.msra.mxu0 0.0
        %1504 = vmatprep.subr.mxu0 0.0
        %1505 = vmatpush1.msra.mxu0 0.0
        %1506 = vmatprep.mubr.f32.mxu0 0.0
        %1507 = vmatmul.mubr.f32.gmra.mrb[0].mxu0 %v1279
        %v1508 = vpop.f32.mrb[0].mxu0
        %v1509 = vadd.f32 0.0, %v1508
        %v1510 = vpop.f32.mrb[0].mxu0
        %v1511 = vadd.f32 0.0, %v1510
        %1512 = vmatprep.mubr.f32.mxu0 0.0
        %1513 = vmatmul.mubr.f32.gmra.mrb[0].mxu0 %v1280
        %v1514 = vpop.f32.mrb[0].mxu0
        %v1515 = vadd.f32 0.0, %v1514
        %v1516 = vpop.f32.mrb[0].mxu0
        %v1517 = vadd.f32 0.0, %v1516
        %1518 = vdwg.mxu0
        %1519 = vmatprep.subr.mxu0 0.0
        %1520 = vmatpush1.msra.mxu0 %v492
        %1521 = vmatprep.subr.mxu0 0.0
        %1522 = vmatpush1.msra.mxu0 %v495
        %1523 = vmatprep.subr.mxu0 0.0
        %1524 = vmatpush1.msra.mxu0 %v498
        %1525 = vmatprep.subr.mxu0 0.0
        %1526 = vmatpush1.msra.mxu0 %v501
        %1527 = vmatprep.subr.mxu0 0.0
        %1528 = vmatpush1.msra.mxu0 %v504
        %1529 = vmatprep.subr.mxu0 0.0
        %1530 = vmatpush1.msra.mxu0 %v507
        %1531 = vmatprep.subr.mxu0 0.0
        %1532 = vmatpush1.msra.mxu0 %v510
        %1533 = vmatprep.subr.mxu0 0.0
        %1534 = vmatpush1.msra.mxu0 %v513
        %1535 = vmatprep.subr.mxu0 0.0
        %1536 = vmatpush1.msra.mxu0 %v516
        %1537 = vmatprep.subr.mxu0 0.0
        %1538 = vmatpush1.msra.mxu0 %v519
        %1539 = vmatprep.subr.mxu0 0.0
        %1540 = vmatpush1.msra.mxu0 %v522
        %1541 = vmatprep.subr.mxu0 0.0
        %1542 = vmatpush1.msra.mxu0 %v525
        %1543 = vmatprep.subr.mxu0 0.0
        %1544 = vmatpush1.msra.mxu0 %v528
        %1545 = vmatprep.subr.mxu0 0.0
        %1546 = vmatpush1.msra.mxu0 %v531
        %1547 = vmatprep.subr.mxu0 0.0
        %1548 = vmatpush1.msra.mxu0 %v534
        %1549 = vmatprep.subr.mxu0 0.0
        %1550 = vmatpush1.msra.mxu0 %v537
        %1551 = vmatprep.subr.mxu0 0.0
        %1552 = vmatpush1.msra.mxu0 0.0
        %1553 = vmatprep.subr.mxu0 0.0
        %1554 = vmatpush1.msra.mxu0 0.0
        %1555 = vmatprep.subr.mxu0 0.0
        %1556 = vmatpush1.msra.mxu0 0.0
        %1557 = vmatprep.subr.mxu0 0.0
        %1558 = vmatpush1.msra.mxu0 0.0
        %1559 = vmatprep.subr.mxu0 0.0
        %1560 = vmatpush1.msra.mxu0 0.0
        %1561 = vmatprep.subr.mxu0 0.0
        %1562 = vmatpush1.msra.mxu0 0.0
        %1563 = vmatprep.subr.mxu0 0.0
        %1564 = vmatpush1.msra.mxu0 0.0
        %1565 = vmatprep.subr.mxu0 0.0
        %1566 = vmatpush1.msra.mxu0 0.0
        %1567 = vmatprep.subr.mxu0 0.0
        %1568 = vmatpush1.msra.mxu0 0.0
        %1569 = vmatprep.subr.mxu0 0.0
        %1570 = vmatpush1.msra.mxu0 0.0
        %1571 = vmatprep.subr.mxu0 0.0
        %1572 = vmatpush1.msra.mxu0 0.0
        %1573 = vmatprep.subr.mxu0 0.0
        %1574 = vmatpush1.msra.mxu0 0.0
        %1575 = vmatprep.subr.mxu0 0.0
        %1576 = vmatpush1.msra.mxu0 0.0
        %1577 = vmatprep.subr.mxu0 0.0
        %1578 = vmatpush1.msra.mxu0 0.0
        %1579 = vmatprep.subr.mxu0 0.0
        %1580 = vmatpush1.msra.mxu0 0.0
        %1581 = vmatprep.subr.mxu0 0.0
        %1582 = vmatpush1.msra.mxu0 0.0
        %1583 = vmatprep.mubr.f32.mxu0 0.0
        %1584 = vmatmul.mubr.f32.gmra.mrb[0].mxu0 %v1279
        %v1585 = vpop.f32.mrb[0].mxu0
        %v1586 = vadd.f32 0.0, %v1585
        %v1587 = vpop.f32.mrb[0].mxu0
        %1588 = vmatprep.mubr.f32.mxu0 0.0
        %1589 = vmatmul.mubr.f32.gmra.mrb[0].mxu0 %v1280
        %v1590 = vpop.f32.mrb[0].mxu0
        %v1591 = vadd.f32 0.0, %v1590
        %v1592 = vpop.f32.mrb[0].mxu0
        %1593 = vdwg.mxu0
        %v1594 = vadd.f32 %v1357, %v1509
        %v1595 = vadd.f32 %v1363, %v1515
        %v1596 = vxor.u32 %v1594, 2147483648
        %v1597 = vxor.u32 %v1595, 2147483648
        %v1598 = vmul.f32 %v1596, 1.442695
        %v1599 = vpow.pop %v1598
        %v1600 = vmul.f32 %v1597, 1.442695
        %v1601 = vpow.pop %v1600
        %v1602 = vadd.f32 %v1599, 1.0
        %v1603 = vadd.f32 %v1601, 1.0
        %v1604 = vrcp.pop %v1602
        %v1605 = vmul.f32 1.0, %v1604
        %v1606 = vrcp.pop %v1603
        %v1607 = vmul.f32 1.0, %v1606
        %v1608 = vadd.f32 %v1359, %v1511
        %v1609 = vadd.f32 %v1365, %v1517
        %v1610 = vxor.u32 %v1608, 2147483648
        %v1611 = vxor.u32 %v1609, 2147483648
        %v1612 = vmul.f32 %v1610, 1.442695
        %v1613 = vpow.pop %v1612
        %v1614 = vmul.f32 %v1611, 1.442695
        %v1615 = vpow.pop %v1614
        %v1616 = vadd.f32 %v1613, 1.0
        %v1617 = vadd.f32 %v1615, 1.0
        %v1618 = vrcp.pop %v1616
        %v1619 = vmul.f32 1.0, %v1618
        %v1620 = vrcp.pop %v1617
        %v1621 = vmul.f32 1.0, %v1620
        %v1622 = vadd.f32 %v1586, %v895
        %v1623 = vadd.f32 %v1591, %v895
        %v1624 = vmul.f32 %v1605, %v1622
        %v1625 = vmul.f32 %v1607, %v1623
        %v1626 = vadd.f32 %v1434, %v1624
        %v1627 = vadd.f32 %v1439, %v1625
        %v1628 = vtanh.pop %v1626
        %v1629 = vtanh.pop %v1627
        %v1630 = vsub.f32 1.0, %v1619
        %v1631 = vsub.f32 1.0, %v1621
        %v1632 = vmul.f32 %v1630, %v1628
        %v1633 = vmul.f32 %v1631, %v1629
        %v1634 = vmul.f32 %v1619, %v1279
        %v1635 = vmul.f32 %v1621, %v1280
        %v1636 = vadd.f32 %v1632, %v1634
        %v1637 = vadd.f32 %v1633, %v1635
        %s1638 = sadd.s32 %s547, 2
        %v1639 = vstv %s1638
        %vm1640 = vcmp.lt.s32.totalorder %v1639, %v543
        %vm1641 = vcmp.lt.s32.totalorder %v1639, %v546
        %v1642 = vsel %vm1640, %v1636, %v1279
        %v1643 = vsel %vm1641, %v1637, %v1280
        %s1644 = scalar_lea.vmem %s435, 48 [#allocation3]
        %v1645 = vld [vmem:[%s1644] sm:$0xff]
        %v1646 = vld [vmem:[%s1644 + $0x8] sm:$0xff]
        %v1648 = vsel %vm552, %v1645, 0
        %v1651 = vsel %vm552, %v1646, 0
        %1653 = vmatprep.subr.mxu0 %v485
        %1654 = vmatpush1.msra.mxu0 %v484
        %1655 = vmatprep.subr.mxu0 %v488
        %1656 = vmatpush1.msra.mxu0 %v487
        %1657 = vmatprep.subr.mxu0 0.0
        %1658 = vmatpush1.msra.mxu0 0.0
        %1659 = vmatprep.subr.mxu0 0.0
        %1660 = vmatpush1.msra.mxu0 0.0
        %1661 = vmatprep.subr.mxu0 0.0
        %1662 = vmatpush1.msra.mxu0 0.0
        %1663 = vmatprep.subr.mxu0 0.0
        %1664 = vmatpush1.msra.mxu0 0.0
        %1665 = vmatprep.subr.mxu0 0.0
        %1666 = vmatpush1.msra.mxu0 0.0
        %1667 = vmatprep.subr.mxu0 0.0
        %1668 = vmatpush1.msra.mxu0 0.0
        %1669 = vmatprep.subr.mxu0 0.0
        %1670 = vmatpush1.msra.mxu0 0.0
        %1671 = vmatprep.subr.mxu0 0.0
        %1672 = vmatpush1.msra.mxu0 0.0
        %1673 = vmatprep.subr.mxu0 0.0
        %1674 = vmatpush1.msra.mxu0 0.0
        %1675 = vmatprep.subr.mxu0 0.0
        %1676 = vmatpush1.msra.mxu0 0.0
        %1677 = vmatprep.subr.mxu0 0.0
        %1678 = vmatpush1.msra.mxu0 0.0
        %1679 = vmatprep.subr.mxu0 0.0
        %1680 = vmatpush1.msra.mxu0 0.0
        %1681 = vmatprep.subr.mxu0 0.0
        %1682 = vmatpush1.msra.mxu0 0.0
        %1683 = vmatprep.subr.mxu0 0.0
        %1684 = vmatpush1.msra.mxu0 0.0
        %1685 = vmatprep.subr.mxu0 0.0
        %1686 = vmatpush1.msra.mxu0 0.0
        %1687 = vmatprep.subr.mxu0 0.0
        %1688 = vmatpush1.msra.mxu0 0.0
        %1689 = vmatprep.subr.mxu0 0.0
        %1690 = vmatpush1.msra.mxu0 0.0
        %1691 = vmatprep.subr.mxu0 0.0
        %1692 = vmatpush1.msra.mxu0 0.0
        %1693 = vmatprep.subr.mxu0 0.0
        %1694 = vmatpush1.msra.mxu0 0.0
        %1695 = vmatprep.subr.mxu0 0.0
        %1696 = vmatpush1.msra.mxu0 0.0
        %1697 = vmatprep.subr.mxu0 0.0
        %1698 = vmatpush1.msra.mxu0 0.0
        %1699 = vmatprep.subr.mxu0 0.0
        %1700 = vmatpush1.msra.mxu0 0.0
        %1701 = vmatprep.subr.mxu0 0.0
        %1702 = vmatpush1.msra.mxu0 0.0
        %1703 = vmatprep.subr.mxu0 0.0
        %1704 = vmatpush1.msra.mxu0 0.0
        %1705 = vmatprep.subr.mxu0 0.0
        %1706 = vmatpush1.msra.mxu0 0.0
        %1707 = vmatprep.subr.mxu0 0.0
        %1708 = vmatpush1.msra.mxu0 0.0
        %1709 = vmatprep.subr.mxu0 0.0
        %1710 = vmatpush1.msra.mxu0 0.0
        %1711 = vmatprep.subr.mxu0 0.0
        %1712 = vmatpush1.msra.mxu0 0.0
        %1713 = vmatprep.subr.mxu0 0.0
        %1714 = vmatpush1.msra.mxu0 0.0
        %1715 = vmatprep.subr.mxu0 0.0
        %1716 = vmatpush1.msra.mxu0 0.0
        %1717 = vmatprep.mubr.f32.mxu0 0.0
        %1718 = vmatmul.mubr.f32.gmra.mrb[0].mxu0 %v1648
        %v1719 = vpop.f32.mrb[0].mxu0
        %v1720 = vadd.f32 0.0, %v1719
        %v1721 = vpop.f32.mrb[0].mxu0
        %v1722 = vadd.f32 0.0, %v1721
        %1723 = vmatprep.mubr.f32.mxu0 0.0
        %1724 = vmatmul.mubr.f32.gmra.mrb[0].mxu0 %v1651
        %v1725 = vpop.f32.mrb[0].mxu0
        %v1726 = vadd.f32 0.0, %v1725
        %v1727 = vpop.f32.mrb[0].mxu0
        %v1728 = vadd.f32 0.0, %v1727
        %1729 = vdwg.mxu0
        %1730 = vmatprep.subr.mxu0 0.0
        %1731 = vmatpush1.msra.mxu0 %v486
        %1732 = vmatprep.subr.mxu0 0.0
        %1733 = vmatpush1.msra.mxu0 %v489
        %1734 = vmatprep.subr.mxu0 0.0
        %1735 = vmatpush1.msra.mxu0 0.0
        %1736 = vmatprep.subr.mxu0 0.0
        %1737 = vmatpush1.msra.mxu0 0.0
        %1738 = vmatprep.subr.mxu0 0.0
        %1739 = vmatpush1.msra.mxu0 0.0
        %1740 = vmatprep.subr.mxu0 0.0
        %1741 = vmatpush1.msra.mxu0 0.0
        %1742 = vmatprep.subr.mxu0 0.0
        %1743 = vmatpush1.msra.mxu0 0.0
        %1744 = vmatprep.subr.mxu0 0.0
        %1745 = vmatpush1.msra.mxu0 0.0
        %1746 = vmatprep.subr.mxu0 0.0
        %1747 = vmatpush1.msra.mxu0 0.0
        %1748 = vmatprep.subr.mxu0 0.0
        %1749 = vmatpush1.msra.mxu0 0.0
        %1750 = vmatprep.subr.mxu0 0.0
        %1751 = vmatpush1.msra.mxu0 0.0
        %1752 = vmatprep.subr.mxu0 0.0
        %1753 = vmatpush1.msra.mxu0 0.0
        %1754 = vmatprep.subr.mxu0 0.0
        %1755 = vmatpush1.msra.mxu0 0.0
        %1756 = vmatprep.subr.mxu0 0.0
        %1757 = vmatpush1.msra.mxu0 0.0
        %1758 = vmatprep.subr.mxu0 0.0
        %1759 = vmatpush1.msra.mxu0 0.0
        %1760 = vmatprep.subr.mxu0 0.0
        %1761 = vmatpush1.msra.mxu0 0.0
        %1762 = vmatprep.subr.mxu0 0.0
        %1763 = vmatpush1.msra.mxu0 0.0
        %1764 = vmatprep.subr.mxu0 0.0
        %1765 = vmatpush1.msra.mxu0 0.0
        %1766 = vmatprep.subr.mxu0 0.0
        %1767 = vmatpush1.msra.mxu0 0.0
        %1768 = vmatprep.subr.mxu0 0.0
        %1769 = vmatpush1.msra.mxu0 0.0
        %1770 = vmatprep.subr.mxu0 0.0
        %1771 = vmatpush1.msra.mxu0 0.0
        %1772 = vmatprep.subr.mxu0 0.0
        %1773 = vmatpush1.msra.mxu0 0.0
        %1774 = vmatprep.subr.mxu0 0.0
        %1775 = vmatpush1.msra.mxu0 0.0
        %1776 = vmatprep.subr.mxu0 0.0
        %1777 = vmatpush1.msra.mxu0 0.0
        %1778 = vmatprep.subr.mxu0 0.0
        %1779 = vmatpush1.msra.mxu0 0.0
        %1780 = vmatprep.subr.mxu0 0.0
        %1781 = vmatpush1.msra.mxu0 0.0
        %1782 = vmatprep.subr.mxu0 0.0
        %1783 = vmatpush1.msra.mxu0 0.0
        %1784 = vmatprep.subr.mxu0 0.0
        %1785 = vmatpush1.msra.mxu0 0.0
        %1786 = vmatprep.subr.mxu0 0.0
        %1787 = vmatpush1.msra.mxu0 0.0
        %1788 = vmatprep.subr.mxu0 0.0
        %1789 = vmatpush1.msra.mxu0 0.0
        %1790 = vmatprep.subr.mxu0 0.0
        %1791 = vmatpush1.msra.mxu0 0.0
        %1792 = vmatprep.subr.mxu0 0.0
        %1793 = vmatpush1.msra.mxu0 0.0
        %1794 = vmatprep.mubr.f32.mxu0 0.0
        %1795 = vmatmul.mubr.f32.gmra.mrb[0].mxu0 %v1648
        %v1796 = vpop.f32.mrb[0].mxu0
        %v1797 = vadd.f32 0.0, %v1796
        %v1798 = vpop.f32.mrb[0].mxu0
        %1799 = vmatprep.mubr.f32.mxu0 0.0
        %1800 = vmatmul.mubr.f32.gmra.mrb[0].mxu0 %v1651
        %v1801 = vpop.f32.mrb[0].mxu0
        %v1802 = vadd.f32 0.0, %v1801
        %v1803 = vpop.f32.mrb[0].mxu0
        %1804 = vdwg.mxu0
        %1805 = vmatprep.subr.mxu0 %v491
        %1806 = vmatpush1.msra.mxu0 %v490
        %1807 = vmatprep.subr.mxu0 %v494
        %1808 = vmatpush1.msra.mxu0 %v493
        %1809 = vmatprep.subr.mxu0 %v497
        %1810 = vmatpush1.msra.mxu0 %v496
        %1811 = vmatprep.subr.mxu0 %v500
        %1812 = vmatpush1.msra.mxu0 %v499
        %1813 = vmatprep.subr.mxu0 %v503
        %1814 = vmatpush1.msra.mxu0 %v502
        %1815 = vmatprep.subr.mxu0 %v506
        %1816 = vmatpush1.msra.mxu0 %v505
        %1817 = vmatprep.subr.mxu0 %v509
        %1818 = vmatpush1.msra.mxu0 %v508
        %1819 = vmatprep.subr.mxu0 %v512
        %1820 = vmatpush1.msra.mxu0 %v511
        %1821 = vmatprep.subr.mxu0 %v515
        %1822 = vmatpush1.msra.mxu0 %v514
        %1823 = vmatprep.subr.mxu0 %v518
        %1824 = vmatpush1.msra.mxu0 %v517
        %1825 = vmatprep.subr.mxu0 %v521
        %1826 = vmatpush1.msra.mxu0 %v520
        %1827 = vmatprep.subr.mxu0 %v524
        %1828 = vmatpush1.msra.mxu0 %v523
        %1829 = vmatprep.subr.mxu0 %v527
        %1830 = vmatpush1.msra.mxu0 %v526
        %1831 = vmatprep.subr.mxu0 %v530
        %1832 = vmatpush1.msra.mxu0 %v529
        %1833 = vmatprep.subr.mxu0 %v533
        %1834 = vmatpush1.msra.mxu0 %v532
        %1835 = vmatprep.subr.mxu0 %v536
        %1836 = vmatpush1.msra.mxu0 %v535
        %1837 = vmatprep.subr.mxu0 0.0
        %1838 = vmatpush1.msra.mxu0 0.0
        %1839 = vmatprep.subr.mxu0 0.0
        %1840 = vmatpush1.msra.mxu0 0.0
        %1841 = vmatprep.subr.mxu0 0.0
        %1842 = vmatpush1.msra.mxu0 0.0
        %1843 = vmatprep.subr.mxu0 0.0
        %1844 = vmatpush1.msra.mxu0 0.0
        %1845 = vmatprep.subr.mxu0 0.0
        %1846 = vmatpush1.msra.mxu0 0.0
        %1847 = vmatprep.subr.mxu0 0.0
        %1848 = vmatpush1.msra.mxu0 0.0
        %1849 = vmatprep.subr.mxu0 0.0
        %1850 = vmatpush1.msra.mxu0 0.0
        %1851 = vmatprep.subr.mxu0 0.0
        %1852 = vmatpush1.msra.mxu0 0.0
        %1853 = vmatprep.subr.mxu0 0.0
        %1854 = vmatpush1.msra.mxu0 0.0
        %1855 = vmatprep.subr.mxu0 0.0
        %1856 = vmatpush1.msra.mxu0 0.0
        %1857 = vmatprep.subr.mxu0 0.0
        %1858 = vmatpush1.msra.mxu0 0.0
        %1859 = vmatprep.subr.mxu0 0.0
        %1860 = vmatpush1.msra.mxu0 0.0
        %1861 = vmatprep.subr.mxu0 0.0
        %1862 = vmatpush1.msra.mxu0 0.0
        %1863 = vmatprep.subr.mxu0 0.0
        %1864 = vmatpush1.msra.mxu0 0.0
        %1865 = vmatprep.subr.mxu0 0.0
        %1866 = vmatpush1.msra.mxu0 0.0
        %1867 = vmatprep.subr.mxu0 0.0
        %1868 = vmatpush1.msra.mxu0 0.0
        %1869 = vmatprep.mubr.f32.mxu0 0.0
        %1870 = vmatmul.mubr.f32.gmra.mrb[0].mxu0 %v1642
        %v1871 = vpop.f32.mrb[0].mxu0
        %v1872 = vadd.f32 0.0, %v1871
        %v1873 = vpop.f32.mrb[0].mxu0
        %v1874 = vadd.f32 0.0, %v1873
        %1875 = vmatprep.mubr.f32.mxu0 0.0
        %1876 = vmatmul.mubr.f32.gmra.mrb[0].mxu0 %v1643
        %v1877 = vpop.f32.mrb[0].mxu0
        %v1878 = vadd.f32 0.0, %v1877
        %v1879 = vpop.f32.mrb[0].mxu0
        %v1880 = vadd.f32 0.0, %v1879
        %1881 = vdwg.mxu0
        %1882 = vmatprep.subr.mxu0 0.0
        %1883 = vmatpush1.msra.mxu0 %v492
        %1884 = vmatprep.subr.mxu0 0.0
        %1885 = vmatpush1.msra.mxu0 %v495
        %1886 = vmatprep.subr.mxu0 0.0
        %1887 = vmatpush1.msra.mxu0 %v498
        %1888 = vmatprep.subr.mxu0 0.0
        %1889 = vmatpush1.msra.mxu0 %v501
        %1890 = vmatprep.subr.mxu0 0.0
        %1891 = vmatpush1.msra.mxu0 %v504
        %1892 = vmatprep.subr.mxu0 0.0
        %1893 = vmatpush1.msra.mxu0 %v507
        %1894 = vmatprep.subr.mxu0 0.0
        %1895 = vmatpush1.msra.mxu0 %v510
        %1896 = vmatprep.subr.mxu0 0.0
        %1897 = vmatpush1.msra.mxu0 %v513
        %1898 = vmatprep.subr.mxu0 0.0
        %1899 = vmatpush1.msra.mxu0 %v516
        %1900 = vmatprep.subr.mxu0 0.0
        %1901 = vmatpush1.msra.mxu0 %v519
        %1902 = vmatprep.subr.mxu0 0.0
        %1903 = vmatpush1.msra.mxu0 %v522
        %1904 = vmatprep.subr.mxu0 0.0
        %1905 = vmatpush1.msra.mxu0 %v525
        %1906 = vmatprep.subr.mxu0 0.0
        %1907 = vmatpush1.msra.mxu0 %v528
        %1908 = vmatprep.subr.mxu0 0.0
        %1909 = vmatpush1.msra.mxu0 %v531
        %1910 = vmatprep.subr.mxu0 0.0
        %1911 = vmatpush1.msra.mxu0 %v534
        %1912 = vmatprep.subr.mxu0 0.0
        %1913 = vmatpush1.msra.mxu0 %v537
        %1914 = vmatprep.subr.mxu0 0.0
        %1915 = vmatpush1.msra.mxu0 0.0
        %1916 = vmatprep.subr.mxu0 0.0
        %1917 = vmatpush1.msra.mxu0 0.0
        %1918 = vmatprep.subr.mxu0 0.0
        %1919 = vmatpush1.msra.mxu0 0.0
        %1920 = vmatprep.subr.mxu0 0.0
        %1921 = vmatpush1.msra.mxu0 0.0
        %1922 = vmatprep.subr.mxu0 0.0
        %1923 = vmatpush1.msra.mxu0 0.0
        %1924 = vmatprep.subr.mxu0 0.0
        %1925 = vmatpush1.msra.mxu0 0.0
        %1926 = vmatprep.subr.mxu0 0.0
        %1927 = vmatpush1.msra.mxu0 0.0
        %1928 = vmatprep.subr.mxu0 0.0
        %1929 = vmatpush1.msra.mxu0 0.0
        %1930 = vmatprep.subr.mxu0 0.0
        %1931 = vmatpush1.msra.mxu0 0.0
        %1932 = vmatprep.subr.mxu0 0.0
        %1933 = vmatpush1.msra.mxu0 0.0
        %1934 = vmatprep.subr.mxu0 0.0
        %1935 = vmatpush1.msra.mxu0 0.0
        %1936 = vmatprep.subr.mxu0 0.0
        %1937 = vmatpush1.msra.mxu0 0.0
        %1938 = vmatprep.subr.mxu0 0.0
        %1939 = vmatpush1.msra.mxu0 0.0
        %1940 = vmatprep.subr.mxu0 0.0
        %1941 = vmatpush1.msra.mxu0 0.0
        %1942 = vmatprep.subr.mxu0 0.0
        %1943 = vmatpush1.msra.mxu0 0.0
        %1944 = vmatprep.subr.mxu0 0.0
        %1945 = vmatpush1.msra.mxu0 0.0
        %1946 = vmatprep.mubr.f32.mxu0 0.0
        %1947 = vmatmul.mubr.f32.gmra.mrb[0].mxu0 %v1642
        %v1948 = vpop.f32.mrb[0].mxu0
        %v1949 = vadd.f32 0.0, %v1948
        %v1950 = vpop.f32.mrb[0].mxu0
        %1951 = vmatprep.mubr.f32.mxu0 0.0
        %1952 = vmatmul.mubr.f32.gmra.mrb[0].mxu0 %v1643
        %v1953 = vpop.f32.mrb[0].mxu0
        %v1954 = vadd.f32 0.0, %v1953
        %v1955 = vpop.f32.mrb[0].mxu0
        %1956 = vdwg.mxu0
        %v1957 = vadd.f32 %v1720, %v1872
        %v1958 = vadd.f32 %v1726, %v1878
        %v1959 = vxor.u32 %v1957, 2147483648
        %v1960 = vxor.u32 %v1958, 2147483648
        %v1961 = vmul.f32 %v1959, 1.442695
        %v1962 = vpow.pop %v1961
        %v1963 = vmul.f32 %v1960, 1.442695
        %v1964 = vpow.pop %v1963
        %v1965 = vadd.f32 %v1962, 1.0
        %v1966 = vadd.f32 %v1964, 1.0
        %v1967 = vrcp.pop %v1965
        %v1968 = vmul.f32 1.0, %v1967
        %v1969 = vrcp.pop %v1966
        %v1970 = vmul.f32 1.0, %v1969
        %v1971 = vadd.f32 %v1722, %v1874
        %v1972 = vadd.f32 %v1728, %v1880
        %v1973 = vxor.u32 %v1971, 2147483648
        %v1974 = vxor.u32 %v1972, 2147483648
        %v1975 = vmul.f32 %v1973, 1.442695
        %v1976 = vpow.pop %v1975
        %v1977 = vmul.f32 %v1974, 1.442695
        %v1978 = vpow.pop %v1977
        %v1979 = vadd.f32 %v1976, 1.0
        %v1980 = vadd.f32 %v1978, 1.0
        %v1981 = vrcp.pop %v1979
        %v1982 = vmul.f32 1.0, %v1981
        %v1983 = vrcp.pop %v1980
        %v1984 = vmul.f32 1.0, %v1983
        %v1985 = vadd.f32 %v1949, %v895
        %v1986 = vadd.f32 %v1954, %v895
        %v1987 = vmul.f32 %v1968, %v1985
        %v1988 = vmul.f32 %v1970, %v1986
        %v1989 = vadd.f32 %v1797, %v1987
        %v1990 = vadd.f32 %v1802, %v1988
        %v1991 = vtanh.pop %v1989
        %v1992 = vtanh.pop %v1990
        %v1993 = vsub.f32 1.0, %v1982
        %v1994 = vsub.f32 1.0, %v1984
        %v1995 = vmul.f32 %v1993, %v1991
        %v1996 = vmul.f32 %v1994, %v1992
        %v1997 = vmul.f32 %v1982, %v1642
        %v1998 = vmul.f32 %v1984, %v1643
        %v1999 = vadd.f32 %v1995, %v1997
        %v2000 = vadd.f32 %v1996, %v1998
        %s2001 = sadd.s32 %s547, 3
        %v2002 = vstv %s2001
        %vm2003 = vcmp.lt.s32.totalorder %v2002, %v543
        %vm2004 = vcmp.lt.s32.totalorder %v2002, %v546
        %v2005 = vsel %vm2003, %v1999, %v1642
        %v2006 = vsel %vm2004, %v2000, %v1643
        %s2007 = scalar_lea.vmem %s435, 64 [#allocation3]
        %v2008 = vld [vmem:[%s2007] sm:$0xff]
        %v2009 = vld [vmem:[%s2007 + $0x8] sm:$0xff]
        %v2011 = vsel %vm552, %v2008, 0
        %v2014 = vsel %vm552, %v2009, 0
        %2016 = vmatprep.subr.mxu0 %v485
        %2017 = vmatpush1.msra.mxu0 %v484
        %2018 = vmatprep.subr.mxu0 %v488
        %2019 = vmatpush1.msra.mxu0 %v487
        %2020 = vmatprep.subr.mxu0 0.0
        %2021 = vmatpush1.msra.mxu0 0.0
        %2022 = vmatprep.subr.mxu0 0.0
        %2023 = vmatpush1.msra.mxu0 0.0
        %2024 = vmatprep.subr.mxu0 0.0
        %2025 = vmatpush1.msra.mxu0 0.0
        %2026 = vmatprep.subr.mxu0 0.0
        %2027 = vmatpush1.msra.mxu0 0.0
        %2028 = vmatprep.subr.mxu0 0.0
        %2029 = vmatpush1.msra.mxu0 0.0
        %2030 = vmatprep.subr.mxu0 0.0
        %2031 = vmatpush1.msra.mxu0 0.0
        %2032 = vmatprep.subr.mxu0 0.0
        %2033 = vmatpush1.msra.mxu0 0.0
        %2034 = vmatprep.subr.mxu0 0.0
        %2035 = vmatpush1.msra.mxu0 0.0
        %2036 = vmatprep.subr.mxu0 0.0
        %2037 = vmatpush1.msra.mxu0 0.0
        %2038 = vmatprep.subr.mxu0 0.0
        %2039 = vmatpush1.msra.mxu0 0.0
        %2040 = vmatprep.subr.mxu0 0.0
        %2041 = vmatpush1.msra.mxu0 0.0
        %2042 = vmatprep.subr.mxu0 0.0
        %2043 = vmatpush1.msra.mxu0 0.0
        %2044 = vmatprep.subr.mxu0 0.0
        %2045 = vmatpush1.msra.mxu0 0.0
        %2046 = vmatprep.subr.mxu0 0.0
        %2047 = vmatpush1.msra.mxu0 0.0
        %2048 = vmatprep.subr.mxu0 0.0
        %2049 = vmatpush1.msra.mxu0 0.0
        %2050 = vmatprep.subr.mxu0 0.0
        %2051 = vmatpush1.msra.mxu0 0.0
        %2052 = vmatprep.subr.mxu0 0.0
        %2053 = vmatpush1.msra.mxu0 0.0
        %2054 = vmatprep.subr.mxu0 0.0
        %2055 = vmatpush1.msra.mxu0 0.0
        %2056 = vmatprep.subr.mxu0 0.0
        %2057 = vmatpush1.msra.mxu0 0.0
        %2058 = vmatprep.subr.mxu0 0.0
        %2059 = vmatpush1.msra.mxu0 0.0
        %2060 = vmatprep.subr.mxu0 0.0
        %2061 = vmatpush1.msra.mxu0 0.0
        %2062 = vmatprep.subr.mxu0 0.0
        %2063 = vmatpush1.msra.mxu0 0.0
        %2064 = vmatprep.subr.mxu0 0.0
        %2065 = vmatpush1.msra.mxu0 0.0
        %2066 = vmatprep.subr.mxu0 0.0
        %2067 = vmatpush1.msra.mxu0 0.0
        %2068 = vmatprep.subr.mxu0 0.0
        %2069 = vmatpush1.msra.mxu0 0.0
        %2070 = vmatprep.subr.mxu0 0.0
        %2071 = vmatpush1.msra.mxu0 0.0
        %2072 = vmatprep.subr.mxu0 0.0
        %2073 = vmatpush1.msra.mxu0 0.0
        %2074 = vmatprep.subr.mxu0 0.0
        %2075 = vmatpush1.msra.mxu0 0.0
        %2076 = vmatprep.subr.mxu0 0.0
        %2077 = vmatpush1.msra.mxu0 0.0
        %2078 = vmatprep.subr.mxu0 0.0
        %2079 = vmatpush1.msra.mxu0 0.0
        %2080 = vmatprep.mubr.f32.mxu0 0.0
        %2081 = vmatmul.mubr.f32.gmra.mrb[0].mxu0 %v2011
        %v2082 = vpop.f32.mrb[0].mxu0
        %v2083 = vadd.f32 0.0, %v2082
        %v2084 = vpop.f32.mrb[0].mxu0
        %v2085 = vadd.f32 0.0, %v2084
        %2086 = vmatprep.mubr.f32.mxu0 0.0
        %2087 = vmatmul.mubr.f32.gmra.mrb[0].mxu0 %v2014
        %v2088 = vpop.f32.mrb[0].mxu0
        %v2089 = vadd.f32 0.0, %v2088
        %v2090 = vpop.f32.mrb[0].mxu0
        %v2091 = vadd.f32 0.0, %v2090
        %2092 = vdwg.mxu0
        %2093 = vmatprep.subr.mxu0 0.0
        %2094 = vmatpush1.msra.mxu0 %v486
        %2095 = vmatprep.subr.mxu0 0.0
        %2096 = vmatpush1.msra.mxu0 %v489
        %2097 = vmatprep.subr.mxu0 0.0
        %2098 = vmatpush1.msra.mxu0 0.0
        %2099 = vmatprep.subr.mxu0 0.0
        %2100 = vmatpush1.msra.mxu0 0.0
        %2101 = vmatprep.subr.mxu0 0.0
        %2102 = vmatpush1.msra.mxu0 0.0
        %2103 = vmatprep.subr.mxu0 0.0
        %2104 = vmatpush1.msra.mxu0 0.0
        %2105 = vmatprep.subr.mxu0 0.0
        %2106 = vmatpush1.msra.mxu0 0.0
        %2107 = vmatprep.subr.mxu0 0.0
        %2108 = vmatpush1.msra.mxu0 0.0
        %2109 = vmatprep.subr.mxu0 0.0
        %2110 = vmatpush1.msra.mxu0 0.0
        %2111 = vmatprep.subr.mxu0 0.0
        %2112 = vmatpush1.msra.mxu0 0.0
        %2113 = vmatprep.subr.mxu0 0.0
        %2114 = vmatpush1.msra.mxu0 0.0
        %2115 = vmatprep.subr.mxu0 0.0
        %2116 = vmatpush1.msra.mxu0 0.0
        %2117 = vmatprep.subr.mxu0 0.0
        %2118 = vmatpush1.msra.mxu0 0.0
        %2119 = vmatprep.subr.mxu0 0.0
        %2120 = vmatpush1.msra.mxu0 0.0
        %2121 = vmatprep.subr.mxu0 0.0
        %2122 = vmatpush1.msra.mxu0 0.0
        %2123 = vmatprep.subr.mxu0 0.0
        %2124 = vmatpush1.msra.mxu0 0.0
        %2125 = vmatprep.subr.mxu0 0.0
        %2126 = vmatpush1.msra.mxu0 0.0
        %2127 = vmatprep.subr.mxu0 0.0
        %2128 = vmatpush1.msra.mxu0 0.0
        %2129 = vmatprep.subr.mxu0 0.0
        %2130 = vmatpush1.msra.mxu0 0.0
        %2131 = vmatprep.subr.mxu0 0.0
        %2132 = vmatpush1.msra.mxu0 0.0
        %2133 = vmatprep.subr.mxu0 0.0
        %2134 = vmatpush1.msra.mxu0 0.0
        %2135 = vmatprep.subr.mxu0 0.0
        %2136 = vmatpush1.msra.mxu0 0.0
        %2137 = vmatprep.subr.mxu0 0.0
        %2138 = vmatpush1.msra.mxu0 0.0
        %2139 = vmatprep.subr.mxu0 0.0
        %2140 = vmatpush1.msra.mxu0 0.0
        %2141 = vmatprep.subr.mxu0 0.0
        %2142 = vmatpush1.msra.mxu0 0.0
        %2143 = vmatprep.subr.mxu0 0.0
        %2144 = vmatpush1.msra.mxu0 0.0
        %2145 = vmatprep.subr.mxu0 0.0
        %2146 = vmatpush1.msra.mxu0 0.0
        %2147 = vmatprep.subr.mxu0 0.0
        %2148 = vmatpush1.msra.mxu0 0.0
        %2149 = vmatprep.subr.mxu0 0.0
        %2150 = vmatpush1.msra.mxu0 0.0
        %2151 = vmatprep.subr.mxu0 0.0
        %2152 = vmatpush1.msra.mxu0 0.0
        %2153 = vmatprep.subr.mxu0 0.0
        %2154 = vmatpush1.msra.mxu0 0.0
        %2155 = vmatprep.subr.mxu0 0.0
        %2156 = vmatpush1.msra.mxu0 0.0
        %2157 = vmatprep.mubr.f32.mxu0 0.0
        %2158 = vmatmul.mubr.f32.gmra.mrb[0].mxu0 %v2011
        %v2159 = vpop.f32.mrb[0].mxu0
        %v2160 = vadd.f32 0.0, %v2159
        %v2161 = vpop.f32.mrb[0].mxu0
        %2162 = vmatprep.mubr.f32.mxu0 0.0
        %2163 = vmatmul.mubr.f32.gmra.mrb[0].mxu0 %v2014
        %v2164 = vpop.f32.mrb[0].mxu0
        %v2165 = vadd.f32 0.0, %v2164
        %v2166 = vpop.f32.mrb[0].mxu0
        %2167 = vdwg.mxu0
        %2168 = vmatprep.subr.mxu0 %v491
        %2169 = vmatpush1.msra.mxu0 %v490
        %2170 = vmatprep.subr.mxu0 %v494
        %2171 = vmatpush1.msra.mxu0 %v493
        %2172 = vmatprep.subr.mxu0 %v497
        %2173 = vmatpush1.msra.mxu0 %v496
        %2174 = vmatprep.subr.mxu0 %v500
        %2175 = vmatpush1.msra.mxu0 %v499
        %2176 = vmatprep.subr.mxu0 %v503
        %2177 = vmatpush1.msra.mxu0 %v502
        %2178 = vmatprep.subr.mxu0 %v506
        %2179 = vmatpush1.msra.mxu0 %v505
        %2180 = vmatprep.subr.mxu0 %v509
        %2181 = vmatpush1.msra.mxu0 %v508
        %2182 = vmatprep.subr.mxu0 %v512
        %2183 = vmatpush1.msra.mxu0 %v511
        %2184 = vmatprep.subr.mxu0 %v515
        %2185 = vmatpush1.msra.mxu0 %v514
        %2186 = vmatprep.subr.mxu0 %v518
        %2187 = vmatpush1.msra.mxu0 %v517
        %2188 = vmatprep.subr.mxu0 %v521
        %2189 = vmatpush1.msra.mxu0 %v520
        %2190 = vmatprep.subr.mxu0 %v524
        %2191 = vmatpush1.msra.mxu0 %v523
        %2192 = vmatprep.subr.mxu0 %v527
        %2193 = vmatpush1.msra.mxu0 %v526
        %2194 = vmatprep.subr.mxu0 %v530
        %2195 = vmatpush1.msra.mxu0 %v529
        %2196 = vmatprep.subr.mxu0 %v533
        %2197 = vmatpush1.msra.mxu0 %v532
        %2198 = vmatprep.subr.mxu0 %v536
        %2199 = vmatpush1.msra.mxu0 %v535
        %2200 = vmatprep.subr.mxu0 0.0
        %2201 = vmatpush1.msra.mxu0 0.0
        %2202 = vmatprep.subr.mxu0 0.0
        %2203 = vmatpush1.msra.mxu0 0.0
        %2204 = vmatprep.subr.mxu0 0.0
        %2205 = vmatpush1.msra.mxu0 0.0
        %2206 = vmatprep.subr.mxu0 0.0
        %2207 = vmatpush1.msra.mxu0 0.0
        %2208 = vmatprep.subr.mxu0 0.0
        %2209 = vmatpush1.msra.mxu0 0.0
        %2210 = vmatprep.subr.mxu0 0.0
        %2211 = vmatpush1.msra.mxu0 0.0
        %2212 = vmatprep.subr.mxu0 0.0
        %2213 = vmatpush1.msra.mxu0 0.0
        %2214 = vmatprep.subr.mxu0 0.0
        %2215 = vmatpush1.msra.mxu0 0.0
        %2216 = vmatprep.subr.mxu0 0.0
        %2217 = vmatpush1.msra.mxu0 0.0
        %2218 = vmatprep.subr.mxu0 0.0
        %2219 = vmatpush1.msra.mxu0 0.0
        %2220 = vmatprep.subr.mxu0 0.0
        %2221 = vmatpush1.msra.mxu0 0.0
        %2222 = vmatprep.subr.mxu0 0.0
        %2223 = vmatpush1.msra.mxu0 0.0
        %2224 = vmatprep.subr.mxu0 0.0
        %2225 = vmatpush1.msra.mxu0 0.0
        %2226 = vmatprep.subr.mxu0 0.0
        %2227 = vmatpush1.msra.mxu0 0.0
        %2228 = vmatprep.subr.mxu0 0.0
        %2229 = vmatpush1.msra.mxu0 0.0
        %2230 = vmatprep.subr.mxu0 0.0
        %2231 = vmatpush1.msra.mxu0 0.0
        %2232 = vmatprep.mubr.f32.mxu0 0.0
        %2233 = vmatmul.mubr.f32.gmra.mrb[0].mxu0 %v2005
        %v2234 = vpop.f32.mrb[0].mxu0
        %v2235 = vadd.f32 0.0, %v2234
        %v2236 = vpop.f32.mrb[0].mxu0
        %v2237 = vadd.f32 0.0, %v2236
        %2238 = vmatprep.mubr.f32.mxu0 0.0
        %2239 = vmatmul.mubr.f32.gmra.mrb[0].mxu0 %v2006
        %v2240 = vpop.f32.mrb[0].mxu0
        %v2241 = vadd.f32 0.0, %v2240
        %v2242 = vpop.f32.mrb[0].mxu0
        %v2243 = vadd.f32 0.0, %v2242
        %2244 = vdwg.mxu0
        %2245 = vmatprep.subr.mxu0 0.0
        %2246 = vmatpush1.msra.mxu0 %v492
        %2247 = vmatprep.subr.mxu0 0.0
        %2248 = vmatpush1.msra.mxu0 %v495
        %2249 = vmatprep.subr.mxu0 0.0
        %2250 = vmatpush1.msra.mxu0 %v498
        %2251 = vmatprep.subr.mxu0 0.0
        %2252 = vmatpush1.msra.mxu0 %v501
        %2253 = vmatprep.subr.mxu0 0.0
        %2254 = vmatpush1.msra.mxu0 %v504
        %2255 = vmatprep.subr.mxu0 0.0
        %2256 = vmatpush1.msra.mxu0 %v507
        %2257 = vmatprep.subr.mxu0 0.0
        %2258 = vmatpush1.msra.mxu0 %v510
        %2259 = vmatprep.subr.mxu0 0.0
        %2260 = vmatpush1.msra.mxu0 %v513
        %2261 = vmatprep.subr.mxu0 0.0
        %2262 = vmatpush1.msra.mxu0 %v516
        %2263 = vmatprep.subr.mxu0 0.0
        %2264 = vmatpush1.msra.mxu0 %v519
        %2265 = vmatprep.subr.mxu0 0.0
        %2266 = vmatpush1.msra.mxu0 %v522
        %2267 = vmatprep.subr.mxu0 0.0
        %2268 = vmatpush1.msra.mxu0 %v525
        %2269 = vmatprep.subr.mxu0 0.0
        %2270 = vmatpush1.msra.mxu0 %v528
        %2271 = vmatprep.subr.mxu0 0.0
        %2272 = vmatpush1.msra.mxu0 %v531
        %2273 = vmatprep.subr.mxu0 0.0
        %2274 = vmatpush1.msra.mxu0 %v534
        %2275 = vmatprep.subr.mxu0 0.0
        %2276 = vmatpush1.msra.mxu0 %v537
        %2277 = vmatprep.subr.mxu0 0.0
        %2278 = vmatpush1.msra.mxu0 0.0
        %2279 = vmatprep.subr.mxu0 0.0
        %2280 = vmatpush1.msra.mxu0 0.0
        %2281 = vmatprep.subr.mxu0 0.0
        %2282 = vmatpush1.msra.mxu0 0.0
        %2283 = vmatprep.subr.mxu0 0.0
        %2284 = vmatpush1.msra.mxu0 0.0
        %2285 = vmatprep.subr.mxu0 0.0
        %2286 = vmatpush1.msra.mxu0 0.0
        %2287 = vmatprep.subr.mxu0 0.0
        %2288 = vmatpush1.msra.mxu0 0.0
        %2289 = vmatprep.subr.mxu0 0.0
        %2290 = vmatpush1.msra.mxu0 0.0
        %2291 = vmatprep.subr.mxu0 0.0
        %2292 = vmatpush1.msra.mxu0 0.0
        %2293 = vmatprep.subr.mxu0 0.0
        %2294 = vmatpush1.msra.mxu0 0.0
        %2295 = vmatprep.subr.mxu0 0.0
        %2296 = vmatpush1.msra.mxu0 0.0
        %2297 = vmatprep.subr.mxu0 0.0
        %2298 = vmatpush1.msra.mxu0 0.0
        %2299 = vmatprep.subr.mxu0 0.0
        %2300 = vmatpush1.msra.mxu0 0.0
        %2301 = vmatprep.subr.mxu0 0.0
        %2302 = vmatpush1.msra.mxu0 0.0
        %2303 = vmatprep.subr.mxu0 0.0
        %2304 = vmatpush1.msra.mxu0 0.0
        %2305 = vmatprep.subr.mxu0 0.0
        %2306 = vmatpush1.msra.mxu0 0.0
        %2307 = vmatprep.subr.mxu0 0.0
        %2308 = vmatpush1.msra.mxu0 0.0
        %2309 = vmatprep.mubr.f32.mxu0 0.0
        %2310 = vmatmul.mubr.f32.gmra.mrb[0].mxu0 %v2005
        %v2311 = vpop.f32.mrb[0].mxu0
        %v2312 = vadd.f32 0.0, %v2311
        %v2313 = vpop.f32.mrb[0].mxu0
        %2314 = vmatprep.mubr.f32.mxu0 0.0
        %2315 = vmatmul.mubr.f32.gmra.mrb[0].mxu0 %v2006
        %v2316 = vpop.f32.mrb[0].mxu0
        %v2317 = vadd.f32 0.0, %v2316
        %v2318 = vpop.f32.mrb[0].mxu0
        %2319 = vdwg.mxu0
        %v2320 = vadd.f32 %v2083, %v2235
        %v2321 = vadd.f32 %v2089, %v2241
        %v2322 = vxor.u32 %v2320, 2147483648
        %v2323 = vxor.u32 %v2321, 2147483648
        %v2324 = vmul.f32 %v2322, 1.442695
        %v2325 = vpow.pop %v2324
        %v2326 = vmul.f32 %v2323, 1.442695
        %v2327 = vpow.pop %v2326
        %v2328 = vadd.f32 %v2325, 1.0
        %v2329 = vadd.f32 %v2327, 1.0
        %v2330 = vrcp.pop %v2328
        %v2331 = vmul.f32 1.0, %v2330
        %v2332 = vrcp.pop %v2329
        %v2333 = vmul.f32 1.0, %v2332
        %v2334 = vadd.f32 %v2085, %v2237
        %v2335 = vadd.f32 %v2091, %v2243
        %v2336 = vxor.u32 %v2334, 2147483648
        %v2337 = vxor.u32 %v2335, 2147483648
        %v2338 = vmul.f32 %v2336, 1.442695
        %v2339 = vpow.pop %v2338
        %v2340 = vmul.f32 %v2337, 1.442695
        %v2341 = vpow.pop %v2340
        %v2342 = vadd.f32 %v2339, 1.0
        %v2343 = vadd.f32 %v2341, 1.0
        %v2344 = vrcp.pop %v2342
        %v2345 = vmul.f32 1.0, %v2344
        %v2346 = vrcp.pop %v2343
        %v2347 = vmul.f32 1.0, %v2346
        %v2348 = vadd.f32 %v2312, %v895
        %v2349 = vadd.f32 %v2317, %v895
        %v2350 = vmul.f32 %v2331, %v2348
        %v2351 = vmul.f32 %v2333, %v2349
        %v2352 = vadd.f32 %v2160, %v2350
        %v2353 = vadd.f32 %v2165, %v2351
        %v2354 = vtanh.pop %v2352
        %v2355 = vtanh.pop %v2353
        %v2356 = vsub.f32 1.0, %v2345
        %v2357 = vsub.f32 1.0, %v2347
        %v2358 = vmul.f32 %v2356, %v2354
        %v2359 = vmul.f32 %v2357, %v2355
        %v2360 = vmul.f32 %v2345, %v2005
        %v2361 = vmul.f32 %v2347, %v2006
        %v2362 = vadd.f32 %v2358, %v2360
        %v2363 = vadd.f32 %v2359, %v2361
        %s2364 = sadd.s32 %s547, 4
        %v2365 = vstv %s2364
        %vm2366 = vcmp.lt.s32.totalorder %v2365, %v543
        %vm2367 = vcmp.lt.s32.totalorder %v2365, %v546
        %v2368 = vsel %vm2366, %v2362, %v2005
        %v2369 = vsel %vm2367, %v2363, %v2006
        %s2370 = scalar_lea.vmem %s435, 80 [#allocation3]
        %v2371 = vld [vmem:[%s2370] sm:$0xff]
        %v2372 = vld [vmem:[%s2370 + $0x8] sm:$0xff]
        %v2374 = vsel %vm552, %v2371, 0
        %v2377 = vsel %vm552, %v2372, 0
        %2379 = vmatprep.subr.mxu0 %v485
        %2380 = vmatpush1.msra.mxu0 %v484
        %2381 = vmatprep.subr.mxu0 %v488
        %2382 = vmatpush1.msra.mxu0 %v487
        %2383 = vmatprep.subr.mxu0 0.0
        %2384 = vmatpush1.msra.mxu0 0.0
        %2385 = vmatprep.subr.mxu0 0.0
        %2386 = vmatpush1.msra.mxu0 0.0
        %2387 = vmatprep.subr.mxu0 0.0
        %2388 = vmatpush1.msra.mxu0 0.0
        %2389 = vmatprep.subr.mxu0 0.0
        %2390 = vmatpush1.msra.mxu0 0.0
        %2391 = vmatprep.subr.mxu0 0.0
        %2392 = vmatpush1.msra.mxu0 0.0
        %2393 = vmatprep.subr.mxu0 0.0
        %2394 = vmatpush1.msra.mxu0 0.0
        %2395 = vmatprep.subr.mxu0 0.0
        %2396 = vmatpush1.msra.mxu0 0.0
        %2397 = vmatprep.subr.mxu0 0.0
        %2398 = vmatpush1.msra.mxu0 0.0
        %2399 = vmatprep.subr.mxu0 0.0
        %2400 = vmatpush1.msra.mxu0 0.0
        %2401 = vmatprep.subr.mxu0 0.0
        %2402 = vmatpush1.msra.mxu0 0.0
        %2403 = vmatprep.subr.mxu0 0.0
        %2404 = vmatpush1.msra.mxu0 0.0
        %2405 = vmatprep.subr.mxu0 0.0
        %2406 = vmatpush1.msra.mxu0 0.0
        %2407 = vmatprep.subr.mxu0 0.0
        %2408 = vmatpush1.msra.mxu0 0.0
        %2409 = vmatprep.subr.mxu0 0.0
        %2410 = vmatpush1.msra.mxu0 0.0
        %2411 = vmatprep.subr.mxu0 0.0
        %2412 = vmatpush1.msra.mxu0 0.0
        %2413 = vmatprep.subr.mxu0 0.0
        %2414 = vmatpush1.msra.mxu0 0.0
        %2415 = vmatprep.subr.mxu0 0.0
        %2416 = vmatpush1.msra.mxu0 0.0
        %2417 = vmatprep.subr.mxu0 0.0
        %2418 = vmatpush1.msra.mxu0 0.0
        %2419 = vmatprep.subr.mxu0 0.0
        %2420 = vmatpush1.msra.mxu0 0.0
        %2421 = vmatprep.subr.mxu0 0.0
        %2422 = vmatpush1.msra.mxu0 0.0
        %2423 = vmatprep.subr.mxu0 0.0
        %2424 = vmatpush1.msra.mxu0 0.0
        %2425 = vmatprep.subr.mxu0 0.0
        %2426 = vmatpush1.msra.mxu0 0.0
        %2427 = vmatprep.subr.mxu0 0.0
        %2428 = vmatpush1.msra.mxu0 0.0
        %2429 = vmatprep.subr.mxu0 0.0
        %2430 = vmatpush1.msra.mxu0 0.0
        %2431 = vmatprep.subr.mxu0 0.0
        %2432 = vmatpush1.msra.mxu0 0.0
        %2433 = vmatprep.subr.mxu0 0.0
        %2434 = vmatpush1.msra.mxu0 0.0
        %2435 = vmatprep.subr.mxu0 0.0
        %2436 = vmatpush1.msra.mxu0 0.0
        %2437 = vmatprep.subr.mxu0 0.0
        %2438 = vmatpush1.msra.mxu0 0.0
        %2439 = vmatprep.subr.mxu0 0.0
        %2440 = vmatpush1.msra.mxu0 0.0
        %2441 = vmatprep.subr.mxu0 0.0
        %2442 = vmatpush1.msra.mxu0 0.0
        %2443 = vmatprep.mubr.f32.mxu0 0.0
        %2444 = vmatmul.mubr.f32.gmra.mrb[0].mxu0 %v2374
        %v2445 = vpop.f32.mrb[0].mxu0
        %v2446 = vadd.f32 0.0, %v2445
        %v2447 = vpop.f32.mrb[0].mxu0
        %v2448 = vadd.f32 0.0, %v2447
        %2449 = vmatprep.mubr.f32.mxu0 0.0
        %2450 = vmatmul.mubr.f32.gmra.mrb[0].mxu0 %v2377
        %v2451 = vpop.f32.mrb[0].mxu0
        %v2452 = vadd.f32 0.0, %v2451
        %v2453 = vpop.f32.mrb[0].mxu0
        %v2454 = vadd.f32 0.0, %v2453
        %2455 = vdwg.mxu0
        %2456 = vmatprep.subr.mxu0 0.0
        %2457 = vmatpush1.msra.mxu0 %v486
        %2458 = vmatprep.subr.mxu0 0.0
        %2459 = vmatpush1.msra.mxu0 %v489
        %2460 = vmatprep.subr.mxu0 0.0
        %2461 = vmatpush1.msra.mxu0 0.0
        %2462 = vmatprep.subr.mxu0 0.0
        %2463 = vmatpush1.msra.mxu0 0.0
        %2464 = vmatprep.subr.mxu0 0.0
        %2465 = vmatpush1.msra.mxu0 0.0
        %2466 = vmatprep.subr.mxu0 0.0
        %2467 = vmatpush1.msra.mxu0 0.0
        %2468 = vmatprep.subr.mxu0 0.0
        %2469 = vmatpush1.msra.mxu0 0.0
        %2470 = vmatprep.subr.mxu0 0.0
        %2471 = vmatpush1.msra.mxu0 0.0
        %2472 = vmatprep.subr.mxu0 0.0
        %2473 = vmatpush1.msra.mxu0 0.0
        %2474 = vmatprep.subr.mxu0 0.0
        %2475 = vmatpush1.msra.mxu0 0.0
        %2476 = vmatprep.subr.mxu0 0.0
        %2477 = vmatpush1.msra.mxu0 0.0
        %2478 = vmatprep.subr.mxu0 0.0
        %2479 = vmatpush1.msra.mxu0 0.0
        %2480 = vmatprep.subr.mxu0 0.0
        %2481 = vmatpush1.msra.mxu0 0.0
        %2482 = vmatprep.subr.mxu0 0.0
        %2483 = vmatpush1.msra.mxu0 0.0
        %2484 = vmatprep.subr.mxu0 0.0
        %2485 = vmatpush1.msra.mxu0 0.0
        %2486 = vmatprep.subr.mxu0 0.0
        %2487 = vmatpush1.msra.mxu0 0.0
        %2488 = vmatprep.subr.mxu0 0.0
        %2489 = vmatpush1.msra.mxu0 0.0
        %2490 = vmatprep.subr.mxu0 0.0
        %2491 = vmatpush1.msra.mxu0 0.0
        %2492 = vmatprep.subr.mxu0 0.0
        %2493 = vmatpush1.msra.mxu0 0.0
        %2494 = vmatprep.subr.mxu0 0.0
        %2495 = vmatpush1.msra.mxu0 0.0
        %2496 = vmatprep.subr.mxu0 0.0
        %2497 = vmatpush1.msra.mxu0 0.0
        %2498 = vmatprep.subr.mxu0 0.0
        %2499 = vmatpush1.msra.mxu0 0.0
        %2500 = vmatprep.subr.mxu0 0.0
        %2501 = vmatpush1.msra.mxu0 0.0
        %2502 = vmatprep.subr.mxu0 0.0
        %2503 = vmatpush1.msra.mxu0 0.0
        %2504 = vmatprep.subr.mxu0 0.0
        %2505 = vmatpush1.msra.mxu0 0.0
        %2506 = vmatprep.subr.mxu0 0.0
        %2507 = vmatpush1.msra.mxu0 0.0
        %2508 = vmatprep.subr.mxu0 0.0
        %2509 = vmatpush1.msra.mxu0 0.0
        %2510 = vmatprep.subr.mxu0 0.0
        %2511 = vmatpush1.msra.mxu0 0.0
        %2512 = vmatprep.subr.mxu0 0.0
        %2513 = vmatpush1.msra.mxu0 0.0
        %2514 = vmatprep.subr.mxu0 0.0
        %2515 = vmatpush1.msra.mxu0 0.0
        %2516 = vmatprep.subr.mxu0 0.0
        %2517 = vmatpush1.msra.mxu0 0.0
        %2518 = vmatprep.subr.mxu0 0.0
        %2519 = vmatpush1.msra.mxu0 0.0
        %2520 = vmatprep.mubr.f32.mxu0 0.0
        %2521 = vmatmul.mubr.f32.gmra.mrb[0].mxu0 %v2374
        %v2522 = vpop.f32.mrb[0].mxu0
        %v2523 = vadd.f32 0.0, %v2522
        %v2524 = vpop.f32.mrb[0].mxu0
        %2525 = vmatprep.mubr.f32.mxu0 0.0
        %2526 = vmatmul.mubr.f32.gmra.mrb[0].mxu0 %v2377
        %v2527 = vpop.f32.mrb[0].mxu0
        %v2528 = vadd.f32 0.0, %v2527
        %v2529 = vpop.f32.mrb[0].mxu0
        %2530 = vdwg.mxu0
        %2531 = vmatprep.subr.mxu0 %v491
        %2532 = vmatpush1.msra.mxu0 %v490
        %2533 = vmatprep.subr.mxu0 %v494
        %2534 = vmatpush1.msra.mxu0 %v493
        %2535 = vmatprep.subr.mxu0 %v497
        %2536 = vmatpush1.msra.mxu0 %v496
        %2537 = vmatprep.subr.mxu0 %v500
        %2538 = vmatpush1.msra.mxu0 %v499
        %2539 = vmatprep.subr.mxu0 %v503
        %2540 = vmatpush1.msra.mxu0 %v502
        %2541 = vmatprep.subr.mxu0 %v506
        %2542 = vmatpush1.msra.mxu0 %v505
        %2543 = vmatprep.subr.mxu0 %v509
        %2544 = vmatpush1.msra.mxu0 %v508
        %2545 = vmatprep.subr.mxu0 %v512
        %2546 = vmatpush1.msra.mxu0 %v511
        %2547 = vmatprep.subr.mxu0 %v515
        %2548 = vmatpush1.msra.mxu0 %v514
        %2549 = vmatprep.subr.mxu0 %v518
        %2550 = vmatpush1.msra.mxu0 %v517
        %2551 = vmatprep.subr.mxu0 %v521
        %2552 = vmatpush1.msra.mxu0 %v520
        %2553 = vmatprep.subr.mxu0 %v524
        %2554 = vmatpush1.msra.mxu0 %v523
        %2555 = vmatprep.subr.mxu0 %v527
        %2556 = vmatpush1.msra.mxu0 %v526
        %2557 = vmatprep.subr.mxu0 %v530
        %2558 = vmatpush1.msra.mxu0 %v529
        %2559 = vmatprep.subr.mxu0 %v533
        %2560 = vmatpush1.msra.mxu0 %v532
        %2561 = vmatprep.subr.mxu0 %v536
        %2562 = vmatpush1.msra.mxu0 %v535
        %2563 = vmatprep.subr.mxu0 0.0
        %2564 = vmatpush1.msra.mxu0 0.0
        %2565 = vmatprep.subr.mxu0 0.0
        %2566 = vmatpush1.msra.mxu0 0.0
        %2567 = vmatprep.subr.mxu0 0.0
        %2568 = vmatpush1.msra.mxu0 0.0
        %2569 = vmatprep.subr.mxu0 0.0
        %2570 = vmatpush1.msra.mxu0 0.0
        %2571 = vmatprep.subr.mxu0 0.0
        %2572 = vmatpush1.msra.mxu0 0.0
        %2573 = vmatprep.subr.mxu0 0.0
        %2574 = vmatpush1.msra.mxu0 0.0
        %2575 = vmatprep.subr.mxu0 0.0
        %2576 = vmatpush1.msra.mxu0 0.0
        %2577 = vmatprep.subr.mxu0 0.0
        %2578 = vmatpush1.msra.mxu0 0.0
        %2579 = vmatprep.subr.mxu0 0.0
        %2580 = vmatpush1.msra.mxu0 0.0
        %2581 = vmatprep.subr.mxu0 0.0
        %2582 = vmatpush1.msra.mxu0 0.0
        %2583 = vmatprep.subr.mxu0 0.0
        %2584 = vmatpush1.msra.mxu0 0.0
        %2585 = vmatprep.subr.mxu0 0.0
        %2586 = vmatpush1.msra.mxu0 0.0
        %2587 = vmatprep.subr.mxu0 0.0
        %2588 = vmatpush1.msra.mxu0 0.0
        %2589 = vmatprep.subr.mxu0 0.0
        %2590 = vmatpush1.msra.mxu0 0.0
        %2591 = vmatprep.subr.mxu0 0.0
        %2592 = vmatpush1.msra.mxu0 0.0
        %2593 = vmatprep.subr.mxu0 0.0
        %2594 = vmatpush1.msra.mxu0 0.0
        %2595 = vmatprep.mubr.f32.mxu0 0.0
        %2596 = vmatmul.mubr.f32.gmra.mrb[0].mxu0 %v2368
        %v2597 = vpop.f32.mrb[0].mxu0
        %v2598 = vadd.f32 0.0, %v2597
        %v2599 = vpop.f32.mrb[0].mxu0
        %v2600 = vadd.f32 0.0, %v2599
        %2601 = vmatprep.mubr.f32.mxu0 0.0
        %2602 = vmatmul.mubr.f32.gmra.mrb[0].mxu0 %v2369
        %v2603 = vpop.f32.mrb[0].mxu0
        %v2604 = vadd.f32 0.0, %v2603
        %v2605 = vpop.f32.mrb[0].mxu0
        %v2606 = vadd.f32 0.0, %v2605
        %2607 = vdwg.mxu0
        %2608 = vmatprep.subr.mxu0 0.0
        %2609 = vmatpush1.msra.mxu0 %v492
        %2610 = vmatprep.subr.mxu0 0.0
        %2611 = vmatpush1.msra.mxu0 %v495
        %2612 = vmatprep.subr.mxu0 0.0
        %2613 = vmatpush1.msra.mxu0 %v498
        %2614 = vmatprep.subr.mxu0 0.0
        %2615 = vmatpush1.msra.mxu0 %v501
        %2616 = vmatprep.subr.mxu0 0.0
        %2617 = vmatpush1.msra.mxu0 %v504
        %2618 = vmatprep.subr.mxu0 0.0
        %2619 = vmatpush1.msra.mxu0 %v507
        %2620 = vmatprep.subr.mxu0 0.0
        %2621 = vmatpush1.msra.mxu0 %v510
        %2622 = vmatprep.subr.mxu0 0.0
        %2623 = vmatpush1.msra.mxu0 %v513
        %2624 = vmatprep.subr.mxu0 0.0
        %2625 = vmatpush1.msra.mxu0 %v516
        %2626 = vmatprep.subr.mxu0 0.0
        %2627 = vmatpush1.msra.mxu0 %v519
        %2628 = vmatprep.subr.mxu0 0.0
        %2629 = vmatpush1.msra.mxu0 %v522
        %2630 = vmatprep.subr.mxu0 0.0
        %2631 = vmatpush1.msra.mxu0 %v525
        %2632 = vmatprep.subr.mxu0 0.0
        %2633 = vmatpush1.msra.mxu0 %v528
        %2634 = vmatprep.subr.mxu0 0.0
        %2635 = vmatpush1.msra.mxu0 %v531
        %2636 = vmatprep.subr.mxu0 0.0
        %2637 = vmatpush1.msra.mxu0 %v534
        %2638 = vmatprep.subr.mxu0 0.0
        %2639 = vmatpush1.msra.mxu0 %v537
        %2640 = vmatprep.subr.mxu0 0.0
        %2641 = vmatpush1.msra.mxu0 0.0
        %2642 = vmatprep.subr.mxu0 0.0
        %2643 = vmatpush1.msra.mxu0 0.0
        %2644 = vmatprep.subr.mxu0 0.0
        %2645 = vmatpush1.msra.mxu0 0.0
        %2646 = vmatprep.subr.mxu0 0.0
        %2647 = vmatpush1.msra.mxu0 0.0
        %2648 = vmatprep.subr.mxu0 0.0
        %2649 = vmatpush1.msra.mxu0 0.0
        %2650 = vmatprep.subr.mxu0 0.0
        %2651 = vmatpush1.msra.mxu0 0.0
        %2652 = vmatprep.subr.mxu0 0.0
        %2653 = vmatpush1.msra.mxu0 0.0
        %2654 = vmatprep.subr.mxu0 0.0
        %2655 = vmatpush1.msra.mxu0 0.0
        %2656 = vmatprep.subr.mxu0 0.0
        %2657 = vmatpush1.msra.mxu0 0.0
        %2658 = vmatprep.subr.mxu0 0.0
        %2659 = vmatpush1.msra.mxu0 0.0
        %2660 = vmatprep.subr.mxu0 0.0
        %2661 = vmatpush1.msra.mxu0 0.0
        %2662 = vmatprep.subr.mxu0 0.0
        %2663 = vmatpush1.msra.mxu0 0.0
        %2664 = vmatprep.subr.mxu0 0.0
        %2665 = vmatpush1.msra.mxu0 0.0
        %2666 = vmatprep.subr.mxu0 0.0
        %2667 = vmatpush1.msra.mxu0 0.0
        %2668 = vmatprep.subr.mxu0 0.0
        %2669 = vmatpush1.msra.mxu0 0.0
        %2670 = vmatprep.subr.mxu0 0.0
        %2671 = vmatpush1.msra.mxu0 0.0
        %2672 = vmatprep.mubr.f32.mxu0 0.0
        %2673 = vmatmul.mubr.f32.gmra.mrb[0].mxu0 %v2368
        %v2674 = vpop.f32.mrb[0].mxu0
        %v2675 = vadd.f32 0.0, %v2674
        %v2676 = vpop.f32.mrb[0].mxu0
        %2677 = vmatprep.mubr.f32.mxu0 0.0
        %2678 = vmatmul.mubr.f32.gmra.mrb[0].mxu0 %v2369
        %v2679 = vpop.f32.mrb[0].mxu0
        %v2680 = vadd.f32 0.0, %v2679
        %v2681 = vpop.f32.mrb[0].mxu0
        %2682 = vdwg.mxu0
        %v2683 = vadd.f32 %v2446, %v2598
        %v2684 = vadd.f32 %v2452, %v2604
        %v2685 = vxor.u32 %v2683, 2147483648
        %v2686 = vxor.u32 %v2684, 2147483648
        %v2687 = vmul.f32 %v2685, 1.442695
        %v2688 = vpow.pop %v2687
        %v2689 = vmul.f32 %v2686, 1.442695
        %v2690 = vpow.pop %v2689
        %v2691 = vadd.f32 %v2688, 1.0
        %v2692 = vadd.f32 %v2690, 1.0
        %v2693 = vrcp.pop %v2691
        %v2694 = vmul.f32 1.0, %v2693
        %v2695 = vrcp.pop %v2692
        %v2696 = vmul.f32 1.0, %v2695
        %v2697 = vadd.f32 %v2448, %v2600
        %v2698 = vadd.f32 %v2454, %v2606
        %v2699 = vxor.u32 %v2697, 2147483648
        %v2700 = vxor.u32 %v2698, 2147483648
        %v2701 = vmul.f32 %v2699, 1.442695
        %v2702 = vpow.pop %v2701
        %v2703 = vmul.f32 %v2700, 1.442695
        %v2704 = vpow.pop %v2703
        %v2705 = vadd.f32 %v2702, 1.0
        %v2706 = vadd.f32 %v2704, 1.0
        %v2707 = vrcp.pop %v2705
        %v2708 = vmul.f32 1.0, %v2707
        %v2709 = vrcp.pop %v2706
        %v2710 = vmul.f32 1.0, %v2709
        %v2711 = vadd.f32 %v2675, %v895
        %v2712 = vadd.f32 %v2680, %v895
        %v2713 = vmul.f32 %v2694, %v2711
        %v2714 = vmul.f32 %v2696, %v2712
        %v2715 = vadd.f32 %v2523, %v2713
        %v2716 = vadd.f32 %v2528, %v2714
        %v2717 = vtanh.pop %v2715
        %v2718 = vtanh.pop %v2716
        %v2719 = vsub.f32 1.0, %v2708
        %v2720 = vsub.f32 1.0, %v2710
        %v2721 = vmul.f32 %v2719, %v2717
        %v2722 = vmul.f32 %v2720, %v2718
        %v2723 = vmul.f32 %v2708, %v2368
        %v2724 = vmul.f32 %v2710, %v2369
        %v2725 = vadd.f32 %v2721, %v2723
        %v2726 = vadd.f32 %v2722, %v2724
        %s2727 = sadd.s32 %s547, 5
        %v2728 = vstv %s2727
        %vm2729 = vcmp.lt.s32.totalorder %v2728, %v543
        %vm2730 = vcmp.lt.s32.totalorder %v2728, %v546
        %v2731 = vsel %vm2729, %v2725, %v2368
        %v2732 = vsel %vm2730, %v2726, %v2369
        %s2733 = scalar_lea.vmem %s435, 96 [#allocation3]
        %v2734 = vld [vmem:[%s2733] sm:$0xff]
        %v2735 = vld [vmem:[%s2733 + $0x8] sm:$0xff]
        %v2737 = vsel %vm552, %v2734, 0
        %v2740 = vsel %vm552, %v2735, 0
        %2742 = vmatprep.subr.mxu0 %v485
        %2743 = vmatpush1.msra.mxu0 %v484
        %2744 = vmatprep.subr.mxu0 %v488
        %2745 = vmatpush1.msra.mxu0 %v487
        %2746 = vmatprep.subr.mxu0 0.0
        %2747 = vmatpush1.msra.mxu0 0.0
        %2748 = vmatprep.subr.mxu0 0.0
        %2749 = vmatpush1.msra.mxu0 0.0
        %2750 = vmatprep.subr.mxu0 0.0
        %2751 = vmatpush1.msra.mxu0 0.0
        %2752 = vmatprep.subr.mxu0 0.0
        %2753 = vmatpush1.msra.mxu0 0.0
        %2754 = vmatprep.subr.mxu0 0.0
        %2755 = vmatpush1.msra.mxu0 0.0
        %2756 = vmatprep.subr.mxu0 0.0
        %2757 = vmatpush1.msra.mxu0 0.0
        %2758 = vmatprep.subr.mxu0 0.0
        %2759 = vmatpush1.msra.mxu0 0.0
        %2760 = vmatprep.subr.mxu0 0.0
        %2761 = vmatpush1.msra.mxu0 0.0
        %2762 = vmatprep.subr.mxu0 0.0
        %2763 = vmatpush1.msra.mxu0 0.0
        %2764 = vmatprep.subr.mxu0 0.0
        %2765 = vmatpush1.msra.mxu0 0.0
        %2766 = vmatprep.subr.mxu0 0.0
        %2767 = vmatpush1.msra.mxu0 0.0
        %2768 = vmatprep.subr.mxu0 0.0
        %2769 = vmatpush1.msra.mxu0 0.0
        %2770 = vmatprep.subr.mxu0 0.0
        %2771 = vmatpush1.msra.mxu0 0.0
        %2772 = vmatprep.subr.mxu0 0.0
        %2773 = vmatpush1.msra.mxu0 0.0
        %2774 = vmatprep.subr.mxu0 0.0
        %2775 = vmatpush1.msra.mxu0 0.0
        %2776 = vmatprep.subr.mxu0 0.0
        %2777 = vmatpush1.msra.mxu0 0.0
        %2778 = vmatprep.subr.mxu0 0.0
        %2779 = vmatpush1.msra.mxu0 0.0
        %2780 = vmatprep.subr.mxu0 0.0
        %2781 = vmatpush1.msra.mxu0 0.0
        %2782 = vmatprep.subr.mxu0 0.0
        %2783 = vmatpush1.msra.mxu0 0.0
        %2784 = vmatprep.subr.mxu0 0.0
        %2785 = vmatpush1.msra.mxu0 0.0
        %2786 = vmatprep.subr.mxu0 0.0
        %2787 = vmatpush1.msra.mxu0 0.0
        %2788 = vmatprep.subr.mxu0 0.0
        %2789 = vmatpush1.msra.mxu0 0.0
        %2790 = vmatprep.subr.mxu0 0.0
        %2791 = vmatpush1.msra.mxu0 0.0
        %2792 = vmatprep.subr.mxu0 0.0
        %2793 = vmatpush1.msra.mxu0 0.0
        %2794 = vmatprep.subr.mxu0 0.0
        %2795 = vmatpush1.msra.mxu0 0.0
        %2796 = vmatprep.subr.mxu0 0.0
        %2797 = vmatpush1.msra.mxu0 0.0
        %2798 = vmatprep.subr.mxu0 0.0
        %2799 = vmatpush1.msra.mxu0 0.0
        %2800 = vmatprep.subr.mxu0 0.0
        %2801 = vmatpush1.msra.mxu0 0.0
        %2802 = vmatprep.subr.mxu0 0.0
        %2803 = vmatpush1.msra.mxu0 0.0
        %2804 = vmatprep.subr.mxu0 0.0
        %2805 = vmatpush1.msra.mxu0 0.0
        %2806 = vmatprep.mubr.f32.mxu0 0.0
        %2807 = vmatmul.mubr.f32.gmra.mrb[0].mxu0 %v2737
        %v2808 = vpop.f32.mrb[0].mxu0
        %v2809 = vadd.f32 0.0, %v2808
        %v2810 = vpop.f32.mrb[0].mxu0
        %v2811 = vadd.f32 0.0, %v2810
        %2812 = vmatprep.mubr.f32.mxu0 0.0
        %2813 = vmatmul.mubr.f32.gmra.mrb[0].mxu0 %v2740
        %v2814 = vpop.f32.mrb[0].mxu0
        %v2815 = vadd.f32 0.0, %v2814
        %v2816 = vpop.f32.mrb[0].mxu0
        %v2817 = vadd.f32 0.0, %v2816
        %2818 = vdwg.mxu0
        %2819 = vmatprep.subr.mxu0 0.0
        %2820 = vmatpush1.msra.mxu0 %v486
        %2821 = vmatprep.subr.mxu0 0.0
        %2822 = vmatpush1.msra.mxu0 %v489
        %2823 = vmatprep.subr.mxu0 0.0
        %2824 = vmatpush1.msra.mxu0 0.0
        %2825 = vmatprep.subr.mxu0 0.0
        %2826 = vmatpush1.msra.mxu0 0.0
        %2827 = vmatprep.subr.mxu0 0.0
        %2828 = vmatpush1.msra.mxu0 0.0
        %2829 = vmatprep.subr.mxu0 0.0
        %2830 = vmatpush1.msra.mxu0 0.0
        %2831 = vmatprep.subr.mxu0 0.0
        %2832 = vmatpush1.msra.mxu0 0.0
        %2833 = vmatprep.subr.mxu0 0.0
        %2834 = vmatpush1.msra.mxu0 0.0
        %2835 = vmatprep.subr.mxu0 0.0
        %2836 = vmatpush1.msra.mxu0 0.0
        %2837 = vmatprep.subr.mxu0 0.0
        %2838 = vmatpush1.msra.mxu0 0.0
        %2839 = vmatprep.subr.mxu0 0.0
        %2840 = vmatpush1.msra.mxu0 0.0
        %2841 = vmatprep.subr.mxu0 0.0
        %2842 = vmatpush1.msra.mxu0 0.0
        %2843 = vmatprep.subr.mxu0 0.0
        %2844 = vmatpush1.msra.mxu0 0.0
        %2845 = vmatprep.subr.mxu0 0.0
        %2846 = vmatpush1.msra.mxu0 0.0
        %2847 = vmatprep.subr.mxu0 0.0
        %2848 = vmatpush1.msra.mxu0 0.0
        %2849 = vmatprep.subr.mxu0 0.0
        %2850 = vmatpush1.msra.mxu0 0.0
        %2851 = vmatprep.subr.mxu0 0.0
        %2852 = vmatpush1.msra.mxu0 0.0
        %2853 = vmatprep.subr.mxu0 0.0
        %2854 = vmatpush1.msra.mxu0 0.0
        %2855 = vmatprep.subr.mxu0 0.0
        %2856 = vmatpush1.msra.mxu0 0.0
        %2857 = vmatprep.subr.mxu0 0.0
        %2858 = vmatpush1.msra.mxu0 0.0
        %2859 = vmatprep.subr.mxu0 0.0
        %2860 = vmatpush1.msra.mxu0 0.0
        %2861 = vmatprep.subr.mxu0 0.0
        %2862 = vmatpush1.msra.mxu0 0.0
        %2863 = vmatprep.subr.mxu0 0.0
        %2864 = vmatpush1.msra.mxu0 0.0
        %2865 = vmatprep.subr.mxu0 0.0
        %2866 = vmatpush1.msra.mxu0 0.0
        %2867 = vmatprep.subr.mxu0 0.0
        %2868 = vmatpush1.msra.mxu0 0.0
        %2869 = vmatprep.subr.mxu0 0.0
        %2870 = vmatpush1.msra.mxu0 0.0
        %2871 = vmatprep.subr.mxu0 0.0
        %2872 = vmatpush1.msra.mxu0 0.0
        %2873 = vmatprep.subr.mxu0 0.0
        %2874 = vmatpush1.msra.mxu0 0.0
        %2875 = vmatprep.subr.mxu0 0.0
        %2876 = vmatpush1.msra.mxu0 0.0
        %2877 = vmatprep.subr.mxu0 0.0
        %2878 = vmatpush1.msra.mxu0 0.0
        %2879 = vmatprep.subr.mxu0 0.0
        %2880 = vmatpush1.msra.mxu0 0.0
        %2881 = vmatprep.subr.mxu0 0.0
        %2882 = vmatpush1.msra.mxu0 0.0
        %2883 = vmatprep.mubr.f32.mxu0 0.0
        %2884 = vmatmul.mubr.f32.gmra.mrb[0].mxu0 %v2737
        %v2885 = vpop.f32.mrb[0].mxu0
        %v2886 = vadd.f32 0.0, %v2885
        %v2887 = vpop.f32.mrb[0].mxu0
        %2888 = vmatprep.mubr.f32.mxu0 0.0
        %2889 = vmatmul.mubr.f32.gmra.mrb[0].mxu0 %v2740
        %v2890 = vpop.f32.mrb[0].mxu0
        %v2891 = vadd.f32 0.0, %v2890
        %v2892 = vpop.f32.mrb[0].mxu0
        %2893 = vdwg.mxu0
        %2894 = vmatprep.subr.mxu0 %v491
        %2895 = vmatpush1.msra.mxu0 %v490
        %2896 = vmatprep.subr.mxu0 %v494
        %2897 = vmatpush1.msra.mxu0 %v493
        %2898 = vmatprep.subr.mxu0 %v497
        %2899 = vmatpush1.msra.mxu0 %v496
        %2900 = vmatprep.subr.mxu0 %v500
        %2901 = vmatpush1.msra.mxu0 %v499
        %2902 = vmatprep.subr.mxu0 %v503
        %2903 = vmatpush1.msra.mxu0 %v502
        %2904 = vmatprep.subr.mxu0 %v506
        %2905 = vmatpush1.msra.mxu0 %v505
        %2906 = vmatprep.subr.mxu0 %v509
        %2907 = vmatpush1.msra.mxu0 %v508
        %2908 = vmatprep.subr.mxu0 %v512
        %2909 = vmatpush1.msra.mxu0 %v511
        %2910 = vmatprep.subr.mxu0 %v515
        %2911 = vmatpush1.msra.mxu0 %v514
        %2912 = vmatprep.subr.mxu0 %v518
        %2913 = vmatpush1.msra.mxu0 %v517
        %2914 = vmatprep.subr.mxu0 %v521
        %2915 = vmatpush1.msra.mxu0 %v520
        %2916 = vmatprep.subr.mxu0 %v524
        %2917 = vmatpush1.msra.mxu0 %v523
        %2918 = vmatprep.subr.mxu0 %v527
        %2919 = vmatpush1.msra.mxu0 %v526
        %2920 = vmatprep.subr.mxu0 %v530
        %2921 = vmatpush1.msra.mxu0 %v529
        %2922 = vmatprep.subr.mxu0 %v533
        %2923 = vmatpush1.msra.mxu0 %v532
        %2924 = vmatprep.subr.mxu0 %v536
        %2925 = vmatpush1.msra.mxu0 %v535
        %2926 = vmatprep.subr.mxu0 0.0
        %2927 = vmatpush1.msra.mxu0 0.0
        %2928 = vmatprep.subr.mxu0 0.0
        %2929 = vmatpush1.msra.mxu0 0.0
        %2930 = vmatprep.subr.mxu0 0.0
        %2931 = vmatpush1.msra.mxu0 0.0
        %2932 = vmatprep.subr.mxu0 0.0
        %2933 = vmatpush1.msra.mxu0 0.0
        %2934 = vmatprep.subr.mxu0 0.0
        %2935 = vmatpush1.msra.mxu0 0.0
        %2936 = vmatprep.subr.mxu0 0.0
        %2937 = vmatpush1.msra.mxu0 0.0
        %2938 = vmatprep.subr.mxu0 0.0
        %2939 = vmatpush1.msra.mxu0 0.0
        %2940 = vmatprep.subr.mxu0 0.0
        %2941 = vmatpush1.msra.mxu0 0.0
        %2942 = vmatprep.subr.mxu0 0.0
        %2943 = vmatpush1.msra.mxu0 0.0
        %2944 = vmatprep.subr.mxu0 0.0
        %2945 = vmatpush1.msra.mxu0 0.0
        %2946 = vmatprep.subr.mxu0 0.0
        %2947 = vmatpush1.msra.mxu0 0.0
        %2948 = vmatprep.subr.mxu0 0.0
        %2949 = vmatpush1.msra.mxu0 0.0
        %2950 = vmatprep.subr.mxu0 0.0
        %2951 = vmatpush1.msra.mxu0 0.0
        %2952 = vmatprep.subr.mxu0 0.0
        %2953 = vmatpush1.msra.mxu0 0.0
        %2954 = vmatprep.subr.mxu0 0.0
        %2955 = vmatpush1.msra.mxu0 0.0
        %2956 = vmatprep.subr.mxu0 0.0
        %2957 = vmatpush1.msra.mxu0 0.0
        %2958 = vmatprep.mubr.f32.mxu0 0.0
        %2959 = vmatmul.mubr.f32.gmra.mrb[0].mxu0 %v2731
        %v2960 = vpop.f32.mrb[0].mxu0
        %v2961 = vadd.f32 0.0, %v2960
        %v2962 = vpop.f32.mrb[0].mxu0
        %v2963 = vadd.f32 0.0, %v2962
        %2964 = vmatprep.mubr.f32.mxu0 0.0
        %2965 = vmatmul.mubr.f32.gmra.mrb[0].mxu0 %v2732
        %v2966 = vpop.f32.mrb[0].mxu0
        %v2967 = vadd.f32 0.0, %v2966
        %v2968 = vpop.f32.mrb[0].mxu0
        %v2969 = vadd.f32 0.0, %v2968
        %2970 = vdwg.mxu0
        %2971 = vmatprep.subr.mxu0 0.0
        %2972 = vmatpush1.msra.mxu0 %v492
        %2973 = vmatprep.subr.mxu0 0.0
        %2974 = vmatpush1.msra.mxu0 %v495
        %2975 = vmatprep.subr.mxu0 0.0
        %2976 = vmatpush1.msra.mxu0 %v498
        %2977 = vmatprep.subr.mxu0 0.0
        %2978 = vmatpush1.msra.mxu0 %v501
        %2979 = vmatprep.subr.mxu0 0.0
        %2980 = vmatpush1.msra.mxu0 %v504
        %2981 = vmatprep.subr.mxu0 0.0
        %2982 = vmatpush1.msra.mxu0 %v507
        %2983 = vmatprep.subr.mxu0 0.0
        %2984 = vmatpush1.msra.mxu0 %v510
        %2985 = vmatprep.subr.mxu0 0.0
        %2986 = vmatpush1.msra.mxu0 %v513
        %2987 = vmatprep.subr.mxu0 0.0
        %2988 = vmatpush1.msra.mxu0 %v516
        %2989 = vmatprep.subr.mxu0 0.0
        %2990 = vmatpush1.msra.mxu0 %v519
        %2991 = vmatprep.subr.mxu0 0.0
        %2992 = vmatpush1.msra.mxu0 %v522
        %2993 = vmatprep.subr.mxu0 0.0
        %2994 = vmatpush1.msra.mxu0 %v525
        %2995 = vmatprep.subr.mxu0 0.0
        %2996 = vmatpush1.msra.mxu0 %v528
        %2997 = vmatprep.subr.mxu0 0.0
        %2998 = vmatpush1.msra.mxu0 %v531
        %2999 = vmatprep.subr.mxu0 0.0
        %3000 = vmatpush1.msra.mxu0 %v534
        %3001 = vmatprep.subr.mxu0 0.0
        %3002 = vmatpush1.msra.mxu0 %v537
        %3003 = vmatprep.subr.mxu0 0.0
        %3004 = vmatpush1.msra.mxu0 0.0
        %3005 = vmatprep.subr.mxu0 0.0
        %3006 = vmatpush1.msra.mxu0 0.0
        %3007 = vmatprep.subr.mxu0 0.0
        %3008 = vmatpush1.msra.mxu0 0.0
        %3009 = vmatprep.subr.mxu0 0.0
        %3010 = vmatpush1.msra.mxu0 0.0
        %3011 = vmatprep.subr.mxu0 0.0
        %3012 = vmatpush1.msra.mxu0 0.0
        %3013 = vmatprep.subr.mxu0 0.0
        %3014 = vmatpush1.msra.mxu0 0.0
        %3015 = vmatprep.subr.mxu0 0.0
        %3016 = vmatpush1.msra.mxu0 0.0
        %3017 = vmatprep.subr.mxu0 0.0
        %3018 = vmatpush1.msra.mxu0 0.0
        %3019 = vmatprep.subr.mxu0 0.0
        %3020 = vmatpush1.msra.mxu0 0.0
        %3021 = vmatprep.subr.mxu0 0.0
        %3022 = vmatpush1.msra.mxu0 0.0
        %3023 = vmatprep.subr.mxu0 0.0
        %3024 = vmatpush1.msra.mxu0 0.0
        %3025 = vmatprep.subr.mxu0 0.0
        %3026 = vmatpush1.msra.mxu0 0.0
        %3027 = vmatprep.subr.mxu0 0.0
        %3028 = vmatpush1.msra.mxu0 0.0
        %3029 = vmatprep.subr.mxu0 0.0
        %3030 = vmatpush1.msra.mxu0 0.0
        %3031 = vmatprep.subr.mxu0 0.0
        %3032 = vmatpush1.msra.mxu0 0.0
        %3033 = vmatprep.subr.mxu0 0.0
        %3034 = vmatpush1.msra.mxu0 0.0
        %3035 = vmatprep.mubr.f32.mxu0 0.0
        %3036 = vmatmul.mubr.f32.gmra.mrb[0].mxu0 %v2731
        %v3037 = vpop.f32.mrb[0].mxu0
        %v3038 = vadd.f32 0.0, %v3037
        %v3039 = vpop.f32.mrb[0].mxu0
        %3040 = vmatprep.mubr.f32.mxu0 0.0
        %3041 = vmatmul.mubr.f32.gmra.mrb[0].mxu0 %v2732
        %v3042 = vpop.f32.mrb[0].mxu0
        %v3043 = vadd.f32 0.0, %v3042
        %v3044 = vpop.f32.mrb[0].mxu0
        %3045 = vdwg.mxu0
        %v3046 = vadd.f32 %v2809, %v2961
        %v3047 = vadd.f32 %v2815, %v2967
        %v3048 = vxor.u32 %v3046, 2147483648
        %v3049 = vxor.u32 %v3047, 2147483648
        %v3050 = vmul.f32 %v3048, 1.442695
        %v3051 = vpow.pop %v3050
        %v3052 = vmul.f32 %v3049, 1.442695
        %v3053 = vpow.pop %v3052
        %v3054 = vadd.f32 %v3051, 1.0
        %v3055 = vadd.f32 %v3053, 1.0
        %v3056 = vrcp.pop %v3054
        %v3057 = vmul.f32 1.0, %v3056
        %v3058 = vrcp.pop %v3055
        %v3059 = vmul.f32 1.0, %v3058
        %v3060 = vadd.f32 %v2811, %v2963
        %v3061 = vadd.f32 %v2817, %v2969
        %v3062 = vxor.u32 %v3060, 2147483648
        %v3063 = vxor.u32 %v3061, 2147483648
        %v3064 = vmul.f32 %v3062, 1.442695
        %v3065 = vpow.pop %v3064
        %v3066 = vmul.f32 %v3063, 1.442695
        %v3067 = vpow.pop %v3066
        %v3068 = vadd.f32 %v3065, 1.0
        %v3069 = vadd.f32 %v3067, 1.0
        %v3070 = vrcp.pop %v3068
        %v3071 = vmul.f32 1.0, %v3070
        %v3072 = vrcp.pop %v3069
        %v3073 = vmul.f32 1.0, %v3072
        %v3074 = vadd.f32 %v3038, %v895
        %v3075 = vadd.f32 %v3043, %v895
        %v3076 = vmul.f32 %v3057, %v3074
        %v3077 = vmul.f32 %v3059, %v3075
        %v3078 = vadd.f32 %v2886, %v3076
        %v3079 = vadd.f32 %v2891, %v3077
        %v3080 = vtanh.pop %v3078
        %v3081 = vtanh.pop %v3079
        %v3082 = vsub.f32 1.0, %v3071
        %v3083 = vsub.f32 1.0, %v3073
        %v3084 = vmul.f32 %v3082, %v3080
        %v3085 = vmul.f32 %v3083, %v3081
        %v3086 = vmul.f32 %v3071, %v2731
        %v3087 = vmul.f32 %v3073, %v2732
        %v3088 = vadd.f32 %v3084, %v3086
        %v3089 = vadd.f32 %v3085, %v3087
        %s3090 = sadd.s32 %s547, 6
        %v3091 = vstv %s3090
        %vm3092 = vcmp.lt.s32.totalorder %v3091, %v543
        %vm3093 = vcmp.lt.s32.totalorder %v3091, %v546
        %v3094 = vsel %vm3092, %v3088, %v2731
        %v3095 = vsel %vm3093, %v3089, %v2732
        %s3096 = scalar_lea.vmem %s435, 112 [#allocation3]
        %v3097 = vld [vmem:[%s3096] sm:$0xff]
        %v3098 = vld [vmem:[%s3096 + $0x8] sm:$0xff]
        %v3100 = vsel %vm552, %v3097, 0
        %v3103 = vsel %vm552, %v3098, 0
        %3105 = vmatprep.subr.mxu0 %v485
        %3106 = vmatpush1.msra.mxu0 %v484
        %3107 = vmatprep.subr.mxu0 %v488
        %3108 = vmatpush1.msra.mxu0 %v487
        %3109 = vmatprep.subr.mxu0 0.0
        %3110 = vmatpush1.msra.mxu0 0.0
        %3111 = vmatprep.subr.mxu0 0.0
        %3112 = vmatpush1.msra.mxu0 0.0
        %3113 = vmatprep.subr.mxu0 0.0
        %3114 = vmatpush1.msra.mxu0 0.0
        %3115 = vmatprep.subr.mxu0 0.0
        %3116 = vmatpush1.msra.mxu0 0.0
        %3117 = vmatprep.subr.mxu0 0.0
        %3118 = vmatpush1.msra.mxu0 0.0
        %3119 = vmatprep.subr.mxu0 0.0
        %3120 = vmatpush1.msra.mxu0 0.0
        %3121 = vmatprep.subr.mxu0 0.0
        %3122 = vmatpush1.msra.mxu0 0.0
        %3123 = vmatprep.subr.mxu0 0.0
        %3124 = vmatpush1.msra.mxu0 0.0
        %3125 = vmatprep.subr.mxu0 0.0
        %3126 = vmatpush1.msra.mxu0 0.0
        %3127 = vmatprep.subr.mxu0 0.0
        %3128 = vmatpush1.msra.mxu0 0.0
        %3129 = vmatprep.subr.mxu0 0.0
        %3130 = vmatpush1.msra.mxu0 0.0
        %3131 = vmatprep.subr.mxu0 0.0
        %3132 = vmatpush1.msra.mxu0 0.0
        %3133 = vmatprep.subr.mxu0 0.0
        %3134 = vmatpush1.msra.mxu0 0.0
        %3135 = vmatprep.subr.mxu0 0.0
        %3136 = vmatpush1.msra.mxu0 0.0
        %3137 = vmatprep.subr.mxu0 0.0
        %3138 = vmatpush1.msra.mxu0 0.0
        %3139 = vmatprep.subr.mxu0 0.0
        %3140 = vmatpush1.msra.mxu0 0.0
        %3141 = vmatprep.subr.mxu0 0.0
        %3142 = vmatpush1.msra.mxu0 0.0
        %3143 = vmatprep.subr.mxu0 0.0
        %3144 = vmatpush1.msra.mxu0 0.0
        %3145 = vmatprep.subr.mxu0 0.0
        %3146 = vmatpush1.msra.mxu0 0.0
        %3147 = vmatprep.subr.mxu0 0.0
        %3148 = vmatpush1.msra.mxu0 0.0
        %3149 = vmatprep.subr.mxu0 0.0
        %3150 = vmatpush1.msra.mxu0 0.0
        %3151 = vmatprep.subr.mxu0 0.0
        %3152 = vmatpush1.msra.mxu0 0.0
        %3153 = vmatprep.subr.mxu0 0.0
        %3154 = vmatpush1.msra.mxu0 0.0
        %3155 = vmatprep.subr.mxu0 0.0
        %3156 = vmatpush1.msra.mxu0 0.0
        %3157 = vmatprep.subr.mxu0 0.0
        %3158 = vmatpush1.msra.mxu0 0.0
        %3159 = vmatprep.subr.mxu0 0.0
        %3160 = vmatpush1.msra.mxu0 0.0
        %3161 = vmatprep.subr.mxu0 0.0
        %3162 = vmatpush1.msra.mxu0 0.0
        %3163 = vmatprep.subr.mxu0 0.0
        %3164 = vmatpush1.msra.mxu0 0.0
        %3165 = vmatprep.subr.mxu0 0.0
        %3166 = vmatpush1.msra.mxu0 0.0
        %3167 = vmatprep.subr.mxu0 0.0
        %3168 = vmatpush1.msra.mxu0 0.0
        %3169 = vmatprep.mubr.f32.mxu0 0.0
        %3170 = vmatmul.mubr.f32.gmra.mrb[0].mxu0 %v3100
        %v3171 = vpop.f32.mrb[0].mxu0
        %v3172 = vadd.f32 0.0, %v3171
        %v3173 = vpop.f32.mrb[0].mxu0
        %v3174 = vadd.f32 0.0, %v3173
        %3175 = vmatprep.mubr.f32.mxu0 0.0
        %3176 = vmatmul.mubr.f32.gmra.mrb[0].mxu0 %v3103
        %v3177 = vpop.f32.mrb[0].mxu0
        %v3178 = vadd.f32 0.0, %v3177
        %v3179 = vpop.f32.mrb[0].mxu0
        %v3180 = vadd.f32 0.0, %v3179
        %3181 = vdwg.mxu0
        %3182 = vmatprep.subr.mxu0 0.0
        %3183 = vmatpush1.msra.mxu0 %v486
        %3184 = vmatprep.subr.mxu0 0.0
        %3185 = vmatpush1.msra.mxu0 %v489
        %3186 = vmatprep.subr.mxu0 0.0
        %3187 = vmatpush1.msra.mxu0 0.0
        %3188 = vmatprep.subr.mxu0 0.0
        %3189 = vmatpush1.msra.mxu0 0.0
        %3190 = vmatprep.subr.mxu0 0.0
        %3191 = vmatpush1.msra.mxu0 0.0
        %3192 = vmatprep.subr.mxu0 0.0
        %3193 = vmatpush1.msra.mxu0 0.0
        %3194 = vmatprep.subr.mxu0 0.0
        %3195 = vmatpush1.msra.mxu0 0.0
        %3196 = vmatprep.subr.mxu0 0.0
        %3197 = vmatpush1.msra.mxu0 0.0
        %3198 = vmatprep.subr.mxu0 0.0
        %3199 = vmatpush1.msra.mxu0 0.0
        %3200 = vmatprep.subr.mxu0 0.0
        %3201 = vmatpush1.msra.mxu0 0.0
        %3202 = vmatprep.subr.mxu0 0.0
        %3203 = vmatpush1.msra.mxu0 0.0
        %3204 = vmatprep.subr.mxu0 0.0
        %3205 = vmatpush1.msra.mxu0 0.0
        %3206 = vmatprep.subr.mxu0 0.0
        %3207 = vmatpush1.msra.mxu0 0.0
        %3208 = vmatprep.subr.mxu0 0.0
        %3209 = vmatpush1.msra.mxu0 0.0
        %3210 = vmatprep.subr.mxu0 0.0
        %3211 = vmatpush1.msra.mxu0 0.0
        %3212 = vmatprep.subr.mxu0 0.0
        %3213 = vmatpush1.msra.mxu0 0.0
        %3214 = vmatprep.subr.mxu0 0.0
        %3215 = vmatpush1.msra.mxu0 0.0
        %3216 = vmatprep.subr.mxu0 0.0
        %3217 = vmatpush1.msra.mxu0 0.0
        %3218 = vmatprep.subr.mxu0 0.0
        %3219 = vmatpush1.msra.mxu0 0.0
        %3220 = vmatprep.subr.mxu0 0.0
        %3221 = vmatpush1.msra.mxu0 0.0
        %3222 = vmatprep.subr.mxu0 0.0
        %3223 = vmatpush1.msra.mxu0 0.0
        %3224 = vmatprep.subr.mxu0 0.0
        %3225 = vmatpush1.msra.mxu0 0.0
        %3226 = vmatprep.subr.mxu0 0.0
        %3227 = vmatpush1.msra.mxu0 0.0
        %3228 = vmatprep.subr.mxu0 0.0
        %3229 = vmatpush1.msra.mxu0 0.0
        %3230 = vmatprep.subr.mxu0 0.0
        %3231 = vmatpush1.msra.mxu0 0.0
        %3232 = vmatprep.subr.mxu0 0.0
        %3233 = vmatpush1.msra.mxu0 0.0
        %3234 = vmatprep.subr.mxu0 0.0
        %3235 = vmatpush1.msra.mxu0 0.0
        %3236 = vmatprep.subr.mxu0 0.0
        %3237 = vmatpush1.msra.mxu0 0.0
        %3238 = vmatprep.subr.mxu0 0.0
        %3239 = vmatpush1.msra.mxu0 0.0
        %3240 = vmatprep.subr.mxu0 0.0
        %3241 = vmatpush1.msra.mxu0 0.0
        %3242 = vmatprep.subr.mxu0 0.0
        %3243 = vmatpush1.msra.mxu0 0.0
        %3244 = vmatprep.subr.mxu0 0.0
        %3245 = vmatpush1.msra.mxu0 0.0
        %3246 = vmatprep.mubr.f32.mxu0 0.0
        %3247 = vmatmul.mubr.f32.gmra.mrb[0].mxu0 %v3100
        %v3248 = vpop.f32.mrb[0].mxu0
        %v3249 = vadd.f32 0.0, %v3248
        %v3250 = vpop.f32.mrb[0].mxu0
        %3251 = vmatprep.mubr.f32.mxu0 0.0
        %3252 = vmatmul.mubr.f32.gmra.mrb[0].mxu0 %v3103
        %v3253 = vpop.f32.mrb[0].mxu0
        %v3254 = vadd.f32 0.0, %v3253
        %v3255 = vpop.f32.mrb[0].mxu0
        %3256 = vdwg.mxu0
        %3257 = vmatprep.subr.mxu0 %v491
        %3258 = vmatpush1.msra.mxu0 %v490
        %3259 = vmatprep.subr.mxu0 %v494
        %3260 = vmatpush1.msra.mxu0 %v493
        %3261 = vmatprep.subr.mxu0 %v497
        %3262 = vmatpush1.msra.mxu0 %v496
        %3263 = vmatprep.subr.mxu0 %v500
        %3264 = vmatpush1.msra.mxu0 %v499
        %3265 = vmatprep.subr.mxu0 %v503
        %3266 = vmatpush1.msra.mxu0 %v502
        %3267 = vmatprep.subr.mxu0 %v506
        %3268 = vmatpush1.msra.mxu0 %v505
        %3269 = vmatprep.subr.mxu0 %v509
        %3270 = vmatpush1.msra.mxu0 %v508
        %3271 = vmatprep.subr.mxu0 %v512
        %3272 = vmatpush1.msra.mxu0 %v511
        %3273 = vmatprep.subr.mxu0 %v515
        %3274 = vmatpush1.msra.mxu0 %v514
        %3275 = vmatprep.subr.mxu0 %v518
        %3276 = vmatpush1.msra.mxu0 %v517
        %3277 = vmatprep.subr.mxu0 %v521
        %3278 = vmatpush1.msra.mxu0 %v520
        %3279 = vmatprep.subr.mxu0 %v524
        %3280 = vmatpush1.msra.mxu0 %v523
        %3281 = vmatprep.subr.mxu0 %v527
        %3282 = vmatpush1.msra.mxu0 %v526
        %3283 = vmatprep.subr.mxu0 %v530
        %3284 = vmatpush1.msra.mxu0 %v529
        %3285 = vmatprep.subr.mxu0 %v533
        %3286 = vmatpush1.msra.mxu0 %v532
        %3287 = vmatprep.subr.mxu0 %v536
        %3288 = vmatpush1.msra.mxu0 %v535
        %3289 = vmatprep.subr.mxu0 0.0
        %3290 = vmatpush1.msra.mxu0 0.0
        %3291 = vmatprep.subr.mxu0 0.0
        %3292 = vmatpush1.msra.mxu0 0.0
        %3293 = vmatprep.subr.mxu0 0.0
        %3294 = vmatpush1.msra.mxu0 0.0
        %3295 = vmatprep.subr.mxu0 0.0
        %3296 = vmatpush1.msra.mxu0 0.0
        %3297 = vmatprep.subr.mxu0 0.0
        %3298 = vmatpush1.msra.mxu0 0.0
        %3299 = vmatprep.subr.mxu0 0.0
        %3300 = vmatpush1.msra.mxu0 0.0
        %3301 = vmatprep.subr.mxu0 0.0
        %3302 = vmatpush1.msra.mxu0 0.0
        %3303 = vmatprep.subr.mxu0 0.0
        %3304 = vmatpush1.msra.mxu0 0.0
        %3305 = vmatprep.subr.mxu0 0.0
        %3306 = vmatpush1.msra.mxu0 0.0
        %3307 = vmatprep.subr.mxu0 0.0
        %3308 = vmatpush1.msra.mxu0 0.0
        %3309 = vmatprep.subr.mxu0 0.0
        %3310 = vmatpush1.msra.mxu0 0.0
        %3311 = vmatprep.subr.mxu0 0.0
        %3312 = vmatpush1.msra.mxu0 0.0
        %3313 = vmatprep.subr.mxu0 0.0
        %3314 = vmatpush1.msra.mxu0 0.0
        %3315 = vmatprep.subr.mxu0 0.0
        %3316 = vmatpush1.msra.mxu0 0.0
        %3317 = vmatprep.subr.mxu0 0.0
        %3318 = vmatpush1.msra.mxu0 0.0
        %3319 = vmatprep.subr.mxu0 0.0
        %3320 = vmatpush1.msra.mxu0 0.0
        %3321 = vmatprep.mubr.f32.mxu0 0.0
        %3322 = vmatmul.mubr.f32.gmra.mrb[0].mxu0 %v3094
        %v3323 = vpop.f32.mrb[0].mxu0
        %v3324 = vadd.f32 0.0, %v3323
        %v3325 = vpop.f32.mrb[0].mxu0
        %v3326 = vadd.f32 0.0, %v3325
        %3327 = vmatprep.mubr.f32.mxu0 0.0
        %3328 = vmatmul.mubr.f32.gmra.mrb[0].mxu0 %v3095
        %v3329 = vpop.f32.mrb[0].mxu0
        %v3330 = vadd.f32 0.0, %v3329
        %v3331 = vpop.f32.mrb[0].mxu0
        %v3332 = vadd.f32 0.0, %v3331
        %3333 = vdwg.mxu0
        %3334 = vmatprep.subr.mxu0 0.0
        %3335 = vmatpush1.msra.mxu0 %v492
        %3336 = vmatprep.subr.mxu0 0.0
        %3337 = vmatpush1.msra.mxu0 %v495
        %3338 = vmatprep.subr.mxu0 0.0
        %3339 = vmatpush1.msra.mxu0 %v498
        %3340 = vmatprep.subr.mxu0 0.0
        %3341 = vmatpush1.msra.mxu0 %v501
        %3342 = vmatprep.subr.mxu0 0.0
        %3343 = vmatpush1.msra.mxu0 %v504
        %3344 = vmatprep.subr.mxu0 0.0
        %3345 = vmatpush1.msra.mxu0 %v507
        %3346 = vmatprep.subr.mxu0 0.0
        %3347 = vmatpush1.msra.mxu0 %v510
        %3348 = vmatprep.subr.mxu0 0.0
        %3349 = vmatpush1.msra.mxu0 %v513
        %3350 = vmatprep.subr.mxu0 0.0
        %3351 = vmatpush1.msra.mxu0 %v516
        %3352 = vmatprep.subr.mxu0 0.0
        %3353 = vmatpush1.msra.mxu0 %v519
        %3354 = vmatprep.subr.mxu0 0.0
        %3355 = vmatpush1.msra.mxu0 %v522
        %3356 = vmatprep.subr.mxu0 0.0
        %3357 = vmatpush1.msra.mxu0 %v525
        %3358 = vmatprep.subr.mxu0 0.0
        %3359 = vmatpush1.msra.mxu0 %v528
        %3360 = vmatprep.subr.mxu0 0.0
        %3361 = vmatpush1.msra.mxu0 %v531
        %3362 = vmatprep.subr.mxu0 0.0
        %3363 = vmatpush1.msra.mxu0 %v534
        %3364 = vmatprep.subr.mxu0 0.0
        %3365 = vmatpush1.msra.mxu0 %v537
        %3366 = vmatprep.subr.mxu0 0.0
        %3367 = vmatpush1.msra.mxu0 0.0
        %3368 = vmatprep.subr.mxu0 0.0
        %3369 = vmatpush1.msra.mxu0 0.0
        %3370 = vmatprep.subr.mxu0 0.0
        %3371 = vmatpush1.msra.mxu0 0.0
        %3372 = vmatprep.subr.mxu0 0.0
        %3373 = vmatpush1.msra.mxu0 0.0
        %3374 = vmatprep.subr.mxu0 0.0
        %3375 = vmatpush1.msra.mxu0 0.0
        %3376 = vmatprep.subr.mxu0 0.0
        %3377 = vmatpush1.msra.mxu0 0.0
        %3378 = vmatprep.subr.mxu0 0.0
        %3379 = vmatpush1.msra.mxu0 0.0
        %3380 = vmatprep.subr.mxu0 0.0
        %3381 = vmatpush1.msra.mxu0 0.0
        %3382 = vmatprep.subr.mxu0 0.0
        %3383 = vmatpush1.msra.mxu0 0.0
        %3384 = vmatprep.subr.mxu0 0.0
        %3385 = vmatpush1.msra.mxu0 0.0
        %3386 = vmatprep.subr.mxu0 0.0
        %3387 = vmatpush1.msra.mxu0 0.0
        %3388 = vmatprep.subr.mxu0 0.0
        %3389 = vmatpush1.msra.mxu0 0.0
        %3390 = vmatprep.subr.mxu0 0.0
        %3391 = vmatpush1.msra.mxu0 0.0
        %3392 = vmatprep.subr.mxu0 0.0
        %3393 = vmatpush1.msra.mxu0 0.0
        %3394 = vmatprep.subr.mxu0 0.0
        %3395 = vmatpush1.msra.mxu0 0.0
        %3396 = vmatprep.subr.mxu0 0.0
        %3397 = vmatpush1.msra.mxu0 0.0
        %3398 = vmatprep.mubr.f32.mxu0 0.0
        %3399 = vmatmul.mubr.f32.gmra.mrb[0].mxu0 %v3094
        %v3400 = vpop.f32.mrb[0].mxu0
        %v3401 = vadd.f32 0.0, %v3400
        %v3402 = vpop.f32.mrb[0].mxu0
        %3403 = vmatprep.mubr.f32.mxu0 0.0
        %3404 = vmatmul.mubr.f32.gmra.mrb[0].mxu0 %v3095
        %v3405 = vpop.f32.mrb[0].mxu0
        %v3406 = vadd.f32 0.0, %v3405
        %v3407 = vpop.f32.mrb[0].mxu0
        %3408 = vdwg.mxu0
        %v3409 = vadd.f32 %v3172, %v3324
        %v3410 = vadd.f32 %v3178, %v3330
        %v3411 = vxor.u32 %v3409, 2147483648
        %v3412 = vxor.u32 %v3410, 2147483648
        %v3413 = vmul.f32 %v3411, 1.442695
        %v3414 = vpow.pop %v3413
        %v3415 = vmul.f32 %v3412, 1.442695
        %v3416 = vpow.pop %v3415
        %v3417 = vadd.f32 %v3414, 1.0
        %v3418 = vadd.f32 %v3416, 1.0
        %v3419 = vrcp.pop %v3417
        %v3420 = vmul.f32 1.0, %v3419
        %v3421 = vrcp.pop %v3418
        %v3422 = vmul.f32 1.0, %v3421
        %v3423 = vadd.f32 %v3174, %v3326
        %v3424 = vadd.f32 %v3180, %v3332
        %v3425 = vxor.u32 %v3423, 2147483648
        %v3426 = vxor.u32 %v3424, 2147483648
        %v3427 = vmul.f32 %v3425, 1.442695
        %v3428 = vpow.pop %v3427
        %v3429 = vmul.f32 %v3426, 1.442695
        %v3430 = vpow.pop %v3429
        %v3431 = vadd.f32 %v3428, 1.0
        %v3432 = vadd.f32 %v3430, 1.0
        %v3433 = vrcp.pop %v3431
        %v3434 = vmul.f32 1.0, %v3433
        %v3435 = vrcp.pop %v3432
        %v3436 = vmul.f32 1.0, %v3435
        %v3437 = vadd.f32 %v3401, %v895
        %v3438 = vadd.f32 %v3406, %v895
        %v3439 = vmul.f32 %v3420, %v3437
        %v3440 = vmul.f32 %v3422, %v3438
        %v3441 = vadd.f32 %v3249, %v3439
        %v3442 = vadd.f32 %v3254, %v3440
        %v3443 = vtanh.pop %v3441
        %v3444 = vtanh.pop %v3442
        %v3445 = vsub.f32 1.0, %v3434
        %v3446 = vsub.f32 1.0, %v3436
        %v3447 = vmul.f32 %v3445, %v3443
        %v3448 = vmul.f32 %v3446, %v3444
        %v3449 = vmul.f32 %v3434, %v3094
        %v3450 = vmul.f32 %v3436, %v3095
        %v3451 = vadd.f32 %v3447, %v3449
        %v3452 = vadd.f32 %v3448, %v3450
        %s3453 = sadd.s32 %s547, 7
        %v3454 = vstv %s3453
        %vm3455 = vcmp.lt.s32.totalorder %v3454, %v543
        %vm3456 = vcmp.lt.s32.totalorder %v3454, %v546
        %v3457 = vsel %vm3455, %v3451, %v3094
        %v3458 = vsel %vm3456, %v3452, %v3095
        %s3459 = scalar_lea.vmem %s435, 128 [#allocation3]
        %v3460 = vld [vmem:[%s3459] sm:$0xff]
        %v3461 = vld [vmem:[%s3459 + $0x8] sm:$0xff]
        %v3463 = vsel %vm552, %v3460, 0
        %v3466 = vsel %vm552, %v3461, 0
        %3468 = vmatprep.subr.mxu0 %v485
        %3469 = vmatpush1.msra.mxu0 %v484
        %3470 = vmatprep.subr.mxu0 %v488
        %3471 = vmatpush1.msra.mxu0 %v487
        %3472 = vmatprep.subr.mxu0 0.0
        %3473 = vmatpush1.msra.mxu0 0.0
        %3474 = vmatprep.subr.mxu0 0.0
        %3475 = vmatpush1.msra.mxu0 0.0
        %3476 = vmatprep.subr.mxu0 0.0
        %3477 = vmatpush1.msra.mxu0 0.0
        %3478 = vmatprep.subr.mxu0 0.0
        %3479 = vmatpush1.msra.mxu0 0.0
        %3480 = vmatprep.subr.mxu0 0.0
        %3481 = vmatpush1.msra.mxu0 0.0
        %3482 = vmatprep.subr.mxu0 0.0
        %3483 = vmatpush1.msra.mxu0 0.0
        %3484 = vmatprep.subr.mxu0 0.0
        %3485 = vmatpush1.msra.mxu0 0.0
        %3486 = vmatprep.subr.mxu0 0.0
        %3487 = vmatpush1.msra.mxu0 0.0
        %3488 = vmatprep.subr.mxu0 0.0
        %3489 = vmatpush1.msra.mxu0 0.0
        %3490 = vmatprep.subr.mxu0 0.0
        %3491 = vmatpush1.msra.mxu0 0.0
        %3492 = vmatprep.subr.mxu0 0.0
        %3493 = vmatpush1.msra.mxu0 0.0
        %3494 = vmatprep.subr.mxu0 0.0
        %3495 = vmatpush1.msra.mxu0 0.0
        %3496 = vmatprep.subr.mxu0 0.0
        %3497 = vmatpush1.msra.mxu0 0.0
        %3498 = vmatprep.subr.mxu0 0.0
        %3499 = vmatpush1.msra.mxu0 0.0
        %3500 = vmatprep.subr.mxu0 0.0
        %3501 = vmatpush1.msra.mxu0 0.0
        %3502 = vmatprep.subr.mxu0 0.0
        %3503 = vmatpush1.msra.mxu0 0.0
        %3504 = vmatprep.subr.mxu0 0.0
        %3505 = vmatpush1.msra.mxu0 0.0
        %3506 = vmatprep.subr.mxu0 0.0
        %3507 = vmatpush1.msra.mxu0 0.0
        %3508 = vmatprep.subr.mxu0 0.0
        %3509 = vmatpush1.msra.mxu0 0.0
        %3510 = vmatprep.subr.mxu0 0.0
        %3511 = vmatpush1.msra.mxu0 0.0
        %3512 = vmatprep.subr.mxu0 0.0
        %3513 = vmatpush1.msra.mxu0 0.0
        %3514 = vmatprep.subr.mxu0 0.0
        %3515 = vmatpush1.msra.mxu0 0.0
        %3516 = vmatprep.subr.mxu0 0.0
        %3517 = vmatpush1.msra.mxu0 0.0
        %3518 = vmatprep.subr.mxu0 0.0
        %3519 = vmatpush1.msra.mxu0 0.0
        %3520 = vmatprep.subr.mxu0 0.0
        %3521 = vmatpush1.msra.mxu0 0.0
        %3522 = vmatprep.subr.mxu0 0.0
        %3523 = vmatpush1.msra.mxu0 0.0
        %3524 = vmatprep.subr.mxu0 0.0
        %3525 = vmatpush1.msra.mxu0 0.0
        %3526 = vmatprep.subr.mxu0 0.0
        %3527 = vmatpush1.msra.mxu0 0.0
        %3528 = vmatprep.subr.mxu0 0.0
        %3529 = vmatpush1.msra.mxu0 0.0
        %3530 = vmatprep.subr.mxu0 0.0
        %3531 = vmatpush1.msra.mxu0 0.0
        %3532 = vmatprep.mubr.f32.mxu0 0.0
        %3533 = vmatmul.mubr.f32.gmra.mrb[0].mxu0 %v3463
        %v3534 = vpop.f32.mrb[0].mxu0
        %v3535 = vadd.f32 0.0, %v3534
        %v3536 = vpop.f32.mrb[0].mxu0
        %v3537 = vadd.f32 0.0, %v3536
        %3538 = vmatprep.mubr.f32.mxu0 0.0
        %3539 = vmatmul.mubr.f32.gmra.mrb[0].mxu0 %v3466
        %v3540 = vpop.f32.mrb[0].mxu0
        %v3541 = vadd.f32 0.0, %v3540
        %v3542 = vpop.f32.mrb[0].mxu0
        %v3543 = vadd.f32 0.0, %v3542
        %3544 = vdwg.mxu0
        %3545 = vmatprep.subr.mxu0 0.0
        %3546 = vmatpush1.msra.mxu0 %v486
        %3547 = vmatprep.subr.mxu0 0.0
        %3548 = vmatpush1.msra.mxu0 %v489
        %3549 = vmatprep.subr.mxu0 0.0
        %3550 = vmatpush1.msra.mxu0 0.0
        %3551 = vmatprep.subr.mxu0 0.0
        %3552 = vmatpush1.msra.mxu0 0.0
        %3553 = vmatprep.subr.mxu0 0.0
        %3554 = vmatpush1.msra.mxu0 0.0
        %3555 = vmatprep.subr.mxu0 0.0
        %3556 = vmatpush1.msra.mxu0 0.0
        %3557 = vmatprep.subr.mxu0 0.0
        %3558 = vmatpush1.msra.mxu0 0.0
        %3559 = vmatprep.subr.mxu0 0.0
        %3560 = vmatpush1.msra.mxu0 0.0
        %3561 = vmatprep.subr.mxu0 0.0
        %3562 = vmatpush1.msra.mxu0 0.0
        %3563 = vmatprep.subr.mxu0 0.0
        %3564 = vmatpush1.msra.mxu0 0.0
        %3565 = vmatprep.subr.mxu0 0.0
        %3566 = vmatpush1.msra.mxu0 0.0
        %3567 = vmatprep.subr.mxu0 0.0
        %3568 = vmatpush1.msra.mxu0 0.0
        %3569 = vmatprep.subr.mxu0 0.0
        %3570 = vmatpush1.msra.mxu0 0.0
        %3571 = vmatprep.subr.mxu0 0.0
        %3572 = vmatpush1.msra.mxu0 0.0
        %3573 = vmatprep.subr.mxu0 0.0
        %3574 = vmatpush1.msra.mxu0 0.0
        %3575 = vmatprep.subr.mxu0 0.0
        %3576 = vmatpush1.msra.mxu0 0.0
        %3577 = vmatprep.subr.mxu0 0.0
        %3578 = vmatpush1.msra.mxu0 0.0
        %3579 = vmatprep.subr.mxu0 0.0
        %3580 = vmatpush1.msra.mxu0 0.0
        %3581 = vmatprep.subr.mxu0 0.0
        %3582 = vmatpush1.msra.mxu0 0.0
        %3583 = vmatprep.subr.mxu0 0.0
        %3584 = vmatpush1.msra.mxu0 0.0
        %3585 = vmatprep.subr.mxu0 0.0
        %3586 = vmatpush1.msra.mxu0 0.0
        %3587 = vmatprep.subr.mxu0 0.0
        %3588 = vmatpush1.msra.mxu0 0.0
        %3589 = vmatprep.subr.mxu0 0.0
        %3590 = vmatpush1.msra.mxu0 0.0
        %3591 = vmatprep.subr.mxu0 0.0
        %3592 = vmatpush1.msra.mxu0 0.0
        %3593 = vmatprep.subr.mxu0 0.0
        %3594 = vmatpush1.msra.mxu0 0.0
        %3595 = vmatprep.subr.mxu0 0.0
        %3596 = vmatpush1.msra.mxu0 0.0
        %3597 = vmatprep.subr.mxu0 0.0
        %3598 = vmatpush1.msra.mxu0 0.0
        %3599 = vmatprep.subr.mxu0 0.0
        %3600 = vmatpush1.msra.mxu0 0.0
        %3601 = vmatprep.subr.mxu0 0.0
        %3602 = vmatpush1.msra.mxu0 0.0
        %3603 = vmatprep.subr.mxu0 0.0
        %3604 = vmatpush1.msra.mxu0 0.0
        %3605 = vmatprep.subr.mxu0 0.0
        %3606 = vmatpush1.msra.mxu0 0.0
        %3607 = vmatprep.subr.mxu0 0.0
        %3608 = vmatpush1.msra.mxu0 0.0
        %3609 = vmatprep.mubr.f32.mxu0 0.0
        %3610 = vmatmul.mubr.f32.gmra.mrb[0].mxu0 %v3463
        %v3611 = vpop.f32.mrb[0].mxu0
        %v3612 = vadd.f32 0.0, %v3611
        %v3613 = vpop.f32.mrb[0].mxu0
        %3614 = vmatprep.mubr.f32.mxu0 0.0
        %3615 = vmatmul.mubr.f32.gmra.mrb[0].mxu0 %v3466
        %v3616 = vpop.f32.mrb[0].mxu0
        %v3617 = vadd.f32 0.0, %v3616
        %v3618 = vpop.f32.mrb[0].mxu0
        %3619 = vdwg.mxu0
        %3620 = vmatprep.subr.mxu0 %v491
        %3621 = vmatpush1.msra.mxu0 %v490
        %3622 = vmatprep.subr.mxu0 %v494
        %3623 = vmatpush1.msra.mxu0 %v493
        %3624 = vmatprep.subr.mxu0 %v497
        %3625 = vmatpush1.msra.mxu0 %v496
        %3626 = vmatprep.subr.mxu0 %v500
        %3627 = vmatpush1.msra.mxu0 %v499
        %3628 = vmatprep.subr.mxu0 %v503
        %3629 = vmatpush1.msra.mxu0 %v502
        %3630 = vmatprep.subr.mxu0 %v506
        %3631 = vmatpush1.msra.mxu0 %v505
        %3632 = vmatprep.subr.mxu0 %v509
        %3633 = vmatpush1.msra.mxu0 %v508
        %3634 = vmatprep.subr.mxu0 %v512
        %3635 = vmatpush1.msra.mxu0 %v511
        %3636 = vmatprep.subr.mxu0 %v515
        %3637 = vmatpush1.msra.mxu0 %v514
        %3638 = vmatprep.subr.mxu0 %v518
        %3639 = vmatpush1.msra.mxu0 %v517
        %3640 = vmatprep.subr.mxu0 %v521
        %3641 = vmatpush1.msra.mxu0 %v520
        %3642 = vmatprep.subr.mxu0 %v524
        %3643 = vmatpush1.msra.mxu0 %v523
        %3644 = vmatprep.subr.mxu0 %v527
        %3645 = vmatpush1.msra.mxu0 %v526
        %3646 = vmatprep.subr.mxu0 %v530
        %3647 = vmatpush1.msra.mxu0 %v529
        %3648 = vmatprep.subr.mxu0 %v533
        %3649 = vmatpush1.msra.mxu0 %v532
        %3650 = vmatprep.subr.mxu0 %v536
        %3651 = vmatpush1.msra.mxu0 %v535
        %3652 = vmatprep.subr.mxu0 0.0
        %3653 = vmatpush1.msra.mxu0 0.0
        %3654 = vmatprep.subr.mxu0 0.0
        %3655 = vmatpush1.msra.mxu0 0.0
        %3656 = vmatprep.subr.mxu0 0.0
        %3657 = vmatpush1.msra.mxu0 0.0
        %3658 = vmatprep.subr.mxu0 0.0
        %3659 = vmatpush1.msra.mxu0 0.0
        %3660 = vmatprep.subr.mxu0 0.0
        %3661 = vmatpush1.msra.mxu0 0.0
        %3662 = vmatprep.subr.mxu0 0.0
        %3663 = vmatpush1.msra.mxu0 0.0
        %3664 = vmatprep.subr.mxu0 0.0
        %3665 = vmatpush1.msra.mxu0 0.0
        %3666 = vmatprep.subr.mxu0 0.0
        %3667 = vmatpush1.msra.mxu0 0.0
        %3668 = vmatprep.subr.mxu0 0.0
        %3669 = vmatpush1.msra.mxu0 0.0
        %3670 = vmatprep.subr.mxu0 0.0
        %3671 = vmatpush1.msra.mxu0 0.0
        %3672 = vmatprep.subr.mxu0 0.0
        %3673 = vmatpush1.msra.mxu0 0.0
        %3674 = vmatprep.subr.mxu0 0.0
        %3675 = vmatpush1.msra.mxu0 0.0
        %3676 = vmatprep.subr.mxu0 0.0
        %3677 = vmatpush1.msra.mxu0 0.0
        %3678 = vmatprep.subr.mxu0 0.0
        %3679 = vmatpush1.msra.mxu0 0.0
        %3680 = vmatprep.subr.mxu0 0.0
        %3681 = vmatpush1.msra.mxu0 0.0
        %3682 = vmatprep.subr.mxu0 0.0
        %3683 = vmatpush1.msra.mxu0 0.0
        %3684 = vmatprep.mubr.f32.mxu0 0.0
        %3685 = vmatmul.mubr.f32.gmra.mrb[0].mxu0 %v3457
        %v3686 = vpop.f32.mrb[0].mxu0
        %v3687 = vadd.f32 0.0, %v3686
        %v3688 = vpop.f32.mrb[0].mxu0
        %v3689 = vadd.f32 0.0, %v3688
        %3690 = vmatprep.mubr.f32.mxu0 0.0
        %3691 = vmatmul.mubr.f32.gmra.mrb[0].mxu0 %v3458
        %v3692 = vpop.f32.mrb[0].mxu0
        %v3693 = vadd.f32 0.0, %v3692
        %v3694 = vpop.f32.mrb[0].mxu0
        %v3695 = vadd.f32 0.0, %v3694
        %3696 = vdwg.mxu0
        %3697 = vmatprep.subr.mxu0 0.0
        %3698 = vmatpush1.msra.mxu0 %v492
        %3699 = vmatprep.subr.mxu0 0.0
        %3700 = vmatpush1.msra.mxu0 %v495
        %3701 = vmatprep.subr.mxu0 0.0
        %3702 = vmatpush1.msra.mxu0 %v498
        %3703 = vmatprep.subr.mxu0 0.0
        %3704 = vmatpush1.msra.mxu0 %v501
        %3705 = vmatprep.subr.mxu0 0.0
        %3706 = vmatpush1.msra.mxu0 %v504
        %3707 = vmatprep.subr.mxu0 0.0
        %3708 = vmatpush1.msra.mxu0 %v507
        %3709 = vmatprep.subr.mxu0 0.0
        %3710 = vmatpush1.msra.mxu0 %v510
        %3711 = vmatprep.subr.mxu0 0.0
        %3712 = vmatpush1.msra.mxu0 %v513
        %3713 = vmatprep.subr.mxu0 0.0
        %3714 = vmatpush1.msra.mxu0 %v516
        %3715 = vmatprep.subr.mxu0 0.0
        %3716 = vmatpush1.msra.mxu0 %v519
        %3717 = vmatprep.subr.mxu0 0.0
        %3718 = vmatpush1.msra.mxu0 %v522
        %3719 = vmatprep.subr.mxu0 0.0
        %3720 = vmatpush1.msra.mxu0 %v525
        %3721 = vmatprep.subr.mxu0 0.0
        %3722 = vmatpush1.msra.mxu0 %v528
        %3723 = vmatprep.subr.mxu0 0.0
        %3724 = vmatpush1.msra.mxu0 %v531
        %3725 = vmatprep.subr.mxu0 0.0
        %3726 = vmatpush1.msra.mxu0 %v534
        %3727 = vmatprep.subr.mxu0 0.0
        %3728 = vmatpush1.msra.mxu0 %v537
        %3729 = vmatprep.subr.mxu0 0.0
        %3730 = vmatpush1.msra.mxu0 0.0
        %3731 = vmatprep.subr.mxu0 0.0
        %3732 = vmatpush1.msra.mxu0 0.0
        %3733 = vmatprep.subr.mxu0 0.0
        %3734 = vmatpush1.msra.mxu0 0.0
        %3735 = vmatprep.subr.mxu0 0.0
        %3736 = vmatpush1.msra.mxu0 0.0
        %3737 = vmatprep.subr.mxu0 0.0
        %3738 = vmatpush1.msra.mxu0 0.0
        %3739 = vmatprep.subr.mxu0 0.0
        %3740 = vmatpush1.msra.mxu0 0.0
        %3741 = vmatprep.subr.mxu0 0.0
        %3742 = vmatpush1.msra.mxu0 0.0
        %3743 = vmatprep.subr.mxu0 0.0
        %3744 = vmatpush1.msra.mxu0 0.0
        %3745 = vmatprep.subr.mxu0 0.0
        %3746 = vmatpush1.msra.mxu0 0.0
        %3747 = vmatprep.subr.mxu0 0.0
        %3748 = vmatpush1.msra.mxu0 0.0
        %3749 = vmatprep.subr.mxu0 0.0
        %3750 = vmatpush1.msra.mxu0 0.0
        %3751 = vmatprep.subr.mxu0 0.0
        %3752 = vmatpush1.msra.mxu0 0.0
        %3753 = vmatprep.subr.mxu0 0.0
        %3754 = vmatpush1.msra.mxu0 0.0
        %3755 = vmatprep.subr.mxu0 0.0
        %3756 = vmatpush1.msra.mxu0 0.0
        %3757 = vmatprep.subr.mxu0 0.0
        %3758 = vmatpush1.msra.mxu0 0.0
        %3759 = vmatprep.subr.mxu0 0.0
        %3760 = vmatpush1.msra.mxu0 0.0
        %3761 = vmatprep.mubr.f32.mxu0 0.0
        %3762 = vmatmul.mubr.f32.gmra.mrb[0].mxu0 %v3457
        %v3763 = vpop.f32.mrb[0].mxu0
        %v3764 = vadd.f32 0.0, %v3763
        %v3765 = vpop.f32.mrb[0].mxu0
        %3766 = vmatprep.mubr.f32.mxu0 0.0
        %3767 = vmatmul.mubr.f32.gmra.mrb[0].mxu0 %v3458
        %v3768 = vpop.f32.mrb[0].mxu0
        %v3769 = vadd.f32 0.0, %v3768
        %v3770 = vpop.f32.mrb[0].mxu0
        %3771 = vdwg.mxu0
        %v3772 = vadd.f32 %v3535, %v3687
        %v3773 = vadd.f32 %v3541, %v3693
        %v3774 = vxor.u32 %v3772, 2147483648
        %v3775 = vxor.u32 %v3773, 2147483648
        %v3776 = vmul.f32 %v3774, 1.442695
        %v3777 = vpow.pop %v3776
        %v3778 = vmul.f32 %v3775, 1.442695
        %v3779 = vpow.pop %v3778
        %v3780 = vadd.f32 %v3777, 1.0
        %v3781 = vadd.f32 %v3779, 1.0
        %v3782 = vrcp.pop %v3780
        %v3783 = vmul.f32 1.0, %v3782
        %v3784 = vrcp.pop %v3781
        %v3785 = vmul.f32 1.0, %v3784
        %v3786 = vadd.f32 %v3537, %v3689
        %v3787 = vadd.f32 %v3543, %v3695
        %v3788 = vxor.u32 %v3786, 2147483648
        %v3789 = vxor.u32 %v3787, 2147483648
        %v3790 = vmul.f32 %v3788, 1.442695
        %v3791 = vpow.pop %v3790
        %v3792 = vmul.f32 %v3789, 1.442695
        %v3793 = vpow.pop %v3792
        %v3794 = vadd.f32 %v3791, 1.0
        %v3795 = vadd.f32 %v3793, 1.0
        %v3796 = vrcp.pop %v3794
        %v3797 = vmul.f32 1.0, %v3796
        %v3798 = vrcp.pop %v3795
        %v3799 = vmul.f32 1.0, %v3798
        %v3800 = vadd.f32 %v3764, %v895
        %v3801 = vadd.f32 %v3769, %v895
        %v3802 = vmul.f32 %v3783, %v3800
        %v3803 = vmul.f32 %v3785, %v3801
        %v3804 = vadd.f32 %v3612, %v3802
        %v3805 = vadd.f32 %v3617, %v3803
        %v3806 = vtanh.pop %v3804
        %v3807 = vtanh.pop %v3805
        %v3808 = vsub.f32 1.0, %v3797
        %v3809 = vsub.f32 1.0, %v3799
        %v3810 = vmul.f32 %v3808, %v3806
        %v3811 = vmul.f32 %v3809, %v3807
        %v3812 = vmul.f32 %v3797, %v3457
        %v3813 = vmul.f32 %v3799, %v3458
        %v3814 = vadd.f32 %v3810, %v3812
        %v3815 = vadd.f32 %v3811, %v3813
        %s3816 = sadd.s32 %s547, 8
        %v3817 = vstv %s3816
        %vm3818 = vcmp.lt.s32.totalorder %v3817, %v543
        %vm3819 = vcmp.lt.s32.totalorder %v3817, %v546
        %v3820 = vsel %vm3818, %v3814, %v3457
        %v3821 = vsel %vm3819, %v3815, %v3458
        %s3822 = scalar_lea.vmem %s435, 144 [#allocation3]
        %v3823 = vld [vmem:[%s3822] sm:$0xff]
        %v3824 = vld [vmem:[%s3822 + $0x8] sm:$0xff]
        %v3826 = vsel %vm552, %v3823, 0
        %v3829 = vsel %vm552, %v3824, 0
        %3831 = vmatprep.subr.mxu0 %v485
        %3832 = vmatpush1.msra.mxu0 %v484
        %3833 = vmatprep.subr.mxu0 %v488
        %3834 = vmatpush1.msra.mxu0 %v487
        %3835 = vmatprep.subr.mxu0 0.0
        %3836 = vmatpush1.msra.mxu0 0.0
        %3837 = vmatprep.subr.mxu0 0.0
        %3838 = vmatpush1.msra.mxu0 0.0
        %3839 = vmatprep.subr.mxu0 0.0
        %3840 = vmatpush1.msra.mxu0 0.0
        %3841 = vmatprep.subr.mxu0 0.0
        %3842 = vmatpush1.msra.mxu0 0.0
        %3843 = vmatprep.subr.mxu0 0.0
        %3844 = vmatpush1.msra.mxu0 0.0
        %3845 = vmatprep.subr.mxu0 0.0
        %3846 = vmatpush1.msra.mxu0 0.0
        %3847 = vmatprep.subr.mxu0 0.0
        %3848 = vmatpush1.msra.mxu0 0.0
        %3849 = vmatprep.subr.mxu0 0.0
        %3850 = vmatpush1.msra.mxu0 0.0
        %3851 = vmatprep.subr.mxu0 0.0
        %3852 = vmatpush1.msra.mxu0 0.0
        %3853 = vmatprep.subr.mxu0 0.0
        %3854 = vmatpush1.msra.mxu0 0.0
        %3855 = vmatprep.subr.mxu0 0.0
        %3856 = vmatpush1.msra.mxu0 0.0
        %3857 = vmatprep.subr.mxu0 0.0
        %3858 = vmatpush1.msra.mxu0 0.0
        %3859 = vmatprep.subr.mxu0 0.0
        %3860 = vmatpush1.msra.mxu0 0.0
        %3861 = vmatprep.subr.mxu0 0.0
        %3862 = vmatpush1.msra.mxu0 0.0
        %3863 = vmatprep.subr.mxu0 0.0
        %3864 = vmatpush1.msra.mxu0 0.0
        %3865 = vmatprep.subr.mxu0 0.0
        %3866 = vmatpush1.msra.mxu0 0.0
        %3867 = vmatprep.subr.mxu0 0.0
        %3868 = vmatpush1.msra.mxu0 0.0
        %3869 = vmatprep.subr.mxu0 0.0
        %3870 = vmatpush1.msra.mxu0 0.0
        %3871 = vmatprep.subr.mxu0 0.0
        %3872 = vmatpush1.msra.mxu0 0.0
        %3873 = vmatprep.subr.mxu0 0.0
        %3874 = vmatpush1.msra.mxu0 0.0
        %3875 = vmatprep.subr.mxu0 0.0
        %3876 = vmatpush1.msra.mxu0 0.0
        %3877 = vmatprep.subr.mxu0 0.0
        %3878 = vmatpush1.msra.mxu0 0.0
        %3879 = vmatprep.subr.mxu0 0.0
        %3880 = vmatpush1.msra.mxu0 0.0
        %3881 = vmatprep.subr.mxu0 0.0
        %3882 = vmatpush1.msra.mxu0 0.0
        %3883 = vmatprep.subr.mxu0 0.0
        %3884 = vmatpush1.msra.mxu0 0.0
        %3885 = vmatprep.subr.mxu0 0.0
        %3886 = vmatpush1.msra.mxu0 0.0
        %3887 = vmatprep.subr.mxu0 0.0
        %3888 = vmatpush1.msra.mxu0 0.0
        %3889 = vmatprep.subr.mxu0 0.0
        %3890 = vmatpush1.msra.mxu0 0.0
        %3891 = vmatprep.subr.mxu0 0.0
        %3892 = vmatpush1.msra.mxu0 0.0
        %3893 = vmatprep.subr.mxu0 0.0
        %3894 = vmatpush1.msra.mxu0 0.0
        %3895 = vmatprep.mubr.f32.mxu0 0.0
        %3896 = vmatmul.mubr.f32.gmra.mrb[0].mxu0 %v3826
        %v3897 = vpop.f32.mrb[0].mxu0
        %v3898 = vadd.f32 0.0, %v3897
        %v3899 = vpop.f32.mrb[0].mxu0
        %v3900 = vadd.f32 0.0, %v3899
        %3901 = vmatprep.mubr.f32.mxu0 0.0
        %3902 = vmatmul.mubr.f32.gmra.mrb[0].mxu0 %v3829
        %v3903 = vpop.f32.mrb[0].mxu0
        %v3904 = vadd.f32 0.0, %v3903
        %v3905 = vpop.f32.mrb[0].mxu0
        %v3906 = vadd.f32 0.0, %v3905
        %3907 = vdwg.mxu0
        %3908 = vmatprep.subr.mxu0 0.0
        %3909 = vmatpush1.msra.mxu0 %v486
        %3910 = vmatprep.subr.mxu0 0.0
        %3911 = vmatpush1.msra.mxu0 %v489
        %3912 = vmatprep.subr.mxu0 0.0
        %3913 = vmatpush1.msra.mxu0 0.0
        %3914 = vmatprep.subr.mxu0 0.0
        %3915 = vmatpush1.msra.mxu0 0.0
        %3916 = vmatprep.subr.mxu0 0.0
        %3917 = vmatpush1.msra.mxu0 0.0
        %3918 = vmatprep.subr.mxu0 0.0
        %3919 = vmatpush1.msra.mxu0 0.0
        %3920 = vmatprep.subr.mxu0 0.0
        %3921 = vmatpush1.msra.mxu0 0.0
        %3922 = vmatprep.subr.mxu0 0.0
        %3923 = vmatpush1.msra.mxu0 0.0
        %3924 = vmatprep.subr.mxu0 0.0
        %3925 = vmatpush1.msra.mxu0 0.0
        %3926 = vmatprep.subr.mxu0 0.0
        %3927 = vmatpush1.msra.mxu0 0.0
        %3928 = vmatprep.subr.mxu0 0.0
        %3929 = vmatpush1.msra.mxu0 0.0
        %3930 = vmatprep.subr.mxu0 0.0
        %3931 = vmatpush1.msra.mxu0 0.0
        %3932 = vmatprep.subr.mxu0 0.0
        %3933 = vmatpush1.msra.mxu0 0.0
        %3934 = vmatprep.subr.mxu0 0.0
        %3935 = vmatpush1.msra.mxu0 0.0
        %3936 = vmatprep.subr.mxu0 0.0
        %3937 = vmatpush1.msra.mxu0 0.0
        %3938 = vmatprep.subr.mxu0 0.0
        %3939 = vmatpush1.msra.mxu0 0.0
        %3940 = vmatprep.subr.mxu0 0.0
        %3941 = vmatpush1.msra.mxu0 0.0
        %3942 = vmatprep.subr.mxu0 0.0
        %3943 = vmatpush1.msra.mxu0 0.0
        %3944 = vmatprep.subr.mxu0 0.0
        %3945 = vmatpush1.msra.mxu0 0.0
        %3946 = vmatprep.subr.mxu0 0.0
        %3947 = vmatpush1.msra.mxu0 0.0
        %3948 = vmatprep.subr.mxu0 0.0
        %3949 = vmatpush1.msra.mxu0 0.0
        %3950 = vmatprep.subr.mxu0 0.0
        %3951 = vmatpush1.msra.mxu0 0.0
        %3952 = vmatprep.subr.mxu0 0.0
        %3953 = vmatpush1.msra.mxu0 0.0
        %3954 = vmatprep.subr.mxu0 0.0
        %3955 = vmatpush1.msra.mxu0 0.0
        %3956 = vmatprep.subr.mxu0 0.0
        %3957 = vmatpush1.msra.mxu0 0.0
        %3958 = vmatprep.subr.mxu0 0.0
        %3959 = vmatpush1.msra.mxu0 0.0
        %3960 = vmatprep.subr.mxu0 0.0
        %3961 = vmatpush1.msra.mxu0 0.0
        %3962 = vmatprep.subr.mxu0 0.0
        %3963 = vmatpush1.msra.mxu0 0.0
        %3964 = vmatprep.subr.mxu0 0.0
        %3965 = vmatpush1.msra.mxu0 0.0
        %3966 = vmatprep.subr.mxu0 0.0
        %3967 = vmatpush1.msra.mxu0 0.0
        %3968 = vmatprep.subr.mxu0 0.0
        %3969 = vmatpush1.msra.mxu0 0.0
        %3970 = vmatprep.subr.mxu0 0.0
        %3971 = vmatpush1.msra.mxu0 0.0
        %3972 = vmatprep.mubr.f32.mxu0 0.0
        %3973 = vmatmul.mubr.f32.gmra.mrb[0].mxu0 %v3826
        %v3974 = vpop.f32.mrb[0].mxu0
        %v3975 = vadd.f32 0.0, %v3974
        %v3976 = vpop.f32.mrb[0].mxu0
        %3977 = vmatprep.mubr.f32.mxu0 0.0
        %3978 = vmatmul.mubr.f32.gmra.mrb[0].mxu0 %v3829
        %v3979 = vpop.f32.mrb[0].mxu0
        %v3980 = vadd.f32 0.0, %v3979
        %v3981 = vpop.f32.mrb[0].mxu0
        %3982 = vdwg.mxu0
        %3983 = vmatprep.subr.mxu0 %v491
        %3984 = vmatpush1.msra.mxu0 %v490
        %3985 = vmatprep.subr.mxu0 %v494
        %3986 = vmatpush1.msra.mxu0 %v493
        %3987 = vmatprep.subr.mxu0 %v497
        %3988 = vmatpush1.msra.mxu0 %v496
        %3989 = vmatprep.subr.mxu0 %v500
        %3990 = vmatpush1.msra.mxu0 %v499
        %3991 = vmatprep.subr.mxu0 %v503
        %3992 = vmatpush1.msra.mxu0 %v502
        %3993 = vmatprep.subr.mxu0 %v506
        %3994 = vmatpush1.msra.mxu0 %v505
        %3995 = vmatprep.subr.mxu0 %v509
        %3996 = vmatpush1.msra.mxu0 %v508
        %3997 = vmatprep.subr.mxu0 %v512
        %3998 = vmatpush1.msra.mxu0 %v511
        %3999 = vmatprep.subr.mxu0 %v515
        %4000 = vmatpush1.msra.mxu0 %v514
        %4001 = vmatprep.subr.mxu0 %v518
        %4002 = vmatpush1.msra.mxu0 %v517
        %4003 = vmatprep.subr.mxu0 %v521
        %4004 = vmatpush1.msra.mxu0 %v520
        %4005 = vmatprep.subr.mxu0 %v524
        %4006 = vmatpush1.msra.mxu0 %v523
        %4007 = vmatprep.subr.mxu0 %v527
        %4008 = vmatpush1.msra.mxu0 %v526
        %4009 = vmatprep.subr.mxu0 %v530
        %4010 = vmatpush1.msra.mxu0 %v529
        %4011 = vmatprep.subr.mxu0 %v533
        %4012 = vmatpush1.msra.mxu0 %v532
        %4013 = vmatprep.subr.mxu0 %v536
        %4014 = vmatpush1.msra.mxu0 %v535
        %4015 = vmatprep.subr.mxu0 0.0
        %4016 = vmatpush1.msra.mxu0 0.0
        %4017 = vmatprep.subr.mxu0 0.0
        %4018 = vmatpush1.msra.mxu0 0.0
        %4019 = vmatprep.subr.mxu0 0.0
        %4020 = vmatpush1.msra.mxu0 0.0
        %4021 = vmatprep.subr.mxu0 0.0
        %4022 = vmatpush1.msra.mxu0 0.0
        %4023 = vmatprep.subr.mxu0 0.0
        %4024 = vmatpush1.msra.mxu0 0.0
        %4025 = vmatprep.subr.mxu0 0.0
        %4026 = vmatpush1.msra.mxu0 0.0
        %4027 = vmatprep.subr.mxu0 0.0
        %4028 = vmatpush1.msra.mxu0 0.0
        %4029 = vmatprep.subr.mxu0 0.0
        %4030 = vmatpush1.msra.mxu0 0.0
        %4031 = vmatprep.subr.mxu0 0.0
        %4032 = vmatpush1.msra.mxu0 0.0
        %4033 = vmatprep.subr.mxu0 0.0
        %4034 = vmatpush1.msra.mxu0 0.0
        %4035 = vmatprep.subr.mxu0 0.0
        %4036 = vmatpush1.msra.mxu0 0.0
        %4037 = vmatprep.subr.mxu0 0.0
        %4038 = vmatpush1.msra.mxu0 0.0
        %4039 = vmatprep.subr.mxu0 0.0
        %4040 = vmatpush1.msra.mxu0 0.0
        %4041 = vmatprep.subr.mxu0 0.0
        %4042 = vmatpush1.msra.mxu0 0.0
        %4043 = vmatprep.subr.mxu0 0.0
        %4044 = vmatpush1.msra.mxu0 0.0
        %4045 = vmatprep.subr.mxu0 0.0
        %4046 = vmatpush1.msra.mxu0 0.0
        %4047 = vmatprep.mubr.f32.mxu0 0.0
        %4048 = vmatmul.mubr.f32.gmra.mrb[0].mxu0 %v3820
        %v4049 = vpop.f32.mrb[0].mxu0
        %v4050 = vadd.f32 0.0, %v4049
        %v4051 = vpop.f32.mrb[0].mxu0
        %v4052 = vadd.f32 0.0, %v4051
        %4053 = vmatprep.mubr.f32.mxu0 0.0
        %4054 = vmatmul.mubr.f32.gmra.mrb[0].mxu0 %v3821
        %v4055 = vpop.f32.mrb[0].mxu0
        %v4056 = vadd.f32 0.0, %v4055
        %v4057 = vpop.f32.mrb[0].mxu0
        %v4058 = vadd.f32 0.0, %v4057
        %4059 = vdwg.mxu0
        %4060 = vmatprep.subr.mxu0 0.0
        %4061 = vmatpush1.msra.mxu0 %v492
        %4062 = vmatprep.subr.mxu0 0.0
        %4063 = vmatpush1.msra.mxu0 %v495
        %4064 = vmatprep.subr.mxu0 0.0
        %4065 = vmatpush1.msra.mxu0 %v498
        %4066 = vmatprep.subr.mxu0 0.0
        %4067 = vmatpush1.msra.mxu0 %v501
        %4068 = vmatprep.subr.mxu0 0.0
        %4069 = vmatpush1.msra.mxu0 %v504
        %4070 = vmatprep.subr.mxu0 0.0
        %4071 = vmatpush1.msra.mxu0 %v507
        %4072 = vmatprep.subr.mxu0 0.0
        %4073 = vmatpush1.msra.mxu0 %v510
        %4074 = vmatprep.subr.mxu0 0.0
        %4075 = vmatpush1.msra.mxu0 %v513
        %4076 = vmatprep.subr.mxu0 0.0
        %4077 = vmatpush1.msra.mxu0 %v516
        %4078 = vmatprep.subr.mxu0 0.0
        %4079 = vmatpush1.msra.mxu0 %v519
        %4080 = vmatprep.subr.mxu0 0.0
        %4081 = vmatpush1.msra.mxu0 %v522
        %4082 = vmatprep.subr.mxu0 0.0
        %4083 = vmatpush1.msra.mxu0 %v525
        %4084 = vmatprep.subr.mxu0 0.0
        %4085 = vmatpush1.msra.mxu0 %v528
        %4086 = vmatprep.subr.mxu0 0.0
        %4087 = vmatpush1.msra.mxu0 %v531
        %4088 = vmatprep.subr.mxu0 0.0
        %4089 = vmatpush1.msra.mxu0 %v534
        %4090 = vmatprep.subr.mxu0 0.0
        %4091 = vmatpush1.msra.mxu0 %v537
        %4092 = vmatprep.subr.mxu0 0.0
        %4093 = vmatpush1.msra.mxu0 0.0
        %4094 = vmatprep.subr.mxu0 0.0
        %4095 = vmatpush1.msra.mxu0 0.0
        %4096 = vmatprep.subr.mxu0 0.0
        %4097 = vmatpush1.msra.mxu0 0.0
        %4098 = vmatprep.subr.mxu0 0.0
        %4099 = vmatpush1.msra.mxu0 0.0
        %4100 = vmatprep.subr.mxu0 0.0
        %4101 = vmatpush1.msra.mxu0 0.0
        %4102 = vmatprep.subr.mxu0 0.0
        %4103 = vmatpush1.msra.mxu0 0.0
        %4104 = vmatprep.subr.mxu0 0.0
        %4105 = vmatpush1.msra.mxu0 0.0
        %4106 = vmatprep.subr.mxu0 0.0
        %4107 = vmatpush1.msra.mxu0 0.0
        %4108 = vmatprep.subr.mxu0 0.0
        %4109 = vmatpush1.msra.mxu0 0.0
        %4110 = vmatprep.subr.mxu0 0.0
        %4111 = vmatpush1.msra.mxu0 0.0
        %4112 = vmatprep.subr.mxu0 0.0
        %4113 = vmatpush1.msra.mxu0 0.0
        %4114 = vmatprep.subr.mxu0 0.0
        %4115 = vmatpush1.msra.mxu0 0.0
        %4116 = vmatprep.subr.mxu0 0.0
        %4117 = vmatpush1.msra.mxu0 0.0
        %4118 = vmatprep.subr.mxu0 0.0
        %4119 = vmatpush1.msra.mxu0 0.0
        %4120 = vmatprep.subr.mxu0 0.0
        %4121 = vmatpush1.msra.mxu0 0.0
        %4122 = vmatprep.subr.mxu0 0.0
        %4123 = vmatpush1.msra.mxu0 0.0
        %4124 = vmatprep.mubr.f32.mxu0 0.0
        %4125 = vmatmul.mubr.f32.gmra.mrb[0].mxu0 %v3820
        %v4126 = vpop.f32.mrb[0].mxu0
        %v4127 = vadd.f32 0.0, %v4126
        %v4128 = vpop.f32.mrb[0].mxu0
        %4129 = vmatprep.mubr.f32.mxu0 0.0
        %4130 = vmatmul.mubr.f32.gmra.mrb[0].mxu0 %v3821
        %v4131 = vpop.f32.mrb[0].mxu0
        %v4132 = vadd.f32 0.0, %v4131
        %v4133 = vpop.f32.mrb[0].mxu0
        %4134 = vdwg.mxu0
        %v4135 = vadd.f32 %v3898, %v4050
        %v4136 = vadd.f32 %v3904, %v4056
        %v4137 = vxor.u32 %v4135, 2147483648
        %v4138 = vxor.u32 %v4136, 2147483648
        %v4139 = vmul.f32 %v4137, 1.442695
        %v4140 = vpow.pop %v4139
        %v4141 = vmul.f32 %v4138, 1.442695
        %v4142 = vpow.pop %v4141
        %v4143 = vadd.f32 %v4140, 1.0
        %v4144 = vadd.f32 %v4142, 1.0
        %v4145 = vrcp.pop %v4143
        %v4146 = vmul.f32 1.0, %v4145
        %v4147 = vrcp.pop %v4144
        %v4148 = vmul.f32 1.0, %v4147
        %v4149 = vadd.f32 %v3900, %v4052
        %v4150 = vadd.f32 %v3906, %v4058
        %v4151 = vxor.u32 %v4149, 2147483648
        %v4152 = vxor.u32 %v4150, 2147483648
        %v4153 = vmul.f32 %v4151, 1.442695
        %v4154 = vpow.pop %v4153
        %v4155 = vmul.f32 %v4152, 1.442695
        %v4156 = vpow.pop %v4155
        %v4157 = vadd.f32 %v4154, 1.0
        %v4158 = vadd.f32 %v4156, 1.0
        %v4159 = vrcp.pop %v4157
        %v4160 = vmul.f32 1.0, %v4159
        %v4161 = vrcp.pop %v4158
        %v4162 = vmul.f32 1.0, %v4161
        %v4163 = vadd.f32 %v4127, %v895
        %v4164 = vadd.f32 %v4132, %v895
        %v4165 = vmul.f32 %v4146, %v4163
        %v4166 = vmul.f32 %v4148, %v4164
        %v4167 = vadd.f32 %v3975, %v4165
        %v4168 = vadd.f32 %v3980, %v4166
        %v4169 = vtanh.pop %v4167
        %v4170 = vtanh.pop %v4168
        %v4171 = vsub.f32 1.0, %v4160
        %v4172 = vsub.f32 1.0, %v4162
        %v4173 = vmul.f32 %v4171, %v4169
        %v4174 = vmul.f32 %v4172, %v4170
        %v4175 = vmul.f32 %v4160, %v3820
        %v4176 = vmul.f32 %v4162, %v3821
        %v4177 = vadd.f32 %v4173, %v4175
        %v4178 = vadd.f32 %v4174, %v4176
        %s4179 = sadd.s32 %s547, 9
        %v4180 = vstv %s4179
        %vm4181 = vcmp.lt.s32.totalorder %v4180, %v543
        %vm4182 = vcmp.lt.s32.totalorder %v4180, %v546
        %v4183 = vsel %vm4181, %v4177, %v3820
        %v4184 = vsel %vm4182, %v4178, %v3821
        %s4185 = scalar_lea.vmem %s435, 160 [#allocation3]
        %v4186 = vld [vmem:[%s4185] sm:$0xff]
        %v4187 = vld [vmem:[%s4185 + $0x8] sm:$0xff]
        %v4189 = vsel %vm552, %v4186, 0
        %v4192 = vsel %vm552, %v4187, 0
        %4194 = vmatprep.subr.mxu0 %v485
        %4195 = vmatpush1.msra.mxu0 %v484
        %4196 = vmatprep.subr.mxu0 %v488
        %4197 = vmatpush1.msra.mxu0 %v487
        %4198 = vmatprep.subr.mxu0 0.0
        %4199 = vmatpush1.msra.mxu0 0.0
        %4200 = vmatprep.subr.mxu0 0.0
        %4201 = vmatpush1.msra.mxu0 0.0
        %4202 = vmatprep.subr.mxu0 0.0
        %4203 = vmatpush1.msra.mxu0 0.0
        %4204 = vmatprep.subr.mxu0 0.0
        %4205 = vmatpush1.msra.mxu0 0.0
        %4206 = vmatprep.subr.mxu0 0.0
        %4207 = vmatpush1.msra.mxu0 0.0
        %4208 = vmatprep.subr.mxu0 0.0
        %4209 = vmatpush1.msra.mxu0 0.0
        %4210 = vmatprep.subr.mxu0 0.0
        %4211 = vmatpush1.msra.mxu0 0.0
        %4212 = vmatprep.subr.mxu0 0.0
        %4213 = vmatpush1.msra.mxu0 0.0
        %4214 = vmatprep.subr.mxu0 0.0
        %4215 = vmatpush1.msra.mxu0 0.0
        %4216 = vmatprep.subr.mxu0 0.0
        %4217 = vmatpush1.msra.mxu0 0.0
        %4218 = vmatprep.subr.mxu0 0.0
        %4219 = vmatpush1.msra.mxu0 0.0
        %4220 = vmatprep.subr.mxu0 0.0
        %4221 = vmatpush1.msra.mxu0 0.0
        %4222 = vmatprep.subr.mxu0 0.0
        %4223 = vmatpush1.msra.mxu0 0.0
        %4224 = vmatprep.subr.mxu0 0.0
        %4225 = vmatpush1.msra.mxu0 0.0
        %4226 = vmatprep.subr.mxu0 0.0
        %4227 = vmatpush1.msra.mxu0 0.0
        %4228 = vmatprep.subr.mxu0 0.0
        %4229 = vmatpush1.msra.mxu0 0.0
        %4230 = vmatprep.subr.mxu0 0.0
        %4231 = vmatpush1.msra.mxu0 0.0
        %4232 = vmatprep.subr.mxu0 0.0
        %4233 = vmatpush1.msra.mxu0 0.0
        %4234 = vmatprep.subr.mxu0 0.0
        %4235 = vmatpush1.msra.mxu0 0.0
        %4236 = vmatprep.subr.mxu0 0.0
        %4237 = vmatpush1.msra.mxu0 0.0
        %4238 = vmatprep.subr.mxu0 0.0
        %4239 = vmatpush1.msra.mxu0 0.0
        %4240 = vmatprep.subr.mxu0 0.0
        %4241 = vmatpush1.msra.mxu0 0.0
        %4242 = vmatprep.subr.mxu0 0.0
        %4243 = vmatpush1.msra.mxu0 0.0
        %4244 = vmatprep.subr.mxu0 0.0
        %4245 = vmatpush1.msra.mxu0 0.0
        %4246 = vmatprep.subr.mxu0 0.0
        %4247 = vmatpush1.msra.mxu0 0.0
        %4248 = vmatprep.subr.mxu0 0.0
        %4249 = vmatpush1.msra.mxu0 0.0
        %4250 = vmatprep.subr.mxu0 0.0
        %4251 = vmatpush1.msra.mxu0 0.0
        %4252 = vmatprep.subr.mxu0 0.0
        %4253 = vmatpush1.msra.mxu0 0.0
        %4254 = vmatprep.subr.mxu0 0.0
        %4255 = vmatpush1.msra.mxu0 0.0
        %4256 = vmatprep.subr.mxu0 0.0
        %4257 = vmatpush1.msra.mxu0 0.0
        %4258 = vmatprep.mubr.f32.mxu0 0.0
        %4259 = vmatmul.mubr.f32.gmra.mrb[0].mxu0 %v4189
        %v4260 = vpop.f32.mrb[0].mxu0
        %v4261 = vadd.f32 0.0, %v4260
        %v4262 = vpop.f32.mrb[0].mxu0
        %v4263 = vadd.f32 0.0, %v4262
        %4264 = vmatprep.mubr.f32.mxu0 0.0
        %4265 = vmatmul.mubr.f32.gmra.mrb[0].mxu0 %v4192
        %v4266 = vpop.f32.mrb[0].mxu0
        %v4267 = vadd.f32 0.0, %v4266
        %v4268 = vpop.f32.mrb[0].mxu0
        %v4269 = vadd.f32 0.0, %v4268
        %4270 = vdwg.mxu0
        %4271 = vmatprep.subr.mxu0 0.0
        %4272 = vmatpush1.msra.mxu0 %v486
        %4273 = vmatprep.subr.mxu0 0.0
        %4274 = vmatpush1.msra.mxu0 %v489
        %4275 = vmatprep.subr.mxu0 0.0
        %4276 = vmatpush1.msra.mxu0 0.0
        %4277 = vmatprep.subr.mxu0 0.0
        %4278 = vmatpush1.msra.mxu0 0.0
        %4279 = vmatprep.subr.mxu0 0.0
        %4280 = vmatpush1.msra.mxu0 0.0
        %4281 = vmatprep.subr.mxu0 0.0
        %4282 = vmatpush1.msra.mxu0 0.0
        %4283 = vmatprep.subr.mxu0 0.0
        %4284 = vmatpush1.msra.mxu0 0.0
        %4285 = vmatprep.subr.mxu0 0.0
        %4286 = vmatpush1.msra.mxu0 0.0
        %4287 = vmatprep.subr.mxu0 0.0
        %4288 = vmatpush1.msra.mxu0 0.0
        %4289 = vmatprep.subr.mxu0 0.0
        %4290 = vmatpush1.msra.mxu0 0.0
        %4291 = vmatprep.subr.mxu0 0.0
        %4292 = vmatpush1.msra.mxu0 0.0
        %4293 = vmatprep.subr.mxu0 0.0
        %4294 = vmatpush1.msra.mxu0 0.0
        %4295 = vmatprep.subr.mxu0 0.0
        %4296 = vmatpush1.msra.mxu0 0.0
        %4297 = vmatprep.subr.mxu0 0.0
        %4298 = vmatpush1.msra.mxu0 0.0
        %4299 = vmatprep.subr.mxu0 0.0
        %4300 = vmatpush1.msra.mxu0 0.0
        %4301 = vmatprep.subr.mxu0 0.0
        %4302 = vmatpush1.msra.mxu0 0.0
        %4303 = vmatprep.subr.mxu0 0.0
        %4304 = vmatpush1.msra.mxu0 0.0
        %4305 = vmatprep.subr.mxu0 0.0
        %4306 = vmatpush1.msra.mxu0 0.0
        %4307 = vmatprep.subr.mxu0 0.0
        %4308 = vmatpush1.msra.mxu0 0.0
        %4309 = vmatprep.subr.mxu0 0.0
        %4310 = vmatpush1.msra.mxu0 0.0
        %4311 = vmatprep.subr.mxu0 0.0
        %4312 = vmatpush1.msra.mxu0 0.0
        %4313 = vmatprep.subr.mxu0 0.0
        %4314 = vmatpush1.msra.mxu0 0.0
        %4315 = vmatprep.subr.mxu0 0.0
        %4316 = vmatpush1.msra.mxu0 0.0
        %4317 = vmatprep.subr.mxu0 0.0
        %4318 = vmatpush1.msra.mxu0 0.0
        %4319 = vmatprep.subr.mxu0 0.0
        %4320 = vmatpush1.msra.mxu0 0.0
        %4321 = vmatprep.subr.mxu0 0.0
        %4322 = vmatpush1.msra.mxu0 0.0
        %4323 = vmatprep.subr.mxu0 0.0
        %4324 = vmatpush1.msra.mxu0 0.0
        %4325 = vmatprep.subr.mxu0 0.0
        %4326 = vmatpush1.msra.mxu0 0.0
        %4327 = vmatprep.subr.mxu0 0.0
        %4328 = vmatpush1.msra.mxu0 0.0
        %4329 = vmatprep.subr.mxu0 0.0
        %4330 = vmatpush1.msra.mxu0 0.0
        %4331 = vmatprep.subr.mxu0 0.0
        %4332 = vmatpush1.msra.mxu0 0.0
        %4333 = vmatprep.subr.mxu0 0.0
        %4334 = vmatpush1.msra.mxu0 0.0
        %4335 = vmatprep.mubr.f32.mxu0 0.0
        %4336 = vmatmul.mubr.f32.gmra.mrb[0].mxu0 %v4189
        %v4337 = vpop.f32.mrb[0].mxu0
        %v4338 = vadd.f32 0.0, %v4337
        %v4339 = vpop.f32.mrb[0].mxu0
        %4340 = vmatprep.mubr.f32.mxu0 0.0
        %4341 = vmatmul.mubr.f32.gmra.mrb[0].mxu0 %v4192
        %v4342 = vpop.f32.mrb[0].mxu0
        %v4343 = vadd.f32 0.0, %v4342
        %v4344 = vpop.f32.mrb[0].mxu0
        %4345 = vdwg.mxu0
        %4346 = vmatprep.subr.mxu0 %v491
        %4347 = vmatpush1.msra.mxu0 %v490
        %4348 = vmatprep.subr.mxu0 %v494
        %4349 = vmatpush1.msra.mxu0 %v493
        %4350 = vmatprep.subr.mxu0 %v497
        %4351 = vmatpush1.msra.mxu0 %v496
        %4352 = vmatprep.subr.mxu0 %v500
        %4353 = vmatpush1.msra.mxu0 %v499
        %4354 = vmatprep.subr.mxu0 %v503
        %4355 = vmatpush1.msra.mxu0 %v502
        %4356 = vmatprep.subr.mxu0 %v506
        %4357 = vmatpush1.msra.mxu0 %v505
        %4358 = vmatprep.subr.mxu0 %v509
        %4359 = vmatpush1.msra.mxu0 %v508
        %4360 = vmatprep.subr.mxu0 %v512
        %4361 = vmatpush1.msra.mxu0 %v511
        %4362 = vmatprep.subr.mxu0 %v515
        %4363 = vmatpush1.msra.mxu0 %v514
        %4364 = vmatprep.subr.mxu0 %v518
        %4365 = vmatpush1.msra.mxu0 %v517
        %4366 = vmatprep.subr.mxu0 %v521
        %4367 = vmatpush1.msra.mxu0 %v520
        %4368 = vmatprep.subr.mxu0 %v524
        %4369 = vmatpush1.msra.mxu0 %v523
        %4370 = vmatprep.subr.mxu0 %v527
        %4371 = vmatpush1.msra.mxu0 %v526
        %4372 = vmatprep.subr.mxu0 %v530
        %4373 = vmatpush1.msra.mxu0 %v529
        %4374 = vmatprep.subr.mxu0 %v533
        %4375 = vmatpush1.msra.mxu0 %v532
        %4376 = vmatprep.subr.mxu0 %v536
        %4377 = vmatpush1.msra.mxu0 %v535
        %4378 = vmatprep.subr.mxu0 0.0
        %4379 = vmatpush1.msra.mxu0 0.0
        %4380 = vmatprep.subr.mxu0 0.0
        %4381 = vmatpush1.msra.mxu0 0.0
        %4382 = vmatprep.subr.mxu0 0.0
        %4383 = vmatpush1.msra.mxu0 0.0
        %4384 = vmatprep.subr.mxu0 0.0
        %4385 = vmatpush1.msra.mxu0 0.0
        %4386 = vmatprep.subr.mxu0 0.0
        %4387 = vmatpush1.msra.mxu0 0.0
        %4388 = vmatprep.subr.mxu0 0.0
        %4389 = vmatpush1.msra.mxu0 0.0
        %4390 = vmatprep.subr.mxu0 0.0
        %4391 = vmatpush1.msra.mxu0 0.0
        %4392 = vmatprep.subr.mxu0 0.0
        %4393 = vmatpush1.msra.mxu0 0.0
        %4394 = vmatprep.subr.mxu0 0.0
        %4395 = vmatpush1.msra.mxu0 0.0
        %4396 = vmatprep.subr.mxu0 0.0
        %4397 = vmatpush1.msra.mxu0 0.0
        %4398 = vmatprep.subr.mxu0 0.0
        %4399 = vmatpush1.msra.mxu0 0.0
        %4400 = vmatprep.subr.mxu0 0.0
        %4401 = vmatpush1.msra.mxu0 0.0
        %4402 = vmatprep.subr.mxu0 0.0
        %4403 = vmatpush1.msra.mxu0 0.0
        %4404 = vmatprep.subr.mxu0 0.0
        %4405 = vmatpush1.msra.mxu0 0.0
        %4406 = vmatprep.subr.mxu0 0.0
        %4407 = vmatpush1.msra.mxu0 0.0
        %4408 = vmatprep.subr.mxu0 0.0
        %4409 = vmatpush1.msra.mxu0 0.0
        %4410 = vmatprep.mubr.f32.mxu0 0.0
        %4411 = vmatmul.mubr.f32.gmra.mrb[0].mxu0 %v4183
        %v4412 = vpop.f32.mrb[0].mxu0
        %v4413 = vadd.f32 0.0, %v4412
        %v4414 = vpop.f32.mrb[0].mxu0
        %v4415 = vadd.f32 0.0, %v4414
        %4416 = vmatprep.mubr.f32.mxu0 0.0
        %4417 = vmatmul.mubr.f32.gmra.mrb[0].mxu0 %v4184
        %v4418 = vpop.f32.mrb[0].mxu0
        %v4419 = vadd.f32 0.0, %v4418
        %v4420 = vpop.f32.mrb[0].mxu0
        %v4421 = vadd.f32 0.0, %v4420
        %4422 = vdwg.mxu0
        %4423 = vmatprep.subr.mxu0 0.0
        %4424 = vmatpush1.msra.mxu0 %v492
        %4425 = vmatprep.subr.mxu0 0.0
        %4426 = vmatpush1.msra.mxu0 %v495
        %4427 = vmatprep.subr.mxu0 0.0
        %4428 = vmatpush1.msra.mxu0 %v498
        %4429 = vmatprep.subr.mxu0 0.0
        %4430 = vmatpush1.msra.mxu0 %v501
        %4431 = vmatprep.subr.mxu0 0.0
        %4432 = vmatpush1.msra.mxu0 %v504
        %4433 = vmatprep.subr.mxu0 0.0
        %4434 = vmatpush1.msra.mxu0 %v507
        %4435 = vmatprep.subr.mxu0 0.0
        %4436 = vmatpush1.msra.mxu0 %v510
        %4437 = vmatprep.subr.mxu0 0.0
        %4438 = vmatpush1.msra.mxu0 %v513
        %4439 = vmatprep.subr.mxu0 0.0
        %4440 = vmatpush1.msra.mxu0 %v516
        %4441 = vmatprep.subr.mxu0 0.0
        %4442 = vmatpush1.msra.mxu0 %v519
        %4443 = vmatprep.subr.mxu0 0.0
        %4444 = vmatpush1.msra.mxu0 %v522
        %4445 = vmatprep.subr.mxu0 0.0
        %4446 = vmatpush1.msra.mxu0 %v525
        %4447 = vmatprep.subr.mxu0 0.0
        %4448 = vmatpush1.msra.mxu0 %v528
        %4449 = vmatprep.subr.mxu0 0.0
        %4450 = vmatpush1.msra.mxu0 %v531
        %4451 = vmatprep.subr.mxu0 0.0
        %4452 = vmatpush1.msra.mxu0 %v534
        %4453 = vmatprep.subr.mxu0 0.0
        %4454 = vmatpush1.msra.mxu0 %v537
        %4455 = vmatprep.subr.mxu0 0.0
        %4456 = vmatpush1.msra.mxu0 0.0
        %4457 = vmatprep.subr.mxu0 0.0
        %4458 = vmatpush1.msra.mxu0 0.0
        %4459 = vmatprep.subr.mxu0 0.0
        %4460 = vmatpush1.msra.mxu0 0.0
        %4461 = vmatprep.subr.mxu0 0.0
        %4462 = vmatpush1.msra.mxu0 0.0
        %4463 = vmatprep.subr.mxu0 0.0
        %4464 = vmatpush1.msra.mxu0 0.0
        %4465 = vmatprep.subr.mxu0 0.0
        %4466 = vmatpush1.msra.mxu0 0.0
        %4467 = vmatprep.subr.mxu0 0.0
        %4468 = vmatpush1.msra.mxu0 0.0
        %4469 = vmatprep.subr.mxu0 0.0
        %4470 = vmatpush1.msra.mxu0 0.0
        %4471 = vmatprep.subr.mxu0 0.0
        %4472 = vmatpush1.msra.mxu0 0.0
        %4473 = vmatprep.subr.mxu0 0.0
        %4474 = vmatpush1.msra.mxu0 0.0
        %4475 = vmatprep.subr.mxu0 0.0
        %4476 = vmatpush1.msra.mxu0 0.0
        %4477 = vmatprep.subr.mxu0 0.0
        %4478 = vmatpush1.msra.mxu0 0.0
        %4479 = vmatprep.subr.mxu0 0.0
        %4480 = vmatpush1.msra.mxu0 0.0
        %4481 = vmatprep.subr.mxu0 0.0
        %4482 = vmatpush1.msra.mxu0 0.0
        %4483 = vmatprep.subr.mxu0 0.0
        %4484 = vmatpush1.msra.mxu0 0.0
        %4485 = vmatprep.subr.mxu0 0.0
        %4486 = vmatpush1.msra.mxu0 0.0
        %4487 = vmatprep.mubr.f32.mxu0 0.0
        %4488 = vmatmul.mubr.f32.gmra.mrb[0].mxu0 %v4183
        %v4489 = vpop.f32.mrb[0].mxu0
        %v4490 = vadd.f32 0.0, %v4489
        %v4491 = vpop.f32.mrb[0].mxu0
        %4492 = vmatprep.mubr.f32.mxu0 0.0
        %4493 = vmatmul.mubr.f32.gmra.mrb[0].mxu0 %v4184
        %v4494 = vpop.f32.mrb[0].mxu0
        %v4495 = vadd.f32 0.0, %v4494
        %v4496 = vpop.f32.mrb[0].mxu0
        %4497 = vdwg.mxu0
        %v4498 = vadd.f32 %v4261, %v4413
        %v4499 = vadd.f32 %v4267, %v4419
        %v4500 = vxor.u32 %v4498, 2147483648
        %v4501 = vxor.u32 %v4499, 2147483648
        %v4502 = vmul.f32 %v4500, 1.442695
        %v4503 = vpow.pop %v4502
        %v4504 = vmul.f32 %v4501, 1.442695
        %v4505 = vpow.pop %v4504
        %v4506 = vadd.f32 %v4503, 1.0
        %v4507 = vadd.f32 %v4505, 1.0
        %v4508 = vrcp.pop %v4506
        %v4509 = vmul.f32 1.0, %v4508
        %v4510 = vrcp.pop %v4507
        %v4511 = vmul.f32 1.0, %v4510
        %v4512 = vadd.f32 %v4263, %v4415
        %v4513 = vadd.f32 %v4269, %v4421
        %v4514 = vxor.u32 %v4512, 2147483648
        %v4515 = vxor.u32 %v4513, 2147483648
        %v4516 = vmul.f32 %v4514, 1.442695
        %v4517 = vpow.pop %v4516
        %v4518 = vmul.f32 %v4515, 1.442695
        %v4519 = vpow.pop %v4518
        %v4520 = vadd.f32 %v4517, 1.0
        %v4521 = vadd.f32 %v4519, 1.0
        %v4522 = vrcp.pop %v4520
        %v4523 = vmul.f32 1.0, %v4522
        %v4524 = vrcp.pop %v4521
        %v4525 = vmul.f32 1.0, %v4524
        %v4526 = vadd.f32 %v4490, %v895
        %v4527 = vadd.f32 %v4495, %v895
        %v4528 = vmul.f32 %v4509, %v4526
        %v4529 = vmul.f32 %v4511, %v4527
        %v4530 = vadd.f32 %v4338, %v4528
        %v4531 = vadd.f32 %v4343, %v4529
        %v4532 = vtanh.pop %v4530
        %v4533 = vtanh.pop %v4531
        %v4534 = vsub.f32 1.0, %v4523
        %v4535 = vsub.f32 1.0, %v4525
        %v4536 = vmul.f32 %v4534, %v4532
        %v4537 = vmul.f32 %v4535, %v4533
        %v4538 = vmul.f32 %v4523, %v4183
        %v4539 = vmul.f32 %v4525, %v4184
        %v4540 = vadd.f32 %v4536, %v4538
        %v4541 = vadd.f32 %v4537, %v4539
        %s4542 = sadd.s32 %s547, 10
        %v4543 = vstv %s4542
        %vm4544 = vcmp.lt.s32.totalorder %v4543, %v543
        %vm4545 = vcmp.lt.s32.totalorder %v4543, %v546
        %v4546 = vsel %vm4544, %v4540, %v4183
        %v4547 = vsel %vm4545, %v4541, %v4184
        %s4548 = scalar_lea.vmem %s435, 176 [#allocation3]
        %v4549 = vld [vmem:[%s4548] sm:$0xff]
        %v4550 = vld [vmem:[%s4548 + $0x8] sm:$0xff]
        %v4552 = vsel %vm552, %v4549, 0
        %v4555 = vsel %vm552, %v4550, 0
        %4557 = vmatprep.subr.mxu0 %v485
        %4558 = vmatpush1.msra.mxu0 %v484
        %4559 = vmatprep.subr.mxu0 %v488
        %4560 = vmatpush1.msra.mxu0 %v487
        %4561 = vmatprep.subr.mxu0 0.0
        %4562 = vmatpush1.msra.mxu0 0.0
        %4563 = vmatprep.subr.mxu0 0.0
        %4564 = vmatpush1.msra.mxu0 0.0
        %4565 = vmatprep.subr.mxu0 0.0
        %4566 = vmatpush1.msra.mxu0 0.0
        %4567 = vmatprep.subr.mxu0 0.0
        %4568 = vmatpush1.msra.mxu0 0.0
        %4569 = vmatprep.subr.mxu0 0.0
        %4570 = vmatpush1.msra.mxu0 0.0
        %4571 = vmatprep.subr.mxu0 0.0
        %4572 = vmatpush1.msra.mxu0 0.0
        %4573 = vmatprep.subr.mxu0 0.0
        %4574 = vmatpush1.msra.mxu0 0.0
        %4575 = vmatprep.subr.mxu0 0.0
        %4576 = vmatpush1.msra.mxu0 0.0
        %4577 = vmatprep.subr.mxu0 0.0
        %4578 = vmatpush1.msra.mxu0 0.0
        %4579 = vmatprep.subr.mxu0 0.0
        %4580 = vmatpush1.msra.mxu0 0.0
        %4581 = vmatprep.subr.mxu0 0.0
        %4582 = vmatpush1.msra.mxu0 0.0
        %4583 = vmatprep.subr.mxu0 0.0
        %4584 = vmatpush1.msra.mxu0 0.0
        %4585 = vmatprep.subr.mxu0 0.0
        %4586 = vmatpush1.msra.mxu0 0.0
        %4587 = vmatprep.subr.mxu0 0.0
        %4588 = vmatpush1.msra.mxu0 0.0
        %4589 = vmatprep.subr.mxu0 0.0
        %4590 = vmatpush1.msra.mxu0 0.0
        %4591 = vmatprep.subr.mxu0 0.0
        %4592 = vmatpush1.msra.mxu0 0.0
        %4593 = vmatprep.subr.mxu0 0.0
        %4594 = vmatpush1.msra.mxu0 0.0
        %4595 = vmatprep.subr.mxu0 0.0
        %4596 = vmatpush1.msra.mxu0 0.0
        %4597 = vmatprep.subr.mxu0 0.0
        %4598 = vmatpush1.msra.mxu0 0.0
        %4599 = vmatprep.subr.mxu0 0.0
        %4600 = vmatpush1.msra.mxu0 0.0
        %4601 = vmatprep.subr.mxu0 0.0
        %4602 = vmatpush1.msra.mxu0 0.0
        %4603 = vmatprep.subr.mxu0 0.0
        %4604 = vmatpush1.msra.mxu0 0.0
        %4605 = vmatprep.subr.mxu0 0.0
        %4606 = vmatpush1.msra.mxu0 0.0
        %4607 = vmatprep.subr.mxu0 0.0
        %4608 = vmatpush1.msra.mxu0 0.0
        %4609 = vmatprep.subr.mxu0 0.0
        %4610 = vmatpush1.msra.mxu0 0.0
        %4611 = vmatprep.subr.mxu0 0.0
        %4612 = vmatpush1.msra.mxu0 0.0
        %4613 = vmatprep.subr.mxu0 0.0
        %4614 = vmatpush1.msra.mxu0 0.0
        %4615 = vmatprep.subr.mxu0 0.0
        %4616 = vmatpush1.msra.mxu0 0.0
        %4617 = vmatprep.subr.mxu0 0.0
        %4618 = vmatpush1.msra.mxu0 0.0
        %4619 = vmatprep.subr.mxu0 0.0
        %4620 = vmatpush1.msra.mxu0 0.0
        %4621 = vmatprep.mubr.f32.mxu0 0.0
        %4622 = vmatmul.mubr.f32.gmra.mrb[0].mxu0 %v4552
        %v4623 = vpop.f32.mrb[0].mxu0
        %v4624 = vadd.f32 0.0, %v4623
        %v4625 = vpop.f32.mrb[0].mxu0
        %v4626 = vadd.f32 0.0, %v4625
        %4627 = vmatprep.mubr.f32.mxu0 0.0
        %4628 = vmatmul.mubr.f32.gmra.mrb[0].mxu0 %v4555
        %v4629 = vpop.f32.mrb[0].mxu0
        %v4630 = vadd.f32 0.0, %v4629
        %v4631 = vpop.f32.mrb[0].mxu0
        %v4632 = vadd.f32 0.0, %v4631
        %4633 = vdwg.mxu0
        %4634 = vmatprep.subr.mxu0 0.0
        %4635 = vmatpush1.msra.mxu0 %v486
        %4636 = vmatprep.subr.mxu0 0.0
        %4637 = vmatpush1.msra.mxu0 %v489
        %4638 = vmatprep.subr.mxu0 0.0
        %4639 = vmatpush1.msra.mxu0 0.0
        %4640 = vmatprep.subr.mxu0 0.0
        %4641 = vmatpush1.msra.mxu0 0.0
        %4642 = vmatprep.subr.mxu0 0.0
        %4643 = vmatpush1.msra.mxu0 0.0
        %4644 = vmatprep.subr.mxu0 0.0
        %4645 = vmatpush1.msra.mxu0 0.0
        %4646 = vmatprep.subr.mxu0 0.0
        %4647 = vmatpush1.msra.mxu0 0.0
        %4648 = vmatprep.subr.mxu0 0.0
        %4649 = vmatpush1.msra.mxu0 0.0
        %4650 = vmatprep.subr.mxu0 0.0
        %4651 = vmatpush1.msra.mxu0 0.0
        %4652 = vmatprep.subr.mxu0 0.0
        %4653 = vmatpush1.msra.mxu0 0.0
        %4654 = vmatprep.subr.mxu0 0.0
        %4655 = vmatpush1.msra.mxu0 0.0
        %4656 = vmatprep.subr.mxu0 0.0
        %4657 = vmatpush1.msra.mxu0 0.0
        %4658 = vmatprep.subr.mxu0 0.0
        %4659 = vmatpush1.msra.mxu0 0.0
        %4660 = vmatprep.subr.mxu0 0.0
        %4661 = vmatpush1.msra.mxu0 0.0
        %4662 = vmatprep.subr.mxu0 0.0
        %4663 = vmatpush1.msra.mxu0 0.0
        %4664 = vmatprep.subr.mxu0 0.0
        %4665 = vmatpush1.msra.mxu0 0.0
        %4666 = vmatprep.subr.mxu0 0.0
        %4667 = vmatpush1.msra.mxu0 0.0
        %4668 = vmatprep.subr.mxu0 0.0
        %4669 = vmatpush1.msra.mxu0 0.0
        %4670 = vmatprep.subr.mxu0 0.0
        %4671 = vmatpush1.msra.mxu0 0.0
        %4672 = vmatprep.subr.mxu0 0.0
        %4673 = vmatpush1.msra.mxu0 0.0
        %4674 = vmatprep.subr.mxu0 0.0
        %4675 = vmatpush1.msra.mxu0 0.0
        %4676 = vmatprep.subr.mxu0 0.0
        %4677 = vmatpush1.msra.mxu0 0.0
        %4678 = vmatprep.subr.mxu0 0.0
        %4679 = vmatpush1.msra.mxu0 0.0
        %4680 = vmatprep.subr.mxu0 0.0
        %4681 = vmatpush1.msra.mxu0 0.0
        %4682 = vmatprep.subr.mxu0 0.0
        %4683 = vmatpush1.msra.mxu0 0.0
        %4684 = vmatprep.subr.mxu0 0.0
        %4685 = vmatpush1.msra.mxu0 0.0
        %4686 = vmatprep.subr.mxu0 0.0
        %4687 = vmatpush1.msra.mxu0 0.0
        %4688 = vmatprep.subr.mxu0 0.0
        %4689 = vmatpush1.msra.mxu0 0.0
        %4690 = vmatprep.subr.mxu0 0.0
        %4691 = vmatpush1.msra.mxu0 0.0
        %4692 = vmatprep.subr.mxu0 0.0
        %4693 = vmatpush1.msra.mxu0 0.0
        %4694 = vmatprep.subr.mxu0 0.0
        %4695 = vmatpush1.msra.mxu0 0.0
        %4696 = vmatprep.subr.mxu0 0.0
        %4697 = vmatpush1.msra.mxu0 0.0
        %4698 = vmatprep.mubr.f32.mxu0 0.0
        %4699 = vmatmul.mubr.f32.gmra.mrb[0].mxu0 %v4552
        %v4700 = vpop.f32.mrb[0].mxu0
        %v4701 = vadd.f32 0.0, %v4700
        %v4702 = vpop.f32.mrb[0].mxu0
        %4703 = vmatprep.mubr.f32.mxu0 0.0
        %4704 = vmatmul.mubr.f32.gmra.mrb[0].mxu0 %v4555
        %v4705 = vpop.f32.mrb[0].mxu0
        %v4706 = vadd.f32 0.0, %v4705
        %v4707 = vpop.f32.mrb[0].mxu0
        %4708 = vdwg.mxu0
        %4709 = vmatprep.subr.mxu0 %v491
        %4710 = vmatpush1.msra.mxu0 %v490
        %4711 = vmatprep.subr.mxu0 %v494
        %4712 = vmatpush1.msra.mxu0 %v493
        %4713 = vmatprep.subr.mxu0 %v497
        %4714 = vmatpush1.msra.mxu0 %v496
        %4715 = vmatprep.subr.mxu0 %v500
        %4716 = vmatpush1.msra.mxu0 %v499
        %4717 = vmatprep.subr.mxu0 %v503
        %4718 = vmatpush1.msra.mxu0 %v502
        %4719 = vmatprep.subr.mxu0 %v506
        %4720 = vmatpush1.msra.mxu0 %v505
        %4721 = vmatprep.subr.mxu0 %v509
        %4722 = vmatpush1.msra.mxu0 %v508
        %4723 = vmatprep.subr.mxu0 %v512
        %4724 = vmatpush1.msra.mxu0 %v511
        %4725 = vmatprep.subr.mxu0 %v515
        %4726 = vmatpush1.msra.mxu0 %v514
        %4727 = vmatprep.subr.mxu0 %v518
        %4728 = vmatpush1.msra.mxu0 %v517
        %4729 = vmatprep.subr.mxu0 %v521
        %4730 = vmatpush1.msra.mxu0 %v520
        %4731 = vmatprep.subr.mxu0 %v524
        %4732 = vmatpush1.msra.mxu0 %v523
        %4733 = vmatprep.subr.mxu0 %v527
        %4734 = vmatpush1.msra.mxu0 %v526
        %4735 = vmatprep.subr.mxu0 %v530
        %4736 = vmatpush1.msra.mxu0 %v529
        %4737 = vmatprep.subr.mxu0 %v533
        %4738 = vmatpush1.msra.mxu0 %v532
        %4739 = vmatprep.subr.mxu0 %v536
        %4740 = vmatpush1.msra.mxu0 %v535
        %4741 = vmatprep.subr.mxu0 0.0
        %4742 = vmatpush1.msra.mxu0 0.0
        %4743 = vmatprep.subr.mxu0 0.0
        %4744 = vmatpush1.msra.mxu0 0.0
        %4745 = vmatprep.subr.mxu0 0.0
        %4746 = vmatpush1.msra.mxu0 0.0
        %4747 = vmatprep.subr.mxu0 0.0
        %4748 = vmatpush1.msra.mxu0 0.0
        %4749 = vmatprep.subr.mxu0 0.0
        %4750 = vmatpush1.msra.mxu0 0.0
        %4751 = vmatprep.subr.mxu0 0.0
        %4752 = vmatpush1.msra.mxu0 0.0
        %4753 = vmatprep.subr.mxu0 0.0
        %4754 = vmatpush1.msra.mxu0 0.0
        %4755 = vmatprep.subr.mxu0 0.0
        %4756 = vmatpush1.msra.mxu0 0.0
        %4757 = vmatprep.subr.mxu0 0.0
        %4758 = vmatpush1.msra.mxu0 0.0
        %4759 = vmatprep.subr.mxu0 0.0
        %4760 = vmatpush1.msra.mxu0 0.0
        %4761 = vmatprep.subr.mxu0 0.0
        %4762 = vmatpush1.msra.mxu0 0.0
        %4763 = vmatprep.subr.mxu0 0.0
        %4764 = vmatpush1.msra.mxu0 0.0
        %4765 = vmatprep.subr.mxu0 0.0
        %4766 = vmatpush1.msra.mxu0 0.0
        %4767 = vmatprep.subr.mxu0 0.0
        %4768 = vmatpush1.msra.mxu0 0.0
        %4769 = vmatprep.subr.mxu0 0.0
        %4770 = vmatpush1.msra.mxu0 0.0
        %4771 = vmatprep.subr.mxu0 0.0
        %4772 = vmatpush1.msra.mxu0 0.0
        %4773 = vmatprep.mubr.f32.mxu0 0.0
        %4774 = vmatmul.mubr.f32.gmra.mrb[0].mxu0 %v4546
        %v4775 = vpop.f32.mrb[0].mxu0
        %v4776 = vadd.f32 0.0, %v4775
        %v4777 = vpop.f32.mrb[0].mxu0
        %v4778 = vadd.f32 0.0, %v4777
        %4779 = vmatprep.mubr.f32.mxu0 0.0
        %4780 = vmatmul.mubr.f32.gmra.mrb[0].mxu0 %v4547
        %v4781 = vpop.f32.mrb[0].mxu0
        %v4782 = vadd.f32 0.0, %v4781
        %v4783 = vpop.f32.mrb[0].mxu0
        %v4784 = vadd.f32 0.0, %v4783
        %4785 = vdwg.mxu0
        %4786 = vmatprep.subr.mxu0 0.0
        %4787 = vmatpush1.msra.mxu0 %v492
        %4788 = vmatprep.subr.mxu0 0.0
        %4789 = vmatpush1.msra.mxu0 %v495
        %4790 = vmatprep.subr.mxu0 0.0
        %4791 = vmatpush1.msra.mxu0 %v498
        %4792 = vmatprep.subr.mxu0 0.0
        %4793 = vmatpush1.msra.mxu0 %v501
        %4794 = vmatprep.subr.mxu0 0.0
        %4795 = vmatpush1.msra.mxu0 %v504
        %4796 = vmatprep.subr.mxu0 0.0
        %4797 = vmatpush1.msra.mxu0 %v507
        %4798 = vmatprep.subr.mxu0 0.0
        %4799 = vmatpush1.msra.mxu0 %v510
        %4800 = vmatprep.subr.mxu0 0.0
        %4801 = vmatpush1.msra.mxu0 %v513
        %4802 = vmatprep.subr.mxu0 0.0
        %4803 = vmatpush1.msra.mxu0 %v516
        %4804 = vmatprep.subr.mxu0 0.0
        %4805 = vmatpush1.msra.mxu0 %v519
        %4806 = vmatprep.subr.mxu0 0.0
        %4807 = vmatpush1.msra.mxu0 %v522
        %4808 = vmatprep.subr.mxu0 0.0
        %4809 = vmatpush1.msra.mxu0 %v525
        %4810 = vmatprep.subr.mxu0 0.0
        %4811 = vmatpush1.msra.mxu0 %v528
        %4812 = vmatprep.subr.mxu0 0.0
        %4813 = vmatpush1.msra.mxu0 %v531
        %4814 = vmatprep.subr.mxu0 0.0
        %4815 = vmatpush1.msra.mxu0 %v534
        %4816 = vmatprep.subr.mxu0 0.0
        %4817 = vmatpush1.msra.mxu0 %v537
        %4818 = vmatprep.subr.mxu0 0.0
        %4819 = vmatpush1.msra.mxu0 0.0
        %4820 = vmatprep.subr.mxu0 0.0
        %4821 = vmatpush1.msra.mxu0 0.0
        %4822 = vmatprep.subr.mxu0 0.0
        %4823 = vmatpush1.msra.mxu0 0.0
        %4824 = vmatprep.subr.mxu0 0.0
        %4825 = vmatpush1.msra.mxu0 0.0
        %4826 = vmatprep.subr.mxu0 0.0
        %4827 = vmatpush1.msra.mxu0 0.0
        %4828 = vmatprep.subr.mxu0 0.0
        %4829 = vmatpush1.msra.mxu0 0.0
        %4830 = vmatprep.subr.mxu0 0.0
        %4831 = vmatpush1.msra.mxu0 0.0
        %4832 = vmatprep.subr.mxu0 0.0
        %4833 = vmatpush1.msra.mxu0 0.0
        %4834 = vmatprep.subr.mxu0 0.0
        %4835 = vmatpush1.msra.mxu0 0.0
        %4836 = vmatprep.subr.mxu0 0.0
        %4837 = vmatpush1.msra.mxu0 0.0
        %4838 = vmatprep.subr.mxu0 0.0
        %4839 = vmatpush1.msra.mxu0 0.0
        %4840 = vmatprep.subr.mxu0 0.0
        %4841 = vmatpush1.msra.mxu0 0.0
        %4842 = vmatprep.subr.mxu0 0.0
        %4843 = vmatpush1.msra.mxu0 0.0
        %4844 = vmatprep.subr.mxu0 0.0
        %4845 = vmatpush1.msra.mxu0 0.0
        %4846 = vmatprep.subr.mxu0 0.0
        %4847 = vmatpush1.msra.mxu0 0.0
        %4848 = vmatprep.subr.mxu0 0.0
        %4849 = vmatpush1.msra.mxu0 0.0
        %4850 = vmatprep.mubr.f32.mxu0 0.0
        %4851 = vmatmul.mubr.f32.gmra.mrb[0].mxu0 %v4546
        %v4852 = vpop.f32.mrb[0].mxu0
        %v4853 = vadd.f32 0.0, %v4852
        %v4854 = vpop.f32.mrb[0].mxu0
        %4855 = vmatprep.mubr.f32.mxu0 0.0
        %4856 = vmatmul.mubr.f32.gmra.mrb[0].mxu0 %v4547
        %v4857 = vpop.f32.mrb[0].mxu0
        %v4858 = vadd.f32 0.0, %v4857
        %v4859 = vpop.f32.mrb[0].mxu0
        %4860 = vdwg.mxu0
        %v4861 = vadd.f32 %v4624, %v4776
        %v4862 = vadd.f32 %v4630, %v4782
        %v4863 = vxor.u32 %v4861, 2147483648
        %v4864 = vxor.u32 %v4862, 2147483648
        %v4865 = vmul.f32 %v4863, 1.442695
        %v4866 = vpow.pop %v4865
        %v4867 = vmul.f32 %v4864, 1.442695
        %v4868 = vpow.pop %v4867
        %v4869 = vadd.f32 %v4866, 1.0
        %v4870 = vadd.f32 %v4868, 1.0
        %v4871 = vrcp.pop %v4869
        %v4872 = vmul.f32 1.0, %v4871
        %v4873 = vrcp.pop %v4870
        %v4874 = vmul.f32 1.0, %v4873
        %v4875 = vadd.f32 %v4626, %v4778
        %v4876 = vadd.f32 %v4632, %v4784
        %v4877 = vxor.u32 %v4875, 2147483648
        %v4878 = vxor.u32 %v4876, 2147483648
        %v4879 = vmul.f32 %v4877, 1.442695
        %v4880 = vpow.pop %v4879
        %v4881 = vmul.f32 %v4878, 1.442695
        %v4882 = vpow.pop %v4881
        %v4883 = vadd.f32 %v4880, 1.0
        %v4884 = vadd.f32 %v4882, 1.0
        %v4885 = vrcp.pop %v4883
        %v4886 = vmul.f32 1.0, %v4885
        %v4887 = vrcp.pop %v4884
        %v4888 = vmul.f32 1.0, %v4887
        %v4889 = vadd.f32 %v4853, %v895
        %v4890 = vadd.f32 %v4858, %v895
        %v4891 = vmul.f32 %v4872, %v4889
        %v4892 = vmul.f32 %v4874, %v4890
        %v4893 = vadd.f32 %v4701, %v4891
        %v4894 = vadd.f32 %v4706, %v4892
        %v4895 = vtanh.pop %v4893
        %v4896 = vtanh.pop %v4894
        %v4897 = vsub.f32 1.0, %v4886
        %v4898 = vsub.f32 1.0, %v4888
        %v4899 = vmul.f32 %v4897, %v4895
        %v4900 = vmul.f32 %v4898, %v4896
        %v4901 = vmul.f32 %v4886, %v4546
        %v4902 = vmul.f32 %v4888, %v4547
        %v4903 = vadd.f32 %v4899, %v4901
        %v4904 = vadd.f32 %v4900, %v4902
        %s4905 = sadd.s32 %s547, 11
        %v4906 = vstv %s4905
        %vm4907 = vcmp.lt.s32.totalorder %v4906, %v543
        %vm4908 = vcmp.lt.s32.totalorder %v4906, %v546
        %v4909 = vsel %vm4907, %v4903, %v4546
        %v4910 = vsel %vm4908, %v4904, %v4547
        %s4911 = scalar_lea.vmem %s435, 192 [#allocation3]
        %v4912 = vld [vmem:[%s4911] sm:$0xff]
        %v4913 = vld [vmem:[%s4911 + $0x8] sm:$0xff]
        %v4915 = vsel %vm552, %v4912, 0
        %v4918 = vsel %vm552, %v4913, 0
        %4920 = vmatprep.subr.mxu0 %v485
        %4921 = vmatpush1.msra.mxu0 %v484
        %4922 = vmatprep.subr.mxu0 %v488
        %4923 = vmatpush1.msra.mxu0 %v487
        %4924 = vmatprep.subr.mxu0 0.0
        %4925 = vmatpush1.msra.mxu0 0.0
        %4926 = vmatprep.subr.mxu0 0.0
        %4927 = vmatpush1.msra.mxu0 0.0
        %4928 = vmatprep.subr.mxu0 0.0
        %4929 = vmatpush1.msra.mxu0 0.0
        %4930 = vmatprep.subr.mxu0 0.0
        %4931 = vmatpush1.msra.mxu0 0.0
        %4932 = vmatprep.subr.mxu0 0.0
        %4933 = vmatpush1.msra.mxu0 0.0
        %4934 = vmatprep.subr.mxu0 0.0
        %4935 = vmatpush1.msra.mxu0 0.0
        %4936 = vmatprep.subr.mxu0 0.0
        %4937 = vmatpush1.msra.mxu0 0.0
        %4938 = vmatprep.subr.mxu0 0.0
        %4939 = vmatpush1.msra.mxu0 0.0
        %4940 = vmatprep.subr.mxu0 0.0
        %4941 = vmatpush1.msra.mxu0 0.0
        %4942 = vmatprep.subr.mxu0 0.0
        %4943 = vmatpush1.msra.mxu0 0.0
        %4944 = vmatprep.subr.mxu0 0.0
        %4945 = vmatpush1.msra.mxu0 0.0
        %4946 = vmatprep.subr.mxu0 0.0
        %4947 = vmatpush1.msra.mxu0 0.0
        %4948 = vmatprep.subr.mxu0 0.0
        %4949 = vmatpush1.msra.mxu0 0.0
        %4950 = vmatprep.subr.mxu0 0.0
        %4951 = vmatpush1.msra.mxu0 0.0
        %4952 = vmatprep.subr.mxu0 0.0
        %4953 = vmatpush1.msra.mxu0 0.0
        %4954 = vmatprep.subr.mxu0 0.0
        %4955 = vmatpush1.msra.mxu0 0.0
        %4956 = vmatprep.subr.mxu0 0.0
        %4957 = vmatpush1.msra.mxu0 0.0
        %4958 = vmatprep.subr.mxu0 0.0
        %4959 = vmatpush1.msra.mxu0 0.0
        %4960 = vmatprep.subr.mxu0 0.0
        %4961 = vmatpush1.msra.mxu0 0.0
        %4962 = vmatprep.subr.mxu0 0.0
        %4963 = vmatpush1.msra.mxu0 0.0
        %4964 = vmatprep.subr.mxu0 0.0
        %4965 = vmatpush1.msra.mxu0 0.0
        %4966 = vmatprep.subr.mxu0 0.0
        %4967 = vmatpush1.msra.mxu0 0.0
        %4968 = vmatprep.subr.mxu0 0.0
        %4969 = vmatpush1.msra.mxu0 0.0
        %4970 = vmatprep.subr.mxu0 0.0
        %4971 = vmatpush1.msra.mxu0 0.0
        %4972 = vmatprep.subr.mxu0 0.0
        %4973 = vmatpush1.msra.mxu0 0.0
        %4974 = vmatprep.subr.mxu0 0.0
        %4975 = vmatpush1.msra.mxu0 0.0
        %4976 = vmatprep.subr.mxu0 0.0
        %4977 = vmatpush1.msra.mxu0 0.0
        %4978 = vmatprep.subr.mxu0 0.0
        %4979 = vmatpush1.msra.mxu0 0.0
        %4980 = vmatprep.subr.mxu0 0.0
        %4981 = vmatpush1.msra.mxu0 0.0
        %4982 = vmatprep.subr.mxu0 0.0
        %4983 = vmatpush1.msra.mxu0 0.0
        %4984 = vmatprep.mubr.f32.mxu0 0.0
        %4985 = vmatmul.mubr.f32.gmra.mrb[0].mxu0 %v4915
        %v4986 = vpop.f32.mrb[0].mxu0
        %v4987 = vadd.f32 0.0, %v4986
        %v4988 = vpop.f32.mrb[0].mxu0
        %v4989 = vadd.f32 0.0, %v4988
        %4990 = vmatprep.mubr.f32.mxu0 0.0
        %4991 = vmatmul.mubr.f32.gmra.mrb[0].mxu0 %v4918
        %v4992 = vpop.f32.mrb[0].mxu0
        %v4993 = vadd.f32 0.0, %v4992
        %v4994 = vpop.f32.mrb[0].mxu0
        %v4995 = vadd.f32 0.0, %v4994
        %4996 = vdwg.mxu0
        %4997 = vmatprep.subr.mxu0 0.0
        %4998 = vmatpush1.msra.mxu0 %v486
        %4999 = vmatprep.subr.mxu0 0.0
        %5000 = vmatpush1.msra.mxu0 %v489
        %5001 = vmatprep.subr.mxu0 0.0
        %5002 = vmatpush1.msra.mxu0 0.0
        %5003 = vmatprep.subr.mxu0 0.0
        %5004 = vmatpush1.msra.mxu0 0.0
        %5005 = vmatprep.subr.mxu0 0.0
        %5006 = vmatpush1.msra.mxu0 0.0
        %5007 = vmatprep.subr.mxu0 0.0
        %5008 = vmatpush1.msra.mxu0 0.0
        %5009 = vmatprep.subr.mxu0 0.0
        %5010 = vmatpush1.msra.mxu0 0.0
        %5011 = vmatprep.subr.mxu0 0.0
        %5012 = vmatpush1.msra.mxu0 0.0
        %5013 = vmatprep.subr.mxu0 0.0
        %5014 = vmatpush1.msra.mxu0 0.0
        %5015 = vmatprep.subr.mxu0 0.0
        %5016 = vmatpush1.msra.mxu0 0.0
        %5017 = vmatprep.subr.mxu0 0.0
        %5018 = vmatpush1.msra.mxu0 0.0
        %5019 = vmatprep.subr.mxu0 0.0
        %5020 = vmatpush1.msra.mxu0 0.0
        %5021 = vmatprep.subr.mxu0 0.0
        %5022 = vmatpush1.msra.mxu0 0.0
        %5023 = vmatprep.subr.mxu0 0.0
        %5024 = vmatpush1.msra.mxu0 0.0
        %5025 = vmatprep.subr.mxu0 0.0
        %5026 = vmatpush1.msra.mxu0 0.0
        %5027 = vmatprep.subr.mxu0 0.0
        %5028 = vmatpush1.msra.mxu0 0.0
        %5029 = vmatprep.subr.mxu0 0.0
        %5030 = vmatpush1.msra.mxu0 0.0
        %5031 = vmatprep.subr.mxu0 0.0
        %5032 = vmatpush1.msra.mxu0 0.0
        %5033 = vmatprep.subr.mxu0 0.0
        %5034 = vmatpush1.msra.mxu0 0.0
        %5035 = vmatprep.subr.mxu0 0.0
        %5036 = vmatpush1.msra.mxu0 0.0
        %5037 = vmatprep.subr.mxu0 0.0
        %5038 = vmatpush1.msra.mxu0 0.0
        %5039 = vmatprep.subr.mxu0 0.0
        %5040 = vmatpush1.msra.mxu0 0.0
        %5041 = vmatprep.subr.mxu0 0.0
        %5042 = vmatpush1.msra.mxu0 0.0
        %5043 = vmatprep.subr.mxu0 0.0
        %5044 = vmatpush1.msra.mxu0 0.0
        %5045 = vmatprep.subr.mxu0 0.0
        %5046 = vmatpush1.msra.mxu0 0.0
        %5047 = vmatprep.subr.mxu0 0.0
        %5048 = vmatpush1.msra.mxu0 0.0
        %5049 = vmatprep.subr.mxu0 0.0
        %5050 = vmatpush1.msra.mxu0 0.0
        %5051 = vmatprep.subr.mxu0 0.0
        %5052 = vmatpush1.msra.mxu0 0.0
        %5053 = vmatprep.subr.mxu0 0.0
        %5054 = vmatpush1.msra.mxu0 0.0
        %5055 = vmatprep.subr.mxu0 0.0
        %5056 = vmatpush1.msra.mxu0 0.0
        %5057 = vmatprep.subr.mxu0 0.0
        %5058 = vmatpush1.msra.mxu0 0.0
        %5059 = vmatprep.subr.mxu0 0.0
        %5060 = vmatpush1.msra.mxu0 0.0
        %5061 = vmatprep.mubr.f32.mxu0 0.0
        %5062 = vmatmul.mubr.f32.gmra.mrb[0].mxu0 %v4915
        %v5063 = vpop.f32.mrb[0].mxu0
        %v5064 = vadd.f32 0.0, %v5063
        %v5065 = vpop.f32.mrb[0].mxu0
        %5066 = vmatprep.mubr.f32.mxu0 0.0
        %5067 = vmatmul.mubr.f32.gmra.mrb[0].mxu0 %v4918
        %v5068 = vpop.f32.mrb[0].mxu0
        %v5069 = vadd.f32 0.0, %v5068
        %v5070 = vpop.f32.mrb[0].mxu0
        %5071 = vdwg.mxu0
        %5072 = vmatprep.subr.mxu0 %v491
        %5073 = vmatpush1.msra.mxu0 %v490
        %5074 = vmatprep.subr.mxu0 %v494
        %5075 = vmatpush1.msra.mxu0 %v493
        %5076 = vmatprep.subr.mxu0 %v497
        %5077 = vmatpush1.msra.mxu0 %v496
        %5078 = vmatprep.subr.mxu0 %v500
        %5079 = vmatpush1.msra.mxu0 %v499
        %5080 = vmatprep.subr.mxu0 %v503
        %5081 = vmatpush1.msra.mxu0 %v502
        %5082 = vmatprep.subr.mxu0 %v506
        %5083 = vmatpush1.msra.mxu0 %v505
        %5084 = vmatprep.subr.mxu0 %v509
        %5085 = vmatpush1.msra.mxu0 %v508
        %5086 = vmatprep.subr.mxu0 %v512
        %5087 = vmatpush1.msra.mxu0 %v511
        %5088 = vmatprep.subr.mxu0 %v515
        %5089 = vmatpush1.msra.mxu0 %v514
        %5090 = vmatprep.subr.mxu0 %v518
        %5091 = vmatpush1.msra.mxu0 %v517
        %5092 = vmatprep.subr.mxu0 %v521
        %5093 = vmatpush1.msra.mxu0 %v520
        %5094 = vmatprep.subr.mxu0 %v524
        %5095 = vmatpush1.msra.mxu0 %v523
        %5096 = vmatprep.subr.mxu0 %v527
        %5097 = vmatpush1.msra.mxu0 %v526
        %5098 = vmatprep.subr.mxu0 %v530
        %5099 = vmatpush1.msra.mxu0 %v529
        %5100 = vmatprep.subr.mxu0 %v533
        %5101 = vmatpush1.msra.mxu0 %v532
        %5102 = vmatprep.subr.mxu0 %v536
        %5103 = vmatpush1.msra.mxu0 %v535
        %5104 = vmatprep.subr.mxu0 0.0
        %5105 = vmatpush1.msra.mxu0 0.0
        %5106 = vmatprep.subr.mxu0 0.0
        %5107 = vmatpush1.msra.mxu0 0.0
        %5108 = vmatprep.subr.mxu0 0.0
        %5109 = vmatpush1.msra.mxu0 0.0
        %5110 = vmatprep.subr.mxu0 0.0
        %5111 = vmatpush1.msra.mxu0 0.0
        %5112 = vmatprep.subr.mxu0 0.0
        %5113 = vmatpush1.msra.mxu0 0.0
        %5114 = vmatprep.subr.mxu0 0.0
        %5115 = vmatpush1.msra.mxu0 0.0
        %5116 = vmatprep.subr.mxu0 0.0
        %5117 = vmatpush1.msra.mxu0 0.0
        %5118 = vmatprep.subr.mxu0 0.0
        %5119 = vmatpush1.msra.mxu0 0.0
        %5120 = vmatprep.subr.mxu0 0.0
        %5121 = vmatpush1.msra.mxu0 0.0
        %5122 = vmatprep.subr.mxu0 0.0
        %5123 = vmatpush1.msra.mxu0 0.0
        %5124 = vmatprep.subr.mxu0 0.0
        %5125 = vmatpush1.msra.mxu0 0.0
        %5126 = vmatprep.subr.mxu0 0.0
        %5127 = vmatpush1.msra.mxu0 0.0
        %5128 = vmatprep.subr.mxu0 0.0
        %5129 = vmatpush1.msra.mxu0 0.0
        %5130 = vmatprep.subr.mxu0 0.0
        %5131 = vmatpush1.msra.mxu0 0.0
        %5132 = vmatprep.subr.mxu0 0.0
        %5133 = vmatpush1.msra.mxu0 0.0
        %5134 = vmatprep.subr.mxu0 0.0
        %5135 = vmatpush1.msra.mxu0 0.0
        %5136 = vmatprep.mubr.f32.mxu0 0.0
        %5137 = vmatmul.mubr.f32.gmra.mrb[0].mxu0 %v4909
        %v5138 = vpop.f32.mrb[0].mxu0
        %v5139 = vadd.f32 0.0, %v5138
        %v5140 = vpop.f32.mrb[0].mxu0
        %v5141 = vadd.f32 0.0, %v5140
        %5142 = vmatprep.mubr.f32.mxu0 0.0
        %5143 = vmatmul.mubr.f32.gmra.mrb[0].mxu0 %v4910
        %v5144 = vpop.f32.mrb[0].mxu0
        %v5145 = vadd.f32 0.0, %v5144
        %v5146 = vpop.f32.mrb[0].mxu0
        %v5147 = vadd.f32 0.0, %v5146
        %5148 = vdwg.mxu0
        %5149 = vmatprep.subr.mxu0 0.0
        %5150 = vmatpush1.msra.mxu0 %v492
        %5151 = vmatprep.subr.mxu0 0.0
        %5152 = vmatpush1.msra.mxu0 %v495
        %5153 = vmatprep.subr.mxu0 0.0
        %5154 = vmatpush1.msra.mxu0 %v498
        %5155 = vmatprep.subr.mxu0 0.0
        %5156 = vmatpush1.msra.mxu0 %v501
        %5157 = vmatprep.subr.mxu0 0.0
        %5158 = vmatpush1.msra.mxu0 %v504
        %5159 = vmatprep.subr.mxu0 0.0
        %5160 = vmatpush1.msra.mxu0 %v507
        %5161 = vmatprep.subr.mxu0 0.0
        %5162 = vmatpush1.msra.mxu0 %v510
        %5163 = vmatprep.subr.mxu0 0.0
        %5164 = vmatpush1.msra.mxu0 %v513
        %5165 = vmatprep.subr.mxu0 0.0
        %5166 = vmatpush1.msra.mxu0 %v516
        %5167 = vmatprep.subr.mxu0 0.0
        %5168 = vmatpush1.msra.mxu0 %v519
        %5169 = vmatprep.subr.mxu0 0.0
        %5170 = vmatpush1.msra.mxu0 %v522
        %5171 = vmatprep.subr.mxu0 0.0
        %5172 = vmatpush1.msra.mxu0 %v525
        %5173 = vmatprep.subr.mxu0 0.0
        %5174 = vmatpush1.msra.mxu0 %v528
        %5175 = vmatprep.subr.mxu0 0.0
        %5176 = vmatpush1.msra.mxu0 %v531
        %5177 = vmatprep.subr.mxu0 0.0
        %5178 = vmatpush1.msra.mxu0 %v534
        %5179 = vmatprep.subr.mxu0 0.0
        %5180 = vmatpush1.msra.mxu0 %v537
        %5181 = vmatprep.subr.mxu0 0.0
        %5182 = vmatpush1.msra.mxu0 0.0
        %5183 = vmatprep.subr.mxu0 0.0
        %5184 = vmatpush1.msra.mxu0 0.0
        %5185 = vmatprep.subr.mxu0 0.0
        %5186 = vmatpush1.msra.mxu0 0.0
        %5187 = vmatprep.subr.mxu0 0.0
        %5188 = vmatpush1.msra.mxu0 0.0
        %5189 = vmatprep.subr.mxu0 0.0
        %5190 = vmatpush1.msra.mxu0 0.0
        %5191 = vmatprep.subr.mxu0 0.0
        %5192 = vmatpush1.msra.mxu0 0.0
        %5193 = vmatprep.subr.mxu0 0.0
        %5194 = vmatpush1.msra.mxu0 0.0
        %5195 = vmatprep.subr.mxu0 0.0
        %5196 = vmatpush1.msra.mxu0 0.0
        %5197 = vmatprep.subr.mxu0 0.0
        %5198 = vmatpush1.msra.mxu0 0.0
        %5199 = vmatprep.subr.mxu0 0.0
        %5200 = vmatpush1.msra.mxu0 0.0
        %5201 = vmatprep.subr.mxu0 0.0
        %5202 = vmatpush1.msra.mxu0 0.0
        %5203 = vmatprep.subr.mxu0 0.0
        %5204 = vmatpush1.msra.mxu0 0.0
        %5205 = vmatprep.subr.mxu0 0.0
        %5206 = vmatpush1.msra.mxu0 0.0
        %5207 = vmatprep.subr.mxu0 0.0
        %5208 = vmatpush1.msra.mxu0 0.0
        %5209 = vmatprep.subr.mxu0 0.0
        %5210 = vmatpush1.msra.mxu0 0.0
        %5211 = vmatprep.subr.mxu0 0.0
        %5212 = vmatpush1.msra.mxu0 0.0
        %5213 = vmatprep.mubr.f32.mxu0 0.0
        %5214 = vmatmul.mubr.f32.gmra.mrb[0].mxu0 %v4909
        %v5215 = vpop.f32.mrb[0].mxu0
        %v5216 = vadd.f32 0.0, %v5215
        %v5217 = vpop.f32.mrb[0].mxu0
        %5218 = vmatprep.mubr.f32.mxu0 0.0
        %5219 = vmatmul.mubr.f32.gmra.mrb[0].mxu0 %v4910
        %v5220 = vpop.f32.mrb[0].mxu0
        %v5221 = vadd.f32 0.0, %v5220
        %v5222 = vpop.f32.mrb[0].mxu0
        %5223 = vdwg.mxu0
        %v5224 = vadd.f32 %v4987, %v5139
        %v5225 = vadd.f32 %v4993, %v5145
        %v5226 = vxor.u32 %v5224, 2147483648
        %v5227 = vxor.u32 %v5225, 2147483648
        %v5228 = vmul.f32 %v5226, 1.442695
        %v5229 = vpow.pop %v5228
        %v5230 = vmul.f32 %v5227, 1.442695
        %v5231 = vpow.pop %v5230
        %v5232 = vadd.f32 %v5229, 1.0
        %v5233 = vadd.f32 %v5231, 1.0
        %v5234 = vrcp.pop %v5232
        %v5235 = vmul.f32 1.0, %v5234
        %v5236 = vrcp.pop %v5233
        %v5237 = vmul.f32 1.0, %v5236
        %v5238 = vadd.f32 %v4989, %v5141
        %v5239 = vadd.f32 %v4995, %v5147
        %v5240 = vxor.u32 %v5238, 2147483648
        %v5241 = vxor.u32 %v5239, 2147483648
        %v5242 = vmul.f32 %v5240, 1.442695
        %v5243 = vpow.pop %v5242
        %v5244 = vmul.f32 %v5241, 1.442695
        %v5245 = vpow.pop %v5244
        %v5246 = vadd.f32 %v5243, 1.0
        %v5247 = vadd.f32 %v5245, 1.0
        %v5248 = vrcp.pop %v5246
        %v5249 = vmul.f32 1.0, %v5248
        %v5250 = vrcp.pop %v5247
        %v5251 = vmul.f32 1.0, %v5250
        %v5252 = vadd.f32 %v5216, %v895
        %v5253 = vadd.f32 %v5221, %v895
        %v5254 = vmul.f32 %v5235, %v5252
        %v5255 = vmul.f32 %v5237, %v5253
        %v5256 = vadd.f32 %v5064, %v5254
        %v5257 = vadd.f32 %v5069, %v5255
        %v5258 = vtanh.pop %v5256
        %v5259 = vtanh.pop %v5257
        %v5260 = vsub.f32 1.0, %v5249
        %v5261 = vsub.f32 1.0, %v5251
        %v5262 = vmul.f32 %v5260, %v5258
        %v5263 = vmul.f32 %v5261, %v5259
        %v5264 = vmul.f32 %v5249, %v4909
        %v5265 = vmul.f32 %v5251, %v4910
        %v5266 = vadd.f32 %v5262, %v5264
        %v5267 = vadd.f32 %v5263, %v5265
        %s5268 = sadd.s32 %s547, 12
        %v5269 = vstv %s5268
        %vm5270 = vcmp.lt.s32.totalorder %v5269, %v543
        %vm5271 = vcmp.lt.s32.totalorder %v5269, %v546
        %v5272 = vsel %vm5270, %v5266, %v4909
        %v5273 = vsel %vm5271, %v5267, %v4910
        %s5274 = scalar_lea.vmem %s435, 208 [#allocation3]
        %v5275 = vld [vmem:[%s5274] sm:$0xff]
        %v5276 = vld [vmem:[%s5274 + $0x8] sm:$0xff]
        %v5278 = vsel %vm552, %v5275, 0
        %v5281 = vsel %vm552, %v5276, 0
        %5283 = vmatprep.subr.mxu0 %v485
        %5284 = vmatpush1.msra.mxu0 %v484
        %5285 = vmatprep.subr.mxu0 %v488
        %5286 = vmatpush1.msra.mxu0 %v487
        %5287 = vmatprep.subr.mxu0 0.0
        %5288 = vmatpush1.msra.mxu0 0.0
        %5289 = vmatprep.subr.mxu0 0.0
        %5290 = vmatpush1.msra.mxu0 0.0
        %5291 = vmatprep.subr.mxu0 0.0
        %5292 = vmatpush1.msra.mxu0 0.0
        %5293 = vmatprep.subr.mxu0 0.0
        %5294 = vmatpush1.msra.mxu0 0.0
        %5295 = vmatprep.subr.mxu0 0.0
        %5296 = vmatpush1.msra.mxu0 0.0
        %5297 = vmatprep.subr.mxu0 0.0
        %5298 = vmatpush1.msra.mxu0 0.0
        %5299 = vmatprep.subr.mxu0 0.0
        %5300 = vmatpush1.msra.mxu0 0.0
        %5301 = vmatprep.subr.mxu0 0.0
        %5302 = vmatpush1.msra.mxu0 0.0
        %5303 = vmatprep.subr.mxu0 0.0
        %5304 = vmatpush1.msra.mxu0 0.0
        %5305 = vmatprep.subr.mxu0 0.0
        %5306 = vmatpush1.msra.mxu0 0.0
        %5307 = vmatprep.subr.mxu0 0.0
        %5308 = vmatpush1.msra.mxu0 0.0
        %5309 = vmatprep.subr.mxu0 0.0
        %5310 = vmatpush1.msra.mxu0 0.0
        %5311 = vmatprep.subr.mxu0 0.0
        %5312 = vmatpush1.msra.mxu0 0.0
        %5313 = vmatprep.subr.mxu0 0.0
        %5314 = vmatpush1.msra.mxu0 0.0
        %5315 = vmatprep.subr.mxu0 0.0
        %5316 = vmatpush1.msra.mxu0 0.0
        %5317 = vmatprep.subr.mxu0 0.0
        %5318 = vmatpush1.msra.mxu0 0.0
        %5319 = vmatprep.subr.mxu0 0.0
        %5320 = vmatpush1.msra.mxu0 0.0
        %5321 = vmatprep.subr.mxu0 0.0
        %5322 = vmatpush1.msra.mxu0 0.0
        %5323 = vmatprep.subr.mxu0 0.0
        %5324 = vmatpush1.msra.mxu0 0.0
        %5325 = vmatprep.subr.mxu0 0.0
        %5326 = vmatpush1.msra.mxu0 0.0
        %5327 = vmatprep.subr.mxu0 0.0
        %5328 = vmatpush1.msra.mxu0 0.0
        %5329 = vmatprep.subr.mxu0 0.0
        %5330 = vmatpush1.msra.mxu0 0.0
        %5331 = vmatprep.subr.mxu0 0.0
        %5332 = vmatpush1.msra.mxu0 0.0
        %5333 = vmatprep.subr.mxu0 0.0
        %5334 = vmatpush1.msra.mxu0 0.0
        %5335 = vmatprep.subr.mxu0 0.0
        %5336 = vmatpush1.msra.mxu0 0.0
        %5337 = vmatprep.subr.mxu0 0.0
        %5338 = vmatpush1.msra.mxu0 0.0
        %5339 = vmatprep.subr.mxu0 0.0
        %5340 = vmatpush1.msra.mxu0 0.0
        %5341 = vmatprep.subr.mxu0 0.0
        %5342 = vmatpush1.msra.mxu0 0.0
        %5343 = vmatprep.subr.mxu0 0.0
        %5344 = vmatpush1.msra.mxu0 0.0
        %5345 = vmatprep.subr.mxu0 0.0
        %5346 = vmatpush1.msra.mxu0 0.0
        %5347 = vmatprep.mubr.f32.mxu0 0.0
        %5348 = vmatmul.mubr.f32.gmra.mrb[0].mxu0 %v5278
        %v5349 = vpop.f32.mrb[0].mxu0
        %v5350 = vadd.f32 0.0, %v5349
        %v5351 = vpop.f32.mrb[0].mxu0
        %v5352 = vadd.f32 0.0, %v5351
        %5353 = vmatprep.mubr.f32.mxu0 0.0
        %5354 = vmatmul.mubr.f32.gmra.mrb[0].mxu0 %v5281
        %v5355 = vpop.f32.mrb[0].mxu0
        %v5356 = vadd.f32 0.0, %v5355
        %v5357 = vpop.f32.mrb[0].mxu0
        %v5358 = vadd.f32 0.0, %v5357
        %5359 = vdwg.mxu0
        %5360 = vmatprep.subr.mxu0 0.0
        %5361 = vmatpush1.msra.mxu0 %v486
        %5362 = vmatprep.subr.mxu0 0.0
        %5363 = vmatpush1.msra.mxu0 %v489
        %5364 = vmatprep.subr.mxu0 0.0
        %5365 = vmatpush1.msra.mxu0 0.0
        %5366 = vmatprep.subr.mxu0 0.0
        %5367 = vmatpush1.msra.mxu0 0.0
        %5368 = vmatprep.subr.mxu0 0.0
        %5369 = vmatpush1.msra.mxu0 0.0
        %5370 = vmatprep.subr.mxu0 0.0
        %5371 = vmatpush1.msra.mxu0 0.0
        %5372 = vmatprep.subr.mxu0 0.0
        %5373 = vmatpush1.msra.mxu0 0.0
        %5374 = vmatprep.subr.mxu0 0.0
        %5375 = vmatpush1.msra.mxu0 0.0
        %5376 = vmatprep.subr.mxu0 0.0
        %5377 = vmatpush1.msra.mxu0 0.0
        %5378 = vmatprep.subr.mxu0 0.0
        %5379 = vmatpush1.msra.mxu0 0.0
        %5380 = vmatprep.subr.mxu0 0.0
        %5381 = vmatpush1.msra.mxu0 0.0
        %5382 = vmatprep.subr.mxu0 0.0
        %5383 = vmatpush1.msra.mxu0 0.0
        %5384 = vmatprep.subr.mxu0 0.0
        %5385 = vmatpush1.msra.mxu0 0.0
        %5386 = vmatprep.subr.mxu0 0.0
        %5387 = vmatpush1.msra.mxu0 0.0
        %5388 = vmatprep.subr.mxu0 0.0
        %5389 = vmatpush1.msra.mxu0 0.0
        %5390 = vmatprep.subr.mxu0 0.0
        %5391 = vmatpush1.msra.mxu0 0.0
        %5392 = vmatprep.subr.mxu0 0.0
        %5393 = vmatpush1.msra.mxu0 0.0
        %5394 = vmatprep.subr.mxu0 0.0
        %5395 = vmatpush1.msra.mxu0 0.0
        %5396 = vmatprep.subr.mxu0 0.0
        %5397 = vmatpush1.msra.mxu0 0.0
        %5398 = vmatprep.subr.mxu0 0.0
        %5399 = vmatpush1.msra.mxu0 0.0
        %5400 = vmatprep.subr.mxu0 0.0
        %5401 = vmatpush1.msra.mxu0 0.0
        %5402 = vmatprep.subr.mxu0 0.0
        %5403 = vmatpush1.msra.mxu0 0.0
        %5404 = vmatprep.subr.mxu0 0.0
        %5405 = vmatpush1.msra.mxu0 0.0
        %5406 = vmatprep.subr.mxu0 0.0
        %5407 = vmatpush1.msra.mxu0 0.0
        %5408 = vmatprep.subr.mxu0 0.0
        %5409 = vmatpush1.msra.mxu0 0.0
        %5410 = vmatprep.subr.mxu0 0.0
        %5411 = vmatpush1.msra.mxu0 0.0
        %5412 = vmatprep.subr.mxu0 0.0
        %5413 = vmatpush1.msra.mxu0 0.0
        %5414 = vmatprep.subr.mxu0 0.0
        %5415 = vmatpush1.msra.mxu0 0.0
        %5416 = vmatprep.subr.mxu0 0.0
        %5417 = vmatpush1.msra.mxu0 0.0
        %5418 = vmatprep.subr.mxu0 0.0
        %5419 = vmatpush1.msra.mxu0 0.0
        %5420 = vmatprep.subr.mxu0 0.0
        %5421 = vmatpush1.msra.mxu0 0.0
        %5422 = vmatprep.subr.mxu0 0.0
        %5423 = vmatpush1.msra.mxu0 0.0
        %5424 = vmatprep.mubr.f32.mxu0 0.0
        %5425 = vmatmul.mubr.f32.gmra.mrb[0].mxu0 %v5278
        %v5426 = vpop.f32.mrb[0].mxu0
        %v5427 = vadd.f32 0.0, %v5426
        %v5428 = vpop.f32.mrb[0].mxu0
        %5429 = vmatprep.mubr.f32.mxu0 0.0
        %5430 = vmatmul.mubr.f32.gmra.mrb[0].mxu0 %v5281
        %v5431 = vpop.f32.mrb[0].mxu0
        %v5432 = vadd.f32 0.0, %v5431
        %v5433 = vpop.f32.mrb[0].mxu0
        %5434 = vdwg.mxu0
        %5435 = vmatprep.subr.mxu0 %v491
        %5436 = vmatpush1.msra.mxu0 %v490
        %5437 = vmatprep.subr.mxu0 %v494
        %5438 = vmatpush1.msra.mxu0 %v493
        %5439 = vmatprep.subr.mxu0 %v497
        %5440 = vmatpush1.msra.mxu0 %v496
        %5441 = vmatprep.subr.mxu0 %v500
        %5442 = vmatpush1.msra.mxu0 %v499
        %5443 = vmatprep.subr.mxu0 %v503
        %5444 = vmatpush1.msra.mxu0 %v502
        %5445 = vmatprep.subr.mxu0 %v506
        %5446 = vmatpush1.msra.mxu0 %v505
        %5447 = vmatprep.subr.mxu0 %v509
        %5448 = vmatpush1.msra.mxu0 %v508
        %5449 = vmatprep.subr.mxu0 %v512
        %5450 = vmatpush1.msra.mxu0 %v511
        %5451 = vmatprep.subr.mxu0 %v515
        %5452 = vmatpush1.msra.mxu0 %v514
        %5453 = vmatprep.subr.mxu0 %v518
        %5454 = vmatpush1.msra.mxu0 %v517
        %5455 = vmatprep.subr.mxu0 %v521
        %5456 = vmatpush1.msra.mxu0 %v520
        %5457 = vmatprep.subr.mxu0 %v524
        %5458 = vmatpush1.msra.mxu0 %v523
        %5459 = vmatprep.subr.mxu0 %v527
        %5460 = vmatpush1.msra.mxu0 %v526
        %5461 = vmatprep.subr.mxu0 %v530
        %5462 = vmatpush1.msra.mxu0 %v529
        %5463 = vmatprep.subr.mxu0 %v533
        %5464 = vmatpush1.msra.mxu0 %v532
        %5465 = vmatprep.subr.mxu0 %v536
        %5466 = vmatpush1.msra.mxu0 %v535
        %5467 = vmatprep.subr.mxu0 0.0
        %5468 = vmatpush1.msra.mxu0 0.0
        %5469 = vmatprep.subr.mxu0 0.0
        %5470 = vmatpush1.msra.mxu0 0.0
        %5471 = vmatprep.subr.mxu0 0.0
        %5472 = vmatpush1.msra.mxu0 0.0
        %5473 = vmatprep.subr.mxu0 0.0
        %5474 = vmatpush1.msra.mxu0 0.0
        %5475 = vmatprep.subr.mxu0 0.0
        %5476 = vmatpush1.msra.mxu0 0.0
        %5477 = vmatprep.subr.mxu0 0.0
        %5478 = vmatpush1.msra.mxu0 0.0
        %5479 = vmatprep.subr.mxu0 0.0
        %5480 = vmatpush1.msra.mxu0 0.0
        %5481 = vmatprep.subr.mxu0 0.0
        %5482 = vmatpush1.msra.mxu0 0.0
        %5483 = vmatprep.subr.mxu0 0.0
        %5484 = vmatpush1.msra.mxu0 0.0
        %5485 = vmatprep.subr.mxu0 0.0
        %5486 = vmatpush1.msra.mxu0 0.0
        %5487 = vmatprep.subr.mxu0 0.0
        %5488 = vmatpush1.msra.mxu0 0.0
        %5489 = vmatprep.subr.mxu0 0.0
        %5490 = vmatpush1.msra.mxu0 0.0
        %5491 = vmatprep.subr.mxu0 0.0
        %5492 = vmatpush1.msra.mxu0 0.0
        %5493 = vmatprep.subr.mxu0 0.0
        %5494 = vmatpush1.msra.mxu0 0.0
        %5495 = vmatprep.subr.mxu0 0.0
        %5496 = vmatpush1.msra.mxu0 0.0
        %5497 = vmatprep.subr.mxu0 0.0
        %5498 = vmatpush1.msra.mxu0 0.0
        %5499 = vmatprep.mubr.f32.mxu0 0.0
        %5500 = vmatmul.mubr.f32.gmra.mrb[0].mxu0 %v5272
        %v5501 = vpop.f32.mrb[0].mxu0
        %v5502 = vadd.f32 0.0, %v5501
        %v5503 = vpop.f32.mrb[0].mxu0
        %v5504 = vadd.f32 0.0, %v5503
        %5505 = vmatprep.mubr.f32.mxu0 0.0
        %5506 = vmatmul.mubr.f32.gmra.mrb[0].mxu0 %v5273
        %v5507 = vpop.f32.mrb[0].mxu0
        %v5508 = vadd.f32 0.0, %v5507
        %v5509 = vpop.f32.mrb[0].mxu0
        %v5510 = vadd.f32 0.0, %v5509
        %5511 = vdwg.mxu0
        %5512 = vmatprep.subr.mxu0 0.0
        %5513 = vmatpush1.msra.mxu0 %v492
        %5514 = vmatprep.subr.mxu0 0.0
        %5515 = vmatpush1.msra.mxu0 %v495
        %5516 = vmatprep.subr.mxu0 0.0
        %5517 = vmatpush1.msra.mxu0 %v498
        %5518 = vmatprep.subr.mxu0 0.0
        %5519 = vmatpush1.msra.mxu0 %v501
        %5520 = vmatprep.subr.mxu0 0.0
        %5521 = vmatpush1.msra.mxu0 %v504
        %5522 = vmatprep.subr.mxu0 0.0
        %5523 = vmatpush1.msra.mxu0 %v507
        %5524 = vmatprep.subr.mxu0 0.0
        %5525 = vmatpush1.msra.mxu0 %v510
        %5526 = vmatprep.subr.mxu0 0.0
        %5527 = vmatpush1.msra.mxu0 %v513
        %5528 = vmatprep.subr.mxu0 0.0
        %5529 = vmatpush1.msra.mxu0 %v516
        %5530 = vmatprep.subr.mxu0 0.0
        %5531 = vmatpush1.msra.mxu0 %v519
        %5532 = vmatprep.subr.mxu0 0.0
        %5533 = vmatpush1.msra.mxu0 %v522
        %5534 = vmatprep.subr.mxu0 0.0
        %5535 = vmatpush1.msra.mxu0 %v525
        %5536 = vmatprep.subr.mxu0 0.0
        %5537 = vmatpush1.msra.mxu0 %v528
        %5538 = vmatprep.subr.mxu0 0.0
        %5539 = vmatpush1.msra.mxu0 %v531
        %5540 = vmatprep.subr.mxu0 0.0
        %5541 = vmatpush1.msra.mxu0 %v534
        %5542 = vmatprep.subr.mxu0 0.0
        %5543 = vmatpush1.msra.mxu0 %v537
        %5544 = vmatprep.subr.mxu0 0.0
        %5545 = vmatpush1.msra.mxu0 0.0
        %5546 = vmatprep.subr.mxu0 0.0
        %5547 = vmatpush1.msra.mxu0 0.0
        %5548 = vmatprep.subr.mxu0 0.0
        %5549 = vmatpush1.msra.mxu0 0.0
        %5550 = vmatprep.subr.mxu0 0.0
        %5551 = vmatpush1.msra.mxu0 0.0
        %5552 = vmatprep.subr.mxu0 0.0
        %5553 = vmatpush1.msra.mxu0 0.0
        %5554 = vmatprep.subr.mxu0 0.0
        %5555 = vmatpush1.msra.mxu0 0.0
        %5556 = vmatprep.subr.mxu0 0.0
        %5557 = vmatpush1.msra.mxu0 0.0
        %5558 = vmatprep.subr.mxu0 0.0
        %5559 = vmatpush1.msra.mxu0 0.0
        %5560 = vmatprep.subr.mxu0 0.0
        %5561 = vmatpush1.msra.mxu0 0.0
        %5562 = vmatprep.subr.mxu0 0.0
        %5563 = vmatpush1.msra.mxu0 0.0
        %5564 = vmatprep.subr.mxu0 0.0
        %5565 = vmatpush1.msra.mxu0 0.0
        %5566 = vmatprep.subr.mxu0 0.0
        %5567 = vmatpush1.msra.mxu0 0.0
        %5568 = vmatprep.subr.mxu0 0.0
        %5569 = vmatpush1.msra.mxu0 0.0
        %5570 = vmatprep.subr.mxu0 0.0
        %5571 = vmatpush1.msra.mxu0 0.0
        %5572 = vmatprep.subr.mxu0 0.0
        %5573 = vmatpush1.msra.mxu0 0.0
        %5574 = vmatprep.subr.mxu0 0.0
        %5575 = vmatpush1.msra.mxu0 0.0
        %5576 = vmatprep.mubr.f32.mxu0 0.0
        %5577 = vmatmul.mubr.f32.gmra.mrb[0].mxu0 %v5272
        %v5578 = vpop.f32.mrb[0].mxu0
        %v5579 = vadd.f32 0.0, %v5578
        %v5580 = vpop.f32.mrb[0].mxu0
        %5581 = vmatprep.mubr.f32.mxu0 0.0
        %5582 = vmatmul.mubr.f32.gmra.mrb[0].mxu0 %v5273
        %v5583 = vpop.f32.mrb[0].mxu0
        %v5584 = vadd.f32 0.0, %v5583
        %v5585 = vpop.f32.mrb[0].mxu0
        %5586 = vdwg.mxu0
        %v5587 = vadd.f32 %v5350, %v5502
        %v5588 = vadd.f32 %v5356, %v5508
        %v5589 = vxor.u32 %v5587, 2147483648
        %v5590 = vxor.u32 %v5588, 2147483648
        %v5591 = vmul.f32 %v5589, 1.442695
        %v5592 = vpow.pop %v5591
        %v5593 = vmul.f32 %v5590, 1.442695
        %v5594 = vpow.pop %v5593
        %v5595 = vadd.f32 %v5592, 1.0
        %v5596 = vadd.f32 %v5594, 1.0
        %v5597 = vrcp.pop %v5595
        %v5598 = vmul.f32 1.0, %v5597
        %v5599 = vrcp.pop %v5596
        %v5600 = vmul.f32 1.0, %v5599
        %v5601 = vadd.f32 %v5352, %v5504
        %v5602 = vadd.f32 %v5358, %v5510
        %v5603 = vxor.u32 %v5601, 2147483648
        %v5604 = vxor.u32 %v5602, 2147483648
        %v5605 = vmul.f32 %v5603, 1.442695
        %v5606 = vpow.pop %v5605
        %v5607 = vmul.f32 %v5604, 1.442695
        %v5608 = vpow.pop %v5607
        %v5609 = vadd.f32 %v5606, 1.0
        %v5610 = vadd.f32 %v5608, 1.0
        %v5611 = vrcp.pop %v5609
        %v5612 = vmul.f32 1.0, %v5611
        %v5613 = vrcp.pop %v5610
        %v5614 = vmul.f32 1.0, %v5613
        %v5615 = vadd.f32 %v5579, %v895
        %v5616 = vadd.f32 %v5584, %v895
        %v5617 = vmul.f32 %v5598, %v5615
        %v5618 = vmul.f32 %v5600, %v5616
        %v5619 = vadd.f32 %v5427, %v5617
        %v5620 = vadd.f32 %v5432, %v5618
        %v5621 = vtanh.pop %v5619
        %v5622 = vtanh.pop %v5620
        %v5623 = vsub.f32 1.0, %v5612
        %v5624 = vsub.f32 1.0, %v5614
        %v5625 = vmul.f32 %v5623, %v5621
        %v5626 = vmul.f32 %v5624, %v5622
        %v5627 = vmul.f32 %v5612, %v5272
        %v5628 = vmul.f32 %v5614, %v5273
        %v5629 = vadd.f32 %v5625, %v5627
        %v5630 = vadd.f32 %v5626, %v5628
        %s5631 = sadd.s32 %s547, 13
        %v5632 = vstv %s5631
        %vm5633 = vcmp.lt.s32.totalorder %v5632, %v543
        %vm5634 = vcmp.lt.s32.totalorder %v5632, %v546
        %v5635 = vsel %vm5633, %v5629, %v5272
        %v5636 = vsel %vm5634, %v5630, %v5273
        %s5637 = scalar_lea.vmem %s435, 224 [#allocation3]
        %v5638 = vld [vmem:[%s5637] sm:$0xff]
        %v5639 = vld [vmem:[%s5637 + $0x8] sm:$0xff]
        %v5641 = vsel %vm552, %v5638, 0
        %v5644 = vsel %vm552, %v5639, 0
        %5646 = vmatprep.subr.mxu0 %v485
        %5647 = vmatpush1.msra.mxu0 %v484
        %5648 = vmatprep.subr.mxu0 %v488
        %5649 = vmatpush1.msra.mxu0 %v487
        %5650 = vmatprep.subr.mxu0 0.0
        %5651 = vmatpush1.msra.mxu0 0.0
        %5652 = vmatprep.subr.mxu0 0.0
        %5653 = vmatpush1.msra.mxu0 0.0
        %5654 = vmatprep.subr.mxu0 0.0
        %5655 = vmatpush1.msra.mxu0 0.0
        %5656 = vmatprep.subr.mxu0 0.0
        %5657 = vmatpush1.msra.mxu0 0.0
        %5658 = vmatprep.subr.mxu0 0.0
        %5659 = vmatpush1.msra.mxu0 0.0
        %5660 = vmatprep.subr.mxu0 0.0
        %5661 = vmatpush1.msra.mxu0 0.0
        %5662 = vmatprep.subr.mxu0 0.0
        %5663 = vmatpush1.msra.mxu0 0.0
        %5664 = vmatprep.subr.mxu0 0.0
        %5665 = vmatpush1.msra.mxu0 0.0
        %5666 = vmatprep.subr.mxu0 0.0
        %5667 = vmatpush1.msra.mxu0 0.0
        %5668 = vmatprep.subr.mxu0 0.0
        %5669 = vmatpush1.msra.mxu0 0.0
        %5670 = vmatprep.subr.mxu0 0.0
        %5671 = vmatpush1.msra.mxu0 0.0
        %5672 = vmatprep.subr.mxu0 0.0
        %5673 = vmatpush1.msra.mxu0 0.0
        %5674 = vmatprep.subr.mxu0 0.0
        %5675 = vmatpush1.msra.mxu0 0.0
        %5676 = vmatprep.subr.mxu0 0.0
        %5677 = vmatpush1.msra.mxu0 0.0
        %5678 = vmatprep.subr.mxu0 0.0
        %5679 = vmatpush1.msra.mxu0 0.0
        %5680 = vmatprep.subr.mxu0 0.0
        %5681 = vmatpush1.msra.mxu0 0.0
        %5682 = vmatprep.subr.mxu0 0.0
        %5683 = vmatpush1.msra.mxu0 0.0
        %5684 = vmatprep.subr.mxu0 0.0
        %5685 = vmatpush1.msra.mxu0 0.0
        %5686 = vmatprep.subr.mxu0 0.0
        %5687 = vmatpush1.msra.mxu0 0.0
        %5688 = vmatprep.subr.mxu0 0.0
        %5689 = vmatpush1.msra.mxu0 0.0
        %5690 = vmatprep.subr.mxu0 0.0
        %5691 = vmatpush1.msra.mxu0 0.0
        %5692 = vmatprep.subr.mxu0 0.0
        %5693 = vmatpush1.msra.mxu0 0.0
        %5694 = vmatprep.subr.mxu0 0.0
        %5695 = vmatpush1.msra.mxu0 0.0
        %5696 = vmatprep.subr.mxu0 0.0
        %5697 = vmatpush1.msra.mxu0 0.0
        %5698 = vmatprep.subr.mxu0 0.0
        %5699 = vmatpush1.msra.mxu0 0.0
        %5700 = vmatprep.subr.mxu0 0.0
        %5701 = vmatpush1.msra.mxu0 0.0
        %5702 = vmatprep.subr.mxu0 0.0
        %5703 = vmatpush1.msra.mxu0 0.0
        %5704 = vmatprep.subr.mxu0 0.0
        %5705 = vmatpush1.msra.mxu0 0.0
        %5706 = vmatprep.subr.mxu0 0.0
        %5707 = vmatpush1.msra.mxu0 0.0
        %5708 = vmatprep.subr.mxu0 0.0
        %5709 = vmatpush1.msra.mxu0 0.0
        %5710 = vmatprep.mubr.f32.mxu0 0.0
        %5711 = vmatmul.mubr.f32.gmra.mrb[0].mxu0 %v5641
        %v5712 = vpop.f32.mrb[0].mxu0
        %v5713 = vadd.f32 0.0, %v5712
        %v5714 = vpop.f32.mrb[0].mxu0
        %v5715 = vadd.f32 0.0, %v5714
        %5716 = vmatprep.mubr.f32.mxu0 0.0
        %5717 = vmatmul.mubr.f32.gmra.mrb[0].mxu0 %v5644
        %v5718 = vpop.f32.mrb[0].mxu0
        %v5719 = vadd.f32 0.0, %v5718
        %v5720 = vpop.f32.mrb[0].mxu0
        %v5721 = vadd.f32 0.0, %v5720
        %5722 = vdwg.mxu0
        %5723 = vmatprep.subr.mxu0 0.0
        %5724 = vmatpush1.msra.mxu0 %v486
        %5725 = vmatprep.subr.mxu0 0.0
        %5726 = vmatpush1.msra.mxu0 %v489
        %5727 = vmatprep.subr.mxu0 0.0
        %5728 = vmatpush1.msra.mxu0 0.0
        %5729 = vmatprep.subr.mxu0 0.0
        %5730 = vmatpush1.msra.mxu0 0.0
        %5731 = vmatprep.subr.mxu0 0.0
        %5732 = vmatpush1.msra.mxu0 0.0
        %5733 = vmatprep.subr.mxu0 0.0
        %5734 = vmatpush1.msra.mxu0 0.0
        %5735 = vmatprep.subr.mxu0 0.0
        %5736 = vmatpush1.msra.mxu0 0.0
        %5737 = vmatprep.subr.mxu0 0.0
        %5738 = vmatpush1.msra.mxu0 0.0
        %5739 = vmatprep.subr.mxu0 0.0
        %5740 = vmatpush1.msra.mxu0 0.0
        %5741 = vmatprep.subr.mxu0 0.0
        %5742 = vmatpush1.msra.mxu0 0.0
        %5743 = vmatprep.subr.mxu0 0.0
        %5744 = vmatpush1.msra.mxu0 0.0
        %5745 = vmatprep.subr.mxu0 0.0
        %5746 = vmatpush1.msra.mxu0 0.0
        %5747 = vmatprep.subr.mxu0 0.0
        %5748 = vmatpush1.msra.mxu0 0.0
        %5749 = vmatprep.subr.mxu0 0.0
        %5750 = vmatpush1.msra.mxu0 0.0
        %5751 = vmatprep.subr.mxu0 0.0
        %5752 = vmatpush1.msra.mxu0 0.0
        %5753 = vmatprep.subr.mxu0 0.0
        %5754 = vmatpush1.msra.mxu0 0.0
        %5755 = vmatprep.subr.mxu0 0.0
        %5756 = vmatpush1.msra.mxu0 0.0
        %5757 = vmatprep.subr.mxu0 0.0
        %5758 = vmatpush1.msra.mxu0 0.0
        %5759 = vmatprep.subr.mxu0 0.0
        %5760 = vmatpush1.msra.mxu0 0.0
        %5761 = vmatprep.subr.mxu0 0.0
        %5762 = vmatpush1.msra.mxu0 0.0
        %5763 = vmatprep.subr.mxu0 0.0
        %5764 = vmatpush1.msra.mxu0 0.0
        %5765 = vmatprep.subr.mxu0 0.0
        %5766 = vmatpush1.msra.mxu0 0.0
        %5767 = vmatprep.subr.mxu0 0.0
        %5768 = vmatpush1.msra.mxu0 0.0
        %5769 = vmatprep.subr.mxu0 0.0
        %5770 = vmatpush1.msra.mxu0 0.0
        %5771 = vmatprep.subr.mxu0 0.0
        %5772 = vmatpush1.msra.mxu0 0.0
        %5773 = vmatprep.subr.mxu0 0.0
        %5774 = vmatpush1.msra.mxu0 0.0
        %5775 = vmatprep.subr.mxu0 0.0
        %5776 = vmatpush1.msra.mxu0 0.0
        %5777 = vmatprep.subr.mxu0 0.0
        %5778 = vmatpush1.msra.mxu0 0.0
        %5779 = vmatprep.subr.mxu0 0.0
        %5780 = vmatpush1.msra.mxu0 0.0
        %5781 = vmatprep.subr.mxu0 0.0
        %5782 = vmatpush1.msra.mxu0 0.0
        %5783 = vmatprep.subr.mxu0 0.0
        %5784 = vmatpush1.msra.mxu0 0.0
        %5785 = vmatprep.subr.mxu0 0.0
        %5786 = vmatpush1.msra.mxu0 0.0
        %5787 = vmatprep.mubr.f32.mxu0 0.0
        %5788 = vmatmul.mubr.f32.gmra.mrb[0].mxu0 %v5641
        %v5789 = vpop.f32.mrb[0].mxu0
        %v5790 = vadd.f32 0.0, %v5789
        %v5791 = vpop.f32.mrb[0].mxu0
        %5792 = vmatprep.mubr.f32.mxu0 0.0
        %5793 = vmatmul.mubr.f32.gmra.mrb[0].mxu0 %v5644
        %v5794 = vpop.f32.mrb[0].mxu0
        %v5795 = vadd.f32 0.0, %v5794
        %v5796 = vpop.f32.mrb[0].mxu0
        %5797 = vdwg.mxu0
        %5798 = vmatprep.subr.mxu0 %v491
        %5799 = vmatpush1.msra.mxu0 %v490
        %5800 = vmatprep.subr.mxu0 %v494
        %5801 = vmatpush1.msra.mxu0 %v493
        %5802 = vmatprep.subr.mxu0 %v497
        %5803 = vmatpush1.msra.mxu0 %v496
        %5804 = vmatprep.subr.mxu0 %v500
        %5805 = vmatpush1.msra.mxu0 %v499
        %5806 = vmatprep.subr.mxu0 %v503
        %5807 = vmatpush1.msra.mxu0 %v502
        %5808 = vmatprep.subr.mxu0 %v506
        %5809 = vmatpush1.msra.mxu0 %v505
        %5810 = vmatprep.subr.mxu0 %v509
        %5811 = vmatpush1.msra.mxu0 %v508
        %5812 = vmatprep.subr.mxu0 %v512
        %5813 = vmatpush1.msra.mxu0 %v511
        %5814 = vmatprep.subr.mxu0 %v515
        %5815 = vmatpush1.msra.mxu0 %v514
        %5816 = vmatprep.subr.mxu0 %v518
        %5817 = vmatpush1.msra.mxu0 %v517
        %5818 = vmatprep.subr.mxu0 %v521
        %5819 = vmatpush1.msra.mxu0 %v520
        %5820 = vmatprep.subr.mxu0 %v524
        %5821 = vmatpush1.msra.mxu0 %v523
        %5822 = vmatprep.subr.mxu0 %v527
        %5823 = vmatpush1.msra.mxu0 %v526
        %5824 = vmatprep.subr.mxu0 %v530
        %5825 = vmatpush1.msra.mxu0 %v529
        %5826 = vmatprep.subr.mxu0 %v533
        %5827 = vmatpush1.msra.mxu0 %v532
        %5828 = vmatprep.subr.mxu0 %v536
        %5829 = vmatpush1.msra.mxu0 %v535
        %5830 = vmatprep.subr.mxu0 0.0
        %5831 = vmatpush1.msra.mxu0 0.0
        %5832 = vmatprep.subr.mxu0 0.0
        %5833 = vmatpush1.msra.mxu0 0.0
        %5834 = vmatprep.subr.mxu0 0.0
        %5835 = vmatpush1.msra.mxu0 0.0
        %5836 = vmatprep.subr.mxu0 0.0
        %5837 = vmatpush1.msra.mxu0 0.0
        %5838 = vmatprep.subr.mxu0 0.0
        %5839 = vmatpush1.msra.mxu0 0.0
        %5840 = vmatprep.subr.mxu0 0.0
        %5841 = vmatpush1.msra.mxu0 0.0
        %5842 = vmatprep.subr.mxu0 0.0
        %5843 = vmatpush1.msra.mxu0 0.0
        %5844 = vmatprep.subr.mxu0 0.0
        %5845 = vmatpush1.msra.mxu0 0.0
        %5846 = vmatprep.subr.mxu0 0.0
        %5847 = vmatpush1.msra.mxu0 0.0
        %5848 = vmatprep.subr.mxu0 0.0
        %5849 = vmatpush1.msra.mxu0 0.0
        %5850 = vmatprep.subr.mxu0 0.0
        %5851 = vmatpush1.msra.mxu0 0.0
        %5852 = vmatprep.subr.mxu0 0.0
        %5853 = vmatpush1.msra.mxu0 0.0
        %5854 = vmatprep.subr.mxu0 0.0
        %5855 = vmatpush1.msra.mxu0 0.0
        %5856 = vmatprep.subr.mxu0 0.0
        %5857 = vmatpush1.msra.mxu0 0.0
        %5858 = vmatprep.subr.mxu0 0.0
        %5859 = vmatpush1.msra.mxu0 0.0
        %5860 = vmatprep.subr.mxu0 0.0
        %5861 = vmatpush1.msra.mxu0 0.0
        %5862 = vmatprep.mubr.f32.mxu0 0.0
        %5863 = vmatmul.mubr.f32.gmra.mrb[0].mxu0 %v5635
        %v5864 = vpop.f32.mrb[0].mxu0
        %v5865 = vadd.f32 0.0, %v5864
        %v5866 = vpop.f32.mrb[0].mxu0
        %v5867 = vadd.f32 0.0, %v5866
        %5868 = vmatprep.mubr.f32.mxu0 0.0
        %5869 = vmatmul.mubr.f32.gmra.mrb[0].mxu0 %v5636
        %v5870 = vpop.f32.mrb[0].mxu0
        %v5871 = vadd.f32 0.0, %v5870
        %v5872 = vpop.f32.mrb[0].mxu0
        %v5873 = vadd.f32 0.0, %v5872
        %5874 = vdwg.mxu0
        %5875 = vmatprep.subr.mxu0 0.0
        %5876 = vmatpush1.msra.mxu0 %v492
        %5877 = vmatprep.subr.mxu0 0.0
        %5878 = vmatpush1.msra.mxu0 %v495
        %5879 = vmatprep.subr.mxu0 0.0
        %5880 = vmatpush1.msra.mxu0 %v498
        %5881 = vmatprep.subr.mxu0 0.0
        %5882 = vmatpush1.msra.mxu0 %v501
        %5883 = vmatprep.subr.mxu0 0.0
        %5884 = vmatpush1.msra.mxu0 %v504
        %5885 = vmatprep.subr.mxu0 0.0
        %5886 = vmatpush1.msra.mxu0 %v507
        %5887 = vmatprep.subr.mxu0 0.0
        %5888 = vmatpush1.msra.mxu0 %v510
        %5889 = vmatprep.subr.mxu0 0.0
        %5890 = vmatpush1.msra.mxu0 %v513
        %5891 = vmatprep.subr.mxu0 0.0
        %5892 = vmatpush1.msra.mxu0 %v516
        %5893 = vmatprep.subr.mxu0 0.0
        %5894 = vmatpush1.msra.mxu0 %v519
        %5895 = vmatprep.subr.mxu0 0.0
        %5896 = vmatpush1.msra.mxu0 %v522
        %5897 = vmatprep.subr.mxu0 0.0
        %5898 = vmatpush1.msra.mxu0 %v525
        %5899 = vmatprep.subr.mxu0 0.0
        %5900 = vmatpush1.msra.mxu0 %v528
        %5901 = vmatprep.subr.mxu0 0.0
        %5902 = vmatpush1.msra.mxu0 %v531
        %5903 = vmatprep.subr.mxu0 0.0
        %5904 = vmatpush1.msra.mxu0 %v534
        %5905 = vmatprep.subr.mxu0 0.0
        %5906 = vmatpush1.msra.mxu0 %v537
        %5907 = vmatprep.subr.mxu0 0.0
        %5908 = vmatpush1.msra.mxu0 0.0
        %5909 = vmatprep.subr.mxu0 0.0
        %5910 = vmatpush1.msra.mxu0 0.0
        %5911 = vmatprep.subr.mxu0 0.0
        %5912 = vmatpush1.msra.mxu0 0.0
        %5913 = vmatprep.subr.mxu0 0.0
        %5914 = vmatpush1.msra.mxu0 0.0
        %5915 = vmatprep.subr.mxu0 0.0
        %5916 = vmatpush1.msra.mxu0 0.0
        %5917 = vmatprep.subr.mxu0 0.0
        %5918 = vmatpush1.msra.mxu0 0.0
        %5919 = vmatprep.subr.mxu0 0.0
        %5920 = vmatpush1.msra.mxu0 0.0
        %5921 = vmatprep.subr.mxu0 0.0
        %5922 = vmatpush1.msra.mxu0 0.0
        %5923 = vmatprep.subr.mxu0 0.0
        %5924 = vmatpush1.msra.mxu0 0.0
        %5925 = vmatprep.subr.mxu0 0.0
        %5926 = vmatpush1.msra.mxu0 0.0
        %5927 = vmatprep.subr.mxu0 0.0
        %5928 = vmatpush1.msra.mxu0 0.0
        %5929 = vmatprep.subr.mxu0 0.0
        %5930 = vmatpush1.msra.mxu0 0.0
        %5931 = vmatprep.subr.mxu0 0.0
        %5932 = vmatpush1.msra.mxu0 0.0
        %5933 = vmatprep.subr.mxu0 0.0
        %5934 = vmatpush1.msra.mxu0 0.0
        %5935 = vmatprep.subr.mxu0 0.0
        %5936 = vmatpush1.msra.mxu0 0.0
        %5937 = vmatprep.subr.mxu0 0.0
        %5938 = vmatpush1.msra.mxu0 0.0
        %5939 = vmatprep.mubr.f32.mxu0 0.0
        %5940 = vmatmul.mubr.f32.gmra.mrb[0].mxu0 %v5635
        %v5941 = vpop.f32.mrb[0].mxu0
        %v5942 = vadd.f32 0.0, %v5941
        %v5943 = vpop.f32.mrb[0].mxu0
        %5944 = vmatprep.mubr.f32.mxu0 0.0
        %5945 = vmatmul.mubr.f32.gmra.mrb[0].mxu0 %v5636
        %v5946 = vpop.f32.mrb[0].mxu0
        %v5947 = vadd.f32 0.0, %v5946
        %v5948 = vpop.f32.mrb[0].mxu0
        %5949 = vdwg.mxu0
        %v5950 = vadd.f32 %v5713, %v5865
        %v5951 = vadd.f32 %v5719, %v5871
        %v5952 = vxor.u32 %v5950, 2147483648
        %v5953 = vxor.u32 %v5951, 2147483648
        %v5954 = vmul.f32 %v5952, 1.442695
        %v5955 = vpow.pop %v5954
        %v5956 = vmul.f32 %v5953, 1.442695
        %v5957 = vpow.pop %v5956
        %v5958 = vadd.f32 %v5955, 1.0
        %v5959 = vadd.f32 %v5957, 1.0
        %v5960 = vrcp.pop %v5958
        %v5961 = vmul.f32 1.0, %v5960
        %v5962 = vrcp.pop %v5959
        %v5963 = vmul.f32 1.0, %v5962
        %v5964 = vadd.f32 %v5715, %v5867
        %v5965 = vadd.f32 %v5721, %v5873
        %v5966 = vxor.u32 %v5964, 2147483648
        %v5967 = vxor.u32 %v5965, 2147483648
        %v5968 = vmul.f32 %v5966, 1.442695
        %v5969 = vpow.pop %v5968
        %v5970 = vmul.f32 %v5967, 1.442695
        %v5971 = vpow.pop %v5970
        %v5972 = vadd.f32 %v5969, 1.0
        %v5973 = vadd.f32 %v5971, 1.0
        %v5974 = vrcp.pop %v5972
        %v5975 = vmul.f32 1.0, %v5974
        %v5976 = vrcp.pop %v5973
        %v5977 = vmul.f32 1.0, %v5976
        %v5978 = vadd.f32 %v5942, %v895
        %v5979 = vadd.f32 %v5947, %v895
        %v5980 = vmul.f32 %v5961, %v5978
        %v5981 = vmul.f32 %v5963, %v5979
        %v5982 = vadd.f32 %v5790, %v5980
        %v5983 = vadd.f32 %v5795, %v5981
        %v5984 = vtanh.pop %v5982
        %v5985 = vtanh.pop %v5983
        %v5986 = vsub.f32 1.0, %v5975
        %v5987 = vsub.f32 1.0, %v5977
        %v5988 = vmul.f32 %v5986, %v5984
        %v5989 = vmul.f32 %v5987, %v5985
        %v5990 = vmul.f32 %v5975, %v5635
        %v5991 = vmul.f32 %v5977, %v5636
        %v5992 = vadd.f32 %v5988, %v5990
        %v5993 = vadd.f32 %v5989, %v5991
        %s5994 = sadd.s32 %s547, 14
        %v5995 = vstv %s5994
        %vm5996 = vcmp.lt.s32.totalorder %v5995, %v543
        %vm5997 = vcmp.lt.s32.totalorder %v5995, %v546
        %v5998 = vsel %vm5996, %v5992, %v5635
        %v5999 = vsel %vm5997, %v5993, %v5636
        %s6000 = scalar_lea.vmem %s435, 240 [#allocation3]
        %v6001 = vld [vmem:[%s6000] sm:$0xff]
        %v6002 = vld [vmem:[%s6000 + $0x8] sm:$0xff]
        %v6004 = vsel %vm552, %v6001, 0
        %v6007 = vsel %vm552, %v6002, 0
        %6009 = vmatprep.subr.mxu0 %v485
        %6010 = vmatpush1.msra.mxu0 %v484
        %6011 = vmatprep.subr.mxu0 %v488
        %6012 = vmatpush1.msra.mxu0 %v487
        %6013 = vmatprep.subr.mxu0 0.0
        %6014 = vmatpush1.msra.mxu0 0.0
        %6015 = vmatprep.subr.mxu0 0.0
        %6016 = vmatpush1.msra.mxu0 0.0
        %6017 = vmatprep.subr.mxu0 0.0
        %6018 = vmatpush1.msra.mxu0 0.0
        %6019 = vmatprep.subr.mxu0 0.0
        %6020 = vmatpush1.msra.mxu0 0.0
        %6021 = vmatprep.subr.mxu0 0.0
        %6022 = vmatpush1.msra.mxu0 0.0
        %6023 = vmatprep.subr.mxu0 0.0
        %6024 = vmatpush1.msra.mxu0 0.0
        %6025 = vmatprep.subr.mxu0 0.0
        %6026 = vmatpush1.msra.mxu0 0.0
        %6027 = vmatprep.subr.mxu0 0.0
        %6028 = vmatpush1.msra.mxu0 0.0
        %6029 = vmatprep.subr.mxu0 0.0
        %6030 = vmatpush1.msra.mxu0 0.0
        %6031 = vmatprep.subr.mxu0 0.0
        %6032 = vmatpush1.msra.mxu0 0.0
        %6033 = vmatprep.subr.mxu0 0.0
        %6034 = vmatpush1.msra.mxu0 0.0
        %6035 = vmatprep.subr.mxu0 0.0
        %6036 = vmatpush1.msra.mxu0 0.0
        %6037 = vmatprep.subr.mxu0 0.0
        %6038 = vmatpush1.msra.mxu0 0.0
        %6039 = vmatprep.subr.mxu0 0.0
        %6040 = vmatpush1.msra.mxu0 0.0
        %6041 = vmatprep.subr.mxu0 0.0
        %6042 = vmatpush1.msra.mxu0 0.0
        %6043 = vmatprep.subr.mxu0 0.0
        %6044 = vmatpush1.msra.mxu0 0.0
        %6045 = vmatprep.subr.mxu0 0.0
        %6046 = vmatpush1.msra.mxu0 0.0
        %6047 = vmatprep.subr.mxu0 0.0
        %6048 = vmatpush1.msra.mxu0 0.0
        %6049 = vmatprep.subr.mxu0 0.0
        %6050 = vmatpush1.msra.mxu0 0.0
        %6051 = vmatprep.subr.mxu0 0.0
        %6052 = vmatpush1.msra.mxu0 0.0
        %6053 = vmatprep.subr.mxu0 0.0
        %6054 = vmatpush1.msra.mxu0 0.0
        %6055 = vmatprep.subr.mxu0 0.0
        %6056 = vmatpush1.msra.mxu0 0.0
        %6057 = vmatprep.subr.mxu0 0.0
        %6058 = vmatpush1.msra.mxu0 0.0
        %6059 = vmatprep.subr.mxu0 0.0
        %6060 = vmatpush1.msra.mxu0 0.0
        %6061 = vmatprep.subr.mxu0 0.0
        %6062 = vmatpush1.msra.mxu0 0.0
        %6063 = vmatprep.subr.mxu0 0.0
        %6064 = vmatpush1.msra.mxu0 0.0
        %6065 = vmatprep.subr.mxu0 0.0
        %6066 = vmatpush1.msra.mxu0 0.0
        %6067 = vmatprep.subr.mxu0 0.0
        %6068 = vmatpush1.msra.mxu0 0.0
        %6069 = vmatprep.subr.mxu0 0.0
        %6070 = vmatpush1.msra.mxu0 0.0
        %6071 = vmatprep.subr.mxu0 0.0
        %6072 = vmatpush1.msra.mxu0 0.0
        %6073 = vmatprep.mubr.f32.mxu0 0.0
        %6074 = vmatmul.mubr.f32.gmra.mrb[0].mxu0 %v6004
        %v6075 = vpop.f32.mrb[0].mxu0
        %v6076 = vadd.f32 0.0, %v6075
        %v6077 = vpop.f32.mrb[0].mxu0
        %v6078 = vadd.f32 0.0, %v6077
        %6079 = vmatprep.mubr.f32.mxu0 0.0
        %6080 = vmatmul.mubr.f32.gmra.mrb[0].mxu0 %v6007
        %v6081 = vpop.f32.mrb[0].mxu0
        %v6082 = vadd.f32 0.0, %v6081
        %v6083 = vpop.f32.mrb[0].mxu0
        %v6084 = vadd.f32 0.0, %v6083
        %6085 = vdwg.mxu0
        %6086 = vmatprep.subr.mxu0 0.0
        %6087 = vmatpush1.msra.mxu0 %v486
        %6088 = vmatprep.subr.mxu0 0.0
        %6089 = vmatpush1.msra.mxu0 %v489
        %6090 = vmatprep.subr.mxu0 0.0
        %6091 = vmatpush1.msra.mxu0 0.0
        %6092 = vmatprep.subr.mxu0 0.0
        %6093 = vmatpush1.msra.mxu0 0.0
        %6094 = vmatprep.subr.mxu0 0.0
        %6095 = vmatpush1.msra.mxu0 0.0
        %6096 = vmatprep.subr.mxu0 0.0
        %6097 = vmatpush1.msra.mxu0 0.0
        %6098 = vmatprep.subr.mxu0 0.0
        %6099 = vmatpush1.msra.mxu0 0.0
        %6100 = vmatprep.subr.mxu0 0.0
        %6101 = vmatpush1.msra.mxu0 0.0
        %6102 = vmatprep.subr.mxu0 0.0
        %6103 = vmatpush1.msra.mxu0 0.0
        %6104 = vmatprep.subr.mxu0 0.0
        %6105 = vmatpush1.msra.mxu0 0.0
        %6106 = vmatprep.subr.mxu0 0.0
        %6107 = vmatpush1.msra.mxu0 0.0
        %6108 = vmatprep.subr.mxu0 0.0
        %6109 = vmatpush1.msra.mxu0 0.0
        %6110 = vmatprep.subr.mxu0 0.0
        %6111 = vmatpush1.msra.mxu0 0.0
        %6112 = vmatprep.subr.mxu0 0.0
        %6113 = vmatpush1.msra.mxu0 0.0
        %6114 = vmatprep.subr.mxu0 0.0
        %6115 = vmatpush1.msra.mxu0 0.0
        %6116 = vmatprep.subr.mxu0 0.0
        %6117 = vmatpush1.msra.mxu0 0.0
        %6118 = vmatprep.subr.mxu0 0.0
        %6119 = vmatpush1.msra.mxu0 0.0
        %6120 = vmatprep.subr.mxu0 0.0
        %6121 = vmatpush1.msra.mxu0 0.0
        %6122 = vmatprep.subr.mxu0 0.0
        %6123 = vmatpush1.msra.mxu0 0.0
        %6124 = vmatprep.subr.mxu0 0.0
        %6125 = vmatpush1.msra.mxu0 0.0
        %6126 = vmatprep.subr.mxu0 0.0
        %6127 = vmatpush1.msra.mxu0 0.0
        %6128 = vmatprep.subr.mxu0 0.0
        %6129 = vmatpush1.msra.mxu0 0.0
        %6130 = vmatprep.subr.mxu0 0.0
        %6131 = vmatpush1.msra.mxu0 0.0
        %6132 = vmatprep.subr.mxu0 0.0
        %6133 = vmatpush1.msra.mxu0 0.0
        %6134 = vmatprep.subr.mxu0 0.0
        %6135 = vmatpush1.msra.mxu0 0.0
        %6136 = vmatprep.subr.mxu0 0.0
        %6137 = vmatpush1.msra.mxu0 0.0
        %6138 = vmatprep.subr.mxu0 0.0
        %6139 = vmatpush1.msra.mxu0 0.0
        %6140 = vmatprep.subr.mxu0 0.0
        %6141 = vmatpush1.msra.mxu0 0.0
        %6142 = vmatprep.subr.mxu0 0.0
        %6143 = vmatpush1.msra.mxu0 0.0
        %6144 = vmatprep.subr.mxu0 0.0
        %6145 = vmatpush1.msra.mxu0 0.0
        %6146 = vmatprep.subr.mxu0 0.0
        %6147 = vmatpush1.msra.mxu0 0.0
        %6148 = vmatprep.subr.mxu0 0.0
        %6149 = vmatpush1.msra.mxu0 0.0
        %6150 = vmatprep.mubr.f32.mxu0 0.0
        %6151 = vmatmul.mubr.f32.gmra.mrb[0].mxu0 %v6004
        %v6152 = vpop.f32.mrb[0].mxu0
        %v6153 = vadd.f32 0.0, %v6152
        %v6154 = vpop.f32.mrb[0].mxu0
        %6155 = vmatprep.mubr.f32.mxu0 0.0
        %6156 = vmatmul.mubr.f32.gmra.mrb[0].mxu0 %v6007
        %v6157 = vpop.f32.mrb[0].mxu0
        %v6158 = vadd.f32 0.0, %v6157
        %v6159 = vpop.f32.mrb[0].mxu0
        %6160 = vdwg.mxu0
        %6161 = vmatprep.subr.mxu0 %v491
        %6162 = vmatpush1.msra.mxu0 %v490
        %6163 = vmatprep.subr.mxu0 %v494
        %6164 = vmatpush1.msra.mxu0 %v493
        %6165 = vmatprep.subr.mxu0 %v497
        %6166 = vmatpush1.msra.mxu0 %v496
        %6167 = vmatprep.subr.mxu0 %v500
        %6168 = vmatpush1.msra.mxu0 %v499
        %6169 = vmatprep.subr.mxu0 %v503
        %6170 = vmatpush1.msra.mxu0 %v502
        %6171 = vmatprep.subr.mxu0 %v506
        %6172 = vmatpush1.msra.mxu0 %v505
        %6173 = vmatprep.subr.mxu0 %v509
        %6174 = vmatpush1.msra.mxu0 %v508
        %6175 = vmatprep.subr.mxu0 %v512
        %6176 = vmatpush1.msra.mxu0 %v511
        %6177 = vmatprep.subr.mxu0 %v515
        %6178 = vmatpush1.msra.mxu0 %v514
        %6179 = vmatprep.subr.mxu0 %v518
        %6180 = vmatpush1.msra.mxu0 %v517
        %6181 = vmatprep.subr.mxu0 %v521
        %6182 = vmatpush1.msra.mxu0 %v520
        %6183 = vmatprep.subr.mxu0 %v524
        %6184 = vmatpush1.msra.mxu0 %v523
        %6185 = vmatprep.subr.mxu0 %v527
        %6186 = vmatpush1.msra.mxu0 %v526
        %6187 = vmatprep.subr.mxu0 %v530
        %6188 = vmatpush1.msra.mxu0 %v529
        %6189 = vmatprep.subr.mxu0 %v533
        %6190 = vmatpush1.msra.mxu0 %v532
        %6191 = vmatprep.subr.mxu0 %v536
        %6192 = vmatpush1.msra.mxu0 %v535
        %6193 = vmatprep.subr.mxu0 0.0
        %6194 = vmatpush1.msra.mxu0 0.0
        %6195 = vmatprep.subr.mxu0 0.0
        %6196 = vmatpush1.msra.mxu0 0.0
        %6197 = vmatprep.subr.mxu0 0.0
        %6198 = vmatpush1.msra.mxu0 0.0
        %6199 = vmatprep.subr.mxu0 0.0
        %6200 = vmatpush1.msra.mxu0 0.0
        %6201 = vmatprep.subr.mxu0 0.0
        %6202 = vmatpush1.msra.mxu0 0.0
        %6203 = vmatprep.subr.mxu0 0.0
        %6204 = vmatpush1.msra.mxu0 0.0
        %6205 = vmatprep.subr.mxu0 0.0
        %6206 = vmatpush1.msra.mxu0 0.0
        %6207 = vmatprep.subr.mxu0 0.0
        %6208 = vmatpush1.msra.mxu0 0.0
        %6209 = vmatprep.subr.mxu0 0.0
        %6210 = vmatpush1.msra.mxu0 0.0
        %6211 = vmatprep.subr.mxu0 0.0
        %6212 = vmatpush1.msra.mxu0 0.0
        %6213 = vmatprep.subr.mxu0 0.0
        %6214 = vmatpush1.msra.mxu0 0.0
        %6215 = vmatprep.subr.mxu0 0.0
        %6216 = vmatpush1.msra.mxu0 0.0
        %6217 = vmatprep.subr.mxu0 0.0
        %6218 = vmatpush1.msra.mxu0 0.0
        %6219 = vmatprep.subr.mxu0 0.0
        %6220 = vmatpush1.msra.mxu0 0.0
        %6221 = vmatprep.subr.mxu0 0.0
        %6222 = vmatpush1.msra.mxu0 0.0
        %6223 = vmatprep.subr.mxu0 0.0
        %6224 = vmatpush1.msra.mxu0 0.0
        %6225 = vmatprep.mubr.f32.mxu0 0.0
        %6226 = vmatmul.mubr.f32.gmra.mrb[0].mxu0 %v5998
        %v6227 = vpop.f32.mrb[0].mxu0
        %v6228 = vadd.f32 0.0, %v6227
        %v6229 = vpop.f32.mrb[0].mxu0
        %v6230 = vadd.f32 0.0, %v6229
        %6231 = vmatprep.mubr.f32.mxu0 0.0
        %6232 = vmatmul.mubr.f32.gmra.mrb[0].mxu0 %v5999
        %v6233 = vpop.f32.mrb[0].mxu0
        %v6234 = vadd.f32 0.0, %v6233
        %v6235 = vpop.f32.mrb[0].mxu0
        %v6236 = vadd.f32 0.0, %v6235
        %6237 = vdwg.mxu0
        %6238 = vmatprep.subr.mxu0 0.0
        %6239 = vmatpush1.msra.mxu0 %v492
        %6240 = vmatprep.subr.mxu0 0.0
        %6241 = vmatpush1.msra.mxu0 %v495
        %6242 = vmatprep.subr.mxu0 0.0
        %6243 = vmatpush1.msra.mxu0 %v498
        %6244 = vmatprep.subr.mxu0 0.0
        %6245 = vmatpush1.msra.mxu0 %v501
        %6246 = vmatprep.subr.mxu0 0.0
        %6247 = vmatpush1.msra.mxu0 %v504
        %6248 = vmatprep.subr.mxu0 0.0
        %6249 = vmatpush1.msra.mxu0 %v507
        %6250 = vmatprep.subr.mxu0 0.0
        %6251 = vmatpush1.msra.mxu0 %v510
        %6252 = vmatprep.subr.mxu0 0.0
        %6253 = vmatpush1.msra.mxu0 %v513
        %6254 = vmatprep.subr.mxu0 0.0
        %6255 = vmatpush1.msra.mxu0 %v516
        %6256 = vmatprep.subr.mxu0 0.0
        %6257 = vmatpush1.msra.mxu0 %v519
        %6258 = vmatprep.subr.mxu0 0.0
        %6259 = vmatpush1.msra.mxu0 %v522
        %6260 = vmatprep.subr.mxu0 0.0
        %6261 = vmatpush1.msra.mxu0 %v525
        %6262 = vmatprep.subr.mxu0 0.0
        %6263 = vmatpush1.msra.mxu0 %v528
        %6264 = vmatprep.subr.mxu0 0.0
        %6265 = vmatpush1.msra.mxu0 %v531
        %6266 = vmatprep.subr.mxu0 0.0
        %6267 = vmatpush1.msra.mxu0 %v534
        %6268 = vmatprep.subr.mxu0 0.0
        %6269 = vmatpush1.msra.mxu0 %v537
        %6270 = vmatprep.subr.mxu0 0.0
        %6271 = vmatpush1.msra.mxu0 0.0
        %6272 = vmatprep.subr.mxu0 0.0
        %6273 = vmatpush1.msra.mxu0 0.0
        %6274 = vmatprep.subr.mxu0 0.0
        %6275 = vmatpush1.msra.mxu0 0.0
        %6276 = vmatprep.subr.mxu0 0.0
        %6277 = vmatpush1.msra.mxu0 0.0
        %6278 = vmatprep.subr.mxu0 0.0
        %6279 = vmatpush1.msra.mxu0 0.0
        %6280 = vmatprep.subr.mxu0 0.0
        %6281 = vmatpush1.msra.mxu0 0.0
        %6282 = vmatprep.subr.mxu0 0.0
        %6283 = vmatpush1.msra.mxu0 0.0
        %6284 = vmatprep.subr.mxu0 0.0
        %6285 = vmatpush1.msra.mxu0 0.0
        %6286 = vmatprep.subr.mxu0 0.0
        %6287 = vmatpush1.msra.mxu0 0.0
        %6288 = vmatprep.subr.mxu0 0.0
        %6289 = vmatpush1.msra.mxu0 0.0
        %6290 = vmatprep.subr.mxu0 0.0
        %6291 = vmatpush1.msra.mxu0 0.0
        %6292 = vmatprep.subr.mxu0 0.0
        %6293 = vmatpush1.msra.mxu0 0.0
        %6294 = vmatprep.subr.mxu0 0.0
        %6295 = vmatpush1.msra.mxu0 0.0
        %6296 = vmatprep.subr.mxu0 0.0
        %6297 = vmatpush1.msra.mxu0 0.0
        %6298 = vmatprep.subr.mxu0 0.0
        %6299 = vmatpush1.msra.mxu0 0.0
        %6300 = vmatprep.subr.mxu0 0.0
        %6301 = vmatpush1.msra.mxu0 0.0
        %6302 = vmatprep.mubr.f32.mxu0 0.0
        %6303 = vmatmul.mubr.f32.gmra.mrb[0].mxu0 %v5998
        %v6304 = vpop.f32.mrb[0].mxu0
        %v6305 = vadd.f32 0.0, %v6304
        %v6306 = vpop.f32.mrb[0].mxu0
        %6307 = vmatprep.mubr.f32.mxu0 0.0
        %6308 = vmatmul.mubr.f32.gmra.mrb[0].mxu0 %v5999
        %v6309 = vpop.f32.mrb[0].mxu0
        %v6310 = vadd.f32 0.0, %v6309
        %v6311 = vpop.f32.mrb[0].mxu0
        %6312 = vdwg.mxu0
        %v6313 = vadd.f32 %v6076, %v6228
        %v6314 = vadd.f32 %v6082, %v6234
        %v6315 = vxor.u32 %v6313, 2147483648
        %v6316 = vxor.u32 %v6314, 2147483648
        %v6317 = vmul.f32 %v6315, 1.442695
        %v6318 = vpow.pop %v6317
        %v6319 = vmul.f32 %v6316, 1.442695
        %v6320 = vpow.pop %v6319
        %v6321 = vadd.f32 %v6318, 1.0
        %v6322 = vadd.f32 %v6320, 1.0
        %v6323 = vrcp.pop %v6321
        %v6324 = vmul.f32 1.0, %v6323
        %v6325 = vrcp.pop %v6322
        %v6326 = vmul.f32 1.0, %v6325
        %v6327 = vadd.f32 %v6078, %v6230
        %v6328 = vadd.f32 %v6084, %v6236
        %v6329 = vxor.u32 %v6327, 2147483648
        %v6330 = vxor.u32 %v6328, 2147483648
        %v6331 = vmul.f32 %v6329, 1.442695
        %v6332 = vpow.pop %v6331
        %v6333 = vmul.f32 %v6330, 1.442695
        %v6334 = vpow.pop %v6333
        %v6335 = vadd.f32 %v6332, 1.0
        %v6336 = vadd.f32 %v6334, 1.0
        %v6337 = vrcp.pop %v6335
        %v6338 = vmul.f32 1.0, %v6337
        %v6339 = vrcp.pop %v6336
        %v6340 = vmul.f32 1.0, %v6339
        %v6341 = vadd.f32 %v6305, %v895
        %v6342 = vadd.f32 %v6310, %v895
        %v6343 = vmul.f32 %v6324, %v6341
        %v6344 = vmul.f32 %v6326, %v6342
        %v6345 = vadd.f32 %v6153, %v6343
        %v6346 = vadd.f32 %v6158, %v6344
        %v6347 = vtanh.pop %v6345
        %v6348 = vtanh.pop %v6346
        %v6349 = vsub.f32 1.0, %v6338
        %v6350 = vsub.f32 1.0, %v6340
        %v6351 = vmul.f32 %v6349, %v6347
        %v6352 = vmul.f32 %v6350, %v6348
        %v6353 = vmul.f32 %v6338, %v5998
        %v6354 = vmul.f32 %v6340, %v5999
        %v6355 = vadd.f32 %v6351, %v6353
        %v6356 = vadd.f32 %v6352, %v6354
        %s6357 = sadd.s32 %s547, 15
        %v6358 = vstv %s6357
        %vm6359 = vcmp.lt.s32.totalorder %v6358, %v543
        %vm6360 = vcmp.lt.s32.totalorder %v6358, %v546
        %v6361 = vsel %vm6359, %v6355, %v5998
        %v6362 = vsel %vm6360, %v6356, %v5999
        %6363 = vst [vmem:[#allocation2] sm:$0xff] %v6361
        %6364 = vst [vmem:[#allocation2 + $0x8] sm:$0xff] %v6362
        %p6365 = scmp.eq.s32.totalorder %s26, 1
        // Predicated region
        $region91: #{tpu_custom_call.1} parent=81 // pred_check
          %p6366 = pneg %p6365
        $region92: #{tpu_custom_call.1} parent=81 // pred_check_branch
          %6368 = sbr.rel (%p6366) target = $region94
        $region93: #{tpu_custom_call.1} parent=81 // pred_region
          %v6369 = vld [vmem:[#allocation2] sm:$0xff]
          %v6370 = vld [vmem:[#allocation2 + $0x8] sm:$0xff]
          %v6371 = vtanh.pop %v6369
          %v6372 = vtanh.pop %v6370
          %v6373 = vld [vmem:[%s5] sm:$0xff]
          %v6374 = vld [vmem:[%s5 + $0x8] sm:$0xff]
          %v6375 = vld [vmem:[%s5 + $0x10] sm:$0xff]
          %v6376 = vld [vmem:[%s5 + $0x18] sm:$0xff]
          %v6377 = vld [vmem:[%s5 + $0x20] sm:$0xff]
          %v6378 = vld [vmem:[%s5 + $0x28] sm:$0xff]
          %v6379 = vld [vmem:[%s5 + $0x30] sm:$0xff]
          %v6380 = vld [vmem:[%s5 + $0x38] sm:$0xff]
          %v6381 = vld [vmem:[%s5 + $0x40] sm:$0xff]
          %v6382 = vld [vmem:[%s5 + $0x48] sm:$0xff]
          %v6383 = vld [vmem:[%s5 + $0x50] sm:$0xff]
          %v6384 = vld [vmem:[%s5 + $0x58] sm:$0xff]
          %v6385 = vld [vmem:[%s5 + $0x60] sm:$0xff]
          %v6386 = vld [vmem:[%s5 + $0x68] sm:$0xff]
          %v6387 = vld [vmem:[%s5 + $0x70] sm:$0xff]
          %v6388 = vld [vmem:[%s5 + $0x78] sm:$0xff]
          %v6389 = vld [vmem:[%s6] sm:$0x1]
          %v6391 = vlaneseq
          %v6392 = vshrl.u32 %v6391, 7
          %v6393 = vsub.s32 0, %v6392
          %v6394 = vrot.slane %v6389, %v6393
          %6396 = vmatprep.subr.mxu0 0.0
          %6397 = vmatpush1.msra.mxu0 %v6373
          %6398 = vmatprep.subr.mxu0 0.0
          %6399 = vmatpush1.msra.mxu0 %v6374
          %6400 = vmatprep.subr.mxu0 0.0
          %6401 = vmatpush1.msra.mxu0 %v6375
          %6402 = vmatprep.subr.mxu0 0.0
          %6403 = vmatpush1.msra.mxu0 %v6376
          %6404 = vmatprep.subr.mxu0 0.0
          %6405 = vmatpush1.msra.mxu0 %v6377
          %6406 = vmatprep.subr.mxu0 0.0
          %6407 = vmatpush1.msra.mxu0 %v6378
          %6408 = vmatprep.subr.mxu0 0.0
          %6409 = vmatpush1.msra.mxu0 %v6379
          %6410 = vmatprep.subr.mxu0 0.0
          %6411 = vmatpush1.msra.mxu0 %v6380
          %6412 = vmatprep.subr.mxu0 0.0
          %6413 = vmatpush1.msra.mxu0 %v6381
          %6414 = vmatprep.subr.mxu0 0.0
          %6415 = vmatpush1.msra.mxu0 %v6382
          %6416 = vmatprep.subr.mxu0 0.0
          %6417 = vmatpush1.msra.mxu0 %v6383
          %6418 = vmatprep.subr.mxu0 0.0
          %6419 = vmatpush1.msra.mxu0 %v6384
          %6420 = vmatprep.subr.mxu0 0.0
          %6421 = vmatpush1.msra.mxu0 %v6385
          %6422 = vmatprep.subr.mxu0 0.0
          %6423 = vmatpush1.msra.mxu0 %v6386
          %6424 = vmatprep.subr.mxu0 0.0
          %6425 = vmatpush1.msra.mxu0 %v6387
          %6426 = vmatprep.subr.mxu0 0.0
          %6427 = vmatpush1.msra.mxu0 %v6388
          %6428 = vmatprep.subr.mxu0 0.0
          %6429 = vmatpush1.msra.mxu0 0.0
          %6430 = vmatprep.subr.mxu0 0.0
          %6431 = vmatpush1.msra.mxu0 0.0
          %6432 = vmatprep.subr.mxu0 0.0
          %6433 = vmatpush1.msra.mxu0 0.0
          %6434 = vmatprep.subr.mxu0 0.0
          %6435 = vmatpush1.msra.mxu0 0.0
          %6436 = vmatprep.subr.mxu0 0.0
          %6437 = vmatpush1.msra.mxu0 0.0
          %6438 = vmatprep.subr.mxu0 0.0
          %6439 = vmatpush1.msra.mxu0 0.0
          %6440 = vmatprep.subr.mxu0 0.0
          %6441 = vmatpush1.msra.mxu0 0.0
          %6442 = vmatprep.subr.mxu0 0.0
          %6443 = vmatpush1.msra.mxu0 0.0
          %6444 = vmatprep.subr.mxu0 0.0
          %6445 = vmatpush1.msra.mxu0 0.0
          %6446 = vmatprep.subr.mxu0 0.0
          %6447 = vmatpush1.msra.mxu0 0.0
          %6448 = vmatprep.subr.mxu0 0.0
          %6449 = vmatpush1.msra.mxu0 0.0
          %6450 = vmatprep.subr.mxu0 0.0
          %6451 = vmatpush1.msra.mxu0 0.0
          %6452 = vmatprep.subr.mxu0 0.0
          %6453 = vmatpush1.msra.mxu0 0.0
          %6454 = vmatprep.subr.mxu0 0.0
          %6455 = vmatpush1.msra.mxu0 0.0
          %6456 = vmatprep.subr.mxu0 0.0
          %6457 = vmatpush1.msra.mxu0 0.0
          %6458 = vmatprep.subr.mxu0 0.0
          %6459 = vmatpush1.msra.mxu0 0.0
          %6460 = vmatprep.mubr.f32.mxu0 0.0
          %6461 = vmatmul.mubr.f32.gmra.mrb[0].mxu0 %v6371
          %v6462 = vpop.f32.mrb[0].mxu0
          %v6463 = vadd.f32 %v6394, %v6462
          %v6464 = vpop.f32.mrb[0].mxu0
          %6465 = vmatprep.mubr.f32.mxu0 0.0
          %6466 = vmatmul.mubr.f32.gmra.mrb[0].mxu0 %v6372
          %v6467 = vpop.f32.mrb[0].mxu0
          %v6468 = vadd.f32 %v6394, %v6467
          %v6469 = vpop.f32.mrb[0].mxu0
          %6470 = vdwg.mxu0
          %6471 = vst [vmem:[%s468] sm:$0xff] %v6463
          %6472 = vst [vmem:[%s468 + $0x8] sm:$0xff] %v6468
        $region94: #{tpu_custom_call.1} parent=81 // pred_fallthru
          _
        %s6473 = sand.u32 %s200, 1
        %s6474 = scalar_lea.sflag [#allocation5], %s6473
        %s6475 = sand.u32 %s200, 1
        %s6476 = smul.addr %s6475, 16
        %s6477 = scalar_lea.vmem [#allocation4], %s6476
        // Predicated region
        $region95: #{tpu_custom_call.1} parent=81 // pred_check
          %p6478 = pneg %p210
        $region96: #{tpu_custom_call.1} parent=81 // pred_check_branch
          %6480 = sbr.rel (%p6478) target = $region98
        $region97: #{tpu_custom_call.1} parent=81 // pred_region
          %s6481 = smul.u32 2, %s25
          %s6483 = ssub.s32 256, 256
          %6484 = vsyncadd %s6474, %s6483
          %s6485 = smul.addr %s6481, 128
          %s6486 = scalar_lea.hbm %s7, %s6485
          %s6487 = sshll.u32 %s6477, 4
          %s6488 = int_to_ptr.vmem [resolvable:$true] %s6487
          %6493 = dma.vmem_to_hbm [thread:$0]  %s6488, 256, %s6486, %s6474, 128, 128, 8
        $region98: #{tpu_custom_call.1} parent=81 // pred_fallthru
          _
      $region82: #{tpu_custom_call.1} parent=5 // pred_fallthru
        _
      %p6494 = scmp.le.s32.totalorder 2, %s16
      // Predicated region
      $region99: #{tpu_custom_call.1} parent=5 // pred_check
        %p6495 = pneg %p6494
      $region100: #{tpu_custom_call.1} parent=5 // pred_check_branch
        %6497 = sbr.rel (%p6495) target = $region102
      $region101: #{tpu_custom_call.1} parent=5 // pred_region
        %s6498 = ssub.s32 %s16, 2
        // Predicated region
        $region103: #{tpu_custom_call.1} parent=101 // pred_check
          %p6499 = pneg %p216
        $region104: #{tpu_custom_call.1} parent=101 // pred_check_branch
          %6501 = sbr.rel (%p6499) target = $region106
        $region105: #{tpu_custom_call.1} parent=101 // pred_region
          %s6502 = sand.u32 %s201, 1
          %s6503 = scalar_lea.sflag [#allocation5], %s6502
          %s6504 = sand.u32 %s201, 1
          %s6505 = smul.addr %s6504, 16
          %s6506 = scalar_lea.vmem [#allocation4], %s6505
          %6507 = dma.done %s6503, 256
        $region106: #{tpu_custom_call.1} parent=101 // pred_fallthru
          _
      $region102: #{tpu_custom_call.1} parent=5 // pred_fallthru
        _
    $region6: #{tpu_custom_call.1} parent=1 // loop_footer
      %s20 = sadd.s32 1, %s16
    $region7: #{tpu_custom_call.1} parent=1 // loop_footer_branch
      %15 = sbr.rel target = $region3
    $region8: #{tpu_custom_call.1} parent=1 // loop_exit
      _
    %6508 = vsyncpa [#allocation5], 1
    %s6509 = scalar_lea.sflag [#allocation5], 1
    %6510 = vsyncpa %s6509, 1

</llo_original>
